<compile_context>
chip_gen: v5e
topology: v5e:2x2
jax: 0.10.0
libtpu: 0.0.40
codegen_flags: <defaults>
</compile_context>

<pallas_src>
import functools

import jax
import jax.numpy as jnp
from jax import lax
from jax.experimental import pallas as pl


SLOPE = 0.2    # F.leaky_relu(x, 0.2) in the reference Net
EPS = 1e-5     # nn.BatchNorm2d default
LANE = 128     # lane width; final conv output padded to this

# name,     cin, cout, k, stride, pad, act,   bn,    upsample
LAYERS = [
    ("conv1",     4,   64, 4, 2, 1, True,  True,  False),
    ("conv2",    64,  128, 4, 2, 1, True,  True,  False),
    ("conv3",   128,  256, 3, 2, 1, True,  True,  False),
    ("conv4",   256,  256, 3, 2, 1, True,  True,  False),
    ("deconv1", 256,  256, 3, 1, 1, True,  True,  True),
    ("deconv2", 256,  128, 3, 1, 1, True,  True,  True),
    ("deconv3", 128,   64, 3, 1, 1, True,  True,  True),
    ("deconv4",  64,    3, 3, 1, 1, False, False, True),
]


# ----------------------------------------------------------------------------
# Pallas kernel: fused matmul + bias [+ leaky_relu] [+ BatchNorm] epilogue
# ----------------------------------------------------------------------------
def _layer_kernel(a_ref, w_ref, s_ref, o_ref, *, slope, eps, do_act, do_bn):
    """(M,K)bf16 @ (K,C)bf16 -> f32, + bias [+ leaky_relu] [+ BN(batch stats)].

    s_ref is a (3, C) f32 block: row 0 = conv bias, row 1 = BN gamma,
    row 2 = BN beta (rows 1-2 unused when do_bn=False).
    """
    y = jnp.dot(a_ref[...], w_ref[...], preferred_element_type=jnp.float32)
    y = y + s_ref[0:1, :]
    if do_act:
        y = jnp.where(y >= 0.0, y, slope * y)
    if do_bn:
        # Per-channel batch statistics: channels lane-dense, reduce over rows.
        mean = jnp.mean(y, axis=0, keepdims=True)
        var = jnp.mean(jnp.square(y - mean), axis=0, keepdims=True)  # biased
        y = (y - mean) * lax.rsqrt(var + eps) * s_ref[1:2, :] + s_ref[2:3, :]
    o_ref[...] = y.astype(o_ref.dtype)


def fused_layer(patches, w_bf16, scales, *, act, bn):
    """One pallas_call for one layer. patches:(M,K) f32, w:(K,Cp) bf16."""
    M, K = patches.shape
    Cp = w_bf16.shape[1]
    kern = functools.partial(_layer_kernel, slope=SLOPE, eps=EPS,
                             do_act=act, do_bn=bn)
    return pl.pallas_call(
        kern,
        out_shape=jax.ShapeDtypeStruct((M, Cp), jnp.float32),
        grid=(1,),
        in_specs=[
            pl.BlockSpec((M, K), lambda i: (0, 0)),
            pl.BlockSpec((K, Cp), lambda i: (0, 0)),
            pl.BlockSpec((3, Cp), lambda i: (0, 0)),
        ],
        out_specs=pl.BlockSpec((M, Cp), lambda i: (0, 0)),
    )(patches.astype(jnp.bfloat16), w_bf16, scales)


# ----------------------------------------------------------------------------
# Channel-last glue (XLA data movement feeding the fused kernels)
# ----------------------------------------------------------------------------
def bilinear_upsample_x2_nhwc(x):
    """nn.UpsamplingBilinear2d(scale_factor=2): bilinear, align_corners=True."""
    def lerp_axis(x, axis):
        n_in = x.shape[axis]
        n_out = 2 * n_in
        if n_in == 1:
            return jnp.repeat(x, 2, axis=axis)
        src = jnp.arange(n_out, dtype=jnp.float32) * (n_in - 1) / (n_out - 1)
        lo = jnp.clip(jnp.floor(src).astype(jnp.int32), 0, n_in - 2)
        frac = src - lo.astype(jnp.float32)
        shape = [1] * x.ndim
        shape[axis] = n_out
        frac = frac.reshape(shape)
        return (jnp.take(x, lo, axis=axis) * (1.0 - frac)
                + jnp.take(x, lo + 1, axis=axis) * frac)
    return lerp_axis(lerp_axis(x, 1), 2)


def _im2col_nhwc(x, kh, kw, stride, pad):
    """x: (N,H,W,C) -> patches (N*Ho*Wo, kh*kw*C), channel-last inner order."""
    N, H, W, C = x.shape
    Ho = (H + 2 * pad - kh) // stride + 1
    Wo = (W + 2 * pad - kw) // stride + 1
    xp = jnp.pad(x, ((0, 0), (pad, pad), (pad, pad), (0, 0)))
    taps = []
    for i in range(kh):
        hi = i + stride * (Ho - 1) + 1
        for j in range(kw):
            wj = j + stride * (Wo - 1) + 1
            taps.append(xp[:, i:hi:stride, j:wj:stride, :])
    p = jnp.stack(taps, axis=3)                       # (N, Ho, Wo, kh*kw, C)
    return p.reshape(N * Ho * Wo, kh * kw * C), N, Ho, Wo


def conv_layer(x, w_bf16, scales, *, k, stride, pad, act, bn, upsample, cout):
    """x: NHWC f32. One fused Pallas call; returns NHWC f32."""
    if upsample:
        x = bilinear_upsample_x2_nhwc(x)
    patches, N, Ho, Wo = _im2col_nhwc(x, k, k, stride, pad)
    y = fused_layer(patches, w_bf16, scales, act=act, bn=bn)
    if y.shape[1] != cout:                            # lane-padded final layer
        y = y[:, :cout]
    return y.reshape(N, Ho, Wo, cout)


# ----------------------------------------------------------------------------
# Parameters: PyTorch-style init, then one-time packing into kernel layout
# ----------------------------------------------------------------------------
def init_conv(key, cout, cin, kh, kw):
    kw_, kb_ = jax.random.split(key)
    fan_in = cin * kh * kw
    bound = 1.0 / jnp.sqrt(fan_in)
    w = jax.random.uniform(kw_, (cout, cin, kh, kw), jnp.float32, -bound, bound)
    b = jax.random.uniform(kb_, (cout,), jnp.float32, -bound, bound)
    return w, b


def init_raw_params(key):
    keys = jax.random.split(key, len(LAYERS))
    raw = {}
    for kk, (name, cin, cout, k, *_rest) in zip(keys, LAYERS):
        raw[name] = init_conv(kk, cout, cin, k, k)
    # BatchNorm affine params: gamma=1, beta=0 (PyTorch default init)
    for name, c in [("bn1", 64), ("bn2", 128), ("bn3", 256), ("bn4", 256),
                    ("bn5", 256), ("bn6", 128), ("bn7", 64)]:
        raw[name] = (jnp.ones((c,), jnp.float32), jnp.zeros((c,), jnp.float32))
    return raw


def pack_params(raw):
    """Prepack weights (OIHW -> (K, Cout) bf16) and (bias, gamma, beta) rows."""
    bn_names = [None] * 8
    bn_names[:7] = ["bn1", "bn2", "bn3", "bn4", "bn5", "bn6", "bn7"]
    packed = []
    for (name, cin, cout, k, _s, _p, _act, bn, _up), bn_name in zip(LAYERS,
                                                                    bn_names):
        w, b = raw[name]
        wm = jnp.transpose(w, (2, 3, 1, 0)).reshape(k * k * cin, cout)
        if bn:
            gamma, beta = raw[bn_name]
        else:
            gamma = jnp.ones((cout,), jnp.float32)
            beta = jnp.zeros((cout,), jnp.float32)
        s = jnp.stack([b, gamma, beta], axis=0)               # (3, Cout)
        if cout < LANE:   # lane-dense output block for the 3-channel conv
            wm = jnp.pad(wm, ((0, 0), (0, LANE - cout)))
            s = jnp.pad(s, ((0, 0), (0, LANE - cout)))
        packed.append({"w": wm.astype(jnp.bfloat16),
                       "s": s.astype(jnp.float32)})
    return packed


# ----------------------------------------------------------------------------
# Full forward pass (mirrors Net.forward; NCHW in, NCHW out)
# ----------------------------------------------------------------------------
def net_forward(packed, x_nchw):
    x = jnp.transpose(x_nchw, (0, 2, 3, 1)).astype(jnp.float32)  # NCHW -> NHWC
    for (name, cin, cout, k, stride, pad, act, bn, up), layer in zip(LAYERS,
                                                                     packed):
        x = conv_layer(x, layer["w"], layer["s"], k=k, stride=stride, pad=pad,
                       act=act, bn=bn, upsample=up, cout=cout)
    return jnp.transpose(x, (0, 3, 1, 2))                        # NHWC -> NCHW


if __name__ == "__main__":
    key = jax.random.PRNGKey(0)
    pkey, xkey = jax.random.split(key)
    raw_params = init_raw_params(pkey)
    packed_params = pack_params(raw_params)    # one-time packing, outside jit

    # Input: N=2, C=4, H=W=16 (NCHW, matches nn.Conv2d(4, ...))
    x = jax.random.normal(xkey, (2, 4, 16, 16), jnp.float32)

    fwd = jax.jit(net_forward)
    out = fwd(packed_params, x)
    jax.block_until_ready(out)

    assert out.shape == (2, 3, 16, 16), out.shape
    assert out.dtype == jnp.float32
    assert bool(jnp.all(jnp.isfinite(out)))
    print("KERNEL_OK")
</pallas_src>

<mosaic_0001>
module attributes {stable_mosaic.version = 11 : i64} {
  func.func @_layer_kernel(%arg0: i32, %arg1: memref<128x64xbf16, #tpu.memory_space<vmem>>, %arg2: memref<64x128xbf16, #tpu.memory_space<vmem>>, %arg3: memref<3x128xf32, #tpu.memory_space<vmem>>, %arg4: memref<128x128xf32, #tpu.memory_space<vmem>>) attributes {dimension_semantics = [#tpu.dimension_semantics<arbitrary>], iteration_bounds = array<i64: 1>, scalar_prefetch = 0 : i64, scratch_operands = 0 : i64, tpu.core_type = #tpu.core_type<tc>, window_params = [{pipeline_mode = #tpu.pipeline_mode<synchronous>, transform_indices = @transform_0, window_bounds = array<i64: 128, 64>}, {pipeline_mode = #tpu.pipeline_mode<synchronous>, transform_indices = @transform_1, window_bounds = array<i64: 64, 128>}, {pipeline_mode = #tpu.pipeline_mode<synchronous>, transform_indices = @transform_2, window_bounds = array<i64: 3, 128>}, {pipeline_mode = #tpu.pipeline_mode<synchronous>, transform_indices = @transform_3, window_bounds = array<i64: 128, 128>}]} {
    %c0 = arith.constant 0 : index
    %c0_0 = arith.constant 0 : index
    %0 = vector.load %arg1[%c0, %c0_0] : memref<128x64xbf16, #tpu.memory_space<vmem>>, vector<128x64xbf16>
    %c0_1 = arith.constant 0 : index
    %c0_2 = arith.constant 0 : index
    %1 = vector.load %arg2[%c0_1, %c0_2] : memref<64x128xbf16, #tpu.memory_space<vmem>>, vector<64x128xbf16>
    %cst = arith.constant dense<0.000000e+00> : vector<128x128xf32>
    %2 = tpu.matmul %0, %1, %cst {dimension_numbers = #tpu.dot_dimension_numbers<[1], [0], [0], [1], [0, 0, 1, 1], [], []>} : vector<128x64xbf16>, vector<64x128xbf16>, vector<128x128xf32> -> vector<128x128xf32>
    %c0_3 = arith.constant 0 : index
    %c0_4 = arith.constant 0 : index
    %3 = vector.load %arg3[%c0_3, %c0_4] : memref<3x128xf32, #tpu.memory_space<vmem>>, vector<1x128xf32>
    %4 = vector.broadcast %3 : vector<1x128xf32> to vector<128x128xf32>
    %5 = arith.addf %2, %4 : vector<128x128xf32>
    %cst_5 = arith.constant 0.000000e+00 : f32
    %6 = vector.broadcast %cst_5 : f32 to vector<128x128xf32>
    %7 = arith.cmpf oge, %5, %6 : vector<128x128xf32>
    %cst_6 = arith.constant 2.000000e-01 : f32
    %8 = vector.broadcast %cst_6 : f32 to vector<128x128xf32>
    %9 = arith.mulf %8, %5 : vector<128x128xf32>
    %10 = arith.select %7, %5, %9 : vector<128x128xi1>, vector<128x128xf32>
    %cst_7 = arith.constant dense<0.000000e+00> : vector<128xf32>
    %11 = vector.multi_reduction <add>, %10, %cst_7 [0] : vector<128x128xf32> to vector<128xf32>
    %12 = vector.shape_cast %11 : vector<128xf32> to vector<1x128xf32>
    %cst_8 = arith.constant 1.280000e+02 : f32
    %13 = vector.broadcast %cst_8 : f32 to vector<1x128xf32>
    %14 = arith.divf %12, %13 : vector<1x128xf32>
    %15 = vector.broadcast %14 : vector<1x128xf32> to vector<128x128xf32>
    %16 = arith.subf %10, %15 : vector<128x128xf32>
    %17 = arith.mulf %16, %16 : vector<128x128xf32>
    %cst_9 = arith.constant dense<0.000000e+00> : vector<128xf32>
    %18 = vector.multi_reduction <add>, %17, %cst_9 [0] : vector<128x128xf32> to vector<128xf32>
    %19 = vector.shape_cast %18 : vector<128xf32> to vector<1x128xf32>
    %cst_10 = arith.constant 1.280000e+02 : f32
    %20 = vector.broadcast %cst_10 : f32 to vector<1x128xf32>
    %21 = arith.divf %19, %20 : vector<1x128xf32>
    %22 = vector.broadcast %14 : vector<1x128xf32> to vector<128x128xf32>
    %23 = arith.subf %10, %22 : vector<128x128xf32>
    %cst_11 = arith.constant 9.99999974E-6 : f32
    %24 = vector.broadcast %cst_11 : f32 to vector<1x128xf32>
    %25 = arith.addf %21, %24 : vector<1x128xf32>
    %26 = math.rsqrt %25 : vector<1x128xf32>
    %27 = vector.broadcast %26 : vector<1x128xf32> to vector<128x128xf32>
    %28 = arith.mulf %23, %27 : vector<128x128xf32>
    %c1 = arith.constant 1 : index
    %c0_12 = arith.constant 0 : index
    %29 = vector.load %arg3[%c1, %c0_12] : memref<3x128xf32, #tpu.memory_space<vmem>>, vector<1x128xf32>
    %30 = vector.broadcast %29 : vector<1x128xf32> to vector<128x128xf32>
    %31 = arith.mulf %28, %30 : vector<128x128xf32>
    %c2 = arith.constant 2 : index
    %c0_13 = arith.constant 0 : index
    %32 = vector.load %arg3[%c2, %c0_13] : memref<3x128xf32, #tpu.memory_space<vmem>>, vector<1x128xf32>
    %33 = vector.broadcast %32 : vector<1x128xf32> to vector<128x128xf32>
    %34 = arith.addf %31, %33 : vector<128x128xf32>
    %c0_14 = arith.constant 0 : index
    %c0_15 = arith.constant 0 : index
    %35 = vector.load %arg4[%c0_14, %c0_15] : memref<128x128xf32, #tpu.memory_space<vmem>>, vector<128x128xf32>
    tpu.vector_store %arg4[%c0_14, %c0_15], %34 {strides = array<i32>} : memref<128x128xf32, #tpu.memory_space<vmem>>, vector<128x128xf32>,
    return
  }
  func.func @transform_0(%arg0: i32) -> (i32, i32) {
    %c0_i32 = arith.constant 0 : i32
    %c0_i32_0 = arith.constant 0 : i32
    %c0_i32_1 = arith.constant 0 : i32
    return %c0_i32, %c0_i32_0 : i32, i32
  }
  func.func @transform_1(%arg0: i32) -> (i32, i32) {
    %c0_i32 = arith.constant 0 : i32
    %c0_i32_0 = arith.constant 0 : i32
    %c0_i32_1 = arith.constant 0 : i32
    return %c0_i32, %c0_i32_0 : i32, i32
  }
  func.func @transform_2(%arg0: i32) -> (i32, i32) {
    %c0_i32 = arith.constant 0 : i32
    %c0_i32_0 = arith.constant 0 : i32
    %c0_i32_1 = arith.constant 0 : i32
    return %c0_i32, %c0_i32_0 : i32, i32
  }
  func.func @transform_3(%arg0: i32) -> (i32, i32) {
    %c0_i32 = arith.constant 0 : i32
    %c0_i32_0 = arith.constant 0 : i32
    %c0_i32_1 = arith.constant 0 : i32
    return %c0_i32, %c0_i32_0 : i32, i32
  }
}

module attributes {stable_mosaic.version = 11 : i64} {
  func.func @_layer_kernel(%arg0: i32, %arg1: memref<32x1024xbf16, #tpu.memory_space<vmem>>, %arg2: memref<1024x128xbf16, #tpu.memory_space<vmem>>, %arg3: memref<3x128xf32, #tpu.memory_space<vmem>>, %arg4: memref<32x128xf32, #tpu.memory_space<vmem>>) attributes {dimension_semantics = [#tpu.dimension_semantics<arbitrary>], iteration_bounds = array<i64: 1>, scalar_prefetch = 0 : i64, scratch_operands = 0 : i64, tpu.core_type = #tpu.core_type<tc>, window_params = [{pipeline_mode = #tpu.pipeline_mode<synchronous>, transform_indices = @transform_0, window_bounds = array<i64: 32, 1024>}, {pipeline_mode = #tpu.pipeline_mode<synchronous>, transform_indices = @transform_1, window_bounds = array<i64: 1024, 128>}, {pipeline_mode = #tpu.pipeline_mode<synchronous>, transform_indices = @transform_2, window_bounds = array<i64: 3, 128>}, {pipeline_mode = #tpu.pipeline_mode<synchronous>, transform_indices = @transform_3, window_bounds = array<i64: 32, 128>}]} {
    %c0 = arith.constant 0 : index
    %c0_0 = arith.constant 0 : index
    %0 = vector.load %arg1[%c0, %c0_0] : memref<32x1024xbf16, #tpu.memory_space<vmem>>, vector<32x1024xbf16>
    %c0_1 = arith.constant 0 : index
    %c0_2 = arith.constant 0 : index
    %1 = vector.load %arg2[%c0_1, %c0_2] : memref<1024x128xbf16, #tpu.memory_space<vmem>>, vector<1024x128xbf16>
    %cst = arith.constant dense<0.000000e+00> : vector<32x128xf32>
    %2 = tpu.matmul %0, %1, %cst {dimension_numbers = #tpu.dot_dimension_numbers<[1], [0], [0], [1], [0, 0, 1, 1], [], []>} : vector<32x1024xbf16>, vector<1024x128xbf16>, vector<32x128xf32> -> vector<32x128xf32>
    %c0_3 = arith.constant 0 : index
    %c0_4 = arith.constant 0 : index
    %3 = vector.load %arg3[%c0_3, %c0_4] : memref<3x128xf32, #tpu.memory_space<vmem>>, vector<1x128xf32>
    %4 = vector.broadcast %3 : vector<1x128xf32> to vector<32x128xf32>
    %5 = arith.addf %2, %4 : vector<32x128xf32>
    %cst_5 = arith.constant 0.000000e+00 : f32
    %6 = vector.broadcast %cst_5 : f32 to vector<32x128xf32>
    %7 = arith.cmpf oge, %5, %6 : vector<32x128xf32>
    %cst_6 = arith.constant 2.000000e-01 : f32
    %8 = vector.broadcast %cst_6 : f32 to vector<32x128xf32>
    %9 = arith.mulf %8, %5 : vector<32x128xf32>
    %10 = arith.select %7, %5, %9 : vector<32x128xi1>, vector<32x128xf32>
    %cst_7 = arith.constant dense<0.000000e+00> : vector<128xf32>
    %11 = vector.multi_reduction <add>, %10, %cst_7 [0] : vector<32x128xf32> to vector<128xf32>
    %12 = vector.shape_cast %11 : vector<128xf32> to vector<1x128xf32>
    %cst_8 = arith.constant 3.200000e+01 : f32
    %13 = vector.broadcast %cst_8 : f32 to vector<1x128xf32>
    %14 = arith.divf %12, %13 : vector<1x128xf32>
    %15 = vector.broadcast %14 : vector<1x128xf32> to vector<32x128xf32>
    %16 = arith.subf %10, %15 : vector<32x128xf32>
    %17 = arith.mulf %16, %16 : vector<32x128xf32>
    %cst_9 = arith.constant dense<0.000000e+00> : vector<128xf32>
    %18 = vector.multi_reduction <add>, %17, %cst_9 [0] : vector<32x128xf32> to vector<128xf32>
    %19 = vector.shape_cast %18 : vector<128xf32> to vector<1x128xf32>
    %cst_10 = arith.constant 3.200000e+01 : f32
    %20 = vector.broadcast %cst_10 : f32 to vector<1x128xf32>
    %21 = arith.divf %19, %20 : vector<1x128xf32>
    %22 = vector.broadcast %14 : vector<1x128xf32> to vector<32x128xf32>
    %23 = arith.subf %10, %22 : vector<32x128xf32>
    %cst_11 = arith.constant 9.99999974E-6 : f32
    %24 = vector.broadcast %cst_11 : f32 to vector<1x128xf32>
    %25 = arith.addf %21, %24 : vector<1x128xf32>
    %26 = math.rsqrt %25 : vector<1x128xf32>
    %27 = vector.broadcast %26 : vector<1x128xf32> to vector<32x128xf32>
    %28 = arith.mulf %23, %27 : vector<32x128xf32>
    %c1 = arith.constant 1 : index
    %c0_12 = arith.constant 0 : index
    %29 = vector.load %arg3[%c1, %c0_12] : memref<3x128xf32, #tpu.memory_space<vmem>>, vector<1x128xf32>
    %30 = vector.broadcast %29 : vector<1x128xf32> to vector<32x128xf32>
    %31 = arith.mulf %28, %30 : vector<32x128xf32>
    %c2 = arith.constant 2 : index
    %c0_13 = arith.constant 0 : index
    %32 = vector.load %arg3[%c2, %c0_13] : memref<3x128xf32, #tpu.memory_space<vmem>>, vector<1x128xf32>
    %33 = vector.broadcast %32 : vector<1x128xf32> to vector<32x128xf32>
    %34 = arith.addf %31, %33 : vector<32x128xf32>
    %c0_14 = arith.constant 0 : index
    %c0_15 = arith.constant 0 : index
    %35 = vector.load %arg4[%c0_14, %c0_15] : memref<32x128xf32, #tpu.memory_space<vmem>>, vector<32x128xf32>
    tpu.vector_store %arg4[%c0_14, %c0_15], %34 {strides = array<i32>} : memref<32x128xf32, #tpu.memory_space<vmem>>, vector<32x128xf32>,
    return
  }
  func.func @transform_0(%arg0: i32) -> (i32, i32) {
    %c0_i32 = arith.constant 0 : i32
    %c0_i32_0 = arith.constant 0 : i32
    %c0_i32_1 = arith.constant 0 : i32
    return %c0_i32, %c0_i32_0 : i32, i32
  }
  func.func @transform_1(%arg0: i32) -> (i32, i32) {
    %c0_i32 = arith.constant 0 : i32
    %c0_i32_0 = arith.constant 0 : i32
    %c0_i32_1 = arith.constant 0 : i32
    return %c0_i32, %c0_i32_0 : i32, i32
  }
  func.func @transform_2(%arg0: i32) -> (i32, i32) {
    %c0_i32 = arith.constant 0 : i32
    %c0_i32_0 = arith.constant 0 : i32
    %c0_i32_1 = arith.constant 0 : i32
    return %c0_i32, %c0_i32_0 : i32, i32
  }
  func.func @transform_3(%arg0: i32) -> (i32, i32) {
    %c0_i32 = arith.constant 0 : i32
    %c0_i32_0 = arith.constant 0 : i32
    %c0_i32_1 = arith.constant 0 : i32
    return %c0_i32, %c0_i32_0 : i32, i32
  }
}

module attributes {stable_mosaic.version = 11 : i64} {
  func.func @_layer_kernel(%arg0: i32, %arg1: memref<8x1152xbf16, #tpu.memory_space<vmem>>, %arg2: memref<1152x256xbf16, #tpu.memory_space<vmem>>, %arg3: memref<3x256xf32, #tpu.memory_space<vmem>>, %arg4: memref<8x256xf32, #tpu.memory_space<vmem>>) attributes {dimension_semantics = [#tpu.dimension_semantics<arbitrary>], iteration_bounds = array<i64: 1>, scalar_prefetch = 0 : i64, scratch_operands = 0 : i64, tpu.core_type = #tpu.core_type<tc>, window_params = [{pipeline_mode = #tpu.pipeline_mode<synchronous>, transform_indices = @transform_0, window_bounds = array<i64: 8, 1152>}, {pipeline_mode = #tpu.pipeline_mode<synchronous>, transform_indices = @transform_1, window_bounds = array<i64: 1152, 256>}, {pipeline_mode = #tpu.pipeline_mode<synchronous>, transform_indices = @transform_2, window_bounds = array<i64: 3, 256>}, {pipeline_mode = #tpu.pipeline_mode<synchronous>, transform_indices = @transform_3, window_bounds = array<i64: 8, 256>}]} {
    %c0 = arith.constant 0 : index
    %c0_0 = arith.constant 0 : index
    %0 = vector.load %arg1[%c0, %c0_0] : memref<8x1152xbf16, #tpu.memory_space<vmem>>, vector<8x1152xbf16>
    %c0_1 = arith.constant 0 : index
    %c0_2 = arith.constant 0 : index
    %1 = vector.load %arg2[%c0_1, %c0_2] : memref<1152x256xbf16, #tpu.memory_space<vmem>>, vector<1152x256xbf16>
    %cst = arith.constant dense<0.000000e+00> : vector<8x256xf32>
    %2 = tpu.matmul %0, %1, %cst {dimension_numbers = #tpu.dot_dimension_numbers<[1], [0], [0], [1], [0, 0, 1, 1], [], []>} : vector<8x1152xbf16>, vector<1152x256xbf16>, vector<8x256xf32> -> vector<8x256xf32>
    %c0_3 = arith.constant 0 : index
    %c0_4 = arith.constant 0 : index
    %3 = vector.load %arg3[%c0_3, %c0_4] : memref<3x256xf32, #tpu.memory_space<vmem>>, vector<1x256xf32>
    %4 = vector.broadcast %3 : vector<1x256xf32> to vector<8x256xf32>
    %5 = arith.addf %2, %4 : vector<8x256xf32>
    %cst_5 = arith.constant 0.000000e+00 : f32
    %6 = vector.broadcast %cst_5 : f32 to vector<8x256xf32>
    %7 = arith.cmpf oge, %5, %6 : vector<8x256xf32>
    %cst_6 = arith.constant 2.000000e-01 : f32
    %8 = vector.broadcast %cst_6 : f32 to vector<8x256xf32>
    %9 = arith.mulf %8, %5 : vector<8x256xf32>
    %10 = arith.select %7, %5, %9 : vector<8x256xi1>, vector<8x256xf32>
    %cst_7 = arith.constant dense<0.000000e+00> : vector<256xf32>
    %11 = vector.multi_reduction <add>, %10, %cst_7 [0] : vector<8x256xf32> to vector<256xf32>
    %12 = vector.shape_cast %11 : vector<256xf32> to vector<1x256xf32>
    %cst_8 = arith.constant 8.000000e+00 : f32
    %13 = vector.broadcast %cst_8 : f32 to vector<1x256xf32>
    %14 = arith.divf %12, %13 : vector<1x256xf32>
    %15 = vector.broadcast %14 : vector<1x256xf32> to vector<8x256xf32>
    %16 = arith.subf %10, %15 : vector<8x256xf32>
    %17 = arith.mulf %16, %16 : vector<8x256xf32>
    %cst_9 = arith.constant dense<0.000000e+00> : vector<256xf32>
    %18 = vector.multi_reduction <add>, %17, %cst_9 [0] : vector<8x256xf32> to vector<256xf32>
    %19 = vector.shape_cast %18 : vector<256xf32> to vector<1x256xf32>
    %cst_10 = arith.constant 8.000000e+00 : f32
    %20 = vector.broadcast %cst_10 : f32 to vector<1x256xf32>
    %21 = arith.divf %19, %20 : vector<1x256xf32>
    %22 = vector.broadcast %14 : vector<1x256xf32> to vector<8x256xf32>
    %23 = arith.subf %10, %22 : vector<8x256xf32>
    %cst_11 = arith.constant 9.99999974E-6 : f32
    %24 = vector.broadcast %cst_11 : f32 to vector<1x256xf32>
    %25 = arith.addf %21, %24 : vector<1x256xf32>
    %26 = math.rsqrt %25 : vector<1x256xf32>
    %27 = vector.broadcast %26 : vector<1x256xf32> to vector<8x256xf32>
    %28 = arith.mulf %23, %27 : vector<8x256xf32>
    %c1 = arith.constant 1 : index
    %c0_12 = arith.constant 0 : index
    %29 = vector.load %arg3[%c1, %c0_12] : memref<3x256xf32, #tpu.memory_space<vmem>>, vector<1x256xf32>
    %30 = vector.broadcast %29 : vector<1x256xf32> to vector<8x256xf32>
    %31 = arith.mulf %28, %30 : vector<8x256xf32>
    %c2 = arith.constant 2 : index
    %c0_13 = arith.constant 0 : index
    %32 = vector.load %arg3[%c2, %c0_13] : memref<3x256xf32, #tpu.memory_space<vmem>>, vector<1x256xf32>
    %33 = vector.broadcast %32 : vector<1x256xf32> to vector<8x256xf32>
    %34 = arith.addf %31, %33 : vector<8x256xf32>
    %c0_14 = arith.constant 0 : index
    %c0_15 = arith.constant 0 : index
    %35 = vector.load %arg4[%c0_14, %c0_15] : memref<8x256xf32, #tpu.memory_space<vmem>>, vector<8x256xf32>
    tpu.vector_store %arg4[%c0_14, %c0_15], %34 {strides = array<i32>} : memref<8x256xf32, #tpu.memory_space<vmem>>, vector<8x256xf32>,
    return
  }
  func.func @transform_0(%arg0: i32) -> (i32, i32) {
    %c0_i32 = arith.constant 0 : i32
    %c0_i32_0 = arith.constant 0 : i32
    %c0_i32_1 = arith.constant 0 : i32
    return %c0_i32, %c0_i32_0 : i32, i32
  }
  func.func @transform_1(%arg0: i32) -> (i32, i32) {
    %c0_i32 = arith.constant 0 : i32
    %c0_i32_0 = arith.constant 0 : i32
    %c0_i32_1 = arith.constant 0 : i32
    return %c0_i32, %c0_i32_0 : i32, i32
  }
  func.func @transform_2(%arg0: i32) -> (i32, i32) {
    %c0_i32 = arith.constant 0 : i32
    %c0_i32_0 = arith.constant 0 : i32
    %c0_i32_1 = arith.constant 0 : i32
    return %c0_i32, %c0_i32_0 : i32, i32
  }
  func.func @transform_3(%arg0: i32) -> (i32, i32) {
    %c0_i32 = arith.constant 0 : i32
    %c0_i32_0 = arith.constant 0 : i32
    %c0_i32_1 = arith.constant 0 : i32
    return %c0_i32, %c0_i32_0 : i32, i32
  }
}

module attributes {stable_mosaic.version = 11 : i64} {
  func.func @_layer_kernel(%arg0: i32, %arg1: memref<2x2304xbf16, #tpu.memory_space<vmem>>, %arg2: memref<2304x256xbf16, #tpu.memory_space<vmem>>, %arg3: memref<3x256xf32, #tpu.memory_space<vmem>>, %arg4: memref<2x256xf32, #tpu.memory_space<vmem>>) attributes {dimension_semantics = [#tpu.dimension_semantics<arbitrary>], iteration_bounds = array<i64: 1>, scalar_prefetch = 0 : i64, scratch_operands = 0 : i64, tpu.core_type = #tpu.core_type<tc>, window_params = [{pipeline_mode = #tpu.pipeline_mode<synchronous>, transform_indices = @transform_0, window_bounds = array<i64: 2, 2304>}, {pipeline_mode = #tpu.pipeline_mode<synchronous>, transform_indices = @transform_1, window_bounds = array<i64: 2304, 256>}, {pipeline_mode = #tpu.pipeline_mode<synchronous>, transform_indices = @transform_2, window_bounds = array<i64: 3, 256>}, {pipeline_mode = #tpu.pipeline_mode<synchronous>, transform_indices = @transform_3, window_bounds = array<i64: 2, 256>}]} {
    %c0 = arith.constant 0 : index
    %c0_0 = arith.constant 0 : index
    %0 = vector.load %arg1[%c0, %c0_0] : memref<2x2304xbf16, #tpu.memory_space<vmem>>, vector<2x2304xbf16>
    %c0_1 = arith.constant 0 : index
    %c0_2 = arith.constant 0 : index
    %1 = vector.load %arg2[%c0_1, %c0_2] : memref<2304x256xbf16, #tpu.memory_space<vmem>>, vector<2304x256xbf16>
    %cst = arith.constant dense<0.000000e+00> : vector<2x256xf32>
    %2 = tpu.matmul %0, %1, %cst {dimension_numbers = #tpu.dot_dimension_numbers<[1], [0], [0], [1], [0, 0, 1, 1], [], []>} : vector<2x2304xbf16>, vector<2304x256xbf16>, vector<2x256xf32> -> vector<2x256xf32>
    %c0_3 = arith.constant 0 : index
    %c0_4 = arith.constant 0 : index
    %3 = vector.load %arg3[%c0_3, %c0_4] : memref<3x256xf32, #tpu.memory_space<vmem>>, vector<1x256xf32>
    %4 = vector.broadcast %3 : vector<1x256xf32> to vector<2x256xf32>
    %5 = arith.addf %2, %4 : vector<2x256xf32>
    %cst_5 = arith.constant 0.000000e+00 : f32
    %6 = vector.broadcast %cst_5 : f32 to vector<2x256xf32>
    %7 = arith.cmpf oge, %5, %6 : vector<2x256xf32>
    %cst_6 = arith.constant 2.000000e-01 : f32
    %8 = vector.broadcast %cst_6 : f32 to vector<2x256xf32>
    %9 = arith.mulf %8, %5 : vector<2x256xf32>
    %10 = arith.select %7, %5, %9 : vector<2x256xi1>, vector<2x256xf32>
    %cst_7 = arith.constant dense<0.000000e+00> : vector<256xf32>
    %11 = vector.multi_reduction <add>, %10, %cst_7 [0] : vector<2x256xf32> to vector<256xf32>
    %12 = vector.shape_cast %11 : vector<256xf32> to vector<1x256xf32>
    %cst_8 = arith.constant 2.000000e+00 : f32
    %13 = vector.broadcast %cst_8 : f32 to vector<1x256xf32>
    %14 = arith.divf %12, %13 : vector<1x256xf32>
    %15 = vector.broadcast %14 : vector<1x256xf32> to vector<2x256xf32>
    %16 = arith.subf %10, %15 : vector<2x256xf32>
    %17 = arith.mulf %16, %16 : vector<2x256xf32>
    %cst_9 = arith.constant dense<0.000000e+00> : vector<256xf32>
    %18 = vector.multi_reduction <add>, %17, %cst_9 [0] : vector<2x256xf32> to vector<256xf32>
    %19 = vector.shape_cast %18 : vector<256xf32> to vector<1x256xf32>
    %cst_10 = arith.constant 2.000000e+00 : f32
    %20 = vector.broadcast %cst_10 : f32 to vector<1x256xf32>
    %21 = arith.divf %19, %20 : vector<1x256xf32>
    %22 = vector.broadcast %14 : vector<1x256xf32> to vector<2x256xf32>
    %23 = arith.subf %10, %22 : vector<2x256xf32>
    %cst_11 = arith.constant 9.99999974E-6 : f32
    %24 = vector.broadcast %cst_11 : f32 to vector<1x256xf32>
    %25 = arith.addf %21, %24 : vector<1x256xf32>
    %26 = math.rsqrt %25 : vector<1x256xf32>
    %27 = vector.broadcast %26 : vector<1x256xf32> to vector<2x256xf32>
    %28 = arith.mulf %23, %27 : vector<2x256xf32>
    %c1 = arith.constant 1 : index
    %c0_12 = arith.constant 0 : index
    %29 = vector.load %arg3[%c1, %c0_12] : memref<3x256xf32, #tpu.memory_space<vmem>>, vector<1x256xf32>
    %30 = vector.broadcast %29 : vector<1x256xf32> to vector<2x256xf32>
    %31 = arith.mulf %28, %30 : vector<2x256xf32>
    %c2 = arith.constant 2 : index
    %c0_13 = arith.constant 0 : index
    %32 = vector.load %arg3[%c2, %c0_13] : memref<3x256xf32, #tpu.memory_space<vmem>>, vector<1x256xf32>
    %33 = vector.broadcast %32 : vector<1x256xf32> to vector<2x256xf32>
    %34 = arith.addf %31, %33 : vector<2x256xf32>
    %c0_14 = arith.constant 0 : index
    %c0_15 = arith.constant 0 : index
    %35 = vector.load %arg4[%c0_14, %c0_15] : memref<2x256xf32, #tpu.memory_space<vmem>>, vector<2x256xf32>
    tpu.vector_store %arg4[%c0_14, %c0_15], %34 {strides = array<i32>} : memref<2x256xf32, #tpu.memory_space<vmem>>, vector<2x256xf32>,
    return
  }
  func.func @transform_0(%arg0: i32) -> (i32, i32) {
    %c0_i32 = arith.constant 0 : i32
    %c0_i32_0 = arith.constant 0 : i32
    %c0_i32_1 = arith.constant 0 : i32
    return %c0_i32, %c0_i32_0 : i32, i32
  }
  func.func @transform_1(%arg0: i32) -> (i32, i32) {
    %c0_i32 = arith.constant 0 : i32
    %c0_i32_0 = arith.constant 0 : i32
    %c0_i32_1 = arith.constant 0 : i32
    return %c0_i32, %c0_i32_0 : i32, i32
  }
  func.func @transform_2(%arg0: i32) -> (i32, i32) {
    %c0_i32 = arith.constant 0 : i32
    %c0_i32_0 = arith.constant 0 : i32
    %c0_i32_1 = arith.constant 0 : i32
    return %c0_i32, %c0_i32_0 : i32, i32
  }
  func.func @transform_3(%arg0: i32) -> (i32, i32) {
    %c0_i32 = arith.constant 0 : i32
    %c0_i32_0 = arith.constant 0 : i32
    %c0_i32_1 = arith.constant 0 : i32
    return %c0_i32, %c0_i32_0 : i32, i32
  }
}

module attributes {stable_mosaic.version = 11 : i64} {
  func.func @_layer_kernel(%arg0: i32, %arg1: memref<8x2304xbf16, #tpu.memory_space<vmem>>, %arg2: memref<2304x256xbf16, #tpu.memory_space<vmem>>, %arg3: memref<3x256xf32, #tpu.memory_space<vmem>>, %arg4: memref<8x256xf32, #tpu.memory_space<vmem>>) attributes {dimension_semantics = [#tpu.dimension_semantics<arbitrary>], iteration_bounds = array<i64: 1>, scalar_prefetch = 0 : i64, scratch_operands = 0 : i64, tpu.core_type = #tpu.core_type<tc>, window_params = [{pipeline_mode = #tpu.pipeline_mode<synchronous>, transform_indices = @transform_0, window_bounds = array<i64: 8, 2304>}, {pipeline_mode = #tpu.pipeline_mode<synchronous>, transform_indices = @transform_1, window_bounds = array<i64: 2304, 256>}, {pipeline_mode = #tpu.pipeline_mode<synchronous>, transform_indices = @transform_2, window_bounds = array<i64: 3, 256>}, {pipeline_mode = #tpu.pipeline_mode<synchronous>, transform_indices = @transform_3, window_bounds = array<i64: 8, 256>}]} {
    %c0 = arith.constant 0 : index
    %c0_0 = arith.constant 0 : index
    %0 = vector.load %arg1[%c0, %c0_0] : memref<8x2304xbf16, #tpu.memory_space<vmem>>, vector<8x2304xbf16>
    %c0_1 = arith.constant 0 : index
    %c0_2 = arith.constant 0 : index
    %1 = vector.load %arg2[%c0_1, %c0_2] : memref<2304x256xbf16, #tpu.memory_space<vmem>>, vector<2304x256xbf16>
    %cst = arith.constant dense<0.000000e+00> : vector<8x256xf32>
    %2 = tpu.matmul %0, %1, %cst {dimension_numbers = #tpu.dot_dimension_numbers<[1], [0], [0], [1], [0, 0, 1, 1], [], []>} : vector<8x2304xbf16>, vector<2304x256xbf16>, vector<8x256xf32> -> vector<8x256xf32>
    %c0_3 = arith.constant 0 : index
    %c0_4 = arith.constant 0 : index
    %3 = vector.load %arg3[%c0_3, %c0_4] : memref<3x256xf32, #tpu.memory_space<vmem>>, vector<1x256xf32>
    %4 = vector.broadcast %3 : vector<1x256xf32> to vector<8x256xf32>
    %5 = arith.addf %2, %4 : vector<8x256xf32>
    %cst_5 = arith.constant 0.000000e+00 : f32
    %6 = vector.broadcast %cst_5 : f32 to vector<8x256xf32>
    %7 = arith.cmpf oge, %5, %6 : vector<8x256xf32>
    %cst_6 = arith.constant 2.000000e-01 : f32
    %8 = vector.broadcast %cst_6 : f32 to vector<8x256xf32>
    %9 = arith.mulf %8, %5 : vector<8x256xf32>
    %10 = arith.select %7, %5, %9 : vector<8x256xi1>, vector<8x256xf32>
    %cst_7 = arith.constant dense<0.000000e+00> : vector<256xf32>
    %11 = vector.multi_reduction <add>, %10, %cst_7 [0] : vector<8x256xf32> to vector<256xf32>
    %12 = vector.shape_cast %11 : vector<256xf32> to vector<1x256xf32>
    %cst_8 = arith.constant 8.000000e+00 : f32
    %13 = vector.broadcast %cst_8 : f32 to vector<1x256xf32>
    %14 = arith.divf %12, %13 : vector<1x256xf32>
    %15 = vector.broadcast %14 : vector<1x256xf32> to vector<8x256xf32>
    %16 = arith.subf %10, %15 : vector<8x256xf32>
    %17 = arith.mulf %16, %16 : vector<8x256xf32>
    %cst_9 = arith.constant dense<0.000000e+00> : vector<256xf32>
    %18 = vector.multi_reduction <add>, %17, %cst_9 [0] : vector<8x256xf32> to vector<256xf32>
    %19 = vector.shape_cast %18 : vector<256xf32> to vector<1x256xf32>
    %cst_10 = arith.constant 8.000000e+00 : f32
    %20 = vector.broadcast %cst_10 : f32 to vector<1x256xf32>
    %21 = arith.divf %19, %20 : vector<1x256xf32>
    %22 = vector.broadcast %14 : vector<1x256xf32> to vector<8x256xf32>
    %23 = arith.subf %10, %22 : vector<8x256xf32>
    %cst_11 = arith.constant 9.99999974E-6 : f32
    %24 = vector.broadcast %cst_11 : f32 to vector<1x256xf32>
    %25 = arith.addf %21, %24 : vector<1x256xf32>
    %26 = math.rsqrt %25 : vector<1x256xf32>
    %27 = vector.broadcast %26 : vector<1x256xf32> to vector<8x256xf32>
    %28 = arith.mulf %23, %27 : vector<8x256xf32>
    %c1 = arith.constant 1 : index
    %c0_12 = arith.constant 0 : index
    %29 = vector.load %arg3[%c1, %c0_12] : memref<3x256xf32, #tpu.memory_space<vmem>>, vector<1x256xf32>
    %30 = vector.broadcast %29 : vector<1x256xf32> to vector<8x256xf32>
    %31 = arith.mulf %28, %30 : vector<8x256xf32>
    %c2 = arith.constant 2 : index
    %c0_13 = arith.constant 0 : index
    %32 = vector.load %arg3[%c2, %c0_13] : memref<3x256xf32, #tpu.memory_space<vmem>>, vector<1x256xf32>
    %33 = vector.broadcast %32 : vector<1x256xf32> to vector<8x256xf32>
    %34 = arith.addf %31, %33 : vector<8x256xf32>
    %c0_14 = arith.constant 0 : index
    %c0_15 = arith.constant 0 : index
    %35 = vector.load %arg4[%c0_14, %c0_15] : memref<8x256xf32, #tpu.memory_space<vmem>>, vector<8x256xf32>
    tpu.vector_store %arg4[%c0_14, %c0_15], %34 {strides = array<i32>} : memref<8x256xf32, #tpu.memory_space<vmem>>, vector<8x256xf32>,
    return
  }
  func.func @transform_0(%arg0: i32) -> (i32, i32) {
    %c0_i32 = arith.constant 0 : i32
    %c0_i32_0 = arith.constant 0 : i32
    %c0_i32_1 = arith.constant 0 : i32
    return %c0_i32, %c0_i32_0 : i32, i32
  }
  func.func @transform_1(%arg0: i32) -> (i32, i32) {
    %c0_i32 = arith.constant 0 : i32
    %c0_i32_0 = arith.constant 0 : i32
    %c0_i32_1 = arith.constant 0 : i32
    return %c0_i32, %c0_i32_0 : i32, i32
  }
  func.func @transform_2(%arg0: i32) -> (i32, i32) {
    %c0_i32 = arith.constant 0 : i32
    %c0_i32_0 = arith.constant 0 : i32
    %c0_i32_1 = arith.constant 0 : i32
    return %c0_i32, %c0_i32_0 : i32, i32
  }
  func.func @transform_3(%arg0: i32) -> (i32, i32) {
    %c0_i32 = arith.constant 0 : i32
    %c0_i32_0 = arith.constant 0 : i32
    %c0_i32_1 = arith.constant 0 : i32
    return %c0_i32, %c0_i32_0 : i32, i32
  }
}

module attributes {stable_mosaic.version = 11 : i64} {
  func.func @_layer_kernel(%arg0: i32, %arg1: memref<32x2304xbf16, #tpu.memory_space<vmem>>, %arg2: memref<2304x128xbf16, #tpu.memory_space<vmem>>, %arg3: memref<3x128xf32, #tpu.memory_space<vmem>>, %arg4: memref<32x128xf32, #tpu.memory_space<vmem>>) attributes {dimension_semantics = [#tpu.dimension_semantics<arbitrary>], iteration_bounds = array<i64: 1>, scalar_prefetch = 0 : i64, scratch_operands = 0 : i64, tpu.core_type = #tpu.core_type<tc>, window_params = [{pipeline_mode = #tpu.pipeline_mode<synchronous>, transform_indices = @transform_0, window_bounds = array<i64: 32, 2304>}, {pipeline_mode = #tpu.pipeline_mode<synchronous>, transform_indices = @transform_1, window_bounds = array<i64: 2304, 128>}, {pipeline_mode = #tpu.pipeline_mode<synchronous>, transform_indices = @transform_2, window_bounds = array<i64: 3, 128>}, {pipeline_mode = #tpu.pipeline_mode<synchronous>, transform_indices = @transform_3, window_bounds = array<i64: 32, 128>}]} {
    %c0 = arith.constant 0 : index
    %c0_0 = arith.constant 0 : index
    %0 = vector.load %arg1[%c0, %c0_0] : memref<32x2304xbf16, #tpu.memory_space<vmem>>, vector<32x2304xbf16>
    %c0_1 = arith.constant 0 : index
    %c0_2 = arith.constant 0 : index
    %1 = vector.load %arg2[%c0_1, %c0_2] : memref<2304x128xbf16, #tpu.memory_space<vmem>>, vector<2304x128xbf16>
    %cst = arith.constant dense<0.000000e+00> : vector<32x128xf32>
    %2 = tpu.matmul %0, %1, %cst {dimension_numbers = #tpu.dot_dimension_numbers<[1], [0], [0], [1], [0, 0, 1, 1], [], []>} : vector<32x2304xbf16>, vector<2304x128xbf16>, vector<32x128xf32> -> vector<32x128xf32>
    %c0_3 = arith.constant 0 : index
    %c0_4 = arith.constant 0 : index
    %3 = vector.load %arg3[%c0_3, %c0_4] : memref<3x128xf32, #tpu.memory_space<vmem>>, vector<1x128xf32>
    %4 = vector.broadcast %3 : vector<1x128xf32> to vector<32x128xf32>
    %5 = arith.addf %2, %4 : vector<32x128xf32>
    %cst_5 = arith.constant 0.000000e+00 : f32
    %6 = vector.broadcast %cst_5 : f32 to vector<32x128xf32>
    %7 = arith.cmpf oge, %5, %6 : vector<32x128xf32>
    %cst_6 = arith.constant 2.000000e-01 : f32
    %8 = vector.broadcast %cst_6 : f32 to vector<32x128xf32>
    %9 = arith.mulf %8, %5 : vector<32x128xf32>
    %10 = arith.select %7, %5, %9 : vector<32x128xi1>, vector<32x128xf32>
    %cst_7 = arith.constant dense<0.000000e+00> : vector<128xf32>
    %11 = vector.multi_reduction <add>, %10, %cst_7 [0] : vector<32x128xf32> to vector<128xf32>
    %12 = vector.shape_cast %11 : vector<128xf32> to vector<1x128xf32>
    %cst_8 = arith.constant 3.200000e+01 : f32
    %13 = vector.broadcast %cst_8 : f32 to vector<1x128xf32>
    %14 = arith.divf %12, %13 : vector<1x128xf32>
    %15 = vector.broadcast %14 : vector<1x128xf32> to vector<32x128xf32>
    %16 = arith.subf %10, %15 : vector<32x128xf32>
    %17 = arith.mulf %16, %16 : vector<32x128xf32>
    %cst_9 = arith.constant dense<0.000000e+00> : vector<128xf32>
    %18 = vector.multi_reduction <add>, %17, %cst_9 [0] : vector<32x128xf32> to vector<128xf32>
    %19 = vector.shape_cast %18 : vector<128xf32> to vector<1x128xf32>
    %cst_10 = arith.constant 3.200000e+01 : f32
    %20 = vector.broadcast %cst_10 : f32 to vector<1x128xf32>
    %21 = arith.divf %19, %20 : vector<1x128xf32>
    %22 = vector.broadcast %14 : vector<1x128xf32> to vector<32x128xf32>
    %23 = arith.subf %10, %22 : vector<32x128xf32>
    %cst_11 = arith.constant 9.99999974E-6 : f32
    %24 = vector.broadcast %cst_11 : f32 to vector<1x128xf32>
    %25 = arith.addf %21, %24 : vector<1x128xf32>
    %26 = math.rsqrt %25 : vector<1x128xf32>
    %27 = vector.broadcast %26 : vector<1x128xf32> to vector<32x128xf32>
    %28 = arith.mulf %23, %27 : vector<32x128xf32>
    %c1 = arith.constant 1 : index
    %c0_12 = arith.constant 0 : index
    %29 = vector.load %arg3[%c1, %c0_12] : memref<3x128xf32, #tpu.memory_space<vmem>>, vector<1x128xf32>
    %30 = vector.broadcast %29 : vector<1x128xf32> to vector<32x128xf32>
    %31 = arith.mulf %28, %30 : vector<32x128xf32>
    %c2 = arith.constant 2 : index
    %c0_13 = arith.constant 0 : index
    %32 = vector.load %arg3[%c2, %c0_13] : memref<3x128xf32, #tpu.memory_space<vmem>>, vector<1x128xf32>
    %33 = vector.broadcast %32 : vector<1x128xf32> to vector<32x128xf32>
    %34 = arith.addf %31, %33 : vector<32x128xf32>
    %c0_14 = arith.constant 0 : index
    %c0_15 = arith.constant 0 : index
    %35 = vector.load %arg4[%c0_14, %c0_15] : memref<32x128xf32, #tpu.memory_space<vmem>>, vector<32x128xf32>
    tpu.vector_store %arg4[%c0_14, %c0_15], %34 {strides = array<i32>} : memref<32x128xf32, #tpu.memory_space<vmem>>, vector<32x128xf32>,
    return
  }
  func.func @transform_0(%arg0: i32) -> (i32, i32) {
    %c0_i32 = arith.constant 0 : i32
    %c0_i32_0 = arith.constant 0 : i32
    %c0_i32_1 = arith.constant 0 : i32
    return %c0_i32, %c0_i32_0 : i32, i32
  }
  func.func @transform_1(%arg0: i32) -> (i32, i32) {
    %c0_i32 = arith.constant 0 : i32
    %c0_i32_0 = arith.constant 0 : i32
    %c0_i32_1 = arith.constant 0 : i32
    return %c0_i32, %c0_i32_0 : i32, i32
  }
  func.func @transform_2(%arg0: i32) -> (i32, i32) {
    %c0_i32 = arith.constant 0 : i32
    %c0_i32_0 = arith.constant 0 : i32
    %c0_i32_1 = arith.constant 0 : i32
    return %c0_i32, %c0_i32_0 : i32, i32
  }
  func.func @transform_3(%arg0: i32) -> (i32, i32) {
    %c0_i32 = arith.constant 0 : i32
    %c0_i32_0 = arith.constant 0 : i32
    %c0_i32_1 = arith.constant 0 : i32
    return %c0_i32, %c0_i32_0 : i32, i32
  }
}

module attributes {stable_mosaic.version = 11 : i64} {
  func.func @_layer_kernel(%arg0: i32, %arg1: memref<128x1152xbf16, #tpu.memory_space<vmem>>, %arg2: memref<1152x128xbf16, #tpu.memory_space<vmem>>, %arg3: memref<3x128xf32, #tpu.memory_space<vmem>>, %arg4: memref<128x128xf32, #tpu.memory_space<vmem>>) attributes {dimension_semantics = [#tpu.dimension_semantics<arbitrary>], iteration_bounds = array<i64: 1>, scalar_prefetch = 0 : i64, scratch_operands = 0 : i64, tpu.core_type = #tpu.core_type<tc>, window_params = [{pipeline_mode = #tpu.pipeline_mode<synchronous>, transform_indices = @transform_0, window_bounds = array<i64: 128, 1152>}, {pipeline_mode = #tpu.pipeline_mode<synchronous>, transform_indices = @transform_1, window_bounds = array<i64: 1152, 128>}, {pipeline_mode = #tpu.pipeline_mode<synchronous>, transform_indices = @transform_2, window_bounds = array<i64: 3, 128>}, {pipeline_mode = #tpu.pipeline_mode<synchronous>, transform_indices = @transform_3, window_bounds = array<i64: 128, 128>}]} {
    %c0 = arith.constant 0 : index
    %c0_0 = arith.constant 0 : index
    %0 = vector.load %arg1[%c0, %c0_0] : memref<128x1152xbf16, #tpu.memory_space<vmem>>, vector<128x1152xbf16>
    %c0_1 = arith.constant 0 : index
    %c0_2 = arith.constant 0 : index
    %1 = vector.load %arg2[%c0_1, %c0_2] : memref<1152x128xbf16, #tpu.memory_space<vmem>>, vector<1152x128xbf16>
    %cst = arith.constant dense<0.000000e+00> : vector<128x128xf32>
    %2 = tpu.matmul %0, %1, %cst {dimension_numbers = #tpu.dot_dimension_numbers<[1], [0], [0], [1], [0, 0, 1, 1], [], []>} : vector<128x1152xbf16>, vector<1152x128xbf16>, vector<128x128xf32> -> vector<128x128xf32>
    %c0_3 = arith.constant 0 : index
    %c0_4 = arith.constant 0 : index
    %3 = vector.load %arg3[%c0_3, %c0_4] : memref<3x128xf32, #tpu.memory_space<vmem>>, vector<1x128xf32>
    %4 = vector.broadcast %3 : vector<1x128xf32> to vector<128x128xf32>
    %5 = arith.addf %2, %4 : vector<128x128xf32>
    %cst_5 = arith.constant 0.000000e+00 : f32
    %6 = vector.broadcast %cst_5 : f32 to vector<128x128xf32>
    %7 = arith.cmpf oge, %5, %6 : vector<128x128xf32>
    %cst_6 = arith.constant 2.000000e-01 : f32
    %8 = vector.broadcast %cst_6 : f32 to vector<128x128xf32>
    %9 = arith.mulf %8, %5 : vector<128x128xf32>
    %10 = arith.select %7, %5, %9 : vector<128x128xi1>, vector<128x128xf32>
    %cst_7 = arith.constant dense<0.000000e+00> : vector<128xf32>
    %11 = vector.multi_reduction <add>, %10, %cst_7 [0] : vector<128x128xf32> to vector<128xf32>
    %12 = vector.shape_cast %11 : vector<128xf32> to vector<1x128xf32>
    %cst_8 = arith.constant 1.280000e+02 : f32
    %13 = vector.broadcast %cst_8 : f32 to vector<1x128xf32>
    %14 = arith.divf %12, %13 : vector<1x128xf32>
    %15 = vector.broadcast %14 : vector<1x128xf32> to vector<128x128xf32>
    %16 = arith.subf %10, %15 : vector<128x128xf32>
    %17 = arith.mulf %16, %16 : vector<128x128xf32>
    %cst_9 = arith.constant dense<0.000000e+00> : vector<128xf32>
    %18 = vector.multi_reduction <add>, %17, %cst_9 [0] : vector<128x128xf32> to vector<128xf32>
    %19 = vector.shape_cast %18 : vector<128xf32> to vector<1x128xf32>
    %cst_10 = arith.constant 1.280000e+02 : f32
    %20 = vector.broadcast %cst_10 : f32 to vector<1x128xf32>
    %21 = arith.divf %19, %20 : vector<1x128xf32>
    %22 = vector.broadcast %14 : vector<1x128xf32> to vector<128x128xf32>
    %23 = arith.subf %10, %22 : vector<128x128xf32>
    %cst_11 = arith.constant 9.99999974E-6 : f32
    %24 = vector.broadcast %cst_11 : f32 to vector<1x128xf32>
    %25 = arith.addf %21, %24 : vector<1x128xf32>
    %26 = math.rsqrt %25 : vector<1x128xf32>
    %27 = vector.broadcast %26 : vector<1x128xf32> to vector<128x128xf32>
    %28 = arith.mulf %23, %27 : vector<128x128xf32>
    %c1 = arith.constant 1 : index
    %c0_12 = arith.constant 0 : index
    %29 = vector.load %arg3[%c1, %c0_12] : memref<3x128xf32, #tpu.memory_space<vmem>>, vector<1x128xf32>
    %30 = vector.broadcast %29 : vector<1x128xf32> to vector<128x128xf32>
    %31 = arith.mulf %28, %30 : vector<128x128xf32>
    %c2 = arith.constant 2 : index
    %c0_13 = arith.constant 0 : index
    %32 = vector.load %arg3[%c2, %c0_13] : memref<3x128xf32, #tpu.memory_space<vmem>>, vector<1x128xf32>
    %33 = vector.broadcast %32 : vector<1x128xf32> to vector<128x128xf32>
    %34 = arith.addf %31, %33 : vector<128x128xf32>
    %c0_14 = arith.constant 0 : index
    %c0_15 = arith.constant 0 : index
    %35 = vector.load %arg4[%c0_14, %c0_15] : memref<128x128xf32, #tpu.memory_space<vmem>>, vector<128x128xf32>
    tpu.vector_store %arg4[%c0_14, %c0_15], %34 {strides = array<i32>} : memref<128x128xf32, #tpu.memory_space<vmem>>, vector<128x128xf32>,
    return
  }
  func.func @transform_0(%arg0: i32) -> (i32, i32) {
    %c0_i32 = arith.constant 0 : i32
    %c0_i32_0 = arith.constant 0 : i32
    %c0_i32_1 = arith.constant 0 : i32
    return %c0_i32, %c0_i32_0 : i32, i32
  }
  func.func @transform_1(%arg0: i32) -> (i32, i32) {
    %c0_i32 = arith.constant 0 : i32
    %c0_i32_0 = arith.constant 0 : i32
    %c0_i32_1 = arith.constant 0 : i32
    return %c0_i32, %c0_i32_0 : i32, i32
  }
  func.func @transform_2(%arg0: i32) -> (i32, i32) {
    %c0_i32 = arith.constant 0 : i32
    %c0_i32_0 = arith.constant 0 : i32
    %c0_i32_1 = arith.constant 0 : i32
    return %c0_i32, %c0_i32_0 : i32, i32
  }
  func.func @transform_3(%arg0: i32) -> (i32, i32) {
    %c0_i32 = arith.constant 0 : i32
    %c0_i32_0 = arith.constant 0 : i32
    %c0_i32_1 = arith.constant 0 : i32
    return %c0_i32, %c0_i32_0 : i32, i32
  }
}

module attributes {stable_mosaic.version = 11 : i64} {
  func.func @_layer_kernel(%arg0: i32, %arg1: memref<512x576xbf16, #tpu.memory_space<vmem>>, %arg2: memref<576x128xbf16, #tpu.memory_space<vmem>>, %arg3: memref<3x128xf32, #tpu.memory_space<vmem>>, %arg4: memref<512x128xf32, #tpu.memory_space<vmem>>) attributes {dimension_semantics = [#tpu.dimension_semantics<arbitrary>], iteration_bounds = array<i64: 1>, scalar_prefetch = 0 : i64, scratch_operands = 0 : i64, tpu.core_type = #tpu.core_type<tc>, window_params = [{pipeline_mode = #tpu.pipeline_mode<synchronous>, transform_indices = @transform_0, window_bounds = array<i64: 512, 576>}, {pipeline_mode = #tpu.pipeline_mode<synchronous>, transform_indices = @transform_1, window_bounds = array<i64: 576, 128>}, {pipeline_mode = #tpu.pipeline_mode<synchronous>, transform_indices = @transform_2, window_bounds = array<i64: 3, 128>}, {pipeline_mode = #tpu.pipeline_mode<synchronous>, transform_indices = @transform_3, window_bounds = array<i64: 512, 128>}]} {
    %c0 = arith.constant 0 : index
    %c0_0 = arith.constant 0 : index
    %0 = vector.load %arg1[%c0, %c0_0] : memref<512x576xbf16, #tpu.memory_space<vmem>>, vector<512x576xbf16>
    %c0_1 = arith.constant 0 : index
    %c0_2 = arith.constant 0 : index
    %1 = vector.load %arg2[%c0_1, %c0_2] : memref<576x128xbf16, #tpu.memory_space<vmem>>, vector<576x128xbf16>
    %cst = arith.constant dense<0.000000e+00> : vector<512x128xf32>
    %2 = tpu.matmul %0, %1, %cst {dimension_numbers = #tpu.dot_dimension_numbers<[1], [0], [0], [1], [0, 0, 1, 1], [], []>} : vector<512x576xbf16>, vector<576x128xbf16>, vector<512x128xf32> -> vector<512x128xf32>
    %c0_3 = arith.constant 0 : index
    %c0_4 = arith.constant 0 : index
    %3 = vector.load %arg3[%c0_3, %c0_4] : memref<3x128xf32, #tpu.memory_space<vmem>>, vector<1x128xf32>
    %4 = vector.broadcast %3 : vector<1x128xf32> to vector<512x128xf32>
    %5 = arith.addf %2, %4 : vector<512x128xf32>
    %c0_5 = arith.constant 0 : index
    %c0_6 = arith.constant 0 : index
    %6 = vector.load %arg4[%c0_5, %c0_6] : memref<512x128xf32, #tpu.memory_space<vmem>>, vector<512x128xf32>
    tpu.vector_store %arg4[%c0_5, %c0_6], %5 {strides = array<i32>} : memref<512x128xf32, #tpu.memory_space<vmem>>, vector<512x128xf32>,
    return
  }
  func.func @transform_0(%arg0: i32) -> (i32, i32) {
    %c0_i32 = arith.constant 0 : i32
    %c0_i32_0 = arith.constant 0 : i32
    %c0_i32_1 = arith.constant 0 : i32
    return %c0_i32, %c0_i32_0 : i32, i32
  }
  func.func @transform_1(%arg0: i32) -> (i32, i32) {
    %c0_i32 = arith.constant 0 : i32
    %c0_i32_0 = arith.constant 0 : i32
    %c0_i32_1 = arith.constant 0 : i32
    return %c0_i32, %c0_i32_0 : i32, i32
  }
  func.func @transform_2(%arg0: i32) -> (i32, i32) {
    %c0_i32 = arith.constant 0 : i32
    %c0_i32_0 = arith.constant 0 : i32
    %c0_i32_1 = arith.constant 0 : i32
    return %c0_i32, %c0_i32_0 : i32, i32
  }
  func.func @transform_3(%arg0: i32) -> (i32, i32) {
    %c0_i32 = arith.constant 0 : i32
    %c0_i32_0 = arith.constant 0 : i32
    %c0_i32_1 = arith.constant 0 : i32
    return %c0_i32, %c0_i32_0 : i32, i32
  }
}

</mosaic_0001>

<llo_original>
// kernel: net_forward.8
$region0: #{net_forward.8}
  #allocation0 [shape = 'u32[]', space=smem, size = 0x4, offset = 0x4, fixed_abs, tag = 'smem constant byte address 0x4 - core index']
  #allocation1 [shape = 'u32[72,128]{1,0:T(1,128)}', space=vmem, size = 0x9000, scoped, tag = 'internal scratch']
  %s0 = inlined_call_operand.vmem [shape: bf16[128,64], index: 0, kind: input, shape index: {}]
  %s1 = inlined_call_operand.vmem [shape: bf16[64,128], index: 1, kind: input, shape index: {}]
  %s2 = inlined_call_operand.vmem [shape: f32[3,128], index: 2, kind: input, shape index: {}]
  %s3 = inlined_call_operand.vmem [shape: f32[128,128], index: 3, kind: output, shape index: {}]
  %s4 = sld [smem:[#allocation0]]
  $region22: #{net_forward.8} parent=0
    _
  %s6 = ssub.s32 1, %s4
  %s7 = scalar_select 0, %s6, %s4
  // Predicated region
  $region2: #{net_forward.8} parent=0 // pred_check
    _
  $region3: #{net_forward.8} parent=0 // pred_check_branch
    %9 = sbr.rel (0) target = $region5
  $region4: #{net_forward.8} parent=0 // pred_region
    _
  $region5: #{net_forward.8} parent=0 // pred_fallthru
    _
  // Predicated region
  $region6: #{net_forward.8} parent=0 // pred_check
    _
  $region7: #{net_forward.8} parent=0 // pred_check_branch
    %11 = sbr.rel (0) target = $region9
  $region8: #{net_forward.8} parent=0 // pred_region
    _
  $region9: #{net_forward.8} parent=0 // pred_fallthru
    _
  // Predicated region
  $region10: #{net_forward.8} parent=0 // pred_check
    _
  $region11: #{net_forward.8} parent=0 // pred_check_branch
    %13 = sbr.rel (0) target = $region13
  $region12: #{net_forward.8} parent=0 // pred_region
    _
  $region13: #{net_forward.8} parent=0 // pred_fallthru
    _
  %v15 = vld [vmem:[%s0] sm:$0xf]
  %v16 = vld [vmem:[%s0 + $0x4] sm:$0xf]
  %v17 = vld [vmem:[%s0 + $0x8] sm:$0xf]
  %v18 = vld [vmem:[%s0 + $0xc] sm:$0xf]
  %v19 = vld [vmem:[%s0 + $0x10] sm:$0xf]
  %v20 = vld [vmem:[%s0 + $0x14] sm:$0xf]
  %v21 = vld [vmem:[%s0 + $0x18] sm:$0xf]
  %v22 = vld [vmem:[%s0 + $0x1c] sm:$0xf]
  %v23 = vld [vmem:[%s0 + $0x20] sm:$0xf]
  %v24 = vld [vmem:[%s0 + $0x24] sm:$0xf]
  %v25 = vld [vmem:[%s0 + $0x28] sm:$0xf]
  %v26 = vld [vmem:[%s0 + $0x2c] sm:$0xf]
  %v27 = vld [vmem:[%s0 + $0x30] sm:$0xf]
  %v28 = vld [vmem:[%s0 + $0x34] sm:$0xf]
  %v29 = vld [vmem:[%s0 + $0x38] sm:$0xf]
  %v30 = vld [vmem:[%s0 + $0x3c] sm:$0xf]
  %v31 = vld [vmem:[%s1] sm:$0xf]
  %v32 = vld [vmem:[%s1 + $0x4] sm:$0xf]
  %v33 = vld [vmem:[%s1 + $0x8] sm:$0xf]
  %v34 = vld [vmem:[%s1 + $0xc] sm:$0xf]
  %v35 = vld [vmem:[%s1 + $0x10] sm:$0xf]
  %v36 = vld [vmem:[%s1 + $0x14] sm:$0xf]
  %v37 = vld [vmem:[%s1 + $0x18] sm:$0xf]
  %v38 = vld [vmem:[%s1 + $0x1c] sm:$0xf]
  %v39 = vld [vmem:[%s2] sm:$0x1]
  %v40 = vperm.slane %v39, 0
  %v57 = vunpack.c.l.b16 %v15
  %v58 = vunpack.c.l.b16 %v16
  %v59 = vunpack.c.l.b16 %v17
  %v60 = vunpack.c.l.b16 %v18
  %v61 = vunpack.c.l.b16 %v19
  %v62 = vunpack.c.l.b16 %v20
  %v63 = vunpack.c.l.b16 %v21
  %v64 = vunpack.c.l.b16 %v22
  %v65 = vunpack.c.l.b16 %v23
  %v66 = vunpack.c.l.b16 %v24
  %v67 = vunpack.c.l.b16 %v25
  %v68 = vunpack.c.l.b16 %v26
  %v69 = vunpack.c.l.b16 %v27
  %v70 = vunpack.c.l.b16 %v28
  %v71 = vunpack.c.l.b16 %v29
  %v72 = vunpack.c.l.b16 %v30
  %v73 = vpack.c.b16 %v58, %v57
  %v74 = vpack.c.b16 %v60, %v59
  %v75 = vpack.c.b16 %v62, %v61
  %v76 = vpack.c.b16 %v64, %v63
  %v77 = vpack.c.b16 %v66, %v65
  %v78 = vpack.c.b16 %v68, %v67
  %v79 = vpack.c.b16 %v70, %v69
  %v80 = vpack.c.b16 %v72, %v71
  %v89 = vunpack.c.l.b16 %v31
  %v90 = vunpack.c.l.b16 %v32
  %v91 = vunpack.c.l.b16 %v33
  %v92 = vunpack.c.l.b16 %v34
  %v93 = vunpack.c.l.b16 %v35
  %v94 = vunpack.c.l.b16 %v36
  %v95 = vunpack.c.l.b16 %v37
  %v96 = vunpack.c.l.b16 %v38
  %v97 = vpack.c.b16 %v90, %v89
  %v98 = vpack.c.b16 %v92, %v91
  %v99 = vpack.c.b16 %v94, %v93
  %v100 = vpack.c.b16 %v96, %v95
  %vm105 = vcmask 523264
  %v107 = vsel %vm105, %v73, 0
  %v110 = vsel %vm105, %v74, 0
  %v113 = vsel %vm105, %v75, 0
  %v116 = vsel %vm105, %v76, 0
  %v119 = vsel %vm105, %v77, 0
  %v122 = vsel %vm105, %v78, 0
  %v125 = vsel %vm105, %v79, 0
  %v128 = vsel %vm105, %v80, 0
  %130 = vmatpush.bf16.msra.mxu0 0
  %131 = vmatpush.bf16.msra.mxu0 0
  %132 = vmatpush.bf16.msra.mxu0 0
  %133 = vmatpush.bf16.msra.mxu0 0
  %134 = vmatpush.bf16.msra.mxu0 %v100
  %135 = vmatpush.bf16.msra.mxu0 %v99
  %136 = vmatpush.bf16.msra.mxu0 %v98
  %137 = vmatpush.bf16.msra.mxu0 %v97
  %138 = vmatmul.bf16.gmra.mxu0 %v107
  %v139 = vpop.f32.mrf.mxu0
  %v140 = vadd.f32 %v40, %v139
  %v141 = vpop.f32.mrf.mxu0
  %v142 = vadd.f32 %v40, %v141
  %143 = vmatmul.bf16.gmra.mxu0 %v110
  %v144 = vpop.f32.mrf.mxu0
  %v145 = vadd.f32 %v40, %v144
  %v146 = vpop.f32.mrf.mxu0
  %v147 = vadd.f32 %v40, %v146
  %148 = vmatmul.bf16.gmra.mxu0 %v113
  %v149 = vpop.f32.mrf.mxu0
  %v150 = vadd.f32 %v40, %v149
  %v151 = vpop.f32.mrf.mxu0
  %v152 = vadd.f32 %v40, %v151
  %153 = vmatmul.bf16.gmra.mxu0 %v116
  %v154 = vpop.f32.mrf.mxu0
  %v155 = vadd.f32 %v40, %v154
  %v156 = vpop.f32.mrf.mxu0
  %v157 = vadd.f32 %v40, %v156
  %158 = vmatmul.bf16.gmra.mxu0 %v119
  %v159 = vpop.f32.mrf.mxu0
  %v160 = vadd.f32 %v40, %v159
  %v161 = vpop.f32.mrf.mxu0
  %v162 = vadd.f32 %v40, %v161
  %163 = vmatmul.bf16.gmra.mxu0 %v122
  %v164 = vpop.f32.mrf.mxu0
  %v165 = vadd.f32 %v40, %v164
  %v166 = vpop.f32.mrf.mxu0
  %v167 = vadd.f32 %v40, %v166
  %168 = vmatmul.bf16.gmra.mxu0 %v125
  %v169 = vpop.f32.mrf.mxu0
  %v170 = vadd.f32 %v40, %v169
  %v171 = vpop.f32.mrf.mxu0
  %v172 = vadd.f32 %v40, %v171
  %173 = vmatmul.bf16.gmra.mxu0 %v128
  %v174 = vpop.f32.mrf.mxu0
  %v175 = vadd.f32 %v40, %v174
  %v176 = vpop.f32.mrf.mxu0
  %v177 = vadd.f32 %v40, %v176
  %178 = vdwg.mxu0
  %vm179 = vcmp.ge.f32.partialorder %v140, 0.0
  %vm180 = vcmp.ge.f32.partialorder %v142, 0.0
  %vm181 = vcmp.ge.f32.partialorder %v145, 0.0
  %vm182 = vcmp.ge.f32.partialorder %v147, 0.0
  %vm183 = vcmp.ge.f32.partialorder %v150, 0.0
  %vm184 = vcmp.ge.f32.partialorder %v152, 0.0
  %vm185 = vcmp.ge.f32.partialorder %v155, 0.0
  %vm186 = vcmp.ge.f32.partialorder %v157, 0.0
  %vm187 = vcmp.ge.f32.partialorder %v160, 0.0
  %vm188 = vcmp.ge.f32.partialorder %v162, 0.0
  %vm189 = vcmp.ge.f32.partialorder %v165, 0.0
  %vm190 = vcmp.ge.f32.partialorder %v167, 0.0
  %vm191 = vcmp.ge.f32.partialorder %v170, 0.0
  %vm192 = vcmp.ge.f32.partialorder %v172, 0.0
  %vm193 = vcmp.ge.f32.partialorder %v175, 0.0
  %vm194 = vcmp.ge.f32.partialorder %v177, 0.0
  %v195 = vmul.f32 %v140, 0.2
  %v196 = vmul.f32 %v142, 0.2
  %v197 = vmul.f32 %v145, 0.2
  %v198 = vmul.f32 %v147, 0.2
  %v199 = vmul.f32 %v150, 0.2
  %v200 = vmul.f32 %v152, 0.2
  %v201 = vmul.f32 %v155, 0.2
  %v202 = vmul.f32 %v157, 0.2
  %v203 = vmul.f32 %v160, 0.2
  %v204 = vmul.f32 %v162, 0.2
  %v205 = vmul.f32 %v165, 0.2
  %v206 = vmul.f32 %v167, 0.2
  %v207 = vmul.f32 %v170, 0.2
  %v208 = vmul.f32 %v172, 0.2
  %v209 = vmul.f32 %v175, 0.2
  %v210 = vmul.f32 %v177, 0.2
  %v211 = vsel %vm179, %v140, %v195
  %v212 = vsel %vm180, %v142, %v196
  %v213 = vsel %vm181, %v145, %v197
  %v214 = vsel %vm182, %v147, %v198
  %v215 = vsel %vm183, %v150, %v199
  %v216 = vsel %vm184, %v152, %v200
  %v217 = vsel %vm185, %v155, %v201
  %v218 = vsel %vm186, %v157, %v202
  %v219 = vsel %vm187, %v160, %v203
  %v220 = vsel %vm188, %v162, %v204
  %v221 = vsel %vm189, %v165, %v205
  %v222 = vsel %vm190, %v167, %v206
  %v223 = vsel %vm191, %v170, %v207
  %v224 = vsel %vm192, %v172, %v208
  %v225 = vsel %vm193, %v175, %v209
  %v226 = vsel %vm194, %v177, %v210
  %v227 = vadd.f32 %v211, %v212
  %v228 = vadd.f32 %v227, %v213
  %v229 = vadd.f32 %v228, %v214
  %v230 = vadd.f32 %v229, %v215
  %v231 = vadd.f32 %v230, %v216
  %v232 = vadd.f32 %v231, %v217
  %v233 = vadd.f32 %v232, %v218
  %v234 = vadd.f32 %v233, %v219
  %v235 = vadd.f32 %v234, %v220
  %v236 = vadd.f32 %v235, %v221
  %v237 = vadd.f32 %v236, %v222
  %v238 = vadd.f32 %v237, %v223
  %v239 = vadd.f32 %v238, %v224
  %v240 = vadd.f32 %v239, %v225
  %v241 = vadd.f32 %v240, %v226
  %v242 = vrot.slane %v241, 4
  %v243 = vadd.f32 %v241, %v242
  %v244 = vrot.slane %v243, 2
  %v245 = vadd.f32 %v243, %v244
  %v246 = vrot.slane %v245, 1
  %v247 = vadd.f32 %v245, %v246
  %v248 = vrcp.pop 128.0
  %v249 = vmul.f32 128.0, %v248
  %v250 = vsub.f32 1.0, %v249
  %v251 = vmul.f32 %v248, %v250
  %v252 = vadd.f32 %v248, %v251
  %vm253 = vweird.f32 %v248
  %v254 = vsel %vm253, %v248, %v252
  %v255 = vmul.f32 %v247, %v254
  %v256 = vsub.f32 %v211, %v255
  %v257 = vsub.f32 %v212, %v255
  %v258 = vsub.f32 %v213, %v255
  %v259 = vsub.f32 %v214, %v255
  %v260 = vsub.f32 %v215, %v255
  %v261 = vsub.f32 %v216, %v255
  %v262 = vsub.f32 %v217, %v255
  %v263 = vsub.f32 %v218, %v255
  %v264 = vsub.f32 %v219, %v255
  %v265 = vsub.f32 %v220, %v255
  %v266 = vsub.f32 %v221, %v255
  %v267 = vsub.f32 %v222, %v255
  %v268 = vsub.f32 %v223, %v255
  %v269 = vsub.f32 %v224, %v255
  %v270 = vsub.f32 %v225, %v255
  %v271 = vsub.f32 %v226, %v255
  %v272 = vmul.f32 %v256, %v256
  %v273 = vmul.f32 %v257, %v257
  %v274 = vmul.f32 %v258, %v258
  %v275 = vmul.f32 %v259, %v259
  %v276 = vmul.f32 %v260, %v260
  %v277 = vmul.f32 %v261, %v261
  %v278 = vmul.f32 %v262, %v262
  %v279 = vmul.f32 %v263, %v263
  %v280 = vmul.f32 %v264, %v264
  %v281 = vmul.f32 %v265, %v265
  %v282 = vmul.f32 %v266, %v266
  %v283 = vmul.f32 %v267, %v267
  %v284 = vmul.f32 %v268, %v268
  %v285 = vmul.f32 %v269, %v269
  %v286 = vmul.f32 %v270, %v270
  %v287 = vmul.f32 %v271, %v271
  %v288 = vadd.f32 %v272, %v273
  %v289 = vadd.f32 %v288, %v274
  %v290 = vadd.f32 %v289, %v275
  %v291 = vadd.f32 %v290, %v276
  %v292 = vadd.f32 %v291, %v277
  %v293 = vadd.f32 %v292, %v278
  %v294 = vadd.f32 %v293, %v279
  %v295 = vadd.f32 %v294, %v280
  %v296 = vadd.f32 %v295, %v281
  %v297 = vadd.f32 %v296, %v282
  %v298 = vadd.f32 %v297, %v283
  %v299 = vadd.f32 %v298, %v284
  %v300 = vadd.f32 %v299, %v285
  %v301 = vadd.f32 %v300, %v286
  %v302 = vadd.f32 %v301, %v287
  %v303 = vrot.slane %v302, 4
  %v304 = vadd.f32 %v302, %v303
  %v305 = vrot.slane %v304, 2
  %v306 = vadd.f32 %v304, %v305
  %v307 = vrot.slane %v306, 1
  %v308 = vadd.f32 %v306, %v307
  %v309 = vmul.f32 %v308, %v254
  %v310 = vadd.f32 %v309, 1e-05
  %v311 = vrsqrt.pop %v310
  %v312 = vmul.f32 %v311, %v310
  %v313 = vmul.f32 %v312, %v311
  %v314 = vmul.f32 0.5, %v313
  %v315 = vsub.f32 1.5, %v314
  %v316 = vmul.f32 %v311, %v315
  %vm317 = vweird.f32 %v310
  %vm318 = vweird.f32 %v311
  %vm319 = vmor %vm317, %vm318
  %v320 = vsel %vm319, %v311, %v316
  %v321 = vmul.f32 %v256, %v320
  %v322 = vmul.f32 %v257, %v320
  %v323 = vmul.f32 %v258, %v320
  %v324 = vmul.f32 %v259, %v320
  %v325 = vmul.f32 %v260, %v320
  %v326 = vmul.f32 %v261, %v320
  %v327 = vmul.f32 %v262, %v320
  %v328 = vmul.f32 %v263, %v320
  %v329 = vmul.f32 %v264, %v320
  %v330 = vmul.f32 %v265, %v320
  %v331 = vmul.f32 %v266, %v320
  %v332 = vmul.f32 %v267, %v320
  %v333 = vmul.f32 %v268, %v320
  %v334 = vmul.f32 %v269, %v320
  %v335 = vmul.f32 %v270, %v320
  %v336 = vmul.f32 %v271, %v320
  %v337 = vld [vmem:[%s2 + $0x1] sm:$0x1]
  %v338 = vperm.slane %v337, 0
  %v339 = vmul.f32 %v321, %v338
  %v340 = vmul.f32 %v322, %v338
  %v341 = vmul.f32 %v323, %v338
  %v342 = vmul.f32 %v324, %v338
  %v343 = vmul.f32 %v325, %v338
  %v344 = vmul.f32 %v326, %v338
  %v345 = vmul.f32 %v327, %v338
  %v346 = vmul.f32 %v328, %v338
  %v347 = vmul.f32 %v329, %v338
  %v348 = vmul.f32 %v330, %v338
  %v349 = vmul.f32 %v331, %v338
  %v350 = vmul.f32 %v332, %v338
  %v351 = vmul.f32 %v333, %v338
  %v352 = vmul.f32 %v334, %v338
  %v353 = vmul.f32 %v335, %v338
  %v354 = vmul.f32 %v336, %v338
  %v355 = vld [vmem:[%s2 + $0x2] sm:$0x1]
  %v356 = vperm.slane %v355, 0
  %v357 = vadd.f32 %v339, %v356
  %v358 = vadd.f32 %v340, %v356
  %v359 = vadd.f32 %v341, %v356
  %v360 = vadd.f32 %v342, %v356
  %v361 = vadd.f32 %v343, %v356
  %v362 = vadd.f32 %v344, %v356
  %v363 = vadd.f32 %v345, %v356
  %v364 = vadd.f32 %v346, %v356
  %v365 = vadd.f32 %v347, %v356
  %v366 = vadd.f32 %v348, %v356
  %v367 = vadd.f32 %v349, %v356
  %v368 = vadd.f32 %v350, %v356
  %v369 = vadd.f32 %v351, %v356
  %v370 = vadd.f32 %v352, %v356
  %v371 = vadd.f32 %v353, %v356
  %v372 = vadd.f32 %v354, %v356
  %373 = vst [vmem:[%s3] sm:$0xff] %v357
  %374 = vst [vmem:[%s3 + $0x8] sm:$0xff] %v358
  %375 = vst [vmem:[%s3 + $0x10] sm:$0xff] %v359
  %376 = vst [vmem:[%s3 + $0x18] sm:$0xff] %v360
  %377 = vst [vmem:[%s3 + $0x20] sm:$0xff] %v361
  %378 = vst [vmem:[%s3 + $0x28] sm:$0xff] %v362
  %379 = vst [vmem:[%s3 + $0x30] sm:$0xff] %v363
  %380 = vst [vmem:[%s3 + $0x38] sm:$0xff] %v364
  %381 = vst [vmem:[%s3 + $0x40] sm:$0xff] %v365
  %382 = vst [vmem:[%s3 + $0x48] sm:$0xff] %v366
  %383 = vst [vmem:[%s3 + $0x50] sm:$0xff] %v367
  %384 = vst [vmem:[%s3 + $0x58] sm:$0xff] %v368
  %385 = vst [vmem:[%s3 + $0x60] sm:$0xff] %v369
  %386 = vst [vmem:[%s3 + $0x68] sm:$0xff] %v370
  %387 = vst [vmem:[%s3 + $0x70] sm:$0xff] %v371
  %388 = vst [vmem:[%s3 + $0x78] sm:$0xff] %v372
  // Predicated region
  $region14: #{net_forward.8} parent=0 // pred_check
    _
  $region15: #{net_forward.8} parent=0 // pred_check_branch
    %390 = sbr.rel (0) target = $region17
  $region16: #{net_forward.8} parent=0 // pred_region
    _
  $region17: #{net_forward.8} parent=0 // pred_fallthru
    _
  // Predicated region
  $region18: #{net_forward.8} parent=0 // pred_check
    _
  $region19: #{net_forward.8} parent=0 // pred_check_branch
    %392 = sbr.rel (0) target = $region21
  $region20: #{net_forward.8} parent=0 // pred_region
    _
  $region21: #{net_forward.8} parent=0 // pred_fallthru
    _

// kernel: net_forward.9
$region0: #{net_forward.9}
  #allocation0 [shape = 'u32[]', space=smem, size = 0x4, offset = 0x4, fixed_abs, tag = 'smem constant byte address 0x4 - core index']
  #allocation1 [shape = 'u32[72,128]{1,0:T(1,128)}', space=vmem, size = 0x9000, scoped, tag = 'internal scratch']
  %s0 = inlined_call_operand.vmem [shape: bf16[32,1024], index: 0, kind: input, shape index: {}]
  %s1 = inlined_call_operand.vmem [shape: bf16[1024,128], index: 1, kind: input, shape index: {}]
  %s2 = inlined_call_operand.vmem [shape: f32[3,128], index: 2, kind: input, shape index: {}]
  %s3 = inlined_call_operand.vmem [shape: f32[32,128], index: 3, kind: output, shape index: {}]
  %s4 = sld [smem:[#allocation0]]
  $region22: #{net_forward.9} parent=0
    _
  %s6 = ssub.s32 1, %s4
  %s7 = scalar_select 0, %s6, %s4
  // Predicated region
  $region2: #{net_forward.9} parent=0 // pred_check
    _
  $region3: #{net_forward.9} parent=0 // pred_check_branch
    %9 = sbr.rel (0) target = $region5
  $region4: #{net_forward.9} parent=0 // pred_region
    _
  $region5: #{net_forward.9} parent=0 // pred_fallthru
    _
  // Predicated region
  $region6: #{net_forward.9} parent=0 // pred_check
    _
  $region7: #{net_forward.9} parent=0 // pred_check_branch
    %11 = sbr.rel (0) target = $region9
  $region8: #{net_forward.9} parent=0 // pred_region
    _
  $region9: #{net_forward.9} parent=0 // pred_fallthru
    _
  // Predicated region
  $region10: #{net_forward.9} parent=0 // pred_check
    _
  $region11: #{net_forward.9} parent=0 // pred_check_branch
    %13 = sbr.rel (0) target = $region13
  $region12: #{net_forward.9} parent=0 // pred_region
    _
  $region13: #{net_forward.9} parent=0 // pred_fallthru
    _
  %v14 = vld [vmem:[%s0] sm:$0xff]
  %v15 = vld [vmem:[%s0 + $0x8] sm:$0xff]
  %v16 = vld [vmem:[%s0 + $0x10] sm:$0xff]
  %v17 = vld [vmem:[%s0 + $0x18] sm:$0xff]
  %v18 = vld [vmem:[%s0 + $0x20] sm:$0xff]
  %v19 = vld [vmem:[%s0 + $0x28] sm:$0xff]
  %v20 = vld [vmem:[%s0 + $0x30] sm:$0xff]
  %v21 = vld [vmem:[%s0 + $0x38] sm:$0xff]
  %v22 = vld [vmem:[%s0 + $0x40] sm:$0xff]
  %v23 = vld [vmem:[%s0 + $0x48] sm:$0xff]
  %v24 = vld [vmem:[%s0 + $0x50] sm:$0xff]
  %v25 = vld [vmem:[%s0 + $0x58] sm:$0xff]
  %v26 = vld [vmem:[%s0 + $0x60] sm:$0xff]
  %v27 = vld [vmem:[%s0 + $0x68] sm:$0xff]
  %v28 = vld [vmem:[%s0 + $0x70] sm:$0xff]
  %v29 = vld [vmem:[%s0 + $0x78] sm:$0xff]
  %v30 = vld [vmem:[%s1] sm:$0xf]
  %v31 = vld [vmem:[%s1 + $0x4] sm:$0xf]
  %v32 = vld [vmem:[%s1 + $0x8] sm:$0xf]
  %v33 = vld [vmem:[%s1 + $0xc] sm:$0xf]
  %v34 = vld [vmem:[%s1 + $0x10] sm:$0xf]
  %v35 = vld [vmem:[%s1 + $0x14] sm:$0xf]
  %v36 = vld [vmem:[%s1 + $0x18] sm:$0xf]
  %v37 = vld [vmem:[%s1 + $0x1c] sm:$0xf]
  %v38 = vld [vmem:[%s1 + $0x20] sm:$0xf]
  %v39 = vld [vmem:[%s1 + $0x24] sm:$0xf]
  %v40 = vld [vmem:[%s1 + $0x28] sm:$0xf]
  %v41 = vld [vmem:[%s1 + $0x2c] sm:$0xf]
  %v42 = vld [vmem:[%s1 + $0x30] sm:$0xf]
  %v43 = vld [vmem:[%s1 + $0x34] sm:$0xf]
  %v44 = vld [vmem:[%s1 + $0x38] sm:$0xf]
  %v45 = vld [vmem:[%s1 + $0x3c] sm:$0xf]
  %v46 = vld [vmem:[%s1 + $0x40] sm:$0xf]
  %v47 = vld [vmem:[%s1 + $0x44] sm:$0xf]
  %v48 = vld [vmem:[%s1 + $0x48] sm:$0xf]
  %v49 = vld [vmem:[%s1 + $0x4c] sm:$0xf]
  %v50 = vld [vmem:[%s1 + $0x50] sm:$0xf]
  %v51 = vld [vmem:[%s1 + $0x54] sm:$0xf]
  %v52 = vld [vmem:[%s1 + $0x58] sm:$0xf]
  %v53 = vld [vmem:[%s1 + $0x5c] sm:$0xf]
  %v54 = vld [vmem:[%s1 + $0x60] sm:$0xf]
  %v55 = vld [vmem:[%s1 + $0x64] sm:$0xf]
  %v56 = vld [vmem:[%s1 + $0x68] sm:$0xf]
  %v57 = vld [vmem:[%s1 + $0x6c] sm:$0xf]
  %v58 = vld [vmem:[%s1 + $0x70] sm:$0xf]
  %v59 = vld [vmem:[%s1 + $0x74] sm:$0xf]
  %v60 = vld [vmem:[%s1 + $0x78] sm:$0xf]
  %v61 = vld [vmem:[%s1 + $0x7c] sm:$0xf]
  %v62 = vld [vmem:[%s1 + $0x80] sm:$0xf]
  %v63 = vld [vmem:[%s1 + $0x84] sm:$0xf]
  %v64 = vld [vmem:[%s1 + $0x88] sm:$0xf]
  %v65 = vld [vmem:[%s1 + $0x8c] sm:$0xf]
  %v66 = vld [vmem:[%s1 + $0x90] sm:$0xf]
  %v67 = vld [vmem:[%s1 + $0x94] sm:$0xf]
  %v68 = vld [vmem:[%s1 + $0x98] sm:$0xf]
  %v69 = vld [vmem:[%s1 + $0x9c] sm:$0xf]
  %v70 = vld [vmem:[%s1 + $0xa0] sm:$0xf]
  %v71 = vld [vmem:[%s1 + $0xa4] sm:$0xf]
  %v72 = vld [vmem:[%s1 + $0xa8] sm:$0xf]
  %v73 = vld [vmem:[%s1 + $0xac] sm:$0xf]
  %v74 = vld [vmem:[%s1 + $0xb0] sm:$0xf]
  %v75 = vld [vmem:[%s1 + $0xb4] sm:$0xf]
  %v76 = vld [vmem:[%s1 + $0xb8] sm:$0xf]
  %v77 = vld [vmem:[%s1 + $0xbc] sm:$0xf]
  %v78 = vld [vmem:[%s1 + $0xc0] sm:$0xf]
  %v79 = vld [vmem:[%s1 + $0xc4] sm:$0xf]
  %v80 = vld [vmem:[%s1 + $0xc8] sm:$0xf]
  %v81 = vld [vmem:[%s1 + $0xcc] sm:$0xf]
  %v82 = vld [vmem:[%s1 + $0xd0] sm:$0xf]
  %v83 = vld [vmem:[%s1 + $0xd4] sm:$0xf]
  %v84 = vld [vmem:[%s1 + $0xd8] sm:$0xf]
  %v85 = vld [vmem:[%s1 + $0xdc] sm:$0xf]
  %v86 = vld [vmem:[%s1 + $0xe0] sm:$0xf]
  %v87 = vld [vmem:[%s1 + $0xe4] sm:$0xf]
  %v88 = vld [vmem:[%s1 + $0xe8] sm:$0xf]
  %v89 = vld [vmem:[%s1 + $0xec] sm:$0xf]
  %v90 = vld [vmem:[%s1 + $0xf0] sm:$0xf]
  %v91 = vld [vmem:[%s1 + $0xf4] sm:$0xf]
  %v92 = vld [vmem:[%s1 + $0xf8] sm:$0xf]
  %v93 = vld [vmem:[%s1 + $0xfc] sm:$0xf]
  %v94 = vld [vmem:[%s1 + $0x100] sm:$0xf]
  %v95 = vld [vmem:[%s1 + $0x104] sm:$0xf]
  %v96 = vld [vmem:[%s1 + $0x108] sm:$0xf]
  %v97 = vld [vmem:[%s1 + $0x10c] sm:$0xf]
  %v98 = vld [vmem:[%s1 + $0x110] sm:$0xf]
  %v99 = vld [vmem:[%s1 + $0x114] sm:$0xf]
  %v100 = vld [vmem:[%s1 + $0x118] sm:$0xf]
  %v101 = vld [vmem:[%s1 + $0x11c] sm:$0xf]
  %v102 = vld [vmem:[%s1 + $0x120] sm:$0xf]
  %v103 = vld [vmem:[%s1 + $0x124] sm:$0xf]
  %v104 = vld [vmem:[%s1 + $0x128] sm:$0xf]
  %v105 = vld [vmem:[%s1 + $0x12c] sm:$0xf]
  %v106 = vld [vmem:[%s1 + $0x130] sm:$0xf]
  %v107 = vld [vmem:[%s1 + $0x134] sm:$0xf]
  %v108 = vld [vmem:[%s1 + $0x138] sm:$0xf]
  %v109 = vld [vmem:[%s1 + $0x13c] sm:$0xf]
  %v110 = vld [vmem:[%s1 + $0x140] sm:$0xf]
  %v111 = vld [vmem:[%s1 + $0x144] sm:$0xf]
  %v112 = vld [vmem:[%s1 + $0x148] sm:$0xf]
  %v113 = vld [vmem:[%s1 + $0x14c] sm:$0xf]
  %v114 = vld [vmem:[%s1 + $0x150] sm:$0xf]
  %v115 = vld [vmem:[%s1 + $0x154] sm:$0xf]
  %v116 = vld [vmem:[%s1 + $0x158] sm:$0xf]
  %v117 = vld [vmem:[%s1 + $0x15c] sm:$0xf]
  %v118 = vld [vmem:[%s1 + $0x160] sm:$0xf]
  %v119 = vld [vmem:[%s1 + $0x164] sm:$0xf]
  %v120 = vld [vmem:[%s1 + $0x168] sm:$0xf]
  %v121 = vld [vmem:[%s1 + $0x16c] sm:$0xf]
  %v122 = vld [vmem:[%s1 + $0x170] sm:$0xf]
  %v123 = vld [vmem:[%s1 + $0x174] sm:$0xf]
  %v124 = vld [vmem:[%s1 + $0x178] sm:$0xf]
  %v125 = vld [vmem:[%s1 + $0x17c] sm:$0xf]
  %v126 = vld [vmem:[%s1 + $0x180] sm:$0xf]
  %v127 = vld [vmem:[%s1 + $0x184] sm:$0xf]
  %v128 = vld [vmem:[%s1 + $0x188] sm:$0xf]
  %v129 = vld [vmem:[%s1 + $0x18c] sm:$0xf]
  %v130 = vld [vmem:[%s1 + $0x190] sm:$0xf]
  %v131 = vld [vmem:[%s1 + $0x194] sm:$0xf]
  %v132 = vld [vmem:[%s1 + $0x198] sm:$0xf]
  %v133 = vld [vmem:[%s1 + $0x19c] sm:$0xf]
  %v134 = vld [vmem:[%s1 + $0x1a0] sm:$0xf]
  %v135 = vld [vmem:[%s1 + $0x1a4] sm:$0xf]
  %v136 = vld [vmem:[%s1 + $0x1a8] sm:$0xf]
  %v137 = vld [vmem:[%s1 + $0x1ac] sm:$0xf]
  %v138 = vld [vmem:[%s1 + $0x1b0] sm:$0xf]
  %v139 = vld [vmem:[%s1 + $0x1b4] sm:$0xf]
  %v140 = vld [vmem:[%s1 + $0x1b8] sm:$0xf]
  %v141 = vld [vmem:[%s1 + $0x1bc] sm:$0xf]
  %v142 = vld [vmem:[%s1 + $0x1c0] sm:$0xf]
  %v143 = vld [vmem:[%s1 + $0x1c4] sm:$0xf]
  %v144 = vld [vmem:[%s1 + $0x1c8] sm:$0xf]
  %v145 = vld [vmem:[%s1 + $0x1cc] sm:$0xf]
  %v146 = vld [vmem:[%s1 + $0x1d0] sm:$0xf]
  %v147 = vld [vmem:[%s1 + $0x1d4] sm:$0xf]
  %v148 = vld [vmem:[%s1 + $0x1d8] sm:$0xf]
  %v149 = vld [vmem:[%s1 + $0x1dc] sm:$0xf]
  %v150 = vld [vmem:[%s1 + $0x1e0] sm:$0xf]
  %v151 = vld [vmem:[%s1 + $0x1e4] sm:$0xf]
  %v152 = vld [vmem:[%s1 + $0x1e8] sm:$0xf]
  %v153 = vld [vmem:[%s1 + $0x1ec] sm:$0xf]
  %v154 = vld [vmem:[%s1 + $0x1f0] sm:$0xf]
  %v155 = vld [vmem:[%s1 + $0x1f4] sm:$0xf]
  %v156 = vld [vmem:[%s1 + $0x1f8] sm:$0xf]
  %v157 = vld [vmem:[%s1 + $0x1fc] sm:$0xf]
  %v158 = vld [vmem:[%s2] sm:$0x1]
  %v159 = vperm.slane %v158, 0
  %v176 = vunpack.c.l.b16 %v14
  %v177 = vunpack.c.h.b16 %v14
  %v178 = vunpack.c.l.b16 %v15
  %v179 = vunpack.c.h.b16 %v15
  %v180 = vunpack.c.l.b16 %v16
  %v181 = vunpack.c.h.b16 %v16
  %v182 = vunpack.c.l.b16 %v17
  %v183 = vunpack.c.h.b16 %v17
  %v184 = vunpack.c.l.b16 %v18
  %v185 = vunpack.c.h.b16 %v18
  %v186 = vunpack.c.l.b16 %v19
  %v187 = vunpack.c.h.b16 %v19
  %v188 = vunpack.c.l.b16 %v20
  %v189 = vunpack.c.h.b16 %v20
  %v190 = vunpack.c.l.b16 %v21
  %v191 = vunpack.c.h.b16 %v21
  %v192 = vunpack.c.l.b16 %v22
  %v193 = vunpack.c.h.b16 %v22
  %v194 = vunpack.c.l.b16 %v23
  %v195 = vunpack.c.h.b16 %v23
  %v196 = vunpack.c.l.b16 %v24
  %v197 = vunpack.c.h.b16 %v24
  %v198 = vunpack.c.l.b16 %v25
  %v199 = vunpack.c.h.b16 %v25
  %v200 = vunpack.c.l.b16 %v26
  %v201 = vunpack.c.h.b16 %v26
  %v202 = vunpack.c.l.b16 %v27
  %v203 = vunpack.c.h.b16 %v27
  %v204 = vunpack.c.l.b16 %v28
  %v205 = vunpack.c.h.b16 %v28
  %v206 = vunpack.c.l.b16 %v29
  %v207 = vunpack.c.h.b16 %v29
  %v208 = vpack.c.b16 %v184, %v176
  %v209 = vpack.c.b16 %v185, %v177
  %v210 = vpack.c.b16 %v186, %v178
  %v211 = vpack.c.b16 %v187, %v179
  %v212 = vpack.c.b16 %v188, %v180
  %v213 = vpack.c.b16 %v189, %v181
  %v214 = vpack.c.b16 %v190, %v182
  %v215 = vpack.c.b16 %v191, %v183
  %v216 = vpack.c.b16 %v200, %v192
  %v217 = vpack.c.b16 %v201, %v193
  %v218 = vpack.c.b16 %v202, %v194
  %v219 = vpack.c.b16 %v203, %v195
  %v220 = vpack.c.b16 %v204, %v196
  %v221 = vpack.c.b16 %v205, %v197
  %v222 = vpack.c.b16 %v206, %v198
  %v223 = vpack.c.b16 %v207, %v199
  %v368 = vunpack.c.l.b16 %v30
  %v369 = vunpack.c.l.b16 %v31
  %v370 = vunpack.c.l.b16 %v32
  %v371 = vunpack.c.l.b16 %v33
  %v372 = vunpack.c.l.b16 %v34
  %v373 = vunpack.c.l.b16 %v35
  %v374 = vunpack.c.l.b16 %v36
  %v375 = vunpack.c.l.b16 %v37
  %v376 = vunpack.c.l.b16 %v38
  %v377 = vunpack.c.l.b16 %v39
  %v378 = vunpack.c.l.b16 %v40
  %v379 = vunpack.c.l.b16 %v41
  %v380 = vunpack.c.l.b16 %v42
  %v381 = vunpack.c.l.b16 %v43
  %v382 = vunpack.c.l.b16 %v44
  %v383 = vunpack.c.l.b16 %v45
  %v384 = vunpack.c.l.b16 %v46
  %v385 = vunpack.c.l.b16 %v47
  %v386 = vunpack.c.l.b16 %v48
  %v387 = vunpack.c.l.b16 %v49
  %v388 = vunpack.c.l.b16 %v50
  %v389 = vunpack.c.l.b16 %v51
  %v390 = vunpack.c.l.b16 %v52
  %v391 = vunpack.c.l.b16 %v53
  %v392 = vunpack.c.l.b16 %v54
  %v393 = vunpack.c.l.b16 %v55
  %v394 = vunpack.c.l.b16 %v56
  %v395 = vunpack.c.l.b16 %v57
  %v396 = vunpack.c.l.b16 %v58
  %v397 = vunpack.c.l.b16 %v59
  %v398 = vunpack.c.l.b16 %v60
  %v399 = vunpack.c.l.b16 %v61
  %v400 = vunpack.c.l.b16 %v62
  %v401 = vunpack.c.l.b16 %v63
  %v402 = vunpack.c.l.b16 %v64
  %v403 = vunpack.c.l.b16 %v65
  %v404 = vunpack.c.l.b16 %v66
  %v405 = vunpack.c.l.b16 %v67
  %v406 = vunpack.c.l.b16 %v68
  %v407 = vunpack.c.l.b16 %v69
  %v408 = vunpack.c.l.b16 %v70
  %v409 = vunpack.c.l.b16 %v71
  %v410 = vunpack.c.l.b16 %v72
  %v411 = vunpack.c.l.b16 %v73
  %v412 = vunpack.c.l.b16 %v74
  %v413 = vunpack.c.l.b16 %v75
  %v414 = vunpack.c.l.b16 %v76
  %v415 = vunpack.c.l.b16 %v77
  %v416 = vunpack.c.l.b16 %v78
  %v417 = vunpack.c.l.b16 %v79
  %v418 = vunpack.c.l.b16 %v80
  %v419 = vunpack.c.l.b16 %v81
  %v420 = vunpack.c.l.b16 %v82
  %v421 = vunpack.c.l.b16 %v83
  %v422 = vunpack.c.l.b16 %v84
  %v423 = vunpack.c.l.b16 %v85
  %v424 = vunpack.c.l.b16 %v86
  %v425 = vunpack.c.l.b16 %v87
  %v426 = vunpack.c.l.b16 %v88
  %v427 = vunpack.c.l.b16 %v89
  %v428 = vunpack.c.l.b16 %v90
  %v429 = vunpack.c.l.b16 %v91
  %v430 = vunpack.c.l.b16 %v92
  %v431 = vunpack.c.l.b16 %v93
  %v432 = vunpack.c.l.b16 %v94
  %v433 = vunpack.c.l.b16 %v95
  %v434 = vunpack.c.l.b16 %v96
  %v435 = vunpack.c.l.b16 %v97
  %v436 = vunpack.c.l.b16 %v98
  %v437 = vunpack.c.l.b16 %v99
  %v438 = vunpack.c.l.b16 %v100
  %v439 = vunpack.c.l.b16 %v101
  %v440 = vunpack.c.l.b16 %v102
  %v441 = vunpack.c.l.b16 %v103
  %v442 = vunpack.c.l.b16 %v104
  %v443 = vunpack.c.l.b16 %v105
  %v444 = vunpack.c.l.b16 %v106
  %v445 = vunpack.c.l.b16 %v107
  %v446 = vunpack.c.l.b16 %v108
  %v447 = vunpack.c.l.b16 %v109
  %v448 = vunpack.c.l.b16 %v110
  %v449 = vunpack.c.l.b16 %v111
  %v450 = vunpack.c.l.b16 %v112
  %v451 = vunpack.c.l.b16 %v113
  %v452 = vunpack.c.l.b16 %v114
  %v453 = vunpack.c.l.b16 %v115
  %v454 = vunpack.c.l.b16 %v116
  %v455 = vunpack.c.l.b16 %v117
  %v456 = vunpack.c.l.b16 %v118
  %v457 = vunpack.c.l.b16 %v119
  %v458 = vunpack.c.l.b16 %v120
  %v459 = vunpack.c.l.b16 %v121
  %v460 = vunpack.c.l.b16 %v122
  %v461 = vunpack.c.l.b16 %v123
  %v462 = vunpack.c.l.b16 %v124
  %v463 = vunpack.c.l.b16 %v125
  %v464 = vunpack.c.l.b16 %v126
  %v465 = vunpack.c.l.b16 %v127
  %v466 = vunpack.c.l.b16 %v128
  %v467 = vunpack.c.l.b16 %v129
  %v468 = vunpack.c.l.b16 %v130
  %v469 = vunpack.c.l.b16 %v131
  %v470 = vunpack.c.l.b16 %v132
  %v471 = vunpack.c.l.b16 %v133
  %v472 = vunpack.c.l.b16 %v134
  %v473 = vunpack.c.l.b16 %v135
  %v474 = vunpack.c.l.b16 %v136
  %v475 = vunpack.c.l.b16 %v137
  %v476 = vunpack.c.l.b16 %v138
  %v477 = vunpack.c.l.b16 %v139
  %v478 = vunpack.c.l.b16 %v140
  %v479 = vunpack.c.l.b16 %v141
  %v480 = vunpack.c.l.b16 %v142
  %v481 = vunpack.c.l.b16 %v143
  %v482 = vunpack.c.l.b16 %v144
  %v483 = vunpack.c.l.b16 %v145
  %v484 = vunpack.c.l.b16 %v146
  %v485 = vunpack.c.l.b16 %v147
  %v486 = vunpack.c.l.b16 %v148
  %v487 = vunpack.c.l.b16 %v149
  %v488 = vunpack.c.l.b16 %v150
  %v489 = vunpack.c.l.b16 %v151
  %v490 = vunpack.c.l.b16 %v152
  %v491 = vunpack.c.l.b16 %v153
  %v492 = vunpack.c.l.b16 %v154
  %v493 = vunpack.c.l.b16 %v155
  %v494 = vunpack.c.l.b16 %v156
  %v495 = vunpack.c.l.b16 %v157
  %v496 = vpack.c.b16 %v369, %v368
  %v497 = vpack.c.b16 %v371, %v370
  %v498 = vpack.c.b16 %v373, %v372
  %v499 = vpack.c.b16 %v375, %v374
  %v500 = vpack.c.b16 %v377, %v376
  %v501 = vpack.c.b16 %v379, %v378
  %v502 = vpack.c.b16 %v381, %v380
  %v503 = vpack.c.b16 %v383, %v382
  %v504 = vpack.c.b16 %v385, %v384
  %v505 = vpack.c.b16 %v387, %v386
  %v506 = vpack.c.b16 %v389, %v388
  %v507 = vpack.c.b16 %v391, %v390
  %v508 = vpack.c.b16 %v393, %v392
  %v509 = vpack.c.b16 %v395, %v394
  %v510 = vpack.c.b16 %v397, %v396
  %v511 = vpack.c.b16 %v399, %v398
  %v512 = vpack.c.b16 %v401, %v400
  %v513 = vpack.c.b16 %v403, %v402
  %v514 = vpack.c.b16 %v405, %v404
  %v515 = vpack.c.b16 %v407, %v406
  %v516 = vpack.c.b16 %v409, %v408
  %v517 = vpack.c.b16 %v411, %v410
  %v518 = vpack.c.b16 %v413, %v412
  %v519 = vpack.c.b16 %v415, %v414
  %v520 = vpack.c.b16 %v417, %v416
  %v521 = vpack.c.b16 %v419, %v418
  %v522 = vpack.c.b16 %v421, %v420
  %v523 = vpack.c.b16 %v423, %v422
  %v524 = vpack.c.b16 %v425, %v424
  %v525 = vpack.c.b16 %v427, %v426
  %v526 = vpack.c.b16 %v429, %v428
  %v527 = vpack.c.b16 %v431, %v430
  %v528 = vpack.c.b16 %v433, %v432
  %v529 = vpack.c.b16 %v435, %v434
  %v530 = vpack.c.b16 %v437, %v436
  %v531 = vpack.c.b16 %v439, %v438
  %v532 = vpack.c.b16 %v441, %v440
  %v533 = vpack.c.b16 %v443, %v442
  %v534 = vpack.c.b16 %v445, %v444
  %v535 = vpack.c.b16 %v447, %v446
  %v536 = vpack.c.b16 %v449, %v448
  %v537 = vpack.c.b16 %v451, %v450
  %v538 = vpack.c.b16 %v453, %v452
  %v539 = vpack.c.b16 %v455, %v454
  %v540 = vpack.c.b16 %v457, %v456
  %v541 = vpack.c.b16 %v459, %v458
  %v542 = vpack.c.b16 %v461, %v460
  %v543 = vpack.c.b16 %v463, %v462
  %v544 = vpack.c.b16 %v465, %v464
  %v545 = vpack.c.b16 %v467, %v466
  %v546 = vpack.c.b16 %v469, %v468
  %v547 = vpack.c.b16 %v471, %v470
  %v548 = vpack.c.b16 %v473, %v472
  %v549 = vpack.c.b16 %v475, %v474
  %v550 = vpack.c.b16 %v477, %v476
  %v551 = vpack.c.b16 %v479, %v478
  %v552 = vpack.c.b16 %v481, %v480
  %v553 = vpack.c.b16 %v483, %v482
  %v554 = vpack.c.b16 %v485, %v484
  %v555 = vpack.c.b16 %v487, %v486
  %v556 = vpack.c.b16 %v489, %v488
  %v557 = vpack.c.b16 %v491, %v490
  %v558 = vpack.c.b16 %v493, %v492
  %v559 = vpack.c.b16 %v495, %v494
  %624 = vmatpush.bf16.msra.mxu0 %v503
  %625 = vmatpush.bf16.msra.mxu0 %v502
  %626 = vmatpush.bf16.msra.mxu0 %v501
  %627 = vmatpush.bf16.msra.mxu0 %v500
  %628 = vmatpush.bf16.msra.mxu0 %v499
  %629 = vmatpush.bf16.msra.mxu0 %v498
  %630 = vmatpush.bf16.msra.mxu0 %v497
  %631 = vmatpush.bf16.msra.mxu0 %v496
  %632 = vmatmul.bf16.gmra.mxu0 %v208
  %v633 = vpop.f32.mrf.mxu0
  %v634 = vadd.f32 %v159, %v633
  %v635 = vpop.f32.mrf.mxu0
  %v636 = vadd.f32 %v159, %v635
  %637 = vmatmul.bf16.gmra.mxu0 %v216
  %v638 = vpop.f32.mrf.mxu0
  %v639 = vadd.f32 %v159, %v638
  %v640 = vpop.f32.mrf.mxu0
  %v641 = vadd.f32 %v159, %v640
  %642 = vdwg.mxu0
  %643 = vmatpush.bf16.msra.mxu0 %v511
  %644 = vmatpush.bf16.msra.mxu0 %v510
  %645 = vmatpush.bf16.msra.mxu0 %v509
  %646 = vmatpush.bf16.msra.mxu0 %v508
  %647 = vmatpush.bf16.msra.mxu0 %v507
  %648 = vmatpush.bf16.msra.mxu0 %v506
  %649 = vmatpush.bf16.msra.mxu0 %v505
  %650 = vmatpush.bf16.msra.mxu0 %v504
  %651 = vmatmul.bf16.gmra.mxu0 %v209
  %v652 = vpop.f32.mrf.mxu0
  %v653 = vadd.f32 %v634, %v652
  %v654 = vpop.f32.mrf.mxu0
  %v655 = vadd.f32 %v636, %v654
  %656 = vmatmul.bf16.gmra.mxu0 %v217
  %v657 = vpop.f32.mrf.mxu0
  %v658 = vadd.f32 %v639, %v657
  %v659 = vpop.f32.mrf.mxu0
  %v660 = vadd.f32 %v641, %v659
  %661 = vdwg.mxu0
  %662 = vmatpush.bf16.msra.mxu0 %v519
  %663 = vmatpush.bf16.msra.mxu0 %v518
  %664 = vmatpush.bf16.msra.mxu0 %v517
  %665 = vmatpush.bf16.msra.mxu0 %v516
  %666 = vmatpush.bf16.msra.mxu0 %v515
  %667 = vmatpush.bf16.msra.mxu0 %v514
  %668 = vmatpush.bf16.msra.mxu0 %v513
  %669 = vmatpush.bf16.msra.mxu0 %v512
  %670 = vmatmul.bf16.gmra.mxu0 %v210
  %v671 = vpop.f32.mrf.mxu0
  %v672 = vadd.f32 %v653, %v671
  %v673 = vpop.f32.mrf.mxu0
  %v674 = vadd.f32 %v655, %v673
  %675 = vmatmul.bf16.gmra.mxu0 %v218
  %v676 = vpop.f32.mrf.mxu0
  %v677 = vadd.f32 %v658, %v676
  %v678 = vpop.f32.mrf.mxu0
  %v679 = vadd.f32 %v660, %v678
  %680 = vdwg.mxu0
  %681 = vmatpush.bf16.msra.mxu0 %v527
  %682 = vmatpush.bf16.msra.mxu0 %v526
  %683 = vmatpush.bf16.msra.mxu0 %v525
  %684 = vmatpush.bf16.msra.mxu0 %v524
  %685 = vmatpush.bf16.msra.mxu0 %v523
  %686 = vmatpush.bf16.msra.mxu0 %v522
  %687 = vmatpush.bf16.msra.mxu0 %v521
  %688 = vmatpush.bf16.msra.mxu0 %v520
  %689 = vmatmul.bf16.gmra.mxu0 %v211
  %v690 = vpop.f32.mrf.mxu0
  %v691 = vadd.f32 %v672, %v690
  %v692 = vpop.f32.mrf.mxu0
  %v693 = vadd.f32 %v674, %v692
  %694 = vmatmul.bf16.gmra.mxu0 %v219
  %v695 = vpop.f32.mrf.mxu0
  %v696 = vadd.f32 %v677, %v695
  %v697 = vpop.f32.mrf.mxu0
  %v698 = vadd.f32 %v679, %v697
  %699 = vdwg.mxu0
  %700 = vmatpush.bf16.msra.mxu0 %v535
  %701 = vmatpush.bf16.msra.mxu0 %v534
  %702 = vmatpush.bf16.msra.mxu0 %v533
  %703 = vmatpush.bf16.msra.mxu0 %v532
  %704 = vmatpush.bf16.msra.mxu0 %v531
  %705 = vmatpush.bf16.msra.mxu0 %v530
  %706 = vmatpush.bf16.msra.mxu0 %v529
  %707 = vmatpush.bf16.msra.mxu0 %v528
  %708 = vmatmul.bf16.gmra.mxu0 %v212
  %v709 = vpop.f32.mrf.mxu0
  %v710 = vadd.f32 %v691, %v709
  %v711 = vpop.f32.mrf.mxu0
  %v712 = vadd.f32 %v693, %v711
  %713 = vmatmul.bf16.gmra.mxu0 %v220
  %v714 = vpop.f32.mrf.mxu0
  %v715 = vadd.f32 %v696, %v714
  %v716 = vpop.f32.mrf.mxu0
  %v717 = vadd.f32 %v698, %v716
  %718 = vdwg.mxu0
  %719 = vmatpush.bf16.msra.mxu0 %v543
  %720 = vmatpush.bf16.msra.mxu0 %v542
  %721 = vmatpush.bf16.msra.mxu0 %v541
  %722 = vmatpush.bf16.msra.mxu0 %v540
  %723 = vmatpush.bf16.msra.mxu0 %v539
  %724 = vmatpush.bf16.msra.mxu0 %v538
  %725 = vmatpush.bf16.msra.mxu0 %v537
  %726 = vmatpush.bf16.msra.mxu0 %v536
  %727 = vmatmul.bf16.gmra.mxu0 %v213
  %v728 = vpop.f32.mrf.mxu0
  %v729 = vadd.f32 %v710, %v728
  %v730 = vpop.f32.mrf.mxu0
  %v731 = vadd.f32 %v712, %v730
  %732 = vmatmul.bf16.gmra.mxu0 %v221
  %v733 = vpop.f32.mrf.mxu0
  %v734 = vadd.f32 %v715, %v733
  %v735 = vpop.f32.mrf.mxu0
  %v736 = vadd.f32 %v717, %v735
  %737 = vdwg.mxu0
  %738 = vmatpush.bf16.msra.mxu0 %v551
  %739 = vmatpush.bf16.msra.mxu0 %v550
  %740 = vmatpush.bf16.msra.mxu0 %v549
  %741 = vmatpush.bf16.msra.mxu0 %v548
  %742 = vmatpush.bf16.msra.mxu0 %v547
  %743 = vmatpush.bf16.msra.mxu0 %v546
  %744 = vmatpush.bf16.msra.mxu0 %v545
  %745 = vmatpush.bf16.msra.mxu0 %v544
  %746 = vmatmul.bf16.gmra.mxu0 %v214
  %v747 = vpop.f32.mrf.mxu0
  %v748 = vadd.f32 %v729, %v747
  %v749 = vpop.f32.mrf.mxu0
  %v750 = vadd.f32 %v731, %v749
  %751 = vmatmul.bf16.gmra.mxu0 %v222
  %v752 = vpop.f32.mrf.mxu0
  %v753 = vadd.f32 %v734, %v752
  %v754 = vpop.f32.mrf.mxu0
  %v755 = vadd.f32 %v736, %v754
  %756 = vdwg.mxu0
  %757 = vmatpush.bf16.msra.mxu0 %v559
  %758 = vmatpush.bf16.msra.mxu0 %v558
  %759 = vmatpush.bf16.msra.mxu0 %v557
  %760 = vmatpush.bf16.msra.mxu0 %v556
  %761 = vmatpush.bf16.msra.mxu0 %v555
  %762 = vmatpush.bf16.msra.mxu0 %v554
  %763 = vmatpush.bf16.msra.mxu0 %v553
  %764 = vmatpush.bf16.msra.mxu0 %v552
  %765 = vmatmul.bf16.gmra.mxu0 %v215
  %v766 = vpop.f32.mrf.mxu0
  %v767 = vadd.f32 %v748, %v766
  %v768 = vpop.f32.mrf.mxu0
  %v769 = vadd.f32 %v750, %v768
  %770 = vmatmul.bf16.gmra.mxu0 %v223
  %v771 = vpop.f32.mrf.mxu0
  %v772 = vadd.f32 %v753, %v771
  %v773 = vpop.f32.mrf.mxu0
  %v774 = vadd.f32 %v755, %v773
  %775 = vdwg.mxu0
  %vm776 = vcmp.ge.f32.partialorder %v767, 0.0
  %vm777 = vcmp.ge.f32.partialorder %v769, 0.0
  %vm778 = vcmp.ge.f32.partialorder %v772, 0.0
  %vm779 = vcmp.ge.f32.partialorder %v774, 0.0
  %v780 = vmul.f32 %v767, 0.2
  %v781 = vmul.f32 %v769, 0.2
  %v782 = vmul.f32 %v772, 0.2
  %v783 = vmul.f32 %v774, 0.2
  %v784 = vsel %vm776, %v767, %v780
  %v785 = vsel %vm777, %v769, %v781
  %v786 = vsel %vm778, %v772, %v782
  %v787 = vsel %vm779, %v774, %v783
  %v788 = vadd.f32 %v784, %v785
  %v789 = vadd.f32 %v788, %v786
  %v790 = vadd.f32 %v789, %v787
  %v791 = vrot.slane %v790, 4
  %v792 = vadd.f32 %v790, %v791
  %v793 = vrot.slane %v792, 2
  %v794 = vadd.f32 %v792, %v793
  %v795 = vrot.slane %v794, 1
  %v796 = vadd.f32 %v794, %v795
  %v797 = vrcp.pop 32.0
  %v798 = vmul.f32 32.0, %v797
  %v799 = vsub.f32 1.0, %v798
  %v800 = vmul.f32 %v797, %v799
  %v801 = vadd.f32 %v797, %v800
  %vm802 = vweird.f32 %v797
  %v803 = vsel %vm802, %v797, %v801
  %v804 = vmul.f32 %v796, %v803
  %v805 = vsub.f32 %v784, %v804
  %v806 = vsub.f32 %v785, %v804
  %v807 = vsub.f32 %v786, %v804
  %v808 = vsub.f32 %v787, %v804
  %v809 = vmul.f32 %v805, %v805
  %v810 = vmul.f32 %v806, %v806
  %v811 = vmul.f32 %v807, %v807
  %v812 = vmul.f32 %v808, %v808
  %v813 = vadd.f32 %v809, %v810
  %v814 = vadd.f32 %v813, %v811
  %v815 = vadd.f32 %v814, %v812
  %v816 = vrot.slane %v815, 4
  %v817 = vadd.f32 %v815, %v816
  %v818 = vrot.slane %v817, 2
  %v819 = vadd.f32 %v817, %v818
  %v820 = vrot.slane %v819, 1
  %v821 = vadd.f32 %v819, %v820
  %v822 = vmul.f32 %v821, %v803
  %v823 = vadd.f32 %v822, 1e-05
  %v824 = vrsqrt.pop %v823
  %v825 = vmul.f32 %v824, %v823
  %v826 = vmul.f32 %v825, %v824
  %v827 = vmul.f32 0.5, %v826
  %v828 = vsub.f32 1.5, %v827
  %v829 = vmul.f32 %v824, %v828
  %vm830 = vweird.f32 %v823
  %vm831 = vweird.f32 %v824
  %vm832 = vmor %vm830, %vm831
  %v833 = vsel %vm832, %v824, %v829
  %v834 = vmul.f32 %v805, %v833
  %v835 = vmul.f32 %v806, %v833
  %v836 = vmul.f32 %v807, %v833
  %v837 = vmul.f32 %v808, %v833
  %v838 = vld [vmem:[%s2 + $0x1] sm:$0x1]
  %v839 = vperm.slane %v838, 0
  %v840 = vmul.f32 %v834, %v839
  %v841 = vmul.f32 %v835, %v839
  %v842 = vmul.f32 %v836, %v839
  %v843 = vmul.f32 %v837, %v839
  %v844 = vld [vmem:[%s2 + $0x2] sm:$0x1]
  %v845 = vperm.slane %v844, 0
  %v846 = vadd.f32 %v840, %v845
  %v847 = vadd.f32 %v841, %v845
  %v848 = vadd.f32 %v842, %v845
  %v849 = vadd.f32 %v843, %v845
  %850 = vst [vmem:[%s3] sm:$0xff] %v846
  %851 = vst [vmem:[%s3 + $0x8] sm:$0xff] %v847
  %852 = vst [vmem:[%s3 + $0x10] sm:$0xff] %v848
  %853 = vst [vmem:[%s3 + $0x18] sm:$0xff] %v849
  // Predicated region
  $region14: #{net_forward.9} parent=0 // pred_check
    _
  $region15: #{net_forward.9} parent=0 // pred_check_branch
    %855 = sbr.rel (0) target = $region17
  $region16: #{net_forward.9} parent=0 // pred_region
    _
  $region17: #{net_forward.9} parent=0 // pred_fallthru
    _
  // Predicated region
  $region18: #{net_forward.9} parent=0 // pred_check
    _
  $region19: #{net_forward.9} parent=0 // pred_check_branch
    %857 = sbr.rel (0) target = $region21
  $region20: #{net_forward.9} parent=0 // pred_region
    _
  $region21: #{net_forward.9} parent=0 // pred_fallthru
    _

// kernel: net_forward.10
$region0: #{net_forward.10}
  #allocation0 [shape = 'u32[]', space=smem, size = 0x4, offset = 0x4, fixed_abs, tag = 'smem constant byte address 0x4 - core index']
  #allocation1 [shape = 'u32[72,128]{1,0:T(1,128)}', space=vmem, size = 0x9000, scoped, tag = 'internal scratch']
  %s0 = inlined_call_operand.vmem [shape: bf16[8,1152], index: 0, kind: input, shape index: {}]
  %s1 = inlined_call_operand.vmem [shape: bf16[1152,256], index: 1, kind: input, shape index: {}]
  %s2 = inlined_call_operand.vmem [shape: f32[3,256], index: 2, kind: input, shape index: {}]
  %s3 = inlined_call_operand.vmem [shape: f32[8,256], index: 3, kind: output, shape index: {}]
  %s4 = sld [smem:[#allocation0]]
  $region22: #{net_forward.10} parent=0
    _
  %s6 = ssub.s32 1, %s4
  %s7 = scalar_select 0, %s6, %s4
  // Predicated region
  $region2: #{net_forward.10} parent=0 // pred_check
    _
  $region3: #{net_forward.10} parent=0 // pred_check_branch
    %9 = sbr.rel (0) target = $region5
  $region4: #{net_forward.10} parent=0 // pred_region
    _
  $region5: #{net_forward.10} parent=0 // pred_fallthru
    _
  // Predicated region
  $region6: #{net_forward.10} parent=0 // pred_check
    _
  $region7: #{net_forward.10} parent=0 // pred_check_branch
    %11 = sbr.rel (0) target = $region9
  $region8: #{net_forward.10} parent=0 // pred_region
    _
  $region9: #{net_forward.10} parent=0 // pred_fallthru
    _
  // Predicated region
  $region10: #{net_forward.10} parent=0 // pred_check
    _
  $region11: #{net_forward.10} parent=0 // pred_check_branch
    %13 = sbr.rel (0) target = $region13
  $region12: #{net_forward.10} parent=0 // pred_region
    _
  $region13: #{net_forward.10} parent=0 // pred_fallthru
    _
  %v14 = vld [vmem:[%s0] sm:$0xff]
  %v15 = vld [vmem:[%s0 + $0x8] sm:$0xff]
  %v16 = vld [vmem:[%s0 + $0x10] sm:$0xff]
  %v17 = vld [vmem:[%s0 + $0x18] sm:$0xff]
  %v18 = vld [vmem:[%s0 + $0x20] sm:$0xf]
  %v19 = vld [vmem:[%s1] sm:$0xff]
  %v20 = vld [vmem:[%s1 + $0x8] sm:$0xff]
  %v21 = vld [vmem:[%s1 + $0x10] sm:$0xff]
  %v22 = vld [vmem:[%s1 + $0x18] sm:$0xff]
  %v23 = vld [vmem:[%s1 + $0x20] sm:$0xff]
  %v24 = vld [vmem:[%s1 + $0x28] sm:$0xff]
  %v25 = vld [vmem:[%s1 + $0x30] sm:$0xff]
  %v26 = vld [vmem:[%s1 + $0x38] sm:$0xff]
  %v27 = vld [vmem:[%s1 + $0x40] sm:$0xff]
  %v28 = vld [vmem:[%s1 + $0x48] sm:$0xff]
  %v29 = vld [vmem:[%s1 + $0x50] sm:$0xff]
  %v30 = vld [vmem:[%s1 + $0x58] sm:$0xff]
  %v31 = vld [vmem:[%s1 + $0x60] sm:$0xff]
  %v32 = vld [vmem:[%s1 + $0x68] sm:$0xff]
  %v33 = vld [vmem:[%s1 + $0x70] sm:$0xff]
  %v34 = vld [vmem:[%s1 + $0x78] sm:$0xff]
  %v35 = vld [vmem:[%s1 + $0x80] sm:$0xff]
  %v36 = vld [vmem:[%s1 + $0x88] sm:$0xff]
  %v37 = vld [vmem:[%s1 + $0x90] sm:$0xff]
  %v38 = vld [vmem:[%s1 + $0x98] sm:$0xff]
  %v39 = vld [vmem:[%s1 + $0xa0] sm:$0xff]
  %v40 = vld [vmem:[%s1 + $0xa8] sm:$0xff]
  %v41 = vld [vmem:[%s1 + $0xb0] sm:$0xff]
  %v42 = vld [vmem:[%s1 + $0xb8] sm:$0xff]
  %v43 = vld [vmem:[%s1 + $0xc0] sm:$0xff]
  %v44 = vld [vmem:[%s1 + $0xc8] sm:$0xff]
  %v45 = vld [vmem:[%s1 + $0xd0] sm:$0xff]
  %v46 = vld [vmem:[%s1 + $0xd8] sm:$0xff]
  %v47 = vld [vmem:[%s1 + $0xe0] sm:$0xff]
  %v48 = vld [vmem:[%s1 + $0xe8] sm:$0xff]
  %v49 = vld [vmem:[%s1 + $0xf0] sm:$0xff]
  %v50 = vld [vmem:[%s1 + $0xf8] sm:$0xff]
  %v51 = vld [vmem:[%s1 + $0x100] sm:$0xff]
  %v52 = vld [vmem:[%s1 + $0x108] sm:$0xff]
  %v53 = vld [vmem:[%s1 + $0x110] sm:$0xff]
  %v54 = vld [vmem:[%s1 + $0x118] sm:$0xff]
  %v55 = vld [vmem:[%s1 + $0x120] sm:$0xff]
  %v56 = vld [vmem:[%s1 + $0x128] sm:$0xff]
  %v57 = vld [vmem:[%s1 + $0x130] sm:$0xff]
  %v58 = vld [vmem:[%s1 + $0x138] sm:$0xff]
  %v59 = vld [vmem:[%s1 + $0x140] sm:$0xff]
  %v60 = vld [vmem:[%s1 + $0x148] sm:$0xff]
  %v61 = vld [vmem:[%s1 + $0x150] sm:$0xff]
  %v62 = vld [vmem:[%s1 + $0x158] sm:$0xff]
  %v63 = vld [vmem:[%s1 + $0x160] sm:$0xff]
  %v64 = vld [vmem:[%s1 + $0x168] sm:$0xff]
  %v65 = vld [vmem:[%s1 + $0x170] sm:$0xff]
  %v66 = vld [vmem:[%s1 + $0x178] sm:$0xff]
  %v67 = vld [vmem:[%s1 + $0x180] sm:$0xff]
  %v68 = vld [vmem:[%s1 + $0x188] sm:$0xff]
  %v69 = vld [vmem:[%s1 + $0x190] sm:$0xff]
  %v70 = vld [vmem:[%s1 + $0x198] sm:$0xff]
  %v71 = vld [vmem:[%s1 + $0x1a0] sm:$0xff]
  %v72 = vld [vmem:[%s1 + $0x1a8] sm:$0xff]
  %v73 = vld [vmem:[%s1 + $0x1b0] sm:$0xff]
  %v74 = vld [vmem:[%s1 + $0x1b8] sm:$0xff]
  %v75 = vld [vmem:[%s1 + $0x1c0] sm:$0xff]
  %v76 = vld [vmem:[%s1 + $0x1c8] sm:$0xff]
  %v77 = vld [vmem:[%s1 + $0x1d0] sm:$0xff]
  %v78 = vld [vmem:[%s1 + $0x1d8] sm:$0xff]
  %v79 = vld [vmem:[%s1 + $0x1e0] sm:$0xff]
  %v80 = vld [vmem:[%s1 + $0x1e8] sm:$0xff]
  %v81 = vld [vmem:[%s1 + $0x1f0] sm:$0xff]
  %v82 = vld [vmem:[%s1 + $0x1f8] sm:$0xff]
  %v83 = vld [vmem:[%s1 + $0x200] sm:$0xff]
  %v84 = vld [vmem:[%s1 + $0x208] sm:$0xff]
  %v85 = vld [vmem:[%s1 + $0x210] sm:$0xff]
  %v86 = vld [vmem:[%s1 + $0x218] sm:$0xff]
  %v87 = vld [vmem:[%s1 + $0x220] sm:$0xff]
  %v88 = vld [vmem:[%s1 + $0x228] sm:$0xff]
  %v89 = vld [vmem:[%s1 + $0x230] sm:$0xff]
  %v90 = vld [vmem:[%s1 + $0x238] sm:$0xff]
  %v91 = vld [vmem:[%s1 + $0x240] sm:$0xff]
  %v92 = vld [vmem:[%s1 + $0x248] sm:$0xff]
  %v93 = vld [vmem:[%s1 + $0x250] sm:$0xff]
  %v94 = vld [vmem:[%s1 + $0x258] sm:$0xff]
  %v95 = vld [vmem:[%s1 + $0x260] sm:$0xff]
  %v96 = vld [vmem:[%s1 + $0x268] sm:$0xff]
  %v97 = vld [vmem:[%s1 + $0x270] sm:$0xff]
  %v98 = vld [vmem:[%s1 + $0x278] sm:$0xff]
  %v99 = vld [vmem:[%s1 + $0x280] sm:$0xff]
  %v100 = vld [vmem:[%s1 + $0x288] sm:$0xff]
  %v101 = vld [vmem:[%s1 + $0x290] sm:$0xff]
  %v102 = vld [vmem:[%s1 + $0x298] sm:$0xff]
  %v103 = vld [vmem:[%s1 + $0x2a0] sm:$0xff]
  %v104 = vld [vmem:[%s1 + $0x2a8] sm:$0xff]
  %v105 = vld [vmem:[%s1 + $0x2b0] sm:$0xff]
  %v106 = vld [vmem:[%s1 + $0x2b8] sm:$0xff]
  %v107 = vld [vmem:[%s1 + $0x2c0] sm:$0xff]
  %v108 = vld [vmem:[%s1 + $0x2c8] sm:$0xff]
  %v109 = vld [vmem:[%s1 + $0x2d0] sm:$0xff]
  %v110 = vld [vmem:[%s1 + $0x2d8] sm:$0xff]
  %v111 = vld [vmem:[%s1 + $0x2e0] sm:$0xff]
  %v112 = vld [vmem:[%s1 + $0x2e8] sm:$0xff]
  %v113 = vld [vmem:[%s1 + $0x2f0] sm:$0xff]
  %v114 = vld [vmem:[%s1 + $0x2f8] sm:$0xff]
  %v115 = vld [vmem:[%s1 + $0x300] sm:$0xff]
  %v116 = vld [vmem:[%s1 + $0x308] sm:$0xff]
  %v117 = vld [vmem:[%s1 + $0x310] sm:$0xff]
  %v118 = vld [vmem:[%s1 + $0x318] sm:$0xff]
  %v119 = vld [vmem:[%s1 + $0x320] sm:$0xff]
  %v120 = vld [vmem:[%s1 + $0x328] sm:$0xff]
  %v121 = vld [vmem:[%s1 + $0x330] sm:$0xff]
  %v122 = vld [vmem:[%s1 + $0x338] sm:$0xff]
  %v123 = vld [vmem:[%s1 + $0x340] sm:$0xff]
  %v124 = vld [vmem:[%s1 + $0x348] sm:$0xff]
  %v125 = vld [vmem:[%s1 + $0x350] sm:$0xff]
  %v126 = vld [vmem:[%s1 + $0x358] sm:$0xff]
  %v127 = vld [vmem:[%s1 + $0x360] sm:$0xff]
  %v128 = vld [vmem:[%s1 + $0x368] sm:$0xff]
  %v129 = vld [vmem:[%s1 + $0x370] sm:$0xff]
  %v130 = vld [vmem:[%s1 + $0x378] sm:$0xff]
  %v131 = vld [vmem:[%s1 + $0x380] sm:$0xff]
  %v132 = vld [vmem:[%s1 + $0x388] sm:$0xff]
  %v133 = vld [vmem:[%s1 + $0x390] sm:$0xff]
  %v134 = vld [vmem:[%s1 + $0x398] sm:$0xff]
  %v135 = vld [vmem:[%s1 + $0x3a0] sm:$0xff]
  %v136 = vld [vmem:[%s1 + $0x3a8] sm:$0xff]
  %v137 = vld [vmem:[%s1 + $0x3b0] sm:$0xff]
  %v138 = vld [vmem:[%s1 + $0x3b8] sm:$0xff]
  %v139 = vld [vmem:[%s1 + $0x3c0] sm:$0xff]
  %v140 = vld [vmem:[%s1 + $0x3c8] sm:$0xff]
  %v141 = vld [vmem:[%s1 + $0x3d0] sm:$0xff]
  %v142 = vld [vmem:[%s1 + $0x3d8] sm:$0xff]
  %v143 = vld [vmem:[%s1 + $0x3e0] sm:$0xff]
  %v144 = vld [vmem:[%s1 + $0x3e8] sm:$0xff]
  %v145 = vld [vmem:[%s1 + $0x3f0] sm:$0xff]
  %v146 = vld [vmem:[%s1 + $0x3f8] sm:$0xff]
  %v147 = vld [vmem:[%s1 + $0x400] sm:$0xff]
  %v148 = vld [vmem:[%s1 + $0x408] sm:$0xff]
  %v149 = vld [vmem:[%s1 + $0x410] sm:$0xff]
  %v150 = vld [vmem:[%s1 + $0x418] sm:$0xff]
  %v151 = vld [vmem:[%s1 + $0x420] sm:$0xff]
  %v152 = vld [vmem:[%s1 + $0x428] sm:$0xff]
  %v153 = vld [vmem:[%s1 + $0x430] sm:$0xff]
  %v154 = vld [vmem:[%s1 + $0x438] sm:$0xff]
  %v155 = vld [vmem:[%s1 + $0x440] sm:$0xff]
  %v156 = vld [vmem:[%s1 + $0x448] sm:$0xff]
  %v157 = vld [vmem:[%s1 + $0x450] sm:$0xff]
  %v158 = vld [vmem:[%s1 + $0x458] sm:$0xff]
  %v159 = vld [vmem:[%s1 + $0x460] sm:$0xff]
  %v160 = vld [vmem:[%s1 + $0x468] sm:$0xff]
  %v161 = vld [vmem:[%s1 + $0x470] sm:$0xff]
  %v162 = vld [vmem:[%s1 + $0x478] sm:$0xff]
  %v163 = vld [vmem:[%s2] ss:$4 sm:$0x3]
  %v165 = vperm.slane %v163, 0
  %v166 = vperm.slane %v163, 1
  %v174 = vunpack.c.l.b16 %v14
  %v175 = vunpack.c.h.b16 %v14
  %v176 = vunpack.c.l.b16 %v15
  %v177 = vunpack.c.h.b16 %v15
  %v178 = vunpack.c.l.b16 %v16
  %v179 = vunpack.c.h.b16 %v16
  %v180 = vunpack.c.l.b16 %v17
  %v181 = vunpack.c.h.b16 %v17
  %v182 = vunpack.c.l.b16 %v18
  %v183 = vpack.c.b16 %v174, %v174
  %v184 = vpack.c.b16 %v175, %v175
  %v185 = vpack.c.b16 %v176, %v176
  %v186 = vpack.c.b16 %v177, %v177
  %v187 = vpack.c.b16 %v178, %v178
  %v188 = vpack.c.b16 %v179, %v179
  %v189 = vpack.c.b16 %v180, %v180
  %v190 = vpack.c.b16 %v181, %v181
  %v191 = vpack.c.b16 %v182, %v182
  %v345 = vunpack.c.l.b16 %v19
  %v346 = vunpack.c.h.b16 %v19
  %v347 = vunpack.c.l.b16 %v20
  %v348 = vunpack.c.h.b16 %v20
  %v349 = vunpack.c.l.b16 %v21
  %v350 = vunpack.c.h.b16 %v21
  %v351 = vunpack.c.l.b16 %v22
  %v352 = vunpack.c.h.b16 %v22
  %v353 = vunpack.c.l.b16 %v23
  %v354 = vunpack.c.h.b16 %v23
  %v355 = vunpack.c.l.b16 %v24
  %v356 = vunpack.c.h.b16 %v24
  %v357 = vunpack.c.l.b16 %v25
  %v358 = vunpack.c.h.b16 %v25
  %v359 = vunpack.c.l.b16 %v26
  %v360 = vunpack.c.h.b16 %v26
  %v361 = vunpack.c.l.b16 %v27
  %v362 = vunpack.c.h.b16 %v27
  %v363 = vunpack.c.l.b16 %v28
  %v364 = vunpack.c.h.b16 %v28
  %v365 = vunpack.c.l.b16 %v29
  %v366 = vunpack.c.h.b16 %v29
  %v367 = vunpack.c.l.b16 %v30
  %v368 = vunpack.c.h.b16 %v30
  %v369 = vunpack.c.l.b16 %v31
  %v370 = vunpack.c.h.b16 %v31
  %v371 = vunpack.c.l.b16 %v32
  %v372 = vunpack.c.h.b16 %v32
  %v373 = vunpack.c.l.b16 %v33
  %v374 = vunpack.c.h.b16 %v33
  %v375 = vunpack.c.l.b16 %v34
  %v376 = vunpack.c.h.b16 %v34
  %v377 = vunpack.c.l.b16 %v35
  %v378 = vunpack.c.h.b16 %v35
  %v379 = vunpack.c.l.b16 %v36
  %v380 = vunpack.c.h.b16 %v36
  %v381 = vunpack.c.l.b16 %v37
  %v382 = vunpack.c.h.b16 %v37
  %v383 = vunpack.c.l.b16 %v38
  %v384 = vunpack.c.h.b16 %v38
  %v385 = vunpack.c.l.b16 %v39
  %v386 = vunpack.c.h.b16 %v39
  %v387 = vunpack.c.l.b16 %v40
  %v388 = vunpack.c.h.b16 %v40
  %v389 = vunpack.c.l.b16 %v41
  %v390 = vunpack.c.h.b16 %v41
  %v391 = vunpack.c.l.b16 %v42
  %v392 = vunpack.c.h.b16 %v42
  %v393 = vunpack.c.l.b16 %v43
  %v394 = vunpack.c.h.b16 %v43
  %v395 = vunpack.c.l.b16 %v44
  %v396 = vunpack.c.h.b16 %v44
  %v397 = vunpack.c.l.b16 %v45
  %v398 = vunpack.c.h.b16 %v45
  %v399 = vunpack.c.l.b16 %v46
  %v400 = vunpack.c.h.b16 %v46
  %v401 = vunpack.c.l.b16 %v47
  %v402 = vunpack.c.h.b16 %v47
  %v403 = vunpack.c.l.b16 %v48
  %v404 = vunpack.c.h.b16 %v48
  %v405 = vunpack.c.l.b16 %v49
  %v406 = vunpack.c.h.b16 %v49
  %v407 = vunpack.c.l.b16 %v50
  %v408 = vunpack.c.h.b16 %v50
  %v409 = vunpack.c.l.b16 %v51
  %v410 = vunpack.c.h.b16 %v51
  %v411 = vunpack.c.l.b16 %v52
  %v412 = vunpack.c.h.b16 %v52
  %v413 = vunpack.c.l.b16 %v53
  %v414 = vunpack.c.h.b16 %v53
  %v415 = vunpack.c.l.b16 %v54
  %v416 = vunpack.c.h.b16 %v54
  %v417 = vunpack.c.l.b16 %v55
  %v418 = vunpack.c.h.b16 %v55
  %v419 = vunpack.c.l.b16 %v56
  %v420 = vunpack.c.h.b16 %v56
  %v421 = vunpack.c.l.b16 %v57
  %v422 = vunpack.c.h.b16 %v57
  %v423 = vunpack.c.l.b16 %v58
  %v424 = vunpack.c.h.b16 %v58
  %v425 = vunpack.c.l.b16 %v59
  %v426 = vunpack.c.h.b16 %v59
  %v427 = vunpack.c.l.b16 %v60
  %v428 = vunpack.c.h.b16 %v60
  %v429 = vunpack.c.l.b16 %v61
  %v430 = vunpack.c.h.b16 %v61
  %v431 = vunpack.c.l.b16 %v62
  %v432 = vunpack.c.h.b16 %v62
  %v433 = vunpack.c.l.b16 %v63
  %v434 = vunpack.c.h.b16 %v63
  %v435 = vunpack.c.l.b16 %v64
  %v436 = vunpack.c.h.b16 %v64
  %v437 = vunpack.c.l.b16 %v65
  %v438 = vunpack.c.h.b16 %v65
  %v439 = vunpack.c.l.b16 %v66
  %v440 = vunpack.c.h.b16 %v66
  %v441 = vunpack.c.l.b16 %v67
  %v442 = vunpack.c.h.b16 %v67
  %v443 = vunpack.c.l.b16 %v68
  %v444 = vunpack.c.h.b16 %v68
  %v445 = vunpack.c.l.b16 %v69
  %v446 = vunpack.c.h.b16 %v69
  %v447 = vunpack.c.l.b16 %v70
  %v448 = vunpack.c.h.b16 %v70
  %v449 = vunpack.c.l.b16 %v71
  %v450 = vunpack.c.h.b16 %v71
  %v451 = vunpack.c.l.b16 %v72
  %v452 = vunpack.c.h.b16 %v72
  %v453 = vunpack.c.l.b16 %v73
  %v454 = vunpack.c.h.b16 %v73
  %v455 = vunpack.c.l.b16 %v74
  %v456 = vunpack.c.h.b16 %v74
  %v457 = vunpack.c.l.b16 %v75
  %v458 = vunpack.c.h.b16 %v75
  %v459 = vunpack.c.l.b16 %v76
  %v460 = vunpack.c.h.b16 %v76
  %v461 = vunpack.c.l.b16 %v77
  %v462 = vunpack.c.h.b16 %v77
  %v463 = vunpack.c.l.b16 %v78
  %v464 = vunpack.c.h.b16 %v78
  %v465 = vunpack.c.l.b16 %v79
  %v466 = vunpack.c.h.b16 %v79
  %v467 = vunpack.c.l.b16 %v80
  %v468 = vunpack.c.h.b16 %v80
  %v469 = vunpack.c.l.b16 %v81
  %v470 = vunpack.c.h.b16 %v81
  %v471 = vunpack.c.l.b16 %v82
  %v472 = vunpack.c.h.b16 %v82
  %v473 = vunpack.c.l.b16 %v83
  %v474 = vunpack.c.h.b16 %v83
  %v475 = vunpack.c.l.b16 %v84
  %v476 = vunpack.c.h.b16 %v84
  %v477 = vunpack.c.l.b16 %v85
  %v478 = vunpack.c.h.b16 %v85
  %v479 = vunpack.c.l.b16 %v86
  %v480 = vunpack.c.h.b16 %v86
  %v481 = vunpack.c.l.b16 %v87
  %v482 = vunpack.c.h.b16 %v87
  %v483 = vunpack.c.l.b16 %v88
  %v484 = vunpack.c.h.b16 %v88
  %v485 = vunpack.c.l.b16 %v89
  %v486 = vunpack.c.h.b16 %v89
  %v487 = vunpack.c.l.b16 %v90
  %v488 = vunpack.c.h.b16 %v90
  %v489 = vunpack.c.l.b16 %v91
  %v490 = vunpack.c.h.b16 %v91
  %v491 = vunpack.c.l.b16 %v92
  %v492 = vunpack.c.h.b16 %v92
  %v493 = vunpack.c.l.b16 %v93
  %v494 = vunpack.c.h.b16 %v93
  %v495 = vunpack.c.l.b16 %v94
  %v496 = vunpack.c.h.b16 %v94
  %v497 = vunpack.c.l.b16 %v95
  %v498 = vunpack.c.h.b16 %v95
  %v499 = vunpack.c.l.b16 %v96
  %v500 = vunpack.c.h.b16 %v96
  %v501 = vunpack.c.l.b16 %v97
  %v502 = vunpack.c.h.b16 %v97
  %v503 = vunpack.c.l.b16 %v98
  %v504 = vunpack.c.h.b16 %v98
  %v505 = vunpack.c.l.b16 %v99
  %v506 = vunpack.c.h.b16 %v99
  %v507 = vunpack.c.l.b16 %v100
  %v508 = vunpack.c.h.b16 %v100
  %v509 = vunpack.c.l.b16 %v101
  %v510 = vunpack.c.h.b16 %v101
  %v511 = vunpack.c.l.b16 %v102
  %v512 = vunpack.c.h.b16 %v102
  %v513 = vunpack.c.l.b16 %v103
  %v514 = vunpack.c.h.b16 %v103
  %v515 = vunpack.c.l.b16 %v104
  %v516 = vunpack.c.h.b16 %v104
  %v517 = vunpack.c.l.b16 %v105
  %v518 = vunpack.c.h.b16 %v105
  %v519 = vunpack.c.l.b16 %v106
  %v520 = vunpack.c.h.b16 %v106
  %v521 = vunpack.c.l.b16 %v107
  %v522 = vunpack.c.h.b16 %v107
  %v523 = vunpack.c.l.b16 %v108
  %v524 = vunpack.c.h.b16 %v108
  %v525 = vunpack.c.l.b16 %v109
  %v526 = vunpack.c.h.b16 %v109
  %v527 = vunpack.c.l.b16 %v110
  %v528 = vunpack.c.h.b16 %v110
  %v529 = vunpack.c.l.b16 %v111
  %v530 = vunpack.c.h.b16 %v111
  %v531 = vunpack.c.l.b16 %v112
  %v532 = vunpack.c.h.b16 %v112
  %v533 = vunpack.c.l.b16 %v113
  %v534 = vunpack.c.h.b16 %v113
  %v535 = vunpack.c.l.b16 %v114
  %v536 = vunpack.c.h.b16 %v114
  %v537 = vunpack.c.l.b16 %v115
  %v538 = vunpack.c.h.b16 %v115
  %v539 = vunpack.c.l.b16 %v116
  %v540 = vunpack.c.h.b16 %v116
  %v541 = vunpack.c.l.b16 %v117
  %v542 = vunpack.c.h.b16 %v117
  %v543 = vunpack.c.l.b16 %v118
  %v544 = vunpack.c.h.b16 %v118
  %v545 = vunpack.c.l.b16 %v119
  %v546 = vunpack.c.h.b16 %v119
  %v547 = vunpack.c.l.b16 %v120
  %v548 = vunpack.c.h.b16 %v120
  %v549 = vunpack.c.l.b16 %v121
  %v550 = vunpack.c.h.b16 %v121
  %v551 = vunpack.c.l.b16 %v122
  %v552 = vunpack.c.h.b16 %v122
  %v553 = vunpack.c.l.b16 %v123
  %v554 = vunpack.c.h.b16 %v123
  %v555 = vunpack.c.l.b16 %v124
  %v556 = vunpack.c.h.b16 %v124
  %v557 = vunpack.c.l.b16 %v125
  %v558 = vunpack.c.h.b16 %v125
  %v559 = vunpack.c.l.b16 %v126
  %v560 = vunpack.c.h.b16 %v126
  %v561 = vunpack.c.l.b16 %v127
  %v562 = vunpack.c.h.b16 %v127
  %v563 = vunpack.c.l.b16 %v128
  %v564 = vunpack.c.h.b16 %v128
  %v565 = vunpack.c.l.b16 %v129
  %v566 = vunpack.c.h.b16 %v129
  %v567 = vunpack.c.l.b16 %v130
  %v568 = vunpack.c.h.b16 %v130
  %v569 = vunpack.c.l.b16 %v131
  %v570 = vunpack.c.h.b16 %v131
  %v571 = vunpack.c.l.b16 %v132
  %v572 = vunpack.c.h.b16 %v132
  %v573 = vunpack.c.l.b16 %v133
  %v574 = vunpack.c.h.b16 %v133
  %v575 = vunpack.c.l.b16 %v134
  %v576 = vunpack.c.h.b16 %v134
  %v577 = vunpack.c.l.b16 %v135
  %v578 = vunpack.c.h.b16 %v135
  %v579 = vunpack.c.l.b16 %v136
  %v580 = vunpack.c.h.b16 %v136
  %v581 = vunpack.c.l.b16 %v137
  %v582 = vunpack.c.h.b16 %v137
  %v583 = vunpack.c.l.b16 %v138
  %v584 = vunpack.c.h.b16 %v138
  %v585 = vunpack.c.l.b16 %v139
  %v586 = vunpack.c.h.b16 %v139
  %v587 = vunpack.c.l.b16 %v140
  %v588 = vunpack.c.h.b16 %v140
  %v589 = vunpack.c.l.b16 %v141
  %v590 = vunpack.c.h.b16 %v141
  %v591 = vunpack.c.l.b16 %v142
  %v592 = vunpack.c.h.b16 %v142
  %v593 = vunpack.c.l.b16 %v143
  %v594 = vunpack.c.h.b16 %v143
  %v595 = vunpack.c.l.b16 %v144
  %v596 = vunpack.c.h.b16 %v144
  %v597 = vunpack.c.l.b16 %v145
  %v598 = vunpack.c.h.b16 %v145
  %v599 = vunpack.c.l.b16 %v146
  %v600 = vunpack.c.h.b16 %v146
  %v601 = vunpack.c.l.b16 %v147
  %v602 = vunpack.c.h.b16 %v147
  %v603 = vunpack.c.l.b16 %v148
  %v604 = vunpack.c.h.b16 %v148
  %v605 = vunpack.c.l.b16 %v149
  %v606 = vunpack.c.h.b16 %v149
  %v607 = vunpack.c.l.b16 %v150
  %v608 = vunpack.c.h.b16 %v150
  %v609 = vunpack.c.l.b16 %v151
  %v610 = vunpack.c.h.b16 %v151
  %v611 = vunpack.c.l.b16 %v152
  %v612 = vunpack.c.h.b16 %v152
  %v613 = vunpack.c.l.b16 %v153
  %v614 = vunpack.c.h.b16 %v153
  %v615 = vunpack.c.l.b16 %v154
  %v616 = vunpack.c.h.b16 %v154
  %v617 = vunpack.c.l.b16 %v155
  %v618 = vunpack.c.h.b16 %v155
  %v619 = vunpack.c.l.b16 %v156
  %v620 = vunpack.c.h.b16 %v156
  %v621 = vunpack.c.l.b16 %v157
  %v622 = vunpack.c.h.b16 %v157
  %v623 = vunpack.c.l.b16 %v158
  %v624 = vunpack.c.h.b16 %v158
  %v625 = vunpack.c.l.b16 %v159
  %v626 = vunpack.c.h.b16 %v159
  %v627 = vunpack.c.l.b16 %v160
  %v628 = vunpack.c.h.b16 %v160
  %v629 = vunpack.c.l.b16 %v161
  %v630 = vunpack.c.h.b16 %v161
  %v631 = vunpack.c.l.b16 %v162
  %v632 = vunpack.c.h.b16 %v162
  %v633 = vpack.c.b16 %v347, %v345
  %v634 = vpack.c.b16 %v348, %v346
  %v635 = vpack.c.b16 %v351, %v349
  %v636 = vpack.c.b16 %v352, %v350
  %v637 = vpack.c.b16 %v355, %v353
  %v638 = vpack.c.b16 %v356, %v354
  %v639 = vpack.c.b16 %v359, %v357
  %v640 = vpack.c.b16 %v360, %v358
  %v641 = vpack.c.b16 %v363, %v361
  %v642 = vpack.c.b16 %v364, %v362
  %v643 = vpack.c.b16 %v367, %v365
  %v644 = vpack.c.b16 %v368, %v366
  %v645 = vpack.c.b16 %v371, %v369
  %v646 = vpack.c.b16 %v372, %v370
  %v647 = vpack.c.b16 %v375, %v373
  %v648 = vpack.c.b16 %v376, %v374
  %v649 = vpack.c.b16 %v379, %v377
  %v650 = vpack.c.b16 %v380, %v378
  %v651 = vpack.c.b16 %v383, %v381
  %v652 = vpack.c.b16 %v384, %v382
  %v653 = vpack.c.b16 %v387, %v385
  %v654 = vpack.c.b16 %v388, %v386
  %v655 = vpack.c.b16 %v391, %v389
  %v656 = vpack.c.b16 %v392, %v390
  %v657 = vpack.c.b16 %v395, %v393
  %v658 = vpack.c.b16 %v396, %v394
  %v659 = vpack.c.b16 %v399, %v397
  %v660 = vpack.c.b16 %v400, %v398
  %v661 = vpack.c.b16 %v403, %v401
  %v662 = vpack.c.b16 %v404, %v402
  %v663 = vpack.c.b16 %v407, %v405
  %v664 = vpack.c.b16 %v408, %v406
  %v665 = vpack.c.b16 %v411, %v409
  %v666 = vpack.c.b16 %v412, %v410
  %v667 = vpack.c.b16 %v415, %v413
  %v668 = vpack.c.b16 %v416, %v414
  %v669 = vpack.c.b16 %v419, %v417
  %v670 = vpack.c.b16 %v420, %v418
  %v671 = vpack.c.b16 %v423, %v421
  %v672 = vpack.c.b16 %v424, %v422
  %v673 = vpack.c.b16 %v427, %v425
  %v674 = vpack.c.b16 %v428, %v426
  %v675 = vpack.c.b16 %v431, %v429
  %v676 = vpack.c.b16 %v432, %v430
  %v677 = vpack.c.b16 %v435, %v433
  %v678 = vpack.c.b16 %v436, %v434
  %v679 = vpack.c.b16 %v439, %v437
  %v680 = vpack.c.b16 %v440, %v438
  %v681 = vpack.c.b16 %v443, %v441
  %v682 = vpack.c.b16 %v444, %v442
  %v683 = vpack.c.b16 %v447, %v445
  %v684 = vpack.c.b16 %v448, %v446
  %v685 = vpack.c.b16 %v451, %v449
  %v686 = vpack.c.b16 %v452, %v450
  %v687 = vpack.c.b16 %v455, %v453
  %v688 = vpack.c.b16 %v456, %v454
  %v689 = vpack.c.b16 %v459, %v457
  %v690 = vpack.c.b16 %v460, %v458
  %v691 = vpack.c.b16 %v463, %v461
  %v692 = vpack.c.b16 %v464, %v462
  %v693 = vpack.c.b16 %v467, %v465
  %v694 = vpack.c.b16 %v468, %v466
  %v695 = vpack.c.b16 %v471, %v469
  %v696 = vpack.c.b16 %v472, %v470
  %v697 = vpack.c.b16 %v475, %v473
  %v698 = vpack.c.b16 %v476, %v474
  %v699 = vpack.c.b16 %v479, %v477
  %v700 = vpack.c.b16 %v480, %v478
  %v701 = vpack.c.b16 %v483, %v481
  %v702 = vpack.c.b16 %v484, %v482
  %v703 = vpack.c.b16 %v487, %v485
  %v704 = vpack.c.b16 %v488, %v486
  %v705 = vpack.c.b16 %v491, %v489
  %v706 = vpack.c.b16 %v492, %v490
  %v707 = vpack.c.b16 %v495, %v493
  %v708 = vpack.c.b16 %v496, %v494
  %v709 = vpack.c.b16 %v499, %v497
  %v710 = vpack.c.b16 %v500, %v498
  %v711 = vpack.c.b16 %v503, %v501
  %v712 = vpack.c.b16 %v504, %v502
  %v713 = vpack.c.b16 %v507, %v505
  %v714 = vpack.c.b16 %v508, %v506
  %v715 = vpack.c.b16 %v511, %v509
  %v716 = vpack.c.b16 %v512, %v510
  %v717 = vpack.c.b16 %v515, %v513
  %v718 = vpack.c.b16 %v516, %v514
  %v719 = vpack.c.b16 %v519, %v517
  %v720 = vpack.c.b16 %v520, %v518
  %v721 = vpack.c.b16 %v523, %v521
  %v722 = vpack.c.b16 %v524, %v522
  %v723 = vpack.c.b16 %v527, %v525
  %v724 = vpack.c.b16 %v528, %v526
  %v725 = vpack.c.b16 %v531, %v529
  %v726 = vpack.c.b16 %v532, %v530
  %v727 = vpack.c.b16 %v535, %v533
  %v728 = vpack.c.b16 %v536, %v534
  %v729 = vpack.c.b16 %v539, %v537
  %v730 = vpack.c.b16 %v540, %v538
  %v731 = vpack.c.b16 %v543, %v541
  %v732 = vpack.c.b16 %v544, %v542
  %v733 = vpack.c.b16 %v547, %v545
  %v734 = vpack.c.b16 %v548, %v546
  %v735 = vpack.c.b16 %v551, %v549
  %v736 = vpack.c.b16 %v552, %v550
  %v737 = vpack.c.b16 %v555, %v553
  %v738 = vpack.c.b16 %v556, %v554
  %v739 = vpack.c.b16 %v559, %v557
  %v740 = vpack.c.b16 %v560, %v558
  %v741 = vpack.c.b16 %v563, %v561
  %v742 = vpack.c.b16 %v564, %v562
  %v743 = vpack.c.b16 %v567, %v565
  %v744 = vpack.c.b16 %v568, %v566
  %v745 = vpack.c.b16 %v571, %v569
  %v746 = vpack.c.b16 %v572, %v570
  %v747 = vpack.c.b16 %v575, %v573
  %v748 = vpack.c.b16 %v576, %v574
  %v749 = vpack.c.b16 %v579, %v577
  %v750 = vpack.c.b16 %v580, %v578
  %v751 = vpack.c.b16 %v583, %v581
  %v752 = vpack.c.b16 %v584, %v582
  %v753 = vpack.c.b16 %v587, %v585
  %v754 = vpack.c.b16 %v588, %v586
  %v755 = vpack.c.b16 %v591, %v589
  %v756 = vpack.c.b16 %v592, %v590
  %v757 = vpack.c.b16 %v595, %v593
  %v758 = vpack.c.b16 %v596, %v594
  %v759 = vpack.c.b16 %v599, %v597
  %v760 = vpack.c.b16 %v600, %v598
  %v761 = vpack.c.b16 %v603, %v601
  %v762 = vpack.c.b16 %v604, %v602
  %v763 = vpack.c.b16 %v607, %v605
  %v764 = vpack.c.b16 %v608, %v606
  %v765 = vpack.c.b16 %v611, %v609
  %v766 = vpack.c.b16 %v612, %v610
  %v767 = vpack.c.b16 %v615, %v613
  %v768 = vpack.c.b16 %v616, %v614
  %v769 = vpack.c.b16 %v619, %v617
  %v770 = vpack.c.b16 %v620, %v618
  %v771 = vpack.c.b16 %v623, %v621
  %v772 = vpack.c.b16 %v624, %v622
  %v773 = vpack.c.b16 %v627, %v625
  %v774 = vpack.c.b16 %v628, %v626
  %v775 = vpack.c.b16 %v631, %v629
  %v776 = vpack.c.b16 %v632, %v630
  %921 = vmatpush.bf16.msra.mxu0 %v647
  %922 = vmatpush.bf16.msra.mxu0 %v645
  %923 = vmatpush.bf16.msra.mxu0 %v643
  %924 = vmatpush.bf16.msra.mxu0 %v641
  %925 = vmatpush.bf16.msra.mxu0 %v639
  %926 = vmatpush.bf16.msra.mxu0 %v637
  %927 = vmatpush.bf16.msra.mxu0 %v635
  %928 = vmatpush.bf16.msra.mxu0 %v633
  %929 = vmatmul.bf16.gmra.mxu0 %v183
  %v930 = vpop.f32.mrf.mxu0
  %v931 = vadd.f32 %v165, %v930
  %v932 = vpop.f32.mrf.mxu0
  %933 = vdwg.mxu0
  %934 = vmatpush.bf16.msra.mxu0 %v663
  %935 = vmatpush.bf16.msra.mxu0 %v661
  %936 = vmatpush.bf16.msra.mxu0 %v659
  %937 = vmatpush.bf16.msra.mxu0 %v657
  %938 = vmatpush.bf16.msra.mxu0 %v655
  %939 = vmatpush.bf16.msra.mxu0 %v653
  %940 = vmatpush.bf16.msra.mxu0 %v651
  %941 = vmatpush.bf16.msra.mxu0 %v649
  %942 = vmatmul.bf16.gmra.mxu0 %v184
  %v943 = vpop.f32.mrf.mxu0
  %v944 = vadd.f32 %v931, %v943
  %v945 = vpop.f32.mrf.mxu0
  %946 = vdwg.mxu0
  %947 = vmatpush.bf16.msra.mxu0 %v679
  %948 = vmatpush.bf16.msra.mxu0 %v677
  %949 = vmatpush.bf16.msra.mxu0 %v675
  %950 = vmatpush.bf16.msra.mxu0 %v673
  %951 = vmatpush.bf16.msra.mxu0 %v671
  %952 = vmatpush.bf16.msra.mxu0 %v669
  %953 = vmatpush.bf16.msra.mxu0 %v667
  %954 = vmatpush.bf16.msra.mxu0 %v665
  %955 = vmatmul.bf16.gmra.mxu0 %v185
  %v956 = vpop.f32.mrf.mxu0
  %v957 = vadd.f32 %v944, %v956
  %v958 = vpop.f32.mrf.mxu0
  %959 = vdwg.mxu0
  %960 = vmatpush.bf16.msra.mxu0 %v695
  %961 = vmatpush.bf16.msra.mxu0 %v693
  %962 = vmatpush.bf16.msra.mxu0 %v691
  %963 = vmatpush.bf16.msra.mxu0 %v689
  %964 = vmatpush.bf16.msra.mxu0 %v687
  %965 = vmatpush.bf16.msra.mxu0 %v685
  %966 = vmatpush.bf16.msra.mxu0 %v683
  %967 = vmatpush.bf16.msra.mxu0 %v681
  %968 = vmatmul.bf16.gmra.mxu0 %v186
  %v969 = vpop.f32.mrf.mxu0
  %v970 = vadd.f32 %v957, %v969
  %v971 = vpop.f32.mrf.mxu0
  %972 = vdwg.mxu0
  %973 = vmatpush.bf16.msra.mxu0 %v711
  %974 = vmatpush.bf16.msra.mxu0 %v709
  %975 = vmatpush.bf16.msra.mxu0 %v707
  %976 = vmatpush.bf16.msra.mxu0 %v705
  %977 = vmatpush.bf16.msra.mxu0 %v703
  %978 = vmatpush.bf16.msra.mxu0 %v701
  %979 = vmatpush.bf16.msra.mxu0 %v699
  %980 = vmatpush.bf16.msra.mxu0 %v697
  %981 = vmatmul.bf16.gmra.mxu0 %v187
  %v982 = vpop.f32.mrf.mxu0
  %v983 = vadd.f32 %v970, %v982
  %v984 = vpop.f32.mrf.mxu0
  %985 = vdwg.mxu0
  %986 = vmatpush.bf16.msra.mxu0 %v727
  %987 = vmatpush.bf16.msra.mxu0 %v725
  %988 = vmatpush.bf16.msra.mxu0 %v723
  %989 = vmatpush.bf16.msra.mxu0 %v721
  %990 = vmatpush.bf16.msra.mxu0 %v719
  %991 = vmatpush.bf16.msra.mxu0 %v717
  %992 = vmatpush.bf16.msra.mxu0 %v715
  %993 = vmatpush.bf16.msra.mxu0 %v713
  %994 = vmatmul.bf16.gmra.mxu0 %v188
  %v995 = vpop.f32.mrf.mxu0
  %v996 = vadd.f32 %v983, %v995
  %v997 = vpop.f32.mrf.mxu0
  %998 = vdwg.mxu0
  %999 = vmatpush.bf16.msra.mxu0 %v743
  %1000 = vmatpush.bf16.msra.mxu0 %v741
  %1001 = vmatpush.bf16.msra.mxu0 %v739
  %1002 = vmatpush.bf16.msra.mxu0 %v737
  %1003 = vmatpush.bf16.msra.mxu0 %v735
  %1004 = vmatpush.bf16.msra.mxu0 %v733
  %1005 = vmatpush.bf16.msra.mxu0 %v731
  %1006 = vmatpush.bf16.msra.mxu0 %v729
  %1007 = vmatmul.bf16.gmra.mxu0 %v189
  %v1008 = vpop.f32.mrf.mxu0
  %v1009 = vadd.f32 %v996, %v1008
  %v1010 = vpop.f32.mrf.mxu0
  %1011 = vdwg.mxu0
  %1012 = vmatpush.bf16.msra.mxu0 %v759
  %1013 = vmatpush.bf16.msra.mxu0 %v757
  %1014 = vmatpush.bf16.msra.mxu0 %v755
  %1015 = vmatpush.bf16.msra.mxu0 %v753
  %1016 = vmatpush.bf16.msra.mxu0 %v751
  %1017 = vmatpush.bf16.msra.mxu0 %v749
  %1018 = vmatpush.bf16.msra.mxu0 %v747
  %1019 = vmatpush.bf16.msra.mxu0 %v745
  %1020 = vmatmul.bf16.gmra.mxu0 %v190
  %v1021 = vpop.f32.mrf.mxu0
  %v1022 = vadd.f32 %v1009, %v1021
  %v1023 = vpop.f32.mrf.mxu0
  %1024 = vdwg.mxu0
  %1025 = vmatpush.bf16.msra.mxu0 %v775
  %1026 = vmatpush.bf16.msra.mxu0 %v773
  %1027 = vmatpush.bf16.msra.mxu0 %v771
  %1028 = vmatpush.bf16.msra.mxu0 %v769
  %1029 = vmatpush.bf16.msra.mxu0 %v767
  %1030 = vmatpush.bf16.msra.mxu0 %v765
  %1031 = vmatpush.bf16.msra.mxu0 %v763
  %1032 = vmatpush.bf16.msra.mxu0 %v761
  %1033 = vmatmul.bf16.gmra.mxu0 %v191
  %v1034 = vpop.f32.mrf.mxu0
  %v1035 = vadd.f32 %v1022, %v1034
  %v1036 = vpop.f32.mrf.mxu0
  %1037 = vdwg.mxu0
  %1038 = vmatpush.bf16.msra.mxu0 %v648
  %1039 = vmatpush.bf16.msra.mxu0 %v646
  %1040 = vmatpush.bf16.msra.mxu0 %v644
  %1041 = vmatpush.bf16.msra.mxu0 %v642
  %1042 = vmatpush.bf16.msra.mxu0 %v640
  %1043 = vmatpush.bf16.msra.mxu0 %v638
  %1044 = vmatpush.bf16.msra.mxu0 %v636
  %1045 = vmatpush.bf16.msra.mxu0 %v634
  %1046 = vmatmul.bf16.gmra.mxu0 %v183
  %v1047 = vpop.f32.mrf.mxu0
  %v1048 = vadd.f32 %v166, %v1047
  %v1049 = vpop.f32.mrf.mxu0
  %1050 = vdwg.mxu0
  %1051 = vmatpush.bf16.msra.mxu0 %v664
  %1052 = vmatpush.bf16.msra.mxu0 %v662
  %1053 = vmatpush.bf16.msra.mxu0 %v660
  %1054 = vmatpush.bf16.msra.mxu0 %v658
  %1055 = vmatpush.bf16.msra.mxu0 %v656
  %1056 = vmatpush.bf16.msra.mxu0 %v654
  %1057 = vmatpush.bf16.msra.mxu0 %v652
  %1058 = vmatpush.bf16.msra.mxu0 %v650
  %1059 = vmatmul.bf16.gmra.mxu0 %v184
  %v1060 = vpop.f32.mrf.mxu0
  %v1061 = vadd.f32 %v1048, %v1060
  %v1062 = vpop.f32.mrf.mxu0
  %1063 = vdwg.mxu0
  %1064 = vmatpush.bf16.msra.mxu0 %v680
  %1065 = vmatpush.bf16.msra.mxu0 %v678
  %1066 = vmatpush.bf16.msra.mxu0 %v676
  %1067 = vmatpush.bf16.msra.mxu0 %v674
  %1068 = vmatpush.bf16.msra.mxu0 %v672
  %1069 = vmatpush.bf16.msra.mxu0 %v670
  %1070 = vmatpush.bf16.msra.mxu0 %v668
  %1071 = vmatpush.bf16.msra.mxu0 %v666
  %1072 = vmatmul.bf16.gmra.mxu0 %v185
  %v1073 = vpop.f32.mrf.mxu0
  %v1074 = vadd.f32 %v1061, %v1073
  %v1075 = vpop.f32.mrf.mxu0
  %1076 = vdwg.mxu0
  %1077 = vmatpush.bf16.msra.mxu0 %v696
  %1078 = vmatpush.bf16.msra.mxu0 %v694
  %1079 = vmatpush.bf16.msra.mxu0 %v692
  %1080 = vmatpush.bf16.msra.mxu0 %v690
  %1081 = vmatpush.bf16.msra.mxu0 %v688
  %1082 = vmatpush.bf16.msra.mxu0 %v686
  %1083 = vmatpush.bf16.msra.mxu0 %v684
  %1084 = vmatpush.bf16.msra.mxu0 %v682
  %1085 = vmatmul.bf16.gmra.mxu0 %v186
  %v1086 = vpop.f32.mrf.mxu0
  %v1087 = vadd.f32 %v1074, %v1086
  %v1088 = vpop.f32.mrf.mxu0
  %1089 = vdwg.mxu0
  %1090 = vmatpush.bf16.msra.mxu0 %v712
  %1091 = vmatpush.bf16.msra.mxu0 %v710
  %1092 = vmatpush.bf16.msra.mxu0 %v708
  %1093 = vmatpush.bf16.msra.mxu0 %v706
  %1094 = vmatpush.bf16.msra.mxu0 %v704
  %1095 = vmatpush.bf16.msra.mxu0 %v702
  %1096 = vmatpush.bf16.msra.mxu0 %v700
  %1097 = vmatpush.bf16.msra.mxu0 %v698
  %1098 = vmatmul.bf16.gmra.mxu0 %v187
  %v1099 = vpop.f32.mrf.mxu0
  %v1100 = vadd.f32 %v1087, %v1099
  %v1101 = vpop.f32.mrf.mxu0
  %1102 = vdwg.mxu0
  %1103 = vmatpush.bf16.msra.mxu0 %v728
  %1104 = vmatpush.bf16.msra.mxu0 %v726
  %1105 = vmatpush.bf16.msra.mxu0 %v724
  %1106 = vmatpush.bf16.msra.mxu0 %v722
  %1107 = vmatpush.bf16.msra.mxu0 %v720
  %1108 = vmatpush.bf16.msra.mxu0 %v718
  %1109 = vmatpush.bf16.msra.mxu0 %v716
  %1110 = vmatpush.bf16.msra.mxu0 %v714
  %1111 = vmatmul.bf16.gmra.mxu0 %v188
  %v1112 = vpop.f32.mrf.mxu0
  %v1113 = vadd.f32 %v1100, %v1112
  %v1114 = vpop.f32.mrf.mxu0
  %1115 = vdwg.mxu0
  %1116 = vmatpush.bf16.msra.mxu0 %v744
  %1117 = vmatpush.bf16.msra.mxu0 %v742
  %1118 = vmatpush.bf16.msra.mxu0 %v740
  %1119 = vmatpush.bf16.msra.mxu0 %v738
  %1120 = vmatpush.bf16.msra.mxu0 %v736
  %1121 = vmatpush.bf16.msra.mxu0 %v734
  %1122 = vmatpush.bf16.msra.mxu0 %v732
  %1123 = vmatpush.bf16.msra.mxu0 %v730
  %1124 = vmatmul.bf16.gmra.mxu0 %v189
  %v1125 = vpop.f32.mrf.mxu0
  %v1126 = vadd.f32 %v1113, %v1125
  %v1127 = vpop.f32.mrf.mxu0
  %1128 = vdwg.mxu0
  %1129 = vmatpush.bf16.msra.mxu0 %v760
  %1130 = vmatpush.bf16.msra.mxu0 %v758
  %1131 = vmatpush.bf16.msra.mxu0 %v756
  %1132 = vmatpush.bf16.msra.mxu0 %v754
  %1133 = vmatpush.bf16.msra.mxu0 %v752
  %1134 = vmatpush.bf16.msra.mxu0 %v750
  %1135 = vmatpush.bf16.msra.mxu0 %v748
  %1136 = vmatpush.bf16.msra.mxu0 %v746
  %1137 = vmatmul.bf16.gmra.mxu0 %v190
  %v1138 = vpop.f32.mrf.mxu0
  %v1139 = vadd.f32 %v1126, %v1138
  %v1140 = vpop.f32.mrf.mxu0
  %1141 = vdwg.mxu0
  %1142 = vmatpush.bf16.msra.mxu0 %v776
  %1143 = vmatpush.bf16.msra.mxu0 %v774
  %1144 = vmatpush.bf16.msra.mxu0 %v772
  %1145 = vmatpush.bf16.msra.mxu0 %v770
  %1146 = vmatpush.bf16.msra.mxu0 %v768
  %1147 = vmatpush.bf16.msra.mxu0 %v766
  %1148 = vmatpush.bf16.msra.mxu0 %v764
  %1149 = vmatpush.bf16.msra.mxu0 %v762
  %1150 = vmatmul.bf16.gmra.mxu0 %v191
  %v1151 = vpop.f32.mrf.mxu0
  %v1152 = vadd.f32 %v1139, %v1151
  %v1153 = vpop.f32.mrf.mxu0
  %1154 = vdwg.mxu0
  %vm1155 = vcmp.ge.f32.partialorder %v1035, 0.0
  %vm1156 = vcmp.ge.f32.partialorder %v1152, 0.0
  %v1157 = vmul.f32 %v1035, 0.2
  %v1158 = vmul.f32 %v1152, 0.2
  %v1159 = vsel %vm1155, %v1035, %v1157
  %v1160 = vsel %vm1156, %v1152, %v1158
  %v1161 = vrot.slane %v1159, 4
  %v1162 = vadd.f32 %v1159, %v1161
  %v1163 = vrot.slane %v1162, 2
  %v1164 = vadd.f32 %v1162, %v1163
  %v1165 = vrot.slane %v1164, 1
  %v1166 = vadd.f32 %v1164, %v1165
  %v1167 = vrot.slane %v1160, 4
  %v1168 = vadd.f32 %v1160, %v1167
  %v1169 = vrot.slane %v1168, 2
  %v1170 = vadd.f32 %v1168, %v1169
  %v1171 = vrot.slane %v1170, 1
  %v1172 = vadd.f32 %v1170, %v1171
  %v1173 = vrcp.pop 8.0
  %v1174 = vmul.f32 8.0, %v1173
  %v1175 = vsub.f32 1.0, %v1174
  %v1176 = vmul.f32 %v1173, %v1175
  %v1177 = vadd.f32 %v1173, %v1176
  %vm1178 = vweird.f32 %v1173
  %v1179 = vsel %vm1178, %v1173, %v1177
  %v1180 = vmul.f32 %v1166, %v1179
  %v1181 = vmul.f32 %v1172, %v1179
  %v1182 = vsub.f32 %v1159, %v1180
  %v1183 = vsub.f32 %v1160, %v1181
  %v1184 = vmul.f32 %v1182, %v1182
  %v1185 = vmul.f32 %v1183, %v1183
  %v1186 = vrot.slane %v1184, 4
  %v1187 = vadd.f32 %v1184, %v1186
  %v1188 = vrot.slane %v1187, 2
  %v1189 = vadd.f32 %v1187, %v1188
  %v1190 = vrot.slane %v1189, 1
  %v1191 = vadd.f32 %v1189, %v1190
  %v1192 = vrot.slane %v1185, 4
  %v1193 = vadd.f32 %v1185, %v1192
  %v1194 = vrot.slane %v1193, 2
  %v1195 = vadd.f32 %v1193, %v1194
  %v1196 = vrot.slane %v1195, 1
  %v1197 = vadd.f32 %v1195, %v1196
  %v1198 = vmul.f32 %v1191, %v1179
  %v1199 = vmul.f32 %v1197, %v1179
  %v1200 = vadd.f32 %v1198, 1e-05
  %v1201 = vadd.f32 %v1199, 1e-05
  %v1202 = vrsqrt.pop %v1200
  %v1203 = vmul.f32 %v1202, %v1200
  %v1204 = vmul.f32 %v1203, %v1202
  %v1205 = vmul.f32 0.5, %v1204
  %v1206 = vsub.f32 1.5, %v1205
  %v1207 = vmul.f32 %v1202, %v1206
  %vm1208 = vweird.f32 %v1200
  %vm1209 = vweird.f32 %v1202
  %vm1210 = vmor %vm1208, %vm1209
  %v1211 = vsel %vm1210, %v1202, %v1207
  %v1212 = vrsqrt.pop %v1201
  %v1213 = vmul.f32 %v1212, %v1201
  %v1214 = vmul.f32 %v1213, %v1212
  %v1215 = vmul.f32 0.5, %v1214
  %v1216 = vsub.f32 1.5, %v1215
  %v1217 = vmul.f32 %v1212, %v1216
  %vm1218 = vweird.f32 %v1201
  %vm1219 = vweird.f32 %v1212
  %vm1220 = vmor %vm1218, %vm1219
  %v1221 = vsel %vm1220, %v1212, %v1217
  %v1222 = vmul.f32 %v1182, %v1211
  %v1223 = vmul.f32 %v1183, %v1221
  %s1224 = scalar_lea.vmem %s2, 1
  %v1225 = vld [vmem:[%s1224] ss:$4 sm:$0x3]
  %v1227 = vperm.slane %v1225, 0
  %v1228 = vperm.slane %v1225, 1
  %v1231 = vmul.f32 %v1222, %v1227
  %v1232 = vmul.f32 %v1223, %v1228
  %s1233 = scalar_lea.vmem %s2, 2
  %v1234 = vld [vmem:[%s1233] ss:$4 sm:$0x3]
  %v1236 = vperm.slane %v1234, 0
  %v1237 = vperm.slane %v1234, 1
  %v1240 = vadd.f32 %v1231, %v1236
  %v1241 = vadd.f32 %v1232, %v1237
  %1242 = vst [vmem:[%s3] sm:$0xff] %v1240
  %1243 = vst [vmem:[%s3 + $0x8] sm:$0xff] %v1241
  // Predicated region
  $region14: #{net_forward.10} parent=0 // pred_check
    _
  $region15: #{net_forward.10} parent=0 // pred_check_branch
    %1245 = sbr.rel (0) target = $region17
  $region16: #{net_forward.10} parent=0 // pred_region
    _
  $region17: #{net_forward.10} parent=0 // pred_fallthru
    _
  // Predicated region
  $region18: #{net_forward.10} parent=0 // pred_check
    _
  $region19: #{net_forward.10} parent=0 // pred_check_branch
    %1247 = sbr.rel (0) target = $region21
  $region20: #{net_forward.10} parent=0 // pred_region
    _
  $region21: #{net_forward.10} parent=0 // pred_fallthru
    _

// kernel: net_forward.11
$region0: #{net_forward.11}
  #allocation0 [shape = 'u32[]', space=smem, size = 0x4, offset = 0x4, fixed_abs, tag = 'smem constant byte address 0x4 - core index']
  #allocation1 [shape = 'u32[72,128]{1,0:T(1,128)}', space=vmem, size = 0x9000, scoped, tag = 'internal scratch']
  %s0 = inlined_call_operand.vmem [shape: bf16[2,2304], index: 0, kind: input, shape index: {}]
  %s1 = inlined_call_operand.vmem [shape: bf16[2304,256], index: 1, kind: input, shape index: {}]
  %s2 = inlined_call_operand.vmem [shape: f32[3,256], index: 2, kind: input, shape index: {}]
  %s3 = inlined_call_operand.vmem [shape: f32[2,256], index: 3, kind: output, shape index: {}]
  %s4 = sld [smem:[#allocation0]]
  $region22: #{net_forward.11} parent=0
    _
  %s6 = ssub.s32 1, %s4
  %s7 = scalar_select 0, %s6, %s4
  // Predicated region
  $region2: #{net_forward.11} parent=0 // pred_check
    _
  $region3: #{net_forward.11} parent=0 // pred_check_branch
    %9 = sbr.rel (0) target = $region5
  $region4: #{net_forward.11} parent=0 // pred_region
    _
  $region5: #{net_forward.11} parent=0 // pred_fallthru
    _
  // Predicated region
  $region6: #{net_forward.11} parent=0 // pred_check
    _
  $region7: #{net_forward.11} parent=0 // pred_check_branch
    %11 = sbr.rel (0) target = $region9
  $region8: #{net_forward.11} parent=0 // pred_region
    _
  $region9: #{net_forward.11} parent=0 // pred_fallthru
    _
  // Predicated region
  $region10: #{net_forward.11} parent=0 // pred_check
    _
  $region11: #{net_forward.11} parent=0 // pred_check_branch
    %13 = sbr.rel (0) target = $region13
  $region12: #{net_forward.11} parent=0 // pred_region
    _
  $region13: #{net_forward.11} parent=0 // pred_fallthru
    _
  %v14 = vld [vmem:[%s0] sm:$0xff]
  %v15 = vld [vmem:[%s0 + $0x8] sm:$0xff]
  %v16 = vld [vmem:[%s0 + $0x10] sm:$0x3]
  %v17 = vld [vmem:[%s1] sm:$0xff]
  %v18 = vld [vmem:[%s1 + $0x8] sm:$0xff]
  %v19 = vld [vmem:[%s1 + $0x10] sm:$0xff]
  %v20 = vld [vmem:[%s1 + $0x18] sm:$0xff]
  %v21 = vld [vmem:[%s1 + $0x20] sm:$0xff]
  %v22 = vld [vmem:[%s1 + $0x28] sm:$0xff]
  %v23 = vld [vmem:[%s1 + $0x30] sm:$0xff]
  %v24 = vld [vmem:[%s1 + $0x38] sm:$0xff]
  %v25 = vld [vmem:[%s1 + $0x40] sm:$0xff]
  %v26 = vld [vmem:[%s1 + $0x48] sm:$0xff]
  %v27 = vld [vmem:[%s1 + $0x50] sm:$0xff]
  %v28 = vld [vmem:[%s1 + $0x58] sm:$0xff]
  %v29 = vld [vmem:[%s1 + $0x60] sm:$0xff]
  %v30 = vld [vmem:[%s1 + $0x68] sm:$0xff]
  %v31 = vld [vmem:[%s1 + $0x70] sm:$0xff]
  %v32 = vld [vmem:[%s1 + $0x78] sm:$0xff]
  %v33 = vld [vmem:[%s1 + $0x80] sm:$0xff]
  %v34 = vld [vmem:[%s1 + $0x88] sm:$0xff]
  %v35 = vld [vmem:[%s1 + $0x90] sm:$0xff]
  %v36 = vld [vmem:[%s1 + $0x98] sm:$0xff]
  %v37 = vld [vmem:[%s1 + $0xa0] sm:$0xff]
  %v38 = vld [vmem:[%s1 + $0xa8] sm:$0xff]
  %v39 = vld [vmem:[%s1 + $0xb0] sm:$0xff]
  %v40 = vld [vmem:[%s1 + $0xb8] sm:$0xff]
  %v41 = vld [vmem:[%s1 + $0xc0] sm:$0xff]
  %v42 = vld [vmem:[%s1 + $0xc8] sm:$0xff]
  %v43 = vld [vmem:[%s1 + $0xd0] sm:$0xff]
  %v44 = vld [vmem:[%s1 + $0xd8] sm:$0xff]
  %v45 = vld [vmem:[%s1 + $0xe0] sm:$0xff]
  %v46 = vld [vmem:[%s1 + $0xe8] sm:$0xff]
  %v47 = vld [vmem:[%s1 + $0xf0] sm:$0xff]
  %v48 = vld [vmem:[%s1 + $0xf8] sm:$0xff]
  %v49 = vld [vmem:[%s1 + $0x100] sm:$0xff]
  %v50 = vld [vmem:[%s1 + $0x108] sm:$0xff]
  %v51 = vld [vmem:[%s1 + $0x110] sm:$0xff]
  %v52 = vld [vmem:[%s1 + $0x118] sm:$0xff]
  %v53 = vld [vmem:[%s1 + $0x120] sm:$0xff]
  %v54 = vld [vmem:[%s1 + $0x128] sm:$0xff]
  %v55 = vld [vmem:[%s1 + $0x130] sm:$0xff]
  %v56 = vld [vmem:[%s1 + $0x138] sm:$0xff]
  %v57 = vld [vmem:[%s1 + $0x140] sm:$0xff]
  %v58 = vld [vmem:[%s1 + $0x148] sm:$0xff]
  %v59 = vld [vmem:[%s1 + $0x150] sm:$0xff]
  %v60 = vld [vmem:[%s1 + $0x158] sm:$0xff]
  %v61 = vld [vmem:[%s1 + $0x160] sm:$0xff]
  %v62 = vld [vmem:[%s1 + $0x168] sm:$0xff]
  %v63 = vld [vmem:[%s1 + $0x170] sm:$0xff]
  %v64 = vld [vmem:[%s1 + $0x178] sm:$0xff]
  %v65 = vld [vmem:[%s1 + $0x180] sm:$0xff]
  %v66 = vld [vmem:[%s1 + $0x188] sm:$0xff]
  %v67 = vld [vmem:[%s1 + $0x190] sm:$0xff]
  %v68 = vld [vmem:[%s1 + $0x198] sm:$0xff]
  %v69 = vld [vmem:[%s1 + $0x1a0] sm:$0xff]
  %v70 = vld [vmem:[%s1 + $0x1a8] sm:$0xff]
  %v71 = vld [vmem:[%s1 + $0x1b0] sm:$0xff]
  %v72 = vld [vmem:[%s1 + $0x1b8] sm:$0xff]
  %v73 = vld [vmem:[%s1 + $0x1c0] sm:$0xff]
  %v74 = vld [vmem:[%s1 + $0x1c8] sm:$0xff]
  %v75 = vld [vmem:[%s1 + $0x1d0] sm:$0xff]
  %v76 = vld [vmem:[%s1 + $0x1d8] sm:$0xff]
  %v77 = vld [vmem:[%s1 + $0x1e0] sm:$0xff]
  %v78 = vld [vmem:[%s1 + $0x1e8] sm:$0xff]
  %v79 = vld [vmem:[%s1 + $0x1f0] sm:$0xff]
  %v80 = vld [vmem:[%s1 + $0x1f8] sm:$0xff]
  %v81 = vld [vmem:[%s1 + $0x200] sm:$0xff]
  %v82 = vld [vmem:[%s1 + $0x208] sm:$0xff]
  %v83 = vld [vmem:[%s1 + $0x210] sm:$0xff]
  %v84 = vld [vmem:[%s1 + $0x218] sm:$0xff]
  %v85 = vld [vmem:[%s1 + $0x220] sm:$0xff]
  %v86 = vld [vmem:[%s1 + $0x228] sm:$0xff]
  %v87 = vld [vmem:[%s1 + $0x230] sm:$0xff]
  %v88 = vld [vmem:[%s1 + $0x238] sm:$0xff]
  %v89 = vld [vmem:[%s1 + $0x240] sm:$0xff]
  %v90 = vld [vmem:[%s1 + $0x248] sm:$0xff]
  %v91 = vld [vmem:[%s1 + $0x250] sm:$0xff]
  %v92 = vld [vmem:[%s1 + $0x258] sm:$0xff]
  %v93 = vld [vmem:[%s1 + $0x260] sm:$0xff]
  %v94 = vld [vmem:[%s1 + $0x268] sm:$0xff]
  %v95 = vld [vmem:[%s1 + $0x270] sm:$0xff]
  %v96 = vld [vmem:[%s1 + $0x278] sm:$0xff]
  %v97 = vld [vmem:[%s1 + $0x280] sm:$0xff]
  %v98 = vld [vmem:[%s1 + $0x288] sm:$0xff]
  %v99 = vld [vmem:[%s1 + $0x290] sm:$0xff]
  %v100 = vld [vmem:[%s1 + $0x298] sm:$0xff]
  %v101 = vld [vmem:[%s1 + $0x2a0] sm:$0xff]
  %v102 = vld [vmem:[%s1 + $0x2a8] sm:$0xff]
  %v103 = vld [vmem:[%s1 + $0x2b0] sm:$0xff]
  %v104 = vld [vmem:[%s1 + $0x2b8] sm:$0xff]
  %v105 = vld [vmem:[%s1 + $0x2c0] sm:$0xff]
  %v106 = vld [vmem:[%s1 + $0x2c8] sm:$0xff]
  %v107 = vld [vmem:[%s1 + $0x2d0] sm:$0xff]
  %v108 = vld [vmem:[%s1 + $0x2d8] sm:$0xff]
  %v109 = vld [vmem:[%s1 + $0x2e0] sm:$0xff]
  %v110 = vld [vmem:[%s1 + $0x2e8] sm:$0xff]
  %v111 = vld [vmem:[%s1 + $0x2f0] sm:$0xff]
  %v112 = vld [vmem:[%s1 + $0x2f8] sm:$0xff]
  %v113 = vld [vmem:[%s1 + $0x300] sm:$0xff]
  %v114 = vld [vmem:[%s1 + $0x308] sm:$0xff]
  %v115 = vld [vmem:[%s1 + $0x310] sm:$0xff]
  %v116 = vld [vmem:[%s1 + $0x318] sm:$0xff]
  %v117 = vld [vmem:[%s1 + $0x320] sm:$0xff]
  %v118 = vld [vmem:[%s1 + $0x328] sm:$0xff]
  %v119 = vld [vmem:[%s1 + $0x330] sm:$0xff]
  %v120 = vld [vmem:[%s1 + $0x338] sm:$0xff]
  %v121 = vld [vmem:[%s1 + $0x340] sm:$0xff]
  %v122 = vld [vmem:[%s1 + $0x348] sm:$0xff]
  %v123 = vld [vmem:[%s1 + $0x350] sm:$0xff]
  %v124 = vld [vmem:[%s1 + $0x358] sm:$0xff]
  %v125 = vld [vmem:[%s1 + $0x360] sm:$0xff]
  %v126 = vld [vmem:[%s1 + $0x368] sm:$0xff]
  %v127 = vld [vmem:[%s1 + $0x370] sm:$0xff]
  %v128 = vld [vmem:[%s1 + $0x378] sm:$0xff]
  %v129 = vld [vmem:[%s1 + $0x380] sm:$0xff]
  %v130 = vld [vmem:[%s1 + $0x388] sm:$0xff]
  %v131 = vld [vmem:[%s1 + $0x390] sm:$0xff]
  %v132 = vld [vmem:[%s1 + $0x398] sm:$0xff]
  %v133 = vld [vmem:[%s1 + $0x3a0] sm:$0xff]
  %v134 = vld [vmem:[%s1 + $0x3a8] sm:$0xff]
  %v135 = vld [vmem:[%s1 + $0x3b0] sm:$0xff]
  %v136 = vld [vmem:[%s1 + $0x3b8] sm:$0xff]
  %v137 = vld [vmem:[%s1 + $0x3c0] sm:$0xff]
  %v138 = vld [vmem:[%s1 + $0x3c8] sm:$0xff]
  %v139 = vld [vmem:[%s1 + $0x3d0] sm:$0xff]
  %v140 = vld [vmem:[%s1 + $0x3d8] sm:$0xff]
  %v141 = vld [vmem:[%s1 + $0x3e0] sm:$0xff]
  %v142 = vld [vmem:[%s1 + $0x3e8] sm:$0xff]
  %v143 = vld [vmem:[%s1 + $0x3f0] sm:$0xff]
  %v144 = vld [vmem:[%s1 + $0x3f8] sm:$0xff]
  %v145 = vld [vmem:[%s1 + $0x400] sm:$0xff]
  %v146 = vld [vmem:[%s1 + $0x408] sm:$0xff]
  %v147 = vld [vmem:[%s1 + $0x410] sm:$0xff]
  %v148 = vld [vmem:[%s1 + $0x418] sm:$0xff]
  %v149 = vld [vmem:[%s1 + $0x420] sm:$0xff]
  %v150 = vld [vmem:[%s1 + $0x428] sm:$0xff]
  %v151 = vld [vmem:[%s1 + $0x430] sm:$0xff]
  %v152 = vld [vmem:[%s1 + $0x438] sm:$0xff]
  %v153 = vld [vmem:[%s1 + $0x440] sm:$0xff]
  %v154 = vld [vmem:[%s1 + $0x448] sm:$0xff]
  %v155 = vld [vmem:[%s1 + $0x450] sm:$0xff]
  %v156 = vld [vmem:[%s1 + $0x458] sm:$0xff]
  %v157 = vld [vmem:[%s1 + $0x460] sm:$0xff]
  %v158 = vld [vmem:[%s1 + $0x468] sm:$0xff]
  %v159 = vld [vmem:[%s1 + $0x470] sm:$0xff]
  %v160 = vld [vmem:[%s1 + $0x478] sm:$0xff]
  %v161 = vld [vmem:[%s1 + $0x480] sm:$0xff]
  %v162 = vld [vmem:[%s1 + $0x488] sm:$0xff]
  %v163 = vld [vmem:[%s1 + $0x490] sm:$0xff]
  %v164 = vld [vmem:[%s1 + $0x498] sm:$0xff]
  %v165 = vld [vmem:[%s1 + $0x4a0] sm:$0xff]
  %v166 = vld [vmem:[%s1 + $0x4a8] sm:$0xff]
  %v167 = vld [vmem:[%s1 + $0x4b0] sm:$0xff]
  %v168 = vld [vmem:[%s1 + $0x4b8] sm:$0xff]
  %v169 = vld [vmem:[%s1 + $0x4c0] sm:$0xff]
  %v170 = vld [vmem:[%s1 + $0x4c8] sm:$0xff]
  %v171 = vld [vmem:[%s1 + $0x4d0] sm:$0xff]
  %v172 = vld [vmem:[%s1 + $0x4d8] sm:$0xff]
  %v173 = vld [vmem:[%s1 + $0x4e0] sm:$0xff]
  %v174 = vld [vmem:[%s1 + $0x4e8] sm:$0xff]
  %v175 = vld [vmem:[%s1 + $0x4f0] sm:$0xff]
  %v176 = vld [vmem:[%s1 + $0x4f8] sm:$0xff]
  %v177 = vld [vmem:[%s1 + $0x500] sm:$0xff]
  %v178 = vld [vmem:[%s1 + $0x508] sm:$0xff]
  %v179 = vld [vmem:[%s1 + $0x510] sm:$0xff]
  %v180 = vld [vmem:[%s1 + $0x518] sm:$0xff]
  %v181 = vld [vmem:[%s1 + $0x520] sm:$0xff]
  %v182 = vld [vmem:[%s1 + $0x528] sm:$0xff]
  %v183 = vld [vmem:[%s1 + $0x530] sm:$0xff]
  %v184 = vld [vmem:[%s1 + $0x538] sm:$0xff]
  %v185 = vld [vmem:[%s1 + $0x540] sm:$0xff]
  %v186 = vld [vmem:[%s1 + $0x548] sm:$0xff]
  %v187 = vld [vmem:[%s1 + $0x550] sm:$0xff]
  %v188 = vld [vmem:[%s1 + $0x558] sm:$0xff]
  %v189 = vld [vmem:[%s1 + $0x560] sm:$0xff]
  %v190 = vld [vmem:[%s1 + $0x568] sm:$0xff]
  %v191 = vld [vmem:[%s1 + $0x570] sm:$0xff]
  %v192 = vld [vmem:[%s1 + $0x578] sm:$0xff]
  %v193 = vld [vmem:[%s1 + $0x580] sm:$0xff]
  %v194 = vld [vmem:[%s1 + $0x588] sm:$0xff]
  %v195 = vld [vmem:[%s1 + $0x590] sm:$0xff]
  %v196 = vld [vmem:[%s1 + $0x598] sm:$0xff]
  %v197 = vld [vmem:[%s1 + $0x5a0] sm:$0xff]
  %v198 = vld [vmem:[%s1 + $0x5a8] sm:$0xff]
  %v199 = vld [vmem:[%s1 + $0x5b0] sm:$0xff]
  %v200 = vld [vmem:[%s1 + $0x5b8] sm:$0xff]
  %v201 = vld [vmem:[%s1 + $0x5c0] sm:$0xff]
  %v202 = vld [vmem:[%s1 + $0x5c8] sm:$0xff]
  %v203 = vld [vmem:[%s1 + $0x5d0] sm:$0xff]
  %v204 = vld [vmem:[%s1 + $0x5d8] sm:$0xff]
  %v205 = vld [vmem:[%s1 + $0x5e0] sm:$0xff]
  %v206 = vld [vmem:[%s1 + $0x5e8] sm:$0xff]
  %v207 = vld [vmem:[%s1 + $0x5f0] sm:$0xff]
  %v208 = vld [vmem:[%s1 + $0x5f8] sm:$0xff]
  %v209 = vld [vmem:[%s1 + $0x600] sm:$0xff]
  %v210 = vld [vmem:[%s1 + $0x608] sm:$0xff]
  %v211 = vld [vmem:[%s1 + $0x610] sm:$0xff]
  %v212 = vld [vmem:[%s1 + $0x618] sm:$0xff]
  %v213 = vld [vmem:[%s1 + $0x620] sm:$0xff]
  %v214 = vld [vmem:[%s1 + $0x628] sm:$0xff]
  %v215 = vld [vmem:[%s1 + $0x630] sm:$0xff]
  %v216 = vld [vmem:[%s1 + $0x638] sm:$0xff]
  %v217 = vld [vmem:[%s1 + $0x640] sm:$0xff]
  %v218 = vld [vmem:[%s1 + $0x648] sm:$0xff]
  %v219 = vld [vmem:[%s1 + $0x650] sm:$0xff]
  %v220 = vld [vmem:[%s1 + $0x658] sm:$0xff]
  %v221 = vld [vmem:[%s1 + $0x660] sm:$0xff]
  %v222 = vld [vmem:[%s1 + $0x668] sm:$0xff]
  %v223 = vld [vmem:[%s1 + $0x670] sm:$0xff]
  %v224 = vld [vmem:[%s1 + $0x678] sm:$0xff]
  %v225 = vld [vmem:[%s1 + $0x680] sm:$0xff]
  %v226 = vld [vmem:[%s1 + $0x688] sm:$0xff]
  %v227 = vld [vmem:[%s1 + $0x690] sm:$0xff]
  %v228 = vld [vmem:[%s1 + $0x698] sm:$0xff]
  %v229 = vld [vmem:[%s1 + $0x6a0] sm:$0xff]
  %v230 = vld [vmem:[%s1 + $0x6a8] sm:$0xff]
  %v231 = vld [vmem:[%s1 + $0x6b0] sm:$0xff]
  %v232 = vld [vmem:[%s1 + $0x6b8] sm:$0xff]
  %v233 = vld [vmem:[%s1 + $0x6c0] sm:$0xff]
  %v234 = vld [vmem:[%s1 + $0x6c8] sm:$0xff]
  %v235 = vld [vmem:[%s1 + $0x6d0] sm:$0xff]
  %v236 = vld [vmem:[%s1 + $0x6d8] sm:$0xff]
  %v237 = vld [vmem:[%s1 + $0x6e0] sm:$0xff]
  %v238 = vld [vmem:[%s1 + $0x6e8] sm:$0xff]
  %v239 = vld [vmem:[%s1 + $0x6f0] sm:$0xff]
  %v240 = vld [vmem:[%s1 + $0x6f8] sm:$0xff]
  %v241 = vld [vmem:[%s1 + $0x700] sm:$0xff]
  %v242 = vld [vmem:[%s1 + $0x708] sm:$0xff]
  %v243 = vld [vmem:[%s1 + $0x710] sm:$0xff]
  %v244 = vld [vmem:[%s1 + $0x718] sm:$0xff]
  %v245 = vld [vmem:[%s1 + $0x720] sm:$0xff]
  %v246 = vld [vmem:[%s1 + $0x728] sm:$0xff]
  %v247 = vld [vmem:[%s1 + $0x730] sm:$0xff]
  %v248 = vld [vmem:[%s1 + $0x738] sm:$0xff]
  %v249 = vld [vmem:[%s1 + $0x740] sm:$0xff]
  %v250 = vld [vmem:[%s1 + $0x748] sm:$0xff]
  %v251 = vld [vmem:[%s1 + $0x750] sm:$0xff]
  %v252 = vld [vmem:[%s1 + $0x758] sm:$0xff]
  %v253 = vld [vmem:[%s1 + $0x760] sm:$0xff]
  %v254 = vld [vmem:[%s1 + $0x768] sm:$0xff]
  %v255 = vld [vmem:[%s1 + $0x770] sm:$0xff]
  %v256 = vld [vmem:[%s1 + $0x778] sm:$0xff]
  %v257 = vld [vmem:[%s1 + $0x780] sm:$0xff]
  %v258 = vld [vmem:[%s1 + $0x788] sm:$0xff]
  %v259 = vld [vmem:[%s1 + $0x790] sm:$0xff]
  %v260 = vld [vmem:[%s1 + $0x798] sm:$0xff]
  %v261 = vld [vmem:[%s1 + $0x7a0] sm:$0xff]
  %v262 = vld [vmem:[%s1 + $0x7a8] sm:$0xff]
  %v263 = vld [vmem:[%s1 + $0x7b0] sm:$0xff]
  %v264 = vld [vmem:[%s1 + $0x7b8] sm:$0xff]
  %v265 = vld [vmem:[%s1 + $0x7c0] sm:$0xff]
  %v266 = vld [vmem:[%s1 + $0x7c8] sm:$0xff]
  %v267 = vld [vmem:[%s1 + $0x7d0] sm:$0xff]
  %v268 = vld [vmem:[%s1 + $0x7d8] sm:$0xff]
  %v269 = vld [vmem:[%s1 + $0x7e0] sm:$0xff]
  %v270 = vld [vmem:[%s1 + $0x7e8] sm:$0xff]
  %v271 = vld [vmem:[%s1 + $0x7f0] sm:$0xff]
  %v272 = vld [vmem:[%s1 + $0x7f8] sm:$0xff]
  %v273 = vld [vmem:[%s1 + $0x800] sm:$0xff]
  %v274 = vld [vmem:[%s1 + $0x808] sm:$0xff]
  %v275 = vld [vmem:[%s1 + $0x810] sm:$0xff]
  %v276 = vld [vmem:[%s1 + $0x818] sm:$0xff]
  %v277 = vld [vmem:[%s1 + $0x820] sm:$0xff]
  %v278 = vld [vmem:[%s1 + $0x828] sm:$0xff]
  %v279 = vld [vmem:[%s1 + $0x830] sm:$0xff]
  %v280 = vld [vmem:[%s1 + $0x838] sm:$0xff]
  %v281 = vld [vmem:[%s1 + $0x840] sm:$0xff]
  %v282 = vld [vmem:[%s1 + $0x848] sm:$0xff]
  %v283 = vld [vmem:[%s1 + $0x850] sm:$0xff]
  %v284 = vld [vmem:[%s1 + $0x858] sm:$0xff]
  %v285 = vld [vmem:[%s1 + $0x860] sm:$0xff]
  %v286 = vld [vmem:[%s1 + $0x868] sm:$0xff]
  %v287 = vld [vmem:[%s1 + $0x870] sm:$0xff]
  %v288 = vld [vmem:[%s1 + $0x878] sm:$0xff]
  %v289 = vld [vmem:[%s1 + $0x880] sm:$0xff]
  %v290 = vld [vmem:[%s1 + $0x888] sm:$0xff]
  %v291 = vld [vmem:[%s1 + $0x890] sm:$0xff]
  %v292 = vld [vmem:[%s1 + $0x898] sm:$0xff]
  %v293 = vld [vmem:[%s1 + $0x8a0] sm:$0xff]
  %v294 = vld [vmem:[%s1 + $0x8a8] sm:$0xff]
  %v295 = vld [vmem:[%s1 + $0x8b0] sm:$0xff]
  %v296 = vld [vmem:[%s1 + $0x8b8] sm:$0xff]
  %v297 = vld [vmem:[%s1 + $0x8c0] sm:$0xff]
  %v298 = vld [vmem:[%s1 + $0x8c8] sm:$0xff]
  %v299 = vld [vmem:[%s1 + $0x8d0] sm:$0xff]
  %v300 = vld [vmem:[%s1 + $0x8d8] sm:$0xff]
  %v301 = vld [vmem:[%s1 + $0x8e0] sm:$0xff]
  %v302 = vld [vmem:[%s1 + $0x8e8] sm:$0xff]
  %v303 = vld [vmem:[%s1 + $0x8f0] sm:$0xff]
  %v304 = vld [vmem:[%s1 + $0x8f8] sm:$0xff]
  %v305 = vld [vmem:[%s2] ss:$4 sm:$0x3]
  %v307 = vperm.slane %v305, 0
  %v308 = vperm.slane %v305, 1
  %312 = vst [vmem:[#allocation1] ss:$9 sm:$0xff] %v14
  %v313 = vld [vmem:[#allocation1] sm:$0xff]
  %v314 = vld [vmem:[#allocation1 + $0x9] sm:$0xff]
  %v315 = vld [vmem:[#allocation1 + $0x12] sm:$0xff]
  %v316 = vld [vmem:[#allocation1 + $0x1b] sm:$0xff]
  %v317 = vld [vmem:[#allocation1 + $0x24] sm:$0xff]
  %v318 = vld [vmem:[#allocation1 + $0x2d] sm:$0xff]
  %v319 = vld [vmem:[#allocation1 + $0x36] sm:$0xff]
  %v320 = vld [vmem:[#allocation1 + $0x3f] sm:$0xff]
  %322 = vst [vmem:[#allocation1] ss:$9 sm:$0xff] %v15
  %v323 = vld [vmem:[#allocation1] sm:$0xff]
  %v324 = vld [vmem:[#allocation1 + $0x9] sm:$0xff]
  %v325 = vld [vmem:[#allocation1 + $0x12] sm:$0xff]
  %v326 = vld [vmem:[#allocation1 + $0x1b] sm:$0xff]
  %v327 = vld [vmem:[#allocation1 + $0x24] sm:$0xff]
  %v328 = vld [vmem:[#allocation1 + $0x2d] sm:$0xff]
  %v329 = vld [vmem:[#allocation1 + $0x36] sm:$0xff]
  %v330 = vld [vmem:[#allocation1 + $0x3f] sm:$0xff]
  %332 = vst [vmem:[#allocation1] ss:$9 sm:$0xff] %v16
  %v333 = vld [vmem:[#allocation1] sm:$0xff]
  %v334 = vld [vmem:[#allocation1 + $0x9] sm:$0xff]
  %v641 = vunpack.c.l.b16 %v17
  %v642 = vunpack.c.h.b16 %v17
  %v643 = vunpack.c.l.b16 %v18
  %v644 = vunpack.c.h.b16 %v18
  %v645 = vunpack.c.l.b16 %v19
  %v646 = vunpack.c.h.b16 %v19
  %v647 = vunpack.c.l.b16 %v20
  %v648 = vunpack.c.h.b16 %v20
  %v649 = vunpack.c.l.b16 %v21
  %v650 = vunpack.c.h.b16 %v21
  %v651 = vunpack.c.l.b16 %v22
  %v652 = vunpack.c.h.b16 %v22
  %v653 = vunpack.c.l.b16 %v23
  %v654 = vunpack.c.h.b16 %v23
  %v655 = vunpack.c.l.b16 %v24
  %v656 = vunpack.c.h.b16 %v24
  %v657 = vunpack.c.l.b16 %v25
  %v658 = vunpack.c.h.b16 %v25
  %v659 = vunpack.c.l.b16 %v26
  %v660 = vunpack.c.h.b16 %v26
  %v661 = vunpack.c.l.b16 %v27
  %v662 = vunpack.c.h.b16 %v27
  %v663 = vunpack.c.l.b16 %v28
  %v664 = vunpack.c.h.b16 %v28
  %v665 = vunpack.c.l.b16 %v29
  %v666 = vunpack.c.h.b16 %v29
  %v667 = vunpack.c.l.b16 %v30
  %v668 = vunpack.c.h.b16 %v30
  %v669 = vunpack.c.l.b16 %v31
  %v670 = vunpack.c.h.b16 %v31
  %v671 = vunpack.c.l.b16 %v32
  %v672 = vunpack.c.h.b16 %v32
  %v673 = vunpack.c.l.b16 %v33
  %v674 = vunpack.c.h.b16 %v33
  %v675 = vunpack.c.l.b16 %v34
  %v676 = vunpack.c.h.b16 %v34
  %v677 = vunpack.c.l.b16 %v35
  %v678 = vunpack.c.h.b16 %v35
  %v679 = vunpack.c.l.b16 %v36
  %v680 = vunpack.c.h.b16 %v36
  %v681 = vunpack.c.l.b16 %v37
  %v682 = vunpack.c.h.b16 %v37
  %v683 = vunpack.c.l.b16 %v38
  %v684 = vunpack.c.h.b16 %v38
  %v685 = vunpack.c.l.b16 %v39
  %v686 = vunpack.c.h.b16 %v39
  %v687 = vunpack.c.l.b16 %v40
  %v688 = vunpack.c.h.b16 %v40
  %v689 = vunpack.c.l.b16 %v41
  %v690 = vunpack.c.h.b16 %v41
  %v691 = vunpack.c.l.b16 %v42
  %v692 = vunpack.c.h.b16 %v42
  %v693 = vunpack.c.l.b16 %v43
  %v694 = vunpack.c.h.b16 %v43
  %v695 = vunpack.c.l.b16 %v44
  %v696 = vunpack.c.h.b16 %v44
  %v697 = vunpack.c.l.b16 %v45
  %v698 = vunpack.c.h.b16 %v45
  %v699 = vunpack.c.l.b16 %v46
  %v700 = vunpack.c.h.b16 %v46
  %v701 = vunpack.c.l.b16 %v47
  %v702 = vunpack.c.h.b16 %v47
  %v703 = vunpack.c.l.b16 %v48
  %v704 = vunpack.c.h.b16 %v48
  %v705 = vunpack.c.l.b16 %v49
  %v706 = vunpack.c.h.b16 %v49
  %v707 = vunpack.c.l.b16 %v50
  %v708 = vunpack.c.h.b16 %v50
  %v709 = vunpack.c.l.b16 %v51
  %v710 = vunpack.c.h.b16 %v51
  %v711 = vunpack.c.l.b16 %v52
  %v712 = vunpack.c.h.b16 %v52
  %v713 = vunpack.c.l.b16 %v53
  %v714 = vunpack.c.h.b16 %v53
  %v715 = vunpack.c.l.b16 %v54
  %v716 = vunpack.c.h.b16 %v54
  %v717 = vunpack.c.l.b16 %v55
  %v718 = vunpack.c.h.b16 %v55
  %v719 = vunpack.c.l.b16 %v56
  %v720 = vunpack.c.h.b16 %v56
  %v721 = vunpack.c.l.b16 %v57
  %v722 = vunpack.c.h.b16 %v57
  %v723 = vunpack.c.l.b16 %v58
  %v724 = vunpack.c.h.b16 %v58
  %v725 = vunpack.c.l.b16 %v59
  %v726 = vunpack.c.h.b16 %v59
  %v727 = vunpack.c.l.b16 %v60
  %v728 = vunpack.c.h.b16 %v60
  %v729 = vunpack.c.l.b16 %v61
  %v730 = vunpack.c.h.b16 %v61
  %v731 = vunpack.c.l.b16 %v62
  %v732 = vunpack.c.h.b16 %v62
  %v733 = vunpack.c.l.b16 %v63
  %v734 = vunpack.c.h.b16 %v63
  %v735 = vunpack.c.l.b16 %v64
  %v736 = vunpack.c.h.b16 %v64
  %v737 = vunpack.c.l.b16 %v65
  %v738 = vunpack.c.h.b16 %v65
  %v739 = vunpack.c.l.b16 %v66
  %v740 = vunpack.c.h.b16 %v66
  %v741 = vunpack.c.l.b16 %v67
  %v742 = vunpack.c.h.b16 %v67
  %v743 = vunpack.c.l.b16 %v68
  %v744 = vunpack.c.h.b16 %v68
  %v745 = vunpack.c.l.b16 %v69
  %v746 = vunpack.c.h.b16 %v69
  %v747 = vunpack.c.l.b16 %v70
  %v748 = vunpack.c.h.b16 %v70
  %v749 = vunpack.c.l.b16 %v71
  %v750 = vunpack.c.h.b16 %v71
  %v751 = vunpack.c.l.b16 %v72
  %v752 = vunpack.c.h.b16 %v72
  %v753 = vunpack.c.l.b16 %v73
  %v754 = vunpack.c.h.b16 %v73
  %v755 = vunpack.c.l.b16 %v74
  %v756 = vunpack.c.h.b16 %v74
  %v757 = vunpack.c.l.b16 %v75
  %v758 = vunpack.c.h.b16 %v75
  %v759 = vunpack.c.l.b16 %v76
  %v760 = vunpack.c.h.b16 %v76
  %v761 = vunpack.c.l.b16 %v77
  %v762 = vunpack.c.h.b16 %v77
  %v763 = vunpack.c.l.b16 %v78
  %v764 = vunpack.c.h.b16 %v78
  %v765 = vunpack.c.l.b16 %v79
  %v766 = vunpack.c.h.b16 %v79
  %v767 = vunpack.c.l.b16 %v80
  %v768 = vunpack.c.h.b16 %v80
  %v769 = vunpack.c.l.b16 %v81
  %v770 = vunpack.c.h.b16 %v81
  %v771 = vunpack.c.l.b16 %v82
  %v772 = vunpack.c.h.b16 %v82
  %v773 = vunpack.c.l.b16 %v83
  %v774 = vunpack.c.h.b16 %v83
  %v775 = vunpack.c.l.b16 %v84
  %v776 = vunpack.c.h.b16 %v84
  %v777 = vunpack.c.l.b16 %v85
  %v778 = vunpack.c.h.b16 %v85
  %v779 = vunpack.c.l.b16 %v86
  %v780 = vunpack.c.h.b16 %v86
  %v781 = vunpack.c.l.b16 %v87
  %v782 = vunpack.c.h.b16 %v87
  %v783 = vunpack.c.l.b16 %v88
  %v784 = vunpack.c.h.b16 %v88
  %v785 = vunpack.c.l.b16 %v89
  %v786 = vunpack.c.h.b16 %v89
  %v787 = vunpack.c.l.b16 %v90
  %v788 = vunpack.c.h.b16 %v90
  %v789 = vunpack.c.l.b16 %v91
  %v790 = vunpack.c.h.b16 %v91
  %v791 = vunpack.c.l.b16 %v92
  %v792 = vunpack.c.h.b16 %v92
  %v793 = vunpack.c.l.b16 %v93
  %v794 = vunpack.c.h.b16 %v93
  %v795 = vunpack.c.l.b16 %v94
  %v796 = vunpack.c.h.b16 %v94
  %v797 = vunpack.c.l.b16 %v95
  %v798 = vunpack.c.h.b16 %v95
  %v799 = vunpack.c.l.b16 %v96
  %v800 = vunpack.c.h.b16 %v96
  %v801 = vunpack.c.l.b16 %v97
  %v802 = vunpack.c.h.b16 %v97
  %v803 = vunpack.c.l.b16 %v98
  %v804 = vunpack.c.h.b16 %v98
  %v805 = vunpack.c.l.b16 %v99
  %v806 = vunpack.c.h.b16 %v99
  %v807 = vunpack.c.l.b16 %v100
  %v808 = vunpack.c.h.b16 %v100
  %v809 = vunpack.c.l.b16 %v101
  %v810 = vunpack.c.h.b16 %v101
  %v811 = vunpack.c.l.b16 %v102
  %v812 = vunpack.c.h.b16 %v102
  %v813 = vunpack.c.l.b16 %v103
  %v814 = vunpack.c.h.b16 %v103
  %v815 = vunpack.c.l.b16 %v104
  %v816 = vunpack.c.h.b16 %v104
  %v817 = vunpack.c.l.b16 %v105
  %v818 = vunpack.c.h.b16 %v105
  %v819 = vunpack.c.l.b16 %v106
  %v820 = vunpack.c.h.b16 %v106
  %v821 = vunpack.c.l.b16 %v107
  %v822 = vunpack.c.h.b16 %v107
  %v823 = vunpack.c.l.b16 %v108
  %v824 = vunpack.c.h.b16 %v108
  %v825 = vunpack.c.l.b16 %v109
  %v826 = vunpack.c.h.b16 %v109
  %v827 = vunpack.c.l.b16 %v110
  %v828 = vunpack.c.h.b16 %v110
  %v829 = vunpack.c.l.b16 %v111
  %v830 = vunpack.c.h.b16 %v111
  %v831 = vunpack.c.l.b16 %v112
  %v832 = vunpack.c.h.b16 %v112
  %v833 = vunpack.c.l.b16 %v113
  %v834 = vunpack.c.h.b16 %v113
  %v835 = vunpack.c.l.b16 %v114
  %v836 = vunpack.c.h.b16 %v114
  %v837 = vunpack.c.l.b16 %v115
  %v838 = vunpack.c.h.b16 %v115
  %v839 = vunpack.c.l.b16 %v116
  %v840 = vunpack.c.h.b16 %v116
  %v841 = vunpack.c.l.b16 %v117
  %v842 = vunpack.c.h.b16 %v117
  %v843 = vunpack.c.l.b16 %v118
  %v844 = vunpack.c.h.b16 %v118
  %v845 = vunpack.c.l.b16 %v119
  %v846 = vunpack.c.h.b16 %v119
  %v847 = vunpack.c.l.b16 %v120
  %v848 = vunpack.c.h.b16 %v120
  %v849 = vunpack.c.l.b16 %v121
  %v850 = vunpack.c.h.b16 %v121
  %v851 = vunpack.c.l.b16 %v122
  %v852 = vunpack.c.h.b16 %v122
  %v853 = vunpack.c.l.b16 %v123
  %v854 = vunpack.c.h.b16 %v123
  %v855 = vunpack.c.l.b16 %v124
  %v856 = vunpack.c.h.b16 %v124
  %v857 = vunpack.c.l.b16 %v125
  %v858 = vunpack.c.h.b16 %v125
  %v859 = vunpack.c.l.b16 %v126
  %v860 = vunpack.c.h.b16 %v126
  %v861 = vunpack.c.l.b16 %v127
  %v862 = vunpack.c.h.b16 %v127
  %v863 = vunpack.c.l.b16 %v128
  %v864 = vunpack.c.h.b16 %v128
  %v865 = vunpack.c.l.b16 %v129
  %v866 = vunpack.c.h.b16 %v129
  %v867 = vunpack.c.l.b16 %v130
  %v868 = vunpack.c.h.b16 %v130
  %v869 = vunpack.c.l.b16 %v131
  %v870 = vunpack.c.h.b16 %v131
  %v871 = vunpack.c.l.b16 %v132
  %v872 = vunpack.c.h.b16 %v132
  %v873 = vunpack.c.l.b16 %v133
  %v874 = vunpack.c.h.b16 %v133
  %v875 = vunpack.c.l.b16 %v134
  %v876 = vunpack.c.h.b16 %v134
  %v877 = vunpack.c.l.b16 %v135
  %v878 = vunpack.c.h.b16 %v135
  %v879 = vunpack.c.l.b16 %v136
  %v880 = vunpack.c.h.b16 %v136
  %v881 = vunpack.c.l.b16 %v137
  %v882 = vunpack.c.h.b16 %v137
  %v883 = vunpack.c.l.b16 %v138
  %v884 = vunpack.c.h.b16 %v138
  %v885 = vunpack.c.l.b16 %v139
  %v886 = vunpack.c.h.b16 %v139
  %v887 = vunpack.c.l.b16 %v140
  %v888 = vunpack.c.h.b16 %v140
  %v889 = vunpack.c.l.b16 %v141
  %v890 = vunpack.c.h.b16 %v141
  %v891 = vunpack.c.l.b16 %v142
  %v892 = vunpack.c.h.b16 %v142
  %v893 = vunpack.c.l.b16 %v143
  %v894 = vunpack.c.h.b16 %v143
  %v895 = vunpack.c.l.b16 %v144
  %v896 = vunpack.c.h.b16 %v144
  %v897 = vunpack.c.l.b16 %v145
  %v898 = vunpack.c.h.b16 %v145
  %v899 = vunpack.c.l.b16 %v146
  %v900 = vunpack.c.h.b16 %v146
  %v901 = vunpack.c.l.b16 %v147
  %v902 = vunpack.c.h.b16 %v147
  %v903 = vunpack.c.l.b16 %v148
  %v904 = vunpack.c.h.b16 %v148
  %v905 = vunpack.c.l.b16 %v149
  %v906 = vunpack.c.h.b16 %v149
  %v907 = vunpack.c.l.b16 %v150
  %v908 = vunpack.c.h.b16 %v150
  %v909 = vunpack.c.l.b16 %v151
  %v910 = vunpack.c.h.b16 %v151
  %v911 = vunpack.c.l.b16 %v152
  %v912 = vunpack.c.h.b16 %v152
  %v913 = vunpack.c.l.b16 %v153
  %v914 = vunpack.c.h.b16 %v153
  %v915 = vunpack.c.l.b16 %v154
  %v916 = vunpack.c.h.b16 %v154
  %v917 = vunpack.c.l.b16 %v155
  %v918 = vunpack.c.h.b16 %v155
  %v919 = vunpack.c.l.b16 %v156
  %v920 = vunpack.c.h.b16 %v156
  %v921 = vunpack.c.l.b16 %v157
  %v922 = vunpack.c.h.b16 %v157
  %v923 = vunpack.c.l.b16 %v158
  %v924 = vunpack.c.h.b16 %v158
  %v925 = vunpack.c.l.b16 %v159
  %v926 = vunpack.c.h.b16 %v159
  %v927 = vunpack.c.l.b16 %v160
  %v928 = vunpack.c.h.b16 %v160
  %v929 = vunpack.c.l.b16 %v161
  %v930 = vunpack.c.h.b16 %v161
  %v931 = vunpack.c.l.b16 %v162
  %v932 = vunpack.c.h.b16 %v162
  %v933 = vunpack.c.l.b16 %v163
  %v934 = vunpack.c.h.b16 %v163
  %v935 = vunpack.c.l.b16 %v164
  %v936 = vunpack.c.h.b16 %v164
  %v937 = vunpack.c.l.b16 %v165
  %v938 = vunpack.c.h.b16 %v165
  %v939 = vunpack.c.l.b16 %v166
  %v940 = vunpack.c.h.b16 %v166
  %v941 = vunpack.c.l.b16 %v167
  %v942 = vunpack.c.h.b16 %v167
  %v943 = vunpack.c.l.b16 %v168
  %v944 = vunpack.c.h.b16 %v168
  %v945 = vunpack.c.l.b16 %v169
  %v946 = vunpack.c.h.b16 %v169
  %v947 = vunpack.c.l.b16 %v170
  %v948 = vunpack.c.h.b16 %v170
  %v949 = vunpack.c.l.b16 %v171
  %v950 = vunpack.c.h.b16 %v171
  %v951 = vunpack.c.l.b16 %v172
  %v952 = vunpack.c.h.b16 %v172
  %v953 = vunpack.c.l.b16 %v173
  %v954 = vunpack.c.h.b16 %v173
  %v955 = vunpack.c.l.b16 %v174
  %v956 = vunpack.c.h.b16 %v174
  %v957 = vunpack.c.l.b16 %v175
  %v958 = vunpack.c.h.b16 %v175
  %v959 = vunpack.c.l.b16 %v176
  %v960 = vunpack.c.h.b16 %v176
  %v961 = vunpack.c.l.b16 %v177
  %v962 = vunpack.c.h.b16 %v177
  %v963 = vunpack.c.l.b16 %v178
  %v964 = vunpack.c.h.b16 %v178
  %v965 = vunpack.c.l.b16 %v179
  %v966 = vunpack.c.h.b16 %v179
  %v967 = vunpack.c.l.b16 %v180
  %v968 = vunpack.c.h.b16 %v180
  %v969 = vunpack.c.l.b16 %v181
  %v970 = vunpack.c.h.b16 %v181
  %v971 = vunpack.c.l.b16 %v182
  %v972 = vunpack.c.h.b16 %v182
  %v973 = vunpack.c.l.b16 %v183
  %v974 = vunpack.c.h.b16 %v183
  %v975 = vunpack.c.l.b16 %v184
  %v976 = vunpack.c.h.b16 %v184
  %v977 = vunpack.c.l.b16 %v185
  %v978 = vunpack.c.h.b16 %v185
  %v979 = vunpack.c.l.b16 %v186
  %v980 = vunpack.c.h.b16 %v186
  %v981 = vunpack.c.l.b16 %v187
  %v982 = vunpack.c.h.b16 %v187
  %v983 = vunpack.c.l.b16 %v188
  %v984 = vunpack.c.h.b16 %v188
  %v985 = vunpack.c.l.b16 %v189
  %v986 = vunpack.c.h.b16 %v189
  %v987 = vunpack.c.l.b16 %v190
  %v988 = vunpack.c.h.b16 %v190
  %v989 = vunpack.c.l.b16 %v191
  %v990 = vunpack.c.h.b16 %v191
  %v991 = vunpack.c.l.b16 %v192
  %v992 = vunpack.c.h.b16 %v192
  %v993 = vunpack.c.l.b16 %v193
  %v994 = vunpack.c.h.b16 %v193
  %v995 = vunpack.c.l.b16 %v194
  %v996 = vunpack.c.h.b16 %v194
  %v997 = vunpack.c.l.b16 %v195
  %v998 = vunpack.c.h.b16 %v195
  %v999 = vunpack.c.l.b16 %v196
  %v1000 = vunpack.c.h.b16 %v196
  %v1001 = vunpack.c.l.b16 %v197
  %v1002 = vunpack.c.h.b16 %v197
  %v1003 = vunpack.c.l.b16 %v198
  %v1004 = vunpack.c.h.b16 %v198
  %v1005 = vunpack.c.l.b16 %v199
  %v1006 = vunpack.c.h.b16 %v199
  %v1007 = vunpack.c.l.b16 %v200
  %v1008 = vunpack.c.h.b16 %v200
  %v1009 = vunpack.c.l.b16 %v201
  %v1010 = vunpack.c.h.b16 %v201
  %v1011 = vunpack.c.l.b16 %v202
  %v1012 = vunpack.c.h.b16 %v202
  %v1013 = vunpack.c.l.b16 %v203
  %v1014 = vunpack.c.h.b16 %v203
  %v1015 = vunpack.c.l.b16 %v204
  %v1016 = vunpack.c.h.b16 %v204
  %v1017 = vunpack.c.l.b16 %v205
  %v1018 = vunpack.c.h.b16 %v205
  %v1019 = vunpack.c.l.b16 %v206
  %v1020 = vunpack.c.h.b16 %v206
  %v1021 = vunpack.c.l.b16 %v207
  %v1022 = vunpack.c.h.b16 %v207
  %v1023 = vunpack.c.l.b16 %v208
  %v1024 = vunpack.c.h.b16 %v208
  %v1025 = vunpack.c.l.b16 %v209
  %v1026 = vunpack.c.h.b16 %v209
  %v1027 = vunpack.c.l.b16 %v210
  %v1028 = vunpack.c.h.b16 %v210
  %v1029 = vunpack.c.l.b16 %v211
  %v1030 = vunpack.c.h.b16 %v211
  %v1031 = vunpack.c.l.b16 %v212
  %v1032 = vunpack.c.h.b16 %v212
  %v1033 = vunpack.c.l.b16 %v213
  %v1034 = vunpack.c.h.b16 %v213
  %v1035 = vunpack.c.l.b16 %v214
  %v1036 = vunpack.c.h.b16 %v214
  %v1037 = vunpack.c.l.b16 %v215
  %v1038 = vunpack.c.h.b16 %v215
  %v1039 = vunpack.c.l.b16 %v216
  %v1040 = vunpack.c.h.b16 %v216
  %v1041 = vunpack.c.l.b16 %v217
  %v1042 = vunpack.c.h.b16 %v217
  %v1043 = vunpack.c.l.b16 %v218
  %v1044 = vunpack.c.h.b16 %v218
  %v1045 = vunpack.c.l.b16 %v219
  %v1046 = vunpack.c.h.b16 %v219
  %v1047 = vunpack.c.l.b16 %v220
  %v1048 = vunpack.c.h.b16 %v220
  %v1049 = vunpack.c.l.b16 %v221
  %v1050 = vunpack.c.h.b16 %v221
  %v1051 = vunpack.c.l.b16 %v222
  %v1052 = vunpack.c.h.b16 %v222
  %v1053 = vunpack.c.l.b16 %v223
  %v1054 = vunpack.c.h.b16 %v223
  %v1055 = vunpack.c.l.b16 %v224
  %v1056 = vunpack.c.h.b16 %v224
  %v1057 = vunpack.c.l.b16 %v225
  %v1058 = vunpack.c.h.b16 %v225
  %v1059 = vunpack.c.l.b16 %v226
  %v1060 = vunpack.c.h.b16 %v226
  %v1061 = vunpack.c.l.b16 %v227
  %v1062 = vunpack.c.h.b16 %v227
  %v1063 = vunpack.c.l.b16 %v228
  %v1064 = vunpack.c.h.b16 %v228
  %v1065 = vunpack.c.l.b16 %v229
  %v1066 = vunpack.c.h.b16 %v229
  %v1067 = vunpack.c.l.b16 %v230
  %v1068 = vunpack.c.h.b16 %v230
  %v1069 = vunpack.c.l.b16 %v231
  %v1070 = vunpack.c.h.b16 %v231
  %v1071 = vunpack.c.l.b16 %v232
  %v1072 = vunpack.c.h.b16 %v232
  %v1073 = vunpack.c.l.b16 %v233
  %v1074 = vunpack.c.h.b16 %v233
  %v1075 = vunpack.c.l.b16 %v234
  %v1076 = vunpack.c.h.b16 %v234
  %v1077 = vunpack.c.l.b16 %v235
  %v1078 = vunpack.c.h.b16 %v235
  %v1079 = vunpack.c.l.b16 %v236
  %v1080 = vunpack.c.h.b16 %v236
  %v1081 = vunpack.c.l.b16 %v237
  %v1082 = vunpack.c.h.b16 %v237
  %v1083 = vunpack.c.l.b16 %v238
  %v1084 = vunpack.c.h.b16 %v238
  %v1085 = vunpack.c.l.b16 %v239
  %v1086 = vunpack.c.h.b16 %v239
  %v1087 = vunpack.c.l.b16 %v240
  %v1088 = vunpack.c.h.b16 %v240
  %v1089 = vunpack.c.l.b16 %v241
  %v1090 = vunpack.c.h.b16 %v241
  %v1091 = vunpack.c.l.b16 %v242
  %v1092 = vunpack.c.h.b16 %v242
  %v1093 = vunpack.c.l.b16 %v243
  %v1094 = vunpack.c.h.b16 %v243
  %v1095 = vunpack.c.l.b16 %v244
  %v1096 = vunpack.c.h.b16 %v244
  %v1097 = vunpack.c.l.b16 %v245
  %v1098 = vunpack.c.h.b16 %v245
  %v1099 = vunpack.c.l.b16 %v246
  %v1100 = vunpack.c.h.b16 %v246
  %v1101 = vunpack.c.l.b16 %v247
  %v1102 = vunpack.c.h.b16 %v247
  %v1103 = vunpack.c.l.b16 %v248
  %v1104 = vunpack.c.h.b16 %v248
  %v1105 = vunpack.c.l.b16 %v249
  %v1106 = vunpack.c.h.b16 %v249
  %v1107 = vunpack.c.l.b16 %v250
  %v1108 = vunpack.c.h.b16 %v250
  %v1109 = vunpack.c.l.b16 %v251
  %v1110 = vunpack.c.h.b16 %v251
  %v1111 = vunpack.c.l.b16 %v252
  %v1112 = vunpack.c.h.b16 %v252
  %v1113 = vunpack.c.l.b16 %v253
  %v1114 = vunpack.c.h.b16 %v253
  %v1115 = vunpack.c.l.b16 %v254
  %v1116 = vunpack.c.h.b16 %v254
  %v1117 = vunpack.c.l.b16 %v255
  %v1118 = vunpack.c.h.b16 %v255
  %v1119 = vunpack.c.l.b16 %v256
  %v1120 = vunpack.c.h.b16 %v256
  %v1121 = vunpack.c.l.b16 %v257
  %v1122 = vunpack.c.h.b16 %v257
  %v1123 = vunpack.c.l.b16 %v258
  %v1124 = vunpack.c.h.b16 %v258
  %v1125 = vunpack.c.l.b16 %v259
  %v1126 = vunpack.c.h.b16 %v259
  %v1127 = vunpack.c.l.b16 %v260
  %v1128 = vunpack.c.h.b16 %v260
  %v1129 = vunpack.c.l.b16 %v261
  %v1130 = vunpack.c.h.b16 %v261
  %v1131 = vunpack.c.l.b16 %v262
  %v1132 = vunpack.c.h.b16 %v262
  %v1133 = vunpack.c.l.b16 %v263
  %v1134 = vunpack.c.h.b16 %v263
  %v1135 = vunpack.c.l.b16 %v264
  %v1136 = vunpack.c.h.b16 %v264
  %v1137 = vunpack.c.l.b16 %v265
  %v1138 = vunpack.c.h.b16 %v265
  %v1139 = vunpack.c.l.b16 %v266
  %v1140 = vunpack.c.h.b16 %v266
  %v1141 = vunpack.c.l.b16 %v267
  %v1142 = vunpack.c.h.b16 %v267
  %v1143 = vunpack.c.l.b16 %v268
  %v1144 = vunpack.c.h.b16 %v268
  %v1145 = vunpack.c.l.b16 %v269
  %v1146 = vunpack.c.h.b16 %v269
  %v1147 = vunpack.c.l.b16 %v270
  %v1148 = vunpack.c.h.b16 %v270
  %v1149 = vunpack.c.l.b16 %v271
  %v1150 = vunpack.c.h.b16 %v271
  %v1151 = vunpack.c.l.b16 %v272
  %v1152 = vunpack.c.h.b16 %v272
  %v1153 = vunpack.c.l.b16 %v273
  %v1154 = vunpack.c.h.b16 %v273
  %v1155 = vunpack.c.l.b16 %v274
  %v1156 = vunpack.c.h.b16 %v274
  %v1157 = vunpack.c.l.b16 %v275
  %v1158 = vunpack.c.h.b16 %v275
  %v1159 = vunpack.c.l.b16 %v276
  %v1160 = vunpack.c.h.b16 %v276
  %v1161 = vunpack.c.l.b16 %v277
  %v1162 = vunpack.c.h.b16 %v277
  %v1163 = vunpack.c.l.b16 %v278
  %v1164 = vunpack.c.h.b16 %v278
  %v1165 = vunpack.c.l.b16 %v279
  %v1166 = vunpack.c.h.b16 %v279
  %v1167 = vunpack.c.l.b16 %v280
  %v1168 = vunpack.c.h.b16 %v280
  %v1169 = vunpack.c.l.b16 %v281
  %v1170 = vunpack.c.h.b16 %v281
  %v1171 = vunpack.c.l.b16 %v282
  %v1172 = vunpack.c.h.b16 %v282
  %v1173 = vunpack.c.l.b16 %v283
  %v1174 = vunpack.c.h.b16 %v283
  %v1175 = vunpack.c.l.b16 %v284
  %v1176 = vunpack.c.h.b16 %v284
  %v1177 = vunpack.c.l.b16 %v285
  %v1178 = vunpack.c.h.b16 %v285
  %v1179 = vunpack.c.l.b16 %v286
  %v1180 = vunpack.c.h.b16 %v286
  %v1181 = vunpack.c.l.b16 %v287
  %v1182 = vunpack.c.h.b16 %v287
  %v1183 = vunpack.c.l.b16 %v288
  %v1184 = vunpack.c.h.b16 %v288
  %v1185 = vunpack.c.l.b16 %v289
  %v1186 = vunpack.c.h.b16 %v289
  %v1187 = vunpack.c.l.b16 %v290
  %v1188 = vunpack.c.h.b16 %v290
  %v1189 = vunpack.c.l.b16 %v291
  %v1190 = vunpack.c.h.b16 %v291
  %v1191 = vunpack.c.l.b16 %v292
  %v1192 = vunpack.c.h.b16 %v292
  %v1193 = vunpack.c.l.b16 %v293
  %v1194 = vunpack.c.h.b16 %v293
  %v1195 = vunpack.c.l.b16 %v294
  %v1196 = vunpack.c.h.b16 %v294
  %v1197 = vunpack.c.l.b16 %v295
  %v1198 = vunpack.c.h.b16 %v295
  %v1199 = vunpack.c.l.b16 %v296
  %v1200 = vunpack.c.h.b16 %v296
  %v1201 = vunpack.c.l.b16 %v297
  %v1202 = vunpack.c.h.b16 %v297
  %v1203 = vunpack.c.l.b16 %v298
  %v1204 = vunpack.c.h.b16 %v298
  %v1205 = vunpack.c.l.b16 %v299
  %v1206 = vunpack.c.h.b16 %v299
  %v1207 = vunpack.c.l.b16 %v300
  %v1208 = vunpack.c.h.b16 %v300
  %v1209 = vunpack.c.l.b16 %v301
  %v1210 = vunpack.c.h.b16 %v301
  %v1211 = vunpack.c.l.b16 %v302
  %v1212 = vunpack.c.h.b16 %v302
  %v1213 = vunpack.c.l.b16 %v303
  %v1214 = vunpack.c.h.b16 %v303
  %v1215 = vunpack.c.l.b16 %v304
  %v1216 = vunpack.c.h.b16 %v304
  %v1217 = vpack.c.b16 %v643, %v641
  %v1218 = vpack.c.b16 %v644, %v642
  %v1219 = vpack.c.b16 %v647, %v645
  %v1220 = vpack.c.b16 %v648, %v646
  %v1221 = vpack.c.b16 %v651, %v649
  %v1222 = vpack.c.b16 %v652, %v650
  %v1223 = vpack.c.b16 %v655, %v653
  %v1224 = vpack.c.b16 %v656, %v654
  %v1225 = vpack.c.b16 %v659, %v657
  %v1226 = vpack.c.b16 %v660, %v658
  %v1227 = vpack.c.b16 %v663, %v661
  %v1228 = vpack.c.b16 %v664, %v662
  %v1229 = vpack.c.b16 %v667, %v665
  %v1230 = vpack.c.b16 %v668, %v666
  %v1231 = vpack.c.b16 %v671, %v669
  %v1232 = vpack.c.b16 %v672, %v670
  %v1233 = vpack.c.b16 %v675, %v673
  %v1234 = vpack.c.b16 %v676, %v674
  %v1235 = vpack.c.b16 %v679, %v677
  %v1236 = vpack.c.b16 %v680, %v678
  %v1237 = vpack.c.b16 %v683, %v681
  %v1238 = vpack.c.b16 %v684, %v682
  %v1239 = vpack.c.b16 %v687, %v685
  %v1240 = vpack.c.b16 %v688, %v686
  %v1241 = vpack.c.b16 %v691, %v689
  %v1242 = vpack.c.b16 %v692, %v690
  %v1243 = vpack.c.b16 %v695, %v693
  %v1244 = vpack.c.b16 %v696, %v694
  %v1245 = vpack.c.b16 %v699, %v697
  %v1246 = vpack.c.b16 %v700, %v698
  %v1247 = vpack.c.b16 %v703, %v701
  %v1248 = vpack.c.b16 %v704, %v702
  %v1249 = vpack.c.b16 %v707, %v705
  %v1250 = vpack.c.b16 %v708, %v706
  %v1251 = vpack.c.b16 %v711, %v709
  %v1252 = vpack.c.b16 %v712, %v710
  %v1253 = vpack.c.b16 %v715, %v713
  %v1254 = vpack.c.b16 %v716, %v714
  %v1255 = vpack.c.b16 %v719, %v717
  %v1256 = vpack.c.b16 %v720, %v718
  %v1257 = vpack.c.b16 %v723, %v721
  %v1258 = vpack.c.b16 %v724, %v722
  %v1259 = vpack.c.b16 %v727, %v725
  %v1260 = vpack.c.b16 %v728, %v726
  %v1261 = vpack.c.b16 %v731, %v729
  %v1262 = vpack.c.b16 %v732, %v730
  %v1263 = vpack.c.b16 %v735, %v733
  %v1264 = vpack.c.b16 %v736, %v734
  %v1265 = vpack.c.b16 %v739, %v737
  %v1266 = vpack.c.b16 %v740, %v738
  %v1267 = vpack.c.b16 %v743, %v741
  %v1268 = vpack.c.b16 %v744, %v742
  %v1269 = vpack.c.b16 %v747, %v745
  %v1270 = vpack.c.b16 %v748, %v746
  %v1271 = vpack.c.b16 %v751, %v749
  %v1272 = vpack.c.b16 %v752, %v750
  %v1273 = vpack.c.b16 %v755, %v753
  %v1274 = vpack.c.b16 %v756, %v754
  %v1275 = vpack.c.b16 %v759, %v757
  %v1276 = vpack.c.b16 %v760, %v758
  %v1277 = vpack.c.b16 %v763, %v761
  %v1278 = vpack.c.b16 %v764, %v762
  %v1279 = vpack.c.b16 %v767, %v765
  %v1280 = vpack.c.b16 %v768, %v766
  %v1281 = vpack.c.b16 %v771, %v769
  %v1282 = vpack.c.b16 %v772, %v770
  %v1283 = vpack.c.b16 %v775, %v773
  %v1284 = vpack.c.b16 %v776, %v774
  %v1285 = vpack.c.b16 %v779, %v777
  %v1286 = vpack.c.b16 %v780, %v778
  %v1287 = vpack.c.b16 %v783, %v781
  %v1288 = vpack.c.b16 %v784, %v782
  %v1289 = vpack.c.b16 %v787, %v785
  %v1290 = vpack.c.b16 %v788, %v786
  %v1291 = vpack.c.b16 %v791, %v789
  %v1292 = vpack.c.b16 %v792, %v790
  %v1293 = vpack.c.b16 %v795, %v793
  %v1294 = vpack.c.b16 %v796, %v794
  %v1295 = vpack.c.b16 %v799, %v797
  %v1296 = vpack.c.b16 %v800, %v798
  %v1297 = vpack.c.b16 %v803, %v801
  %v1298 = vpack.c.b16 %v804, %v802
  %v1299 = vpack.c.b16 %v807, %v805
  %v1300 = vpack.c.b16 %v808, %v806
  %v1301 = vpack.c.b16 %v811, %v809
  %v1302 = vpack.c.b16 %v812, %v810
  %v1303 = vpack.c.b16 %v815, %v813
  %v1304 = vpack.c.b16 %v816, %v814
  %v1305 = vpack.c.b16 %v819, %v817
  %v1306 = vpack.c.b16 %v820, %v818
  %v1307 = vpack.c.b16 %v823, %v821
  %v1308 = vpack.c.b16 %v824, %v822
  %v1309 = vpack.c.b16 %v827, %v825
  %v1310 = vpack.c.b16 %v828, %v826
  %v1311 = vpack.c.b16 %v831, %v829
  %v1312 = vpack.c.b16 %v832, %v830
  %v1313 = vpack.c.b16 %v835, %v833
  %v1314 = vpack.c.b16 %v836, %v834
  %v1315 = vpack.c.b16 %v839, %v837
  %v1316 = vpack.c.b16 %v840, %v838
  %v1317 = vpack.c.b16 %v843, %v841
  %v1318 = vpack.c.b16 %v844, %v842
  %v1319 = vpack.c.b16 %v847, %v845
  %v1320 = vpack.c.b16 %v848, %v846
  %v1321 = vpack.c.b16 %v851, %v849
  %v1322 = vpack.c.b16 %v852, %v850
  %v1323 = vpack.c.b16 %v855, %v853
  %v1324 = vpack.c.b16 %v856, %v854
  %v1325 = vpack.c.b16 %v859, %v857
  %v1326 = vpack.c.b16 %v860, %v858
  %v1327 = vpack.c.b16 %v863, %v861
  %v1328 = vpack.c.b16 %v864, %v862
  %v1329 = vpack.c.b16 %v867, %v865
  %v1330 = vpack.c.b16 %v868, %v866
  %v1331 = vpack.c.b16 %v871, %v869
  %v1332 = vpack.c.b16 %v872, %v870
  %v1333 = vpack.c.b16 %v875, %v873
  %v1334 = vpack.c.b16 %v876, %v874
  %v1335 = vpack.c.b16 %v879, %v877
  %v1336 = vpack.c.b16 %v880, %v878
  %v1337 = vpack.c.b16 %v883, %v881
  %v1338 = vpack.c.b16 %v884, %v882
  %v1339 = vpack.c.b16 %v887, %v885
  %v1340 = vpack.c.b16 %v888, %v886
  %v1341 = vpack.c.b16 %v891, %v889
  %v1342 = vpack.c.b16 %v892, %v890
  %v1343 = vpack.c.b16 %v895, %v893
  %v1344 = vpack.c.b16 %v896, %v894
  %v1345 = vpack.c.b16 %v899, %v897
  %v1346 = vpack.c.b16 %v900, %v898
  %v1347 = vpack.c.b16 %v903, %v901
  %v1348 = vpack.c.b16 %v904, %v902
  %v1349 = vpack.c.b16 %v907, %v905
  %v1350 = vpack.c.b16 %v908, %v906
  %v1351 = vpack.c.b16 %v911, %v909
  %v1352 = vpack.c.b16 %v912, %v910
  %v1353 = vpack.c.b16 %v915, %v913
  %v1354 = vpack.c.b16 %v916, %v914
  %v1355 = vpack.c.b16 %v919, %v917
  %v1356 = vpack.c.b16 %v920, %v918
  %v1357 = vpack.c.b16 %v923, %v921
  %v1358 = vpack.c.b16 %v924, %v922
  %v1359 = vpack.c.b16 %v927, %v925
  %v1360 = vpack.c.b16 %v928, %v926
  %v1361 = vpack.c.b16 %v931, %v929
  %v1362 = vpack.c.b16 %v932, %v930
  %v1363 = vpack.c.b16 %v935, %v933
  %v1364 = vpack.c.b16 %v936, %v934
  %v1365 = vpack.c.b16 %v939, %v937
  %v1366 = vpack.c.b16 %v940, %v938
  %v1367 = vpack.c.b16 %v943, %v941
  %v1368 = vpack.c.b16 %v944, %v942
  %v1369 = vpack.c.b16 %v947, %v945
  %v1370 = vpack.c.b16 %v948, %v946
  %v1371 = vpack.c.b16 %v951, %v949
  %v1372 = vpack.c.b16 %v952, %v950
  %v1373 = vpack.c.b16 %v955, %v953
  %v1374 = vpack.c.b16 %v956, %v954
  %v1375 = vpack.c.b16 %v959, %v957
  %v1376 = vpack.c.b16 %v960, %v958
  %v1377 = vpack.c.b16 %v963, %v961
  %v1378 = vpack.c.b16 %v964, %v962
  %v1379 = vpack.c.b16 %v967, %v965
  %v1380 = vpack.c.b16 %v968, %v966
  %v1381 = vpack.c.b16 %v971, %v969
  %v1382 = vpack.c.b16 %v972, %v970
  %v1383 = vpack.c.b16 %v975, %v973
  %v1384 = vpack.c.b16 %v976, %v974
  %v1385 = vpack.c.b16 %v979, %v977
  %v1386 = vpack.c.b16 %v980, %v978
  %v1387 = vpack.c.b16 %v983, %v981
  %v1388 = vpack.c.b16 %v984, %v982
  %v1389 = vpack.c.b16 %v987, %v985
  %v1390 = vpack.c.b16 %v988, %v986
  %v1391 = vpack.c.b16 %v991, %v989
  %v1392 = vpack.c.b16 %v992, %v990
  %v1393 = vpack.c.b16 %v995, %v993
  %v1394 = vpack.c.b16 %v996, %v994
  %v1395 = vpack.c.b16 %v999, %v997
  %v1396 = vpack.c.b16 %v1000, %v998
  %v1397 = vpack.c.b16 %v1003, %v1001
  %v1398 = vpack.c.b16 %v1004, %v1002
  %v1399 = vpack.c.b16 %v1007, %v1005
  %v1400 = vpack.c.b16 %v1008, %v1006
  %v1401 = vpack.c.b16 %v1011, %v1009
  %v1402 = vpack.c.b16 %v1012, %v1010
  %v1403 = vpack.c.b16 %v1015, %v1013
  %v1404 = vpack.c.b16 %v1016, %v1014
  %v1405 = vpack.c.b16 %v1019, %v1017
  %v1406 = vpack.c.b16 %v1020, %v1018
  %v1407 = vpack.c.b16 %v1023, %v1021
  %v1408 = vpack.c.b16 %v1024, %v1022
  %v1409 = vpack.c.b16 %v1027, %v1025
  %v1410 = vpack.c.b16 %v1028, %v1026
  %v1411 = vpack.c.b16 %v1031, %v1029
  %v1412 = vpack.c.b16 %v1032, %v1030
  %v1413 = vpack.c.b16 %v1035, %v1033
  %v1414 = vpack.c.b16 %v1036, %v1034
  %v1415 = vpack.c.b16 %v1039, %v1037
  %v1416 = vpack.c.b16 %v1040, %v1038
  %v1417 = vpack.c.b16 %v1043, %v1041
  %v1418 = vpack.c.b16 %v1044, %v1042
  %v1419 = vpack.c.b16 %v1047, %v1045
  %v1420 = vpack.c.b16 %v1048, %v1046
  %v1421 = vpack.c.b16 %v1051, %v1049
  %v1422 = vpack.c.b16 %v1052, %v1050
  %v1423 = vpack.c.b16 %v1055, %v1053
  %v1424 = vpack.c.b16 %v1056, %v1054
  %v1425 = vpack.c.b16 %v1059, %v1057
  %v1426 = vpack.c.b16 %v1060, %v1058
  %v1427 = vpack.c.b16 %v1063, %v1061
  %v1428 = vpack.c.b16 %v1064, %v1062
  %v1429 = vpack.c.b16 %v1067, %v1065
  %v1430 = vpack.c.b16 %v1068, %v1066
  %v1431 = vpack.c.b16 %v1071, %v1069
  %v1432 = vpack.c.b16 %v1072, %v1070
  %v1433 = vpack.c.b16 %v1075, %v1073
  %v1434 = vpack.c.b16 %v1076, %v1074
  %v1435 = vpack.c.b16 %v1079, %v1077
  %v1436 = vpack.c.b16 %v1080, %v1078
  %v1437 = vpack.c.b16 %v1083, %v1081
  %v1438 = vpack.c.b16 %v1084, %v1082
  %v1439 = vpack.c.b16 %v1087, %v1085
  %v1440 = vpack.c.b16 %v1088, %v1086
  %v1441 = vpack.c.b16 %v1091, %v1089
  %v1442 = vpack.c.b16 %v1092, %v1090
  %v1443 = vpack.c.b16 %v1095, %v1093
  %v1444 = vpack.c.b16 %v1096, %v1094
  %v1445 = vpack.c.b16 %v1099, %v1097
  %v1446 = vpack.c.b16 %v1100, %v1098
  %v1447 = vpack.c.b16 %v1103, %v1101
  %v1448 = vpack.c.b16 %v1104, %v1102
  %v1449 = vpack.c.b16 %v1107, %v1105
  %v1450 = vpack.c.b16 %v1108, %v1106
  %v1451 = vpack.c.b16 %v1111, %v1109
  %v1452 = vpack.c.b16 %v1112, %v1110
  %v1453 = vpack.c.b16 %v1115, %v1113
  %v1454 = vpack.c.b16 %v1116, %v1114
  %v1455 = vpack.c.b16 %v1119, %v1117
  %v1456 = vpack.c.b16 %v1120, %v1118
  %v1457 = vpack.c.b16 %v1123, %v1121
  %v1458 = vpack.c.b16 %v1124, %v1122
  %v1459 = vpack.c.b16 %v1127, %v1125
  %v1460 = vpack.c.b16 %v1128, %v1126
  %v1461 = vpack.c.b16 %v1131, %v1129
  %v1462 = vpack.c.b16 %v1132, %v1130
  %v1463 = vpack.c.b16 %v1135, %v1133
  %v1464 = vpack.c.b16 %v1136, %v1134
  %v1465 = vpack.c.b16 %v1139, %v1137
  %v1466 = vpack.c.b16 %v1140, %v1138
  %v1467 = vpack.c.b16 %v1143, %v1141
  %v1468 = vpack.c.b16 %v1144, %v1142
  %v1469 = vpack.c.b16 %v1147, %v1145
  %v1470 = vpack.c.b16 %v1148, %v1146
  %v1471 = vpack.c.b16 %v1151, %v1149
  %v1472 = vpack.c.b16 %v1152, %v1150
  %v1473 = vpack.c.b16 %v1155, %v1153
  %v1474 = vpack.c.b16 %v1156, %v1154
  %v1475 = vpack.c.b16 %v1159, %v1157
  %v1476 = vpack.c.b16 %v1160, %v1158
  %v1477 = vpack.c.b16 %v1163, %v1161
  %v1478 = vpack.c.b16 %v1164, %v1162
  %v1479 = vpack.c.b16 %v1167, %v1165
  %v1480 = vpack.c.b16 %v1168, %v1166
  %v1481 = vpack.c.b16 %v1171, %v1169
  %v1482 = vpack.c.b16 %v1172, %v1170
  %v1483 = vpack.c.b16 %v1175, %v1173
  %v1484 = vpack.c.b16 %v1176, %v1174
  %v1485 = vpack.c.b16 %v1179, %v1177
  %v1486 = vpack.c.b16 %v1180, %v1178
  %v1487 = vpack.c.b16 %v1183, %v1181
  %v1488 = vpack.c.b16 %v1184, %v1182
  %v1489 = vpack.c.b16 %v1187, %v1185
  %v1490 = vpack.c.b16 %v1188, %v1186
  %v1491 = vpack.c.b16 %v1191, %v1189
  %v1492 = vpack.c.b16 %v1192, %v1190
  %v1493 = vpack.c.b16 %v1195, %v1193
  %v1494 = vpack.c.b16 %v1196, %v1194
  %v1495 = vpack.c.b16 %v1199, %v1197
  %v1496 = vpack.c.b16 %v1200, %v1198
  %v1497 = vpack.c.b16 %v1203, %v1201
  %v1498 = vpack.c.b16 %v1204, %v1202
  %v1499 = vpack.c.b16 %v1207, %v1205
  %v1500 = vpack.c.b16 %v1208, %v1206
  %v1501 = vpack.c.b16 %v1211, %v1209
  %v1502 = vpack.c.b16 %v1212, %v1210
  %v1503 = vpack.c.b16 %v1215, %v1213
  %v1504 = vpack.c.b16 %v1216, %v1214
  %1793 = vmatpush.bf16.msra.mxu0 %v1231
  %1794 = vmatpush.bf16.msra.mxu0 %v1229
  %1795 = vmatpush.bf16.msra.mxu0 %v1227
  %1796 = vmatpush.bf16.msra.mxu0 %v1225
  %1797 = vmatpush.bf16.msra.mxu0 %v1223
  %1798 = vmatpush.bf16.msra.mxu0 %v1221
  %1799 = vmatpush.bf16.msra.mxu0 %v1219
  %1800 = vmatpush.bf16.msra.mxu0 %v1217
  %1801 = vmatmul.bf16.gmra.mxu0 %v313
  %v1802 = vpop.f32.mrf.mxu0
  %v1803 = vadd.f32 %v307, %v1802
  %v1804 = vpop.f32.mrf.mxu0
  %1805 = vdwg.mxu0
  %1806 = vmatpush.bf16.msra.mxu0 %v1247
  %1807 = vmatpush.bf16.msra.mxu0 %v1245
  %1808 = vmatpush.bf16.msra.mxu0 %v1243
  %1809 = vmatpush.bf16.msra.mxu0 %v1241
  %1810 = vmatpush.bf16.msra.mxu0 %v1239
  %1811 = vmatpush.bf16.msra.mxu0 %v1237
  %1812 = vmatpush.bf16.msra.mxu0 %v1235
  %1813 = vmatpush.bf16.msra.mxu0 %v1233
  %1814 = vmatmul.bf16.gmra.mxu0 %v314
  %v1815 = vpop.f32.mrf.mxu0
  %v1816 = vadd.f32 %v1803, %v1815
  %v1817 = vpop.f32.mrf.mxu0
  %1818 = vdwg.mxu0
  %1819 = vmatpush.bf16.msra.mxu0 %v1263
  %1820 = vmatpush.bf16.msra.mxu0 %v1261
  %1821 = vmatpush.bf16.msra.mxu0 %v1259
  %1822 = vmatpush.bf16.msra.mxu0 %v1257
  %1823 = vmatpush.bf16.msra.mxu0 %v1255
  %1824 = vmatpush.bf16.msra.mxu0 %v1253
  %1825 = vmatpush.bf16.msra.mxu0 %v1251
  %1826 = vmatpush.bf16.msra.mxu0 %v1249
  %1827 = vmatmul.bf16.gmra.mxu0 %v315
  %v1828 = vpop.f32.mrf.mxu0
  %v1829 = vadd.f32 %v1816, %v1828
  %v1830 = vpop.f32.mrf.mxu0
  %1831 = vdwg.mxu0
  %1832 = vmatpush.bf16.msra.mxu0 %v1279
  %1833 = vmatpush.bf16.msra.mxu0 %v1277
  %1834 = vmatpush.bf16.msra.mxu0 %v1275
  %1835 = vmatpush.bf16.msra.mxu0 %v1273
  %1836 = vmatpush.bf16.msra.mxu0 %v1271
  %1837 = vmatpush.bf16.msra.mxu0 %v1269
  %1838 = vmatpush.bf16.msra.mxu0 %v1267
  %1839 = vmatpush.bf16.msra.mxu0 %v1265
  %1840 = vmatmul.bf16.gmra.mxu0 %v316
  %v1841 = vpop.f32.mrf.mxu0
  %v1842 = vadd.f32 %v1829, %v1841
  %v1843 = vpop.f32.mrf.mxu0
  %1844 = vdwg.mxu0
  %1845 = vmatpush.bf16.msra.mxu0 %v1295
  %1846 = vmatpush.bf16.msra.mxu0 %v1293
  %1847 = vmatpush.bf16.msra.mxu0 %v1291
  %1848 = vmatpush.bf16.msra.mxu0 %v1289
  %1849 = vmatpush.bf16.msra.mxu0 %v1287
  %1850 = vmatpush.bf16.msra.mxu0 %v1285
  %1851 = vmatpush.bf16.msra.mxu0 %v1283
  %1852 = vmatpush.bf16.msra.mxu0 %v1281
  %1853 = vmatmul.bf16.gmra.mxu0 %v317
  %v1854 = vpop.f32.mrf.mxu0
  %v1855 = vadd.f32 %v1842, %v1854
  %v1856 = vpop.f32.mrf.mxu0
  %1857 = vdwg.mxu0
  %1858 = vmatpush.bf16.msra.mxu0 %v1311
  %1859 = vmatpush.bf16.msra.mxu0 %v1309
  %1860 = vmatpush.bf16.msra.mxu0 %v1307
  %1861 = vmatpush.bf16.msra.mxu0 %v1305
  %1862 = vmatpush.bf16.msra.mxu0 %v1303
  %1863 = vmatpush.bf16.msra.mxu0 %v1301
  %1864 = vmatpush.bf16.msra.mxu0 %v1299
  %1865 = vmatpush.bf16.msra.mxu0 %v1297
  %1866 = vmatmul.bf16.gmra.mxu0 %v318
  %v1867 = vpop.f32.mrf.mxu0
  %v1868 = vadd.f32 %v1855, %v1867
  %v1869 = vpop.f32.mrf.mxu0
  %1870 = vdwg.mxu0
  %1871 = vmatpush.bf16.msra.mxu0 %v1327
  %1872 = vmatpush.bf16.msra.mxu0 %v1325
  %1873 = vmatpush.bf16.msra.mxu0 %v1323
  %1874 = vmatpush.bf16.msra.mxu0 %v1321
  %1875 = vmatpush.bf16.msra.mxu0 %v1319
  %1876 = vmatpush.bf16.msra.mxu0 %v1317
  %1877 = vmatpush.bf16.msra.mxu0 %v1315
  %1878 = vmatpush.bf16.msra.mxu0 %v1313
  %1879 = vmatmul.bf16.gmra.mxu0 %v319
  %v1880 = vpop.f32.mrf.mxu0
  %v1881 = vadd.f32 %v1868, %v1880
  %v1882 = vpop.f32.mrf.mxu0
  %1883 = vdwg.mxu0
  %1884 = vmatpush.bf16.msra.mxu0 %v1343
  %1885 = vmatpush.bf16.msra.mxu0 %v1341
  %1886 = vmatpush.bf16.msra.mxu0 %v1339
  %1887 = vmatpush.bf16.msra.mxu0 %v1337
  %1888 = vmatpush.bf16.msra.mxu0 %v1335
  %1889 = vmatpush.bf16.msra.mxu0 %v1333
  %1890 = vmatpush.bf16.msra.mxu0 %v1331
  %1891 = vmatpush.bf16.msra.mxu0 %v1329
  %1892 = vmatmul.bf16.gmra.mxu0 %v320
  %v1893 = vpop.f32.mrf.mxu0
  %v1894 = vadd.f32 %v1881, %v1893
  %v1895 = vpop.f32.mrf.mxu0
  %1896 = vdwg.mxu0
  %1897 = vmatpush.bf16.msra.mxu0 %v1359
  %1898 = vmatpush.bf16.msra.mxu0 %v1357
  %1899 = vmatpush.bf16.msra.mxu0 %v1355
  %1900 = vmatpush.bf16.msra.mxu0 %v1353
  %1901 = vmatpush.bf16.msra.mxu0 %v1351
  %1902 = vmatpush.bf16.msra.mxu0 %v1349
  %1903 = vmatpush.bf16.msra.mxu0 %v1347
  %1904 = vmatpush.bf16.msra.mxu0 %v1345
  %1905 = vmatmul.bf16.gmra.mxu0 %v323
  %v1906 = vpop.f32.mrf.mxu0
  %v1907 = vadd.f32 %v1894, %v1906
  %v1908 = vpop.f32.mrf.mxu0
  %1909 = vdwg.mxu0
  %1910 = vmatpush.bf16.msra.mxu0 %v1375
  %1911 = vmatpush.bf16.msra.mxu0 %v1373
  %1912 = vmatpush.bf16.msra.mxu0 %v1371
  %1913 = vmatpush.bf16.msra.mxu0 %v1369
  %1914 = vmatpush.bf16.msra.mxu0 %v1367
  %1915 = vmatpush.bf16.msra.mxu0 %v1365
  %1916 = vmatpush.bf16.msra.mxu0 %v1363
  %1917 = vmatpush.bf16.msra.mxu0 %v1361
  %1918 = vmatmul.bf16.gmra.mxu0 %v324
  %v1919 = vpop.f32.mrf.mxu0
  %v1920 = vadd.f32 %v1907, %v1919
  %v1921 = vpop.f32.mrf.mxu0
  %1922 = vdwg.mxu0
  %1923 = vmatpush.bf16.msra.mxu0 %v1391
  %1924 = vmatpush.bf16.msra.mxu0 %v1389
  %1925 = vmatpush.bf16.msra.mxu0 %v1387
  %1926 = vmatpush.bf16.msra.mxu0 %v1385
  %1927 = vmatpush.bf16.msra.mxu0 %v1383
  %1928 = vmatpush.bf16.msra.mxu0 %v1381
  %1929 = vmatpush.bf16.msra.mxu0 %v1379
  %1930 = vmatpush.bf16.msra.mxu0 %v1377
  %1931 = vmatmul.bf16.gmra.mxu0 %v325
  %v1932 = vpop.f32.mrf.mxu0
  %v1933 = vadd.f32 %v1920, %v1932
  %v1934 = vpop.f32.mrf.mxu0
  %1935 = vdwg.mxu0
  %1936 = vmatpush.bf16.msra.mxu0 %v1407
  %1937 = vmatpush.bf16.msra.mxu0 %v1405
  %1938 = vmatpush.bf16.msra.mxu0 %v1403
  %1939 = vmatpush.bf16.msra.mxu0 %v1401
  %1940 = vmatpush.bf16.msra.mxu0 %v1399
  %1941 = vmatpush.bf16.msra.mxu0 %v1397
  %1942 = vmatpush.bf16.msra.mxu0 %v1395
  %1943 = vmatpush.bf16.msra.mxu0 %v1393
  %1944 = vmatmul.bf16.gmra.mxu0 %v326
  %v1945 = vpop.f32.mrf.mxu0
  %v1946 = vadd.f32 %v1933, %v1945
  %v1947 = vpop.f32.mrf.mxu0
  %1948 = vdwg.mxu0
  %1949 = vmatpush.bf16.msra.mxu0 %v1423
  %1950 = vmatpush.bf16.msra.mxu0 %v1421
  %1951 = vmatpush.bf16.msra.mxu0 %v1419
  %1952 = vmatpush.bf16.msra.mxu0 %v1417
  %1953 = vmatpush.bf16.msra.mxu0 %v1415
  %1954 = vmatpush.bf16.msra.mxu0 %v1413
  %1955 = vmatpush.bf16.msra.mxu0 %v1411
  %1956 = vmatpush.bf16.msra.mxu0 %v1409
  %1957 = vmatmul.bf16.gmra.mxu0 %v327
  %v1958 = vpop.f32.mrf.mxu0
  %v1959 = vadd.f32 %v1946, %v1958
  %v1960 = vpop.f32.mrf.mxu0
  %1961 = vdwg.mxu0
  %1962 = vmatpush.bf16.msra.mxu0 %v1439
  %1963 = vmatpush.bf16.msra.mxu0 %v1437
  %1964 = vmatpush.bf16.msra.mxu0 %v1435
  %1965 = vmatpush.bf16.msra.mxu0 %v1433
  %1966 = vmatpush.bf16.msra.mxu0 %v1431
  %1967 = vmatpush.bf16.msra.mxu0 %v1429
  %1968 = vmatpush.bf16.msra.mxu0 %v1427
  %1969 = vmatpush.bf16.msra.mxu0 %v1425
  %1970 = vmatmul.bf16.gmra.mxu0 %v328
  %v1971 = vpop.f32.mrf.mxu0
  %v1972 = vadd.f32 %v1959, %v1971
  %v1973 = vpop.f32.mrf.mxu0
  %1974 = vdwg.mxu0
  %1975 = vmatpush.bf16.msra.mxu0 %v1455
  %1976 = vmatpush.bf16.msra.mxu0 %v1453
  %1977 = vmatpush.bf16.msra.mxu0 %v1451
  %1978 = vmatpush.bf16.msra.mxu0 %v1449
  %1979 = vmatpush.bf16.msra.mxu0 %v1447
  %1980 = vmatpush.bf16.msra.mxu0 %v1445
  %1981 = vmatpush.bf16.msra.mxu0 %v1443
  %1982 = vmatpush.bf16.msra.mxu0 %v1441
  %1983 = vmatmul.bf16.gmra.mxu0 %v329
  %v1984 = vpop.f32.mrf.mxu0
  %v1985 = vadd.f32 %v1972, %v1984
  %v1986 = vpop.f32.mrf.mxu0
  %1987 = vdwg.mxu0
  %1988 = vmatpush.bf16.msra.mxu0 %v1471
  %1989 = vmatpush.bf16.msra.mxu0 %v1469
  %1990 = vmatpush.bf16.msra.mxu0 %v1467
  %1991 = vmatpush.bf16.msra.mxu0 %v1465
  %1992 = vmatpush.bf16.msra.mxu0 %v1463
  %1993 = vmatpush.bf16.msra.mxu0 %v1461
  %1994 = vmatpush.bf16.msra.mxu0 %v1459
  %1995 = vmatpush.bf16.msra.mxu0 %v1457
  %1996 = vmatmul.bf16.gmra.mxu0 %v330
  %v1997 = vpop.f32.mrf.mxu0
  %v1998 = vadd.f32 %v1985, %v1997
  %v1999 = vpop.f32.mrf.mxu0
  %2000 = vdwg.mxu0
  %2001 = vmatpush.bf16.msra.mxu0 %v1487
  %2002 = vmatpush.bf16.msra.mxu0 %v1485
  %2003 = vmatpush.bf16.msra.mxu0 %v1483
  %2004 = vmatpush.bf16.msra.mxu0 %v1481
  %2005 = vmatpush.bf16.msra.mxu0 %v1479
  %2006 = vmatpush.bf16.msra.mxu0 %v1477
  %2007 = vmatpush.bf16.msra.mxu0 %v1475
  %2008 = vmatpush.bf16.msra.mxu0 %v1473
  %2009 = vmatmul.bf16.gmra.mxu0 %v333
  %v2010 = vpop.f32.mrf.mxu0
  %v2011 = vadd.f32 %v1998, %v2010
  %v2012 = vpop.f32.mrf.mxu0
  %2013 = vdwg.mxu0
  %2014 = vmatpush.bf16.msra.mxu0 %v1503
  %2015 = vmatpush.bf16.msra.mxu0 %v1501
  %2016 = vmatpush.bf16.msra.mxu0 %v1499
  %2017 = vmatpush.bf16.msra.mxu0 %v1497
  %2018 = vmatpush.bf16.msra.mxu0 %v1495
  %2019 = vmatpush.bf16.msra.mxu0 %v1493
  %2020 = vmatpush.bf16.msra.mxu0 %v1491
  %2021 = vmatpush.bf16.msra.mxu0 %v1489
  %2022 = vmatmul.bf16.gmra.mxu0 %v334
  %v2023 = vpop.f32.mrf.mxu0
  %v2024 = vadd.f32 %v2011, %v2023
  %v2025 = vpop.f32.mrf.mxu0
  %2026 = vdwg.mxu0
  %2027 = vmatpush.bf16.msra.mxu0 %v1232
  %2028 = vmatpush.bf16.msra.mxu0 %v1230
  %2029 = vmatpush.bf16.msra.mxu0 %v1228
  %2030 = vmatpush.bf16.msra.mxu0 %v1226
  %2031 = vmatpush.bf16.msra.mxu0 %v1224
  %2032 = vmatpush.bf16.msra.mxu0 %v1222
  %2033 = vmatpush.bf16.msra.mxu0 %v1220
  %2034 = vmatpush.bf16.msra.mxu0 %v1218
  %2035 = vmatmul.bf16.gmra.mxu0 %v313
  %v2036 = vpop.f32.mrf.mxu0
  %v2037 = vadd.f32 %v308, %v2036
  %v2038 = vpop.f32.mrf.mxu0
  %2039 = vdwg.mxu0
  %2040 = vmatpush.bf16.msra.mxu0 %v1248
  %2041 = vmatpush.bf16.msra.mxu0 %v1246
  %2042 = vmatpush.bf16.msra.mxu0 %v1244
  %2043 = vmatpush.bf16.msra.mxu0 %v1242
  %2044 = vmatpush.bf16.msra.mxu0 %v1240
  %2045 = vmatpush.bf16.msra.mxu0 %v1238
  %2046 = vmatpush.bf16.msra.mxu0 %v1236
  %2047 = vmatpush.bf16.msra.mxu0 %v1234
  %2048 = vmatmul.bf16.gmra.mxu0 %v314
  %v2049 = vpop.f32.mrf.mxu0
  %v2050 = vadd.f32 %v2037, %v2049
  %v2051 = vpop.f32.mrf.mxu0
  %2052 = vdwg.mxu0
  %2053 = vmatpush.bf16.msra.mxu0 %v1264
  %2054 = vmatpush.bf16.msra.mxu0 %v1262
  %2055 = vmatpush.bf16.msra.mxu0 %v1260
  %2056 = vmatpush.bf16.msra.mxu0 %v1258
  %2057 = vmatpush.bf16.msra.mxu0 %v1256
  %2058 = vmatpush.bf16.msra.mxu0 %v1254
  %2059 = vmatpush.bf16.msra.mxu0 %v1252
  %2060 = vmatpush.bf16.msra.mxu0 %v1250
  %2061 = vmatmul.bf16.gmra.mxu0 %v315
  %v2062 = vpop.f32.mrf.mxu0
  %v2063 = vadd.f32 %v2050, %v2062
  %v2064 = vpop.f32.mrf.mxu0
  %2065 = vdwg.mxu0
  %2066 = vmatpush.bf16.msra.mxu0 %v1280
  %2067 = vmatpush.bf16.msra.mxu0 %v1278
  %2068 = vmatpush.bf16.msra.mxu0 %v1276
  %2069 = vmatpush.bf16.msra.mxu0 %v1274
  %2070 = vmatpush.bf16.msra.mxu0 %v1272
  %2071 = vmatpush.bf16.msra.mxu0 %v1270
  %2072 = vmatpush.bf16.msra.mxu0 %v1268
  %2073 = vmatpush.bf16.msra.mxu0 %v1266
  %2074 = vmatmul.bf16.gmra.mxu0 %v316
  %v2075 = vpop.f32.mrf.mxu0
  %v2076 = vadd.f32 %v2063, %v2075
  %v2077 = vpop.f32.mrf.mxu0
  %2078 = vdwg.mxu0
  %2079 = vmatpush.bf16.msra.mxu0 %v1296
  %2080 = vmatpush.bf16.msra.mxu0 %v1294
  %2081 = vmatpush.bf16.msra.mxu0 %v1292
  %2082 = vmatpush.bf16.msra.mxu0 %v1290
  %2083 = vmatpush.bf16.msra.mxu0 %v1288
  %2084 = vmatpush.bf16.msra.mxu0 %v1286
  %2085 = vmatpush.bf16.msra.mxu0 %v1284
  %2086 = vmatpush.bf16.msra.mxu0 %v1282
  %2087 = vmatmul.bf16.gmra.mxu0 %v317
  %v2088 = vpop.f32.mrf.mxu0
  %v2089 = vadd.f32 %v2076, %v2088
  %v2090 = vpop.f32.mrf.mxu0
  %2091 = vdwg.mxu0
  %2092 = vmatpush.bf16.msra.mxu0 %v1312
  %2093 = vmatpush.bf16.msra.mxu0 %v1310
  %2094 = vmatpush.bf16.msra.mxu0 %v1308
  %2095 = vmatpush.bf16.msra.mxu0 %v1306
  %2096 = vmatpush.bf16.msra.mxu0 %v1304
  %2097 = vmatpush.bf16.msra.mxu0 %v1302
  %2098 = vmatpush.bf16.msra.mxu0 %v1300
  %2099 = vmatpush.bf16.msra.mxu0 %v1298
  %2100 = vmatmul.bf16.gmra.mxu0 %v318
  %v2101 = vpop.f32.mrf.mxu0
  %v2102 = vadd.f32 %v2089, %v2101
  %v2103 = vpop.f32.mrf.mxu0
  %2104 = vdwg.mxu0
  %2105 = vmatpush.bf16.msra.mxu0 %v1328
  %2106 = vmatpush.bf16.msra.mxu0 %v1326
  %2107 = vmatpush.bf16.msra.mxu0 %v1324
  %2108 = vmatpush.bf16.msra.mxu0 %v1322
  %2109 = vmatpush.bf16.msra.mxu0 %v1320
  %2110 = vmatpush.bf16.msra.mxu0 %v1318
  %2111 = vmatpush.bf16.msra.mxu0 %v1316
  %2112 = vmatpush.bf16.msra.mxu0 %v1314
  %2113 = vmatmul.bf16.gmra.mxu0 %v319
  %v2114 = vpop.f32.mrf.mxu0
  %v2115 = vadd.f32 %v2102, %v2114
  %v2116 = vpop.f32.mrf.mxu0
  %2117 = vdwg.mxu0
  %2118 = vmatpush.bf16.msra.mxu0 %v1344
  %2119 = vmatpush.bf16.msra.mxu0 %v1342
  %2120 = vmatpush.bf16.msra.mxu0 %v1340
  %2121 = vmatpush.bf16.msra.mxu0 %v1338
  %2122 = vmatpush.bf16.msra.mxu0 %v1336
  %2123 = vmatpush.bf16.msra.mxu0 %v1334
  %2124 = vmatpush.bf16.msra.mxu0 %v1332
  %2125 = vmatpush.bf16.msra.mxu0 %v1330
  %2126 = vmatmul.bf16.gmra.mxu0 %v320
  %v2127 = vpop.f32.mrf.mxu0
  %v2128 = vadd.f32 %v2115, %v2127
  %v2129 = vpop.f32.mrf.mxu0
  %2130 = vdwg.mxu0
  %2131 = vmatpush.bf16.msra.mxu0 %v1360
  %2132 = vmatpush.bf16.msra.mxu0 %v1358
  %2133 = vmatpush.bf16.msra.mxu0 %v1356
  %2134 = vmatpush.bf16.msra.mxu0 %v1354
  %2135 = vmatpush.bf16.msra.mxu0 %v1352
  %2136 = vmatpush.bf16.msra.mxu0 %v1350
  %2137 = vmatpush.bf16.msra.mxu0 %v1348
  %2138 = vmatpush.bf16.msra.mxu0 %v1346
  %2139 = vmatmul.bf16.gmra.mxu0 %v323
  %v2140 = vpop.f32.mrf.mxu0
  %v2141 = vadd.f32 %v2128, %v2140
  %v2142 = vpop.f32.mrf.mxu0
  %2143 = vdwg.mxu0
  %2144 = vmatpush.bf16.msra.mxu0 %v1376
  %2145 = vmatpush.bf16.msra.mxu0 %v1374
  %2146 = vmatpush.bf16.msra.mxu0 %v1372
  %2147 = vmatpush.bf16.msra.mxu0 %v1370
  %2148 = vmatpush.bf16.msra.mxu0 %v1368
  %2149 = vmatpush.bf16.msra.mxu0 %v1366
  %2150 = vmatpush.bf16.msra.mxu0 %v1364
  %2151 = vmatpush.bf16.msra.mxu0 %v1362
  %2152 = vmatmul.bf16.gmra.mxu0 %v324
  %v2153 = vpop.f32.mrf.mxu0
  %v2154 = vadd.f32 %v2141, %v2153
  %v2155 = vpop.f32.mrf.mxu0
  %2156 = vdwg.mxu0
  %2157 = vmatpush.bf16.msra.mxu0 %v1392
  %2158 = vmatpush.bf16.msra.mxu0 %v1390
  %2159 = vmatpush.bf16.msra.mxu0 %v1388
  %2160 = vmatpush.bf16.msra.mxu0 %v1386
  %2161 = vmatpush.bf16.msra.mxu0 %v1384
  %2162 = vmatpush.bf16.msra.mxu0 %v1382
  %2163 = vmatpush.bf16.msra.mxu0 %v1380
  %2164 = vmatpush.bf16.msra.mxu0 %v1378
  %2165 = vmatmul.bf16.gmra.mxu0 %v325
  %v2166 = vpop.f32.mrf.mxu0
  %v2167 = vadd.f32 %v2154, %v2166
  %v2168 = vpop.f32.mrf.mxu0
  %2169 = vdwg.mxu0
  %2170 = vmatpush.bf16.msra.mxu0 %v1408
  %2171 = vmatpush.bf16.msra.mxu0 %v1406
  %2172 = vmatpush.bf16.msra.mxu0 %v1404
  %2173 = vmatpush.bf16.msra.mxu0 %v1402
  %2174 = vmatpush.bf16.msra.mxu0 %v1400
  %2175 = vmatpush.bf16.msra.mxu0 %v1398
  %2176 = vmatpush.bf16.msra.mxu0 %v1396
  %2177 = vmatpush.bf16.msra.mxu0 %v1394
  %2178 = vmatmul.bf16.gmra.mxu0 %v326
  %v2179 = vpop.f32.mrf.mxu0
  %v2180 = vadd.f32 %v2167, %v2179
  %v2181 = vpop.f32.mrf.mxu0
  %2182 = vdwg.mxu0
  %2183 = vmatpush.bf16.msra.mxu0 %v1424
  %2184 = vmatpush.bf16.msra.mxu0 %v1422
  %2185 = vmatpush.bf16.msra.mxu0 %v1420
  %2186 = vmatpush.bf16.msra.mxu0 %v1418
  %2187 = vmatpush.bf16.msra.mxu0 %v1416
  %2188 = vmatpush.bf16.msra.mxu0 %v1414
  %2189 = vmatpush.bf16.msra.mxu0 %v1412
  %2190 = vmatpush.bf16.msra.mxu0 %v1410
  %2191 = vmatmul.bf16.gmra.mxu0 %v327
  %v2192 = vpop.f32.mrf.mxu0
  %v2193 = vadd.f32 %v2180, %v2192
  %v2194 = vpop.f32.mrf.mxu0
  %2195 = vdwg.mxu0
  %2196 = vmatpush.bf16.msra.mxu0 %v1440
  %2197 = vmatpush.bf16.msra.mxu0 %v1438
  %2198 = vmatpush.bf16.msra.mxu0 %v1436
  %2199 = vmatpush.bf16.msra.mxu0 %v1434
  %2200 = vmatpush.bf16.msra.mxu0 %v1432
  %2201 = vmatpush.bf16.msra.mxu0 %v1430
  %2202 = vmatpush.bf16.msra.mxu0 %v1428
  %2203 = vmatpush.bf16.msra.mxu0 %v1426
  %2204 = vmatmul.bf16.gmra.mxu0 %v328
  %v2205 = vpop.f32.mrf.mxu0
  %v2206 = vadd.f32 %v2193, %v2205
  %v2207 = vpop.f32.mrf.mxu0
  %2208 = vdwg.mxu0
  %2209 = vmatpush.bf16.msra.mxu0 %v1456
  %2210 = vmatpush.bf16.msra.mxu0 %v1454
  %2211 = vmatpush.bf16.msra.mxu0 %v1452
  %2212 = vmatpush.bf16.msra.mxu0 %v1450
  %2213 = vmatpush.bf16.msra.mxu0 %v1448
  %2214 = vmatpush.bf16.msra.mxu0 %v1446
  %2215 = vmatpush.bf16.msra.mxu0 %v1444
  %2216 = vmatpush.bf16.msra.mxu0 %v1442
  %2217 = vmatmul.bf16.gmra.mxu0 %v329
  %v2218 = vpop.f32.mrf.mxu0
  %v2219 = vadd.f32 %v2206, %v2218
  %v2220 = vpop.f32.mrf.mxu0
  %2221 = vdwg.mxu0
  %2222 = vmatpush.bf16.msra.mxu0 %v1472
  %2223 = vmatpush.bf16.msra.mxu0 %v1470
  %2224 = vmatpush.bf16.msra.mxu0 %v1468
  %2225 = vmatpush.bf16.msra.mxu0 %v1466
  %2226 = vmatpush.bf16.msra.mxu0 %v1464
  %2227 = vmatpush.bf16.msra.mxu0 %v1462
  %2228 = vmatpush.bf16.msra.mxu0 %v1460
  %2229 = vmatpush.bf16.msra.mxu0 %v1458
  %2230 = vmatmul.bf16.gmra.mxu0 %v330
  %v2231 = vpop.f32.mrf.mxu0
  %v2232 = vadd.f32 %v2219, %v2231
  %v2233 = vpop.f32.mrf.mxu0
  %2234 = vdwg.mxu0
  %2235 = vmatpush.bf16.msra.mxu0 %v1488
  %2236 = vmatpush.bf16.msra.mxu0 %v1486
  %2237 = vmatpush.bf16.msra.mxu0 %v1484
  %2238 = vmatpush.bf16.msra.mxu0 %v1482
  %2239 = vmatpush.bf16.msra.mxu0 %v1480
  %2240 = vmatpush.bf16.msra.mxu0 %v1478
  %2241 = vmatpush.bf16.msra.mxu0 %v1476
  %2242 = vmatpush.bf16.msra.mxu0 %v1474
  %2243 = vmatmul.bf16.gmra.mxu0 %v333
  %v2244 = vpop.f32.mrf.mxu0
  %v2245 = vadd.f32 %v2232, %v2244
  %v2246 = vpop.f32.mrf.mxu0
  %2247 = vdwg.mxu0
  %2248 = vmatpush.bf16.msra.mxu0 %v1504
  %2249 = vmatpush.bf16.msra.mxu0 %v1502
  %2250 = vmatpush.bf16.msra.mxu0 %v1500
  %2251 = vmatpush.bf16.msra.mxu0 %v1498
  %2252 = vmatpush.bf16.msra.mxu0 %v1496
  %2253 = vmatpush.bf16.msra.mxu0 %v1494
  %2254 = vmatpush.bf16.msra.mxu0 %v1492
  %2255 = vmatpush.bf16.msra.mxu0 %v1490
  %2256 = vmatmul.bf16.gmra.mxu0 %v334
  %v2257 = vpop.f32.mrf.mxu0
  %v2258 = vadd.f32 %v2245, %v2257
  %v2259 = vpop.f32.mrf.mxu0
  %2260 = vdwg.mxu0
  %vm2261 = vcmp.ge.f32.partialorder %v2024, 0.0
  %vm2262 = vcmp.ge.f32.partialorder %v2258, 0.0
  %v2263 = vmul.f32 %v2024, 0.2
  %v2264 = vmul.f32 %v2258, 0.2
  %v2265 = vsel %vm2261, %v2024, %v2263
  %v2266 = vsel %vm2262, %v2258, %v2264
  %vm2267 = vcmask 1041408
  %v2268 = vsel %vm2267, %v2265, 0.0
  %v2269 = vrot.slane %v2268, 4
  %v2270 = vadd.f32 %v2268, %v2269
  %v2271 = vrot.slane %v2270, 2
  %v2272 = vadd.f32 %v2270, %v2271
  %v2273 = vrot.slane %v2272, 1
  %v2274 = vadd.f32 %v2272, %v2273
  %v2275 = vsel %vm2267, %v2266, 0.0
  %v2276 = vrot.slane %v2275, 4
  %v2277 = vadd.f32 %v2275, %v2276
  %v2278 = vrot.slane %v2277, 2
  %v2279 = vadd.f32 %v2277, %v2278
  %v2280 = vrot.slane %v2279, 1
  %v2281 = vadd.f32 %v2279, %v2280
  %v2282 = vrcp.pop 2.0
  %v2283 = vmul.f32 2.0, %v2282
  %v2284 = vsub.f32 1.0, %v2283
  %v2285 = vmul.f32 %v2282, %v2284
  %v2286 = vadd.f32 %v2282, %v2285
  %vm2287 = vweird.f32 %v2282
  %v2288 = vsel %vm2287, %v2282, %v2286
  %v2289 = vmul.f32 %v2274, %v2288
  %v2290 = vmul.f32 %v2281, %v2288
  %v2291 = vsub.f32 %v2265, %v2289
  %v2292 = vsub.f32 %v2266, %v2290
  %v2293 = vmul.f32 %v2291, %v2291
  %v2294 = vmul.f32 %v2292, %v2292
  %v2295 = vsel %vm2267, %v2293, 0.0
  %v2296 = vrot.slane %v2295, 4
  %v2297 = vadd.f32 %v2295, %v2296
  %v2298 = vrot.slane %v2297, 2
  %v2299 = vadd.f32 %v2297, %v2298
  %v2300 = vrot.slane %v2299, 1
  %v2301 = vadd.f32 %v2299, %v2300
  %v2302 = vsel %vm2267, %v2294, 0.0
  %v2303 = vrot.slane %v2302, 4
  %v2304 = vadd.f32 %v2302, %v2303
  %v2305 = vrot.slane %v2304, 2
  %v2306 = vadd.f32 %v2304, %v2305
  %v2307 = vrot.slane %v2306, 1
  %v2308 = vadd.f32 %v2306, %v2307
  %v2309 = vmul.f32 %v2301, %v2288
  %v2310 = vmul.f32 %v2308, %v2288
  %v2311 = vadd.f32 %v2309, 1e-05
  %v2312 = vadd.f32 %v2310, 1e-05
  %v2313 = vrsqrt.pop %v2311
  %v2314 = vmul.f32 %v2313, %v2311
  %v2315 = vmul.f32 %v2314, %v2313
  %v2316 = vmul.f32 0.5, %v2315
  %v2317 = vsub.f32 1.5, %v2316
  %v2318 = vmul.f32 %v2313, %v2317
  %vm2319 = vweird.f32 %v2311
  %vm2320 = vweird.f32 %v2313
  %vm2321 = vmor %vm2319, %vm2320
  %v2322 = vsel %vm2321, %v2313, %v2318
  %v2323 = vrsqrt.pop %v2312
  %v2324 = vmul.f32 %v2323, %v2312
  %v2325 = vmul.f32 %v2324, %v2323
  %v2326 = vmul.f32 0.5, %v2325
  %v2327 = vsub.f32 1.5, %v2326
  %v2328 = vmul.f32 %v2323, %v2327
  %vm2329 = vweird.f32 %v2312
  %vm2330 = vweird.f32 %v2323
  %vm2331 = vmor %vm2329, %vm2330
  %v2332 = vsel %vm2331, %v2323, %v2328
  %v2333 = vmul.f32 %v2291, %v2322
  %v2334 = vmul.f32 %v2292, %v2332
  %s2335 = scalar_lea.vmem %s2, 1
  %v2336 = vld [vmem:[%s2335] ss:$4 sm:$0x3]
  %v2338 = vperm.slane %v2336, 0
  %v2339 = vperm.slane %v2336, 1
  %v2342 = vmul.f32 %v2333, %v2338
  %v2343 = vmul.f32 %v2334, %v2339
  %s2344 = scalar_lea.vmem %s2, 2
  %v2345 = vld [vmem:[%s2344] ss:$4 sm:$0x3]
  %v2347 = vperm.slane %v2345, 0
  %v2348 = vperm.slane %v2345, 1
  %v2351 = vadd.f32 %v2342, %v2347
  %v2352 = vadd.f32 %v2343, %v2348
  %v2355 = vrot.slane %v2352, 6
  %v2356 = vsel %vm2267, %v2351, %v2355
  %2358 = vst [vmem:[%s3] sm:$0xf] %v2356
  // Predicated region
  $region14: #{net_forward.11} parent=0 // pred_check
    _
  $region15: #{net_forward.11} parent=0 // pred_check_branch
    %2360 = sbr.rel (0) target = $region17
  $region16: #{net_forward.11} parent=0 // pred_region
    _
  $region17: #{net_forward.11} parent=0 // pred_fallthru
    _
  // Predicated region
  $region18: #{net_forward.11} parent=0 // pred_check
    _
  $region19: #{net_forward.11} parent=0 // pred_check_branch
    %2362 = sbr.rel (0) target = $region21
  $region20: #{net_forward.11} parent=0 // pred_region
    _
  $region21: #{net_forward.11} parent=0 // pred_fallthru
    _

// kernel: net_forward.12
$region0: #{net_forward.12}
  #allocation0 [shape = 'u32[]', space=smem, size = 0x4, offset = 0x4, fixed_abs, tag = 'smem constant byte address 0x4 - core index']
  #allocation1 [shape = 'u32[72,128]{1,0:T(1,128)}', space=vmem, size = 0x9000, scoped, tag = 'internal scratch']
  %s0 = inlined_call_operand.vmem [shape: bf16[8,2304], index: 0, kind: input, shape index: {}]
  %s1 = inlined_call_operand.vmem [shape: bf16[2304,256], index: 1, kind: input, shape index: {}]
  %s2 = inlined_call_operand.vmem [shape: f32[3,256], index: 2, kind: input, shape index: {}]
  %s3 = inlined_call_operand.vmem [shape: f32[8,256], index: 3, kind: output, shape index: {}]
  %s4 = sld [smem:[#allocation0]]
  $region22: #{net_forward.12} parent=0
    _
  %s6 = ssub.s32 1, %s4
  %s7 = scalar_select 0, %s6, %s4
  // Predicated region
  $region2: #{net_forward.12} parent=0 // pred_check
    _
  $region3: #{net_forward.12} parent=0 // pred_check_branch
    %9 = sbr.rel (0) target = $region5
  $region4: #{net_forward.12} parent=0 // pred_region
    _
  $region5: #{net_forward.12} parent=0 // pred_fallthru
    _
  // Predicated region
  $region6: #{net_forward.12} parent=0 // pred_check
    _
  $region7: #{net_forward.12} parent=0 // pred_check_branch
    %11 = sbr.rel (0) target = $region9
  $region8: #{net_forward.12} parent=0 // pred_region
    _
  $region9: #{net_forward.12} parent=0 // pred_fallthru
    _
  // Predicated region
  $region10: #{net_forward.12} parent=0 // pred_check
    _
  $region11: #{net_forward.12} parent=0 // pred_check_branch
    %13 = sbr.rel (0) target = $region13
  $region12: #{net_forward.12} parent=0 // pred_region
    _
  $region13: #{net_forward.12} parent=0 // pred_fallthru
    _
  %v14 = vld [vmem:[%s0] sm:$0xff]
  %v15 = vld [vmem:[%s0 + $0x8] sm:$0xff]
  %v16 = vld [vmem:[%s0 + $0x10] sm:$0xff]
  %v17 = vld [vmem:[%s0 + $0x18] sm:$0xff]
  %v18 = vld [vmem:[%s0 + $0x20] sm:$0xff]
  %v19 = vld [vmem:[%s0 + $0x28] sm:$0xff]
  %v20 = vld [vmem:[%s0 + $0x30] sm:$0xff]
  %v21 = vld [vmem:[%s0 + $0x38] sm:$0xff]
  %v22 = vld [vmem:[%s0 + $0x40] sm:$0xff]
  %v23 = vld [vmem:[%s1] sm:$0xff]
  %v24 = vld [vmem:[%s1 + $0x8] sm:$0xff]
  %v25 = vld [vmem:[%s1 + $0x10] sm:$0xff]
  %v26 = vld [vmem:[%s1 + $0x18] sm:$0xff]
  %v27 = vld [vmem:[%s1 + $0x20] sm:$0xff]
  %v28 = vld [vmem:[%s1 + $0x28] sm:$0xff]
  %v29 = vld [vmem:[%s1 + $0x30] sm:$0xff]
  %v30 = vld [vmem:[%s1 + $0x38] sm:$0xff]
  %v31 = vld [vmem:[%s1 + $0x40] sm:$0xff]
  %v32 = vld [vmem:[%s1 + $0x48] sm:$0xff]
  %v33 = vld [vmem:[%s1 + $0x50] sm:$0xff]
  %v34 = vld [vmem:[%s1 + $0x58] sm:$0xff]
  %v35 = vld [vmem:[%s1 + $0x60] sm:$0xff]
  %v36 = vld [vmem:[%s1 + $0x68] sm:$0xff]
  %v37 = vld [vmem:[%s1 + $0x70] sm:$0xff]
  %v38 = vld [vmem:[%s1 + $0x78] sm:$0xff]
  %v39 = vld [vmem:[%s1 + $0x80] sm:$0xff]
  %v40 = vld [vmem:[%s1 + $0x88] sm:$0xff]
  %v41 = vld [vmem:[%s1 + $0x90] sm:$0xff]
  %v42 = vld [vmem:[%s1 + $0x98] sm:$0xff]
  %v43 = vld [vmem:[%s1 + $0xa0] sm:$0xff]
  %v44 = vld [vmem:[%s1 + $0xa8] sm:$0xff]
  %v45 = vld [vmem:[%s1 + $0xb0] sm:$0xff]
  %v46 = vld [vmem:[%s1 + $0xb8] sm:$0xff]
  %v47 = vld [vmem:[%s1 + $0xc0] sm:$0xff]
  %v48 = vld [vmem:[%s1 + $0xc8] sm:$0xff]
  %v49 = vld [vmem:[%s1 + $0xd0] sm:$0xff]
  %v50 = vld [vmem:[%s1 + $0xd8] sm:$0xff]
  %v51 = vld [vmem:[%s1 + $0xe0] sm:$0xff]
  %v52 = vld [vmem:[%s1 + $0xe8] sm:$0xff]
  %v53 = vld [vmem:[%s1 + $0xf0] sm:$0xff]
  %v54 = vld [vmem:[%s1 + $0xf8] sm:$0xff]
  %v55 = vld [vmem:[%s1 + $0x100] sm:$0xff]
  %v56 = vld [vmem:[%s1 + $0x108] sm:$0xff]
  %v57 = vld [vmem:[%s1 + $0x110] sm:$0xff]
  %v58 = vld [vmem:[%s1 + $0x118] sm:$0xff]
  %v59 = vld [vmem:[%s1 + $0x120] sm:$0xff]
  %v60 = vld [vmem:[%s1 + $0x128] sm:$0xff]
  %v61 = vld [vmem:[%s1 + $0x130] sm:$0xff]
  %v62 = vld [vmem:[%s1 + $0x138] sm:$0xff]
  %v63 = vld [vmem:[%s1 + $0x140] sm:$0xff]
  %v64 = vld [vmem:[%s1 + $0x148] sm:$0xff]
  %v65 = vld [vmem:[%s1 + $0x150] sm:$0xff]
  %v66 = vld [vmem:[%s1 + $0x158] sm:$0xff]
  %v67 = vld [vmem:[%s1 + $0x160] sm:$0xff]
  %v68 = vld [vmem:[%s1 + $0x168] sm:$0xff]
  %v69 = vld [vmem:[%s1 + $0x170] sm:$0xff]
  %v70 = vld [vmem:[%s1 + $0x178] sm:$0xff]
  %v71 = vld [vmem:[%s1 + $0x180] sm:$0xff]
  %v72 = vld [vmem:[%s1 + $0x188] sm:$0xff]
  %v73 = vld [vmem:[%s1 + $0x190] sm:$0xff]
  %v74 = vld [vmem:[%s1 + $0x198] sm:$0xff]
  %v75 = vld [vmem:[%s1 + $0x1a0] sm:$0xff]
  %v76 = vld [vmem:[%s1 + $0x1a8] sm:$0xff]
  %v77 = vld [vmem:[%s1 + $0x1b0] sm:$0xff]
  %v78 = vld [vmem:[%s1 + $0x1b8] sm:$0xff]
  %v79 = vld [vmem:[%s1 + $0x1c0] sm:$0xff]
  %v80 = vld [vmem:[%s1 + $0x1c8] sm:$0xff]
  %v81 = vld [vmem:[%s1 + $0x1d0] sm:$0xff]
  %v82 = vld [vmem:[%s1 + $0x1d8] sm:$0xff]
  %v83 = vld [vmem:[%s1 + $0x1e0] sm:$0xff]
  %v84 = vld [vmem:[%s1 + $0x1e8] sm:$0xff]
  %v85 = vld [vmem:[%s1 + $0x1f0] sm:$0xff]
  %v86 = vld [vmem:[%s1 + $0x1f8] sm:$0xff]
  %v87 = vld [vmem:[%s1 + $0x200] sm:$0xff]
  %v88 = vld [vmem:[%s1 + $0x208] sm:$0xff]
  %v89 = vld [vmem:[%s1 + $0x210] sm:$0xff]
  %v90 = vld [vmem:[%s1 + $0x218] sm:$0xff]
  %v91 = vld [vmem:[%s1 + $0x220] sm:$0xff]
  %v92 = vld [vmem:[%s1 + $0x228] sm:$0xff]
  %v93 = vld [vmem:[%s1 + $0x230] sm:$0xff]
  %v94 = vld [vmem:[%s1 + $0x238] sm:$0xff]
  %v95 = vld [vmem:[%s1 + $0x240] sm:$0xff]
  %v96 = vld [vmem:[%s1 + $0x248] sm:$0xff]
  %v97 = vld [vmem:[%s1 + $0x250] sm:$0xff]
  %v98 = vld [vmem:[%s1 + $0x258] sm:$0xff]
  %v99 = vld [vmem:[%s1 + $0x260] sm:$0xff]
  %v100 = vld [vmem:[%s1 + $0x268] sm:$0xff]
  %v101 = vld [vmem:[%s1 + $0x270] sm:$0xff]
  %v102 = vld [vmem:[%s1 + $0x278] sm:$0xff]
  %v103 = vld [vmem:[%s1 + $0x280] sm:$0xff]
  %v104 = vld [vmem:[%s1 + $0x288] sm:$0xff]
  %v105 = vld [vmem:[%s1 + $0x290] sm:$0xff]
  %v106 = vld [vmem:[%s1 + $0x298] sm:$0xff]
  %v107 = vld [vmem:[%s1 + $0x2a0] sm:$0xff]
  %v108 = vld [vmem:[%s1 + $0x2a8] sm:$0xff]
  %v109 = vld [vmem:[%s1 + $0x2b0] sm:$0xff]
  %v110 = vld [vmem:[%s1 + $0x2b8] sm:$0xff]
  %v111 = vld [vmem:[%s1 + $0x2c0] sm:$0xff]
  %v112 = vld [vmem:[%s1 + $0x2c8] sm:$0xff]
  %v113 = vld [vmem:[%s1 + $0x2d0] sm:$0xff]
  %v114 = vld [vmem:[%s1 + $0x2d8] sm:$0xff]
  %v115 = vld [vmem:[%s1 + $0x2e0] sm:$0xff]
  %v116 = vld [vmem:[%s1 + $0x2e8] sm:$0xff]
  %v117 = vld [vmem:[%s1 + $0x2f0] sm:$0xff]
  %v118 = vld [vmem:[%s1 + $0x2f8] sm:$0xff]
  %v119 = vld [vmem:[%s1 + $0x300] sm:$0xff]
  %v120 = vld [vmem:[%s1 + $0x308] sm:$0xff]
  %v121 = vld [vmem:[%s1 + $0x310] sm:$0xff]
  %v122 = vld [vmem:[%s1 + $0x318] sm:$0xff]
  %v123 = vld [vmem:[%s1 + $0x320] sm:$0xff]
  %v124 = vld [vmem:[%s1 + $0x328] sm:$0xff]
  %v125 = vld [vmem:[%s1 + $0x330] sm:$0xff]
  %v126 = vld [vmem:[%s1 + $0x338] sm:$0xff]
  %v127 = vld [vmem:[%s1 + $0x340] sm:$0xff]
  %v128 = vld [vmem:[%s1 + $0x348] sm:$0xff]
  %v129 = vld [vmem:[%s1 + $0x350] sm:$0xff]
  %v130 = vld [vmem:[%s1 + $0x358] sm:$0xff]
  %v131 = vld [vmem:[%s1 + $0x360] sm:$0xff]
  %v132 = vld [vmem:[%s1 + $0x368] sm:$0xff]
  %v133 = vld [vmem:[%s1 + $0x370] sm:$0xff]
  %v134 = vld [vmem:[%s1 + $0x378] sm:$0xff]
  %v135 = vld [vmem:[%s1 + $0x380] sm:$0xff]
  %v136 = vld [vmem:[%s1 + $0x388] sm:$0xff]
  %v137 = vld [vmem:[%s1 + $0x390] sm:$0xff]
  %v138 = vld [vmem:[%s1 + $0x398] sm:$0xff]
  %v139 = vld [vmem:[%s1 + $0x3a0] sm:$0xff]
  %v140 = vld [vmem:[%s1 + $0x3a8] sm:$0xff]
  %v141 = vld [vmem:[%s1 + $0x3b0] sm:$0xff]
  %v142 = vld [vmem:[%s1 + $0x3b8] sm:$0xff]
  %v143 = vld [vmem:[%s1 + $0x3c0] sm:$0xff]
  %v144 = vld [vmem:[%s1 + $0x3c8] sm:$0xff]
  %v145 = vld [vmem:[%s1 + $0x3d0] sm:$0xff]
  %v146 = vld [vmem:[%s1 + $0x3d8] sm:$0xff]
  %v147 = vld [vmem:[%s1 + $0x3e0] sm:$0xff]
  %v148 = vld [vmem:[%s1 + $0x3e8] sm:$0xff]
  %v149 = vld [vmem:[%s1 + $0x3f0] sm:$0xff]
  %v150 = vld [vmem:[%s1 + $0x3f8] sm:$0xff]
  %v151 = vld [vmem:[%s1 + $0x400] sm:$0xff]
  %v152 = vld [vmem:[%s1 + $0x408] sm:$0xff]
  %v153 = vld [vmem:[%s1 + $0x410] sm:$0xff]
  %v154 = vld [vmem:[%s1 + $0x418] sm:$0xff]
  %v155 = vld [vmem:[%s1 + $0x420] sm:$0xff]
  %v156 = vld [vmem:[%s1 + $0x428] sm:$0xff]
  %v157 = vld [vmem:[%s1 + $0x430] sm:$0xff]
  %v158 = vld [vmem:[%s1 + $0x438] sm:$0xff]
  %v159 = vld [vmem:[%s1 + $0x440] sm:$0xff]
  %v160 = vld [vmem:[%s1 + $0x448] sm:$0xff]
  %v161 = vld [vmem:[%s1 + $0x450] sm:$0xff]
  %v162 = vld [vmem:[%s1 + $0x458] sm:$0xff]
  %v163 = vld [vmem:[%s1 + $0x460] sm:$0xff]
  %v164 = vld [vmem:[%s1 + $0x468] sm:$0xff]
  %v165 = vld [vmem:[%s1 + $0x470] sm:$0xff]
  %v166 = vld [vmem:[%s1 + $0x478] sm:$0xff]
  %v167 = vld [vmem:[%s1 + $0x480] sm:$0xff]
  %v168 = vld [vmem:[%s1 + $0x488] sm:$0xff]
  %v169 = vld [vmem:[%s1 + $0x490] sm:$0xff]
  %v170 = vld [vmem:[%s1 + $0x498] sm:$0xff]
  %v171 = vld [vmem:[%s1 + $0x4a0] sm:$0xff]
  %v172 = vld [vmem:[%s1 + $0x4a8] sm:$0xff]
  %v173 = vld [vmem:[%s1 + $0x4b0] sm:$0xff]
  %v174 = vld [vmem:[%s1 + $0x4b8] sm:$0xff]
  %v175 = vld [vmem:[%s1 + $0x4c0] sm:$0xff]
  %v176 = vld [vmem:[%s1 + $0x4c8] sm:$0xff]
  %v177 = vld [vmem:[%s1 + $0x4d0] sm:$0xff]
  %v178 = vld [vmem:[%s1 + $0x4d8] sm:$0xff]
  %v179 = vld [vmem:[%s1 + $0x4e0] sm:$0xff]
  %v180 = vld [vmem:[%s1 + $0x4e8] sm:$0xff]
  %v181 = vld [vmem:[%s1 + $0x4f0] sm:$0xff]
  %v182 = vld [vmem:[%s1 + $0x4f8] sm:$0xff]
  %v183 = vld [vmem:[%s1 + $0x500] sm:$0xff]
  %v184 = vld [vmem:[%s1 + $0x508] sm:$0xff]
  %v185 = vld [vmem:[%s1 + $0x510] sm:$0xff]
  %v186 = vld [vmem:[%s1 + $0x518] sm:$0xff]
  %v187 = vld [vmem:[%s1 + $0x520] sm:$0xff]
  %v188 = vld [vmem:[%s1 + $0x528] sm:$0xff]
  %v189 = vld [vmem:[%s1 + $0x530] sm:$0xff]
  %v190 = vld [vmem:[%s1 + $0x538] sm:$0xff]
  %v191 = vld [vmem:[%s1 + $0x540] sm:$0xff]
  %v192 = vld [vmem:[%s1 + $0x548] sm:$0xff]
  %v193 = vld [vmem:[%s1 + $0x550] sm:$0xff]
  %v194 = vld [vmem:[%s1 + $0x558] sm:$0xff]
  %v195 = vld [vmem:[%s1 + $0x560] sm:$0xff]
  %v196 = vld [vmem:[%s1 + $0x568] sm:$0xff]
  %v197 = vld [vmem:[%s1 + $0x570] sm:$0xff]
  %v198 = vld [vmem:[%s1 + $0x578] sm:$0xff]
  %v199 = vld [vmem:[%s1 + $0x580] sm:$0xff]
  %v200 = vld [vmem:[%s1 + $0x588] sm:$0xff]
  %v201 = vld [vmem:[%s1 + $0x590] sm:$0xff]
  %v202 = vld [vmem:[%s1 + $0x598] sm:$0xff]
  %v203 = vld [vmem:[%s1 + $0x5a0] sm:$0xff]
  %v204 = vld [vmem:[%s1 + $0x5a8] sm:$0xff]
  %v205 = vld [vmem:[%s1 + $0x5b0] sm:$0xff]
  %v206 = vld [vmem:[%s1 + $0x5b8] sm:$0xff]
  %v207 = vld [vmem:[%s1 + $0x5c0] sm:$0xff]
  %v208 = vld [vmem:[%s1 + $0x5c8] sm:$0xff]
  %v209 = vld [vmem:[%s1 + $0x5d0] sm:$0xff]
  %v210 = vld [vmem:[%s1 + $0x5d8] sm:$0xff]
  %v211 = vld [vmem:[%s1 + $0x5e0] sm:$0xff]
  %v212 = vld [vmem:[%s1 + $0x5e8] sm:$0xff]
  %v213 = vld [vmem:[%s1 + $0x5f0] sm:$0xff]
  %v214 = vld [vmem:[%s1 + $0x5f8] sm:$0xff]
  %v215 = vld [vmem:[%s1 + $0x600] sm:$0xff]
  %v216 = vld [vmem:[%s1 + $0x608] sm:$0xff]
  %v217 = vld [vmem:[%s1 + $0x610] sm:$0xff]
  %v218 = vld [vmem:[%s1 + $0x618] sm:$0xff]
  %v219 = vld [vmem:[%s1 + $0x620] sm:$0xff]
  %v220 = vld [vmem:[%s1 + $0x628] sm:$0xff]
  %v221 = vld [vmem:[%s1 + $0x630] sm:$0xff]
  %v222 = vld [vmem:[%s1 + $0x638] sm:$0xff]
  %v223 = vld [vmem:[%s1 + $0x640] sm:$0xff]
  %v224 = vld [vmem:[%s1 + $0x648] sm:$0xff]
  %v225 = vld [vmem:[%s1 + $0x650] sm:$0xff]
  %v226 = vld [vmem:[%s1 + $0x658] sm:$0xff]
  %v227 = vld [vmem:[%s1 + $0x660] sm:$0xff]
  %v228 = vld [vmem:[%s1 + $0x668] sm:$0xff]
  %v229 = vld [vmem:[%s1 + $0x670] sm:$0xff]
  %v230 = vld [vmem:[%s1 + $0x678] sm:$0xff]
  %v231 = vld [vmem:[%s1 + $0x680] sm:$0xff]
  %v232 = vld [vmem:[%s1 + $0x688] sm:$0xff]
  %v233 = vld [vmem:[%s1 + $0x690] sm:$0xff]
  %v234 = vld [vmem:[%s1 + $0x698] sm:$0xff]
  %v235 = vld [vmem:[%s1 + $0x6a0] sm:$0xff]
  %v236 = vld [vmem:[%s1 + $0x6a8] sm:$0xff]
  %v237 = vld [vmem:[%s1 + $0x6b0] sm:$0xff]
  %v238 = vld [vmem:[%s1 + $0x6b8] sm:$0xff]
  %v239 = vld [vmem:[%s1 + $0x6c0] sm:$0xff]
  %v240 = vld [vmem:[%s1 + $0x6c8] sm:$0xff]
  %v241 = vld [vmem:[%s1 + $0x6d0] sm:$0xff]
  %v242 = vld [vmem:[%s1 + $0x6d8] sm:$0xff]
  %v243 = vld [vmem:[%s1 + $0x6e0] sm:$0xff]
  %v244 = vld [vmem:[%s1 + $0x6e8] sm:$0xff]
  %v245 = vld [vmem:[%s1 + $0x6f0] sm:$0xff]
  %v246 = vld [vmem:[%s1 + $0x6f8] sm:$0xff]
  %v247 = vld [vmem:[%s1 + $0x700] sm:$0xff]
  %v248 = vld [vmem:[%s1 + $0x708] sm:$0xff]
  %v249 = vld [vmem:[%s1 + $0x710] sm:$0xff]
  %v250 = vld [vmem:[%s1 + $0x718] sm:$0xff]
  %v251 = vld [vmem:[%s1 + $0x720] sm:$0xff]
  %v252 = vld [vmem:[%s1 + $0x728] sm:$0xff]
  %v253 = vld [vmem:[%s1 + $0x730] sm:$0xff]
  %v254 = vld [vmem:[%s1 + $0x738] sm:$0xff]
  %v255 = vld [vmem:[%s1 + $0x740] sm:$0xff]
  %v256 = vld [vmem:[%s1 + $0x748] sm:$0xff]
  %v257 = vld [vmem:[%s1 + $0x750] sm:$0xff]
  %v258 = vld [vmem:[%s1 + $0x758] sm:$0xff]
  %v259 = vld [vmem:[%s1 + $0x760] sm:$0xff]
  %v260 = vld [vmem:[%s1 + $0x768] sm:$0xff]
  %v261 = vld [vmem:[%s1 + $0x770] sm:$0xff]
  %v262 = vld [vmem:[%s1 + $0x778] sm:$0xff]
  %v263 = vld [vmem:[%s1 + $0x780] sm:$0xff]
  %v264 = vld [vmem:[%s1 + $0x788] sm:$0xff]
  %v265 = vld [vmem:[%s1 + $0x790] sm:$0xff]
  %v266 = vld [vmem:[%s1 + $0x798] sm:$0xff]
  %v267 = vld [vmem:[%s1 + $0x7a0] sm:$0xff]
  %v268 = vld [vmem:[%s1 + $0x7a8] sm:$0xff]
  %v269 = vld [vmem:[%s1 + $0x7b0] sm:$0xff]
  %v270 = vld [vmem:[%s1 + $0x7b8] sm:$0xff]
  %v271 = vld [vmem:[%s1 + $0x7c0] sm:$0xff]
  %v272 = vld [vmem:[%s1 + $0x7c8] sm:$0xff]
  %v273 = vld [vmem:[%s1 + $0x7d0] sm:$0xff]
  %v274 = vld [vmem:[%s1 + $0x7d8] sm:$0xff]
  %v275 = vld [vmem:[%s1 + $0x7e0] sm:$0xff]
  %v276 = vld [vmem:[%s1 + $0x7e8] sm:$0xff]
  %v277 = vld [vmem:[%s1 + $0x7f0] sm:$0xff]
  %v278 = vld [vmem:[%s1 + $0x7f8] sm:$0xff]
  %v279 = vld [vmem:[%s1 + $0x800] sm:$0xff]
  %v280 = vld [vmem:[%s1 + $0x808] sm:$0xff]
  %v281 = vld [vmem:[%s1 + $0x810] sm:$0xff]
  %v282 = vld [vmem:[%s1 + $0x818] sm:$0xff]
  %v283 = vld [vmem:[%s1 + $0x820] sm:$0xff]
  %v284 = vld [vmem:[%s1 + $0x828] sm:$0xff]
  %v285 = vld [vmem:[%s1 + $0x830] sm:$0xff]
  %v286 = vld [vmem:[%s1 + $0x838] sm:$0xff]
  %v287 = vld [vmem:[%s1 + $0x840] sm:$0xff]
  %v288 = vld [vmem:[%s1 + $0x848] sm:$0xff]
  %v289 = vld [vmem:[%s1 + $0x850] sm:$0xff]
  %v290 = vld [vmem:[%s1 + $0x858] sm:$0xff]
  %v291 = vld [vmem:[%s1 + $0x860] sm:$0xff]
  %v292 = vld [vmem:[%s1 + $0x868] sm:$0xff]
  %v293 = vld [vmem:[%s1 + $0x870] sm:$0xff]
  %v294 = vld [vmem:[%s1 + $0x878] sm:$0xff]
  %v295 = vld [vmem:[%s1 + $0x880] sm:$0xff]
  %v296 = vld [vmem:[%s1 + $0x888] sm:$0xff]
  %v297 = vld [vmem:[%s1 + $0x890] sm:$0xff]
  %v298 = vld [vmem:[%s1 + $0x898] sm:$0xff]
  %v299 = vld [vmem:[%s1 + $0x8a0] sm:$0xff]
  %v300 = vld [vmem:[%s1 + $0x8a8] sm:$0xff]
  %v301 = vld [vmem:[%s1 + $0x8b0] sm:$0xff]
  %v302 = vld [vmem:[%s1 + $0x8b8] sm:$0xff]
  %v303 = vld [vmem:[%s1 + $0x8c0] sm:$0xff]
  %v304 = vld [vmem:[%s1 + $0x8c8] sm:$0xff]
  %v305 = vld [vmem:[%s1 + $0x8d0] sm:$0xff]
  %v306 = vld [vmem:[%s1 + $0x8d8] sm:$0xff]
  %v307 = vld [vmem:[%s1 + $0x8e0] sm:$0xff]
  %v308 = vld [vmem:[%s1 + $0x8e8] sm:$0xff]
  %v309 = vld [vmem:[%s1 + $0x8f0] sm:$0xff]
  %v310 = vld [vmem:[%s1 + $0x8f8] sm:$0xff]
  %v311 = vld [vmem:[%s2] ss:$4 sm:$0x3]
  %v313 = vperm.slane %v311, 0
  %v314 = vperm.slane %v311, 1
  %v326 = vunpack.c.l.b16 %v14
  %v327 = vunpack.c.h.b16 %v14
  %v328 = vunpack.c.l.b16 %v15
  %v329 = vunpack.c.h.b16 %v15
  %v330 = vunpack.c.l.b16 %v16
  %v331 = vunpack.c.h.b16 %v16
  %v332 = vunpack.c.l.b16 %v17
  %v333 = vunpack.c.h.b16 %v17
  %v334 = vunpack.c.l.b16 %v18
  %v335 = vunpack.c.h.b16 %v18
  %v336 = vunpack.c.l.b16 %v19
  %v337 = vunpack.c.h.b16 %v19
  %v338 = vunpack.c.l.b16 %v20
  %v339 = vunpack.c.h.b16 %v20
  %v340 = vunpack.c.l.b16 %v21
  %v341 = vunpack.c.h.b16 %v21
  %v342 = vunpack.c.l.b16 %v22
  %v343 = vunpack.c.h.b16 %v22
  %v344 = vpack.c.b16 %v326, %v326
  %v345 = vpack.c.b16 %v327, %v327
  %v346 = vpack.c.b16 %v328, %v328
  %v347 = vpack.c.b16 %v329, %v329
  %v348 = vpack.c.b16 %v330, %v330
  %v349 = vpack.c.b16 %v331, %v331
  %v350 = vpack.c.b16 %v332, %v332
  %v351 = vpack.c.b16 %v333, %v333
  %v352 = vpack.c.b16 %v334, %v334
  %v353 = vpack.c.b16 %v335, %v335
  %v354 = vpack.c.b16 %v336, %v336
  %v355 = vpack.c.b16 %v337, %v337
  %v356 = vpack.c.b16 %v338, %v338
  %v357 = vpack.c.b16 %v339, %v339
  %v358 = vpack.c.b16 %v340, %v340
  %v359 = vpack.c.b16 %v341, %v341
  %v360 = vpack.c.b16 %v342, %v342
  %v361 = vpack.c.b16 %v343, %v343
  %v668 = vunpack.c.l.b16 %v23
  %v669 = vunpack.c.h.b16 %v23
  %v670 = vunpack.c.l.b16 %v24
  %v671 = vunpack.c.h.b16 %v24
  %v672 = vunpack.c.l.b16 %v25
  %v673 = vunpack.c.h.b16 %v25
  %v674 = vunpack.c.l.b16 %v26
  %v675 = vunpack.c.h.b16 %v26
  %v676 = vunpack.c.l.b16 %v27
  %v677 = vunpack.c.h.b16 %v27
  %v678 = vunpack.c.l.b16 %v28
  %v679 = vunpack.c.h.b16 %v28
  %v680 = vunpack.c.l.b16 %v29
  %v681 = vunpack.c.h.b16 %v29
  %v682 = vunpack.c.l.b16 %v30
  %v683 = vunpack.c.h.b16 %v30
  %v684 = vunpack.c.l.b16 %v31
  %v685 = vunpack.c.h.b16 %v31
  %v686 = vunpack.c.l.b16 %v32
  %v687 = vunpack.c.h.b16 %v32
  %v688 = vunpack.c.l.b16 %v33
  %v689 = vunpack.c.h.b16 %v33
  %v690 = vunpack.c.l.b16 %v34
  %v691 = vunpack.c.h.b16 %v34
  %v692 = vunpack.c.l.b16 %v35
  %v693 = vunpack.c.h.b16 %v35
  %v694 = vunpack.c.l.b16 %v36
  %v695 = vunpack.c.h.b16 %v36
  %v696 = vunpack.c.l.b16 %v37
  %v697 = vunpack.c.h.b16 %v37
  %v698 = vunpack.c.l.b16 %v38
  %v699 = vunpack.c.h.b16 %v38
  %v700 = vunpack.c.l.b16 %v39
  %v701 = vunpack.c.h.b16 %v39
  %v702 = vunpack.c.l.b16 %v40
  %v703 = vunpack.c.h.b16 %v40
  %v704 = vunpack.c.l.b16 %v41
  %v705 = vunpack.c.h.b16 %v41
  %v706 = vunpack.c.l.b16 %v42
  %v707 = vunpack.c.h.b16 %v42
  %v708 = vunpack.c.l.b16 %v43
  %v709 = vunpack.c.h.b16 %v43
  %v710 = vunpack.c.l.b16 %v44
  %v711 = vunpack.c.h.b16 %v44
  %v712 = vunpack.c.l.b16 %v45
  %v713 = vunpack.c.h.b16 %v45
  %v714 = vunpack.c.l.b16 %v46
  %v715 = vunpack.c.h.b16 %v46
  %v716 = vunpack.c.l.b16 %v47
  %v717 = vunpack.c.h.b16 %v47
  %v718 = vunpack.c.l.b16 %v48
  %v719 = vunpack.c.h.b16 %v48
  %v720 = vunpack.c.l.b16 %v49
  %v721 = vunpack.c.h.b16 %v49
  %v722 = vunpack.c.l.b16 %v50
  %v723 = vunpack.c.h.b16 %v50
  %v724 = vunpack.c.l.b16 %v51
  %v725 = vunpack.c.h.b16 %v51
  %v726 = vunpack.c.l.b16 %v52
  %v727 = vunpack.c.h.b16 %v52
  %v728 = vunpack.c.l.b16 %v53
  %v729 = vunpack.c.h.b16 %v53
  %v730 = vunpack.c.l.b16 %v54
  %v731 = vunpack.c.h.b16 %v54
  %v732 = vunpack.c.l.b16 %v55
  %v733 = vunpack.c.h.b16 %v55
  %v734 = vunpack.c.l.b16 %v56
  %v735 = vunpack.c.h.b16 %v56
  %v736 = vunpack.c.l.b16 %v57
  %v737 = vunpack.c.h.b16 %v57
  %v738 = vunpack.c.l.b16 %v58
  %v739 = vunpack.c.h.b16 %v58
  %v740 = vunpack.c.l.b16 %v59
  %v741 = vunpack.c.h.b16 %v59
  %v742 = vunpack.c.l.b16 %v60
  %v743 = vunpack.c.h.b16 %v60
  %v744 = vunpack.c.l.b16 %v61
  %v745 = vunpack.c.h.b16 %v61
  %v746 = vunpack.c.l.b16 %v62
  %v747 = vunpack.c.h.b16 %v62
  %v748 = vunpack.c.l.b16 %v63
  %v749 = vunpack.c.h.b16 %v63
  %v750 = vunpack.c.l.b16 %v64
  %v751 = vunpack.c.h.b16 %v64
  %v752 = vunpack.c.l.b16 %v65
  %v753 = vunpack.c.h.b16 %v65
  %v754 = vunpack.c.l.b16 %v66
  %v755 = vunpack.c.h.b16 %v66
  %v756 = vunpack.c.l.b16 %v67
  %v757 = vunpack.c.h.b16 %v67
  %v758 = vunpack.c.l.b16 %v68
  %v759 = vunpack.c.h.b16 %v68
  %v760 = vunpack.c.l.b16 %v69
  %v761 = vunpack.c.h.b16 %v69
  %v762 = vunpack.c.l.b16 %v70
  %v763 = vunpack.c.h.b16 %v70
  %v764 = vunpack.c.l.b16 %v71
  %v765 = vunpack.c.h.b16 %v71
  %v766 = vunpack.c.l.b16 %v72
  %v767 = vunpack.c.h.b16 %v72
  %v768 = vunpack.c.l.b16 %v73
  %v769 = vunpack.c.h.b16 %v73
  %v770 = vunpack.c.l.b16 %v74
  %v771 = vunpack.c.h.b16 %v74
  %v772 = vunpack.c.l.b16 %v75
  %v773 = vunpack.c.h.b16 %v75
  %v774 = vunpack.c.l.b16 %v76
  %v775 = vunpack.c.h.b16 %v76
  %v776 = vunpack.c.l.b16 %v77
  %v777 = vunpack.c.h.b16 %v77
  %v778 = vunpack.c.l.b16 %v78
  %v779 = vunpack.c.h.b16 %v78
  %v780 = vunpack.c.l.b16 %v79
  %v781 = vunpack.c.h.b16 %v79
  %v782 = vunpack.c.l.b16 %v80
  %v783 = vunpack.c.h.b16 %v80
  %v784 = vunpack.c.l.b16 %v81
  %v785 = vunpack.c.h.b16 %v81
  %v786 = vunpack.c.l.b16 %v82
  %v787 = vunpack.c.h.b16 %v82
  %v788 = vunpack.c.l.b16 %v83
  %v789 = vunpack.c.h.b16 %v83
  %v790 = vunpack.c.l.b16 %v84
  %v791 = vunpack.c.h.b16 %v84
  %v792 = vunpack.c.l.b16 %v85
  %v793 = vunpack.c.h.b16 %v85
  %v794 = vunpack.c.l.b16 %v86
  %v795 = vunpack.c.h.b16 %v86
  %v796 = vunpack.c.l.b16 %v87
  %v797 = vunpack.c.h.b16 %v87
  %v798 = vunpack.c.l.b16 %v88
  %v799 = vunpack.c.h.b16 %v88
  %v800 = vunpack.c.l.b16 %v89
  %v801 = vunpack.c.h.b16 %v89
  %v802 = vunpack.c.l.b16 %v90
  %v803 = vunpack.c.h.b16 %v90
  %v804 = vunpack.c.l.b16 %v91
  %v805 = vunpack.c.h.b16 %v91
  %v806 = vunpack.c.l.b16 %v92
  %v807 = vunpack.c.h.b16 %v92
  %v808 = vunpack.c.l.b16 %v93
  %v809 = vunpack.c.h.b16 %v93
  %v810 = vunpack.c.l.b16 %v94
  %v811 = vunpack.c.h.b16 %v94
  %v812 = vunpack.c.l.b16 %v95
  %v813 = vunpack.c.h.b16 %v95
  %v814 = vunpack.c.l.b16 %v96
  %v815 = vunpack.c.h.b16 %v96
  %v816 = vunpack.c.l.b16 %v97
  %v817 = vunpack.c.h.b16 %v97
  %v818 = vunpack.c.l.b16 %v98
  %v819 = vunpack.c.h.b16 %v98
  %v820 = vunpack.c.l.b16 %v99
  %v821 = vunpack.c.h.b16 %v99
  %v822 = vunpack.c.l.b16 %v100
  %v823 = vunpack.c.h.b16 %v100
  %v824 = vunpack.c.l.b16 %v101
  %v825 = vunpack.c.h.b16 %v101
  %v826 = vunpack.c.l.b16 %v102
  %v827 = vunpack.c.h.b16 %v102
  %v828 = vunpack.c.l.b16 %v103
  %v829 = vunpack.c.h.b16 %v103
  %v830 = vunpack.c.l.b16 %v104
  %v831 = vunpack.c.h.b16 %v104
  %v832 = vunpack.c.l.b16 %v105
  %v833 = vunpack.c.h.b16 %v105
  %v834 = vunpack.c.l.b16 %v106
  %v835 = vunpack.c.h.b16 %v106
  %v836 = vunpack.c.l.b16 %v107
  %v837 = vunpack.c.h.b16 %v107
  %v838 = vunpack.c.l.b16 %v108
  %v839 = vunpack.c.h.b16 %v108
  %v840 = vunpack.c.l.b16 %v109
  %v841 = vunpack.c.h.b16 %v109
  %v842 = vunpack.c.l.b16 %v110
  %v843 = vunpack.c.h.b16 %v110
  %v844 = vunpack.c.l.b16 %v111
  %v845 = vunpack.c.h.b16 %v111
  %v846 = vunpack.c.l.b16 %v112
  %v847 = vunpack.c.h.b16 %v112
  %v848 = vunpack.c.l.b16 %v113
  %v849 = vunpack.c.h.b16 %v113
  %v850 = vunpack.c.l.b16 %v114
  %v851 = vunpack.c.h.b16 %v114
  %v852 = vunpack.c.l.b16 %v115
  %v853 = vunpack.c.h.b16 %v115
  %v854 = vunpack.c.l.b16 %v116
  %v855 = vunpack.c.h.b16 %v116
  %v856 = vunpack.c.l.b16 %v117
  %v857 = vunpack.c.h.b16 %v117
  %v858 = vunpack.c.l.b16 %v118
  %v859 = vunpack.c.h.b16 %v118
  %v860 = vunpack.c.l.b16 %v119
  %v861 = vunpack.c.h.b16 %v119
  %v862 = vunpack.c.l.b16 %v120
  %v863 = vunpack.c.h.b16 %v120
  %v864 = vunpack.c.l.b16 %v121
  %v865 = vunpack.c.h.b16 %v121
  %v866 = vunpack.c.l.b16 %v122
  %v867 = vunpack.c.h.b16 %v122
  %v868 = vunpack.c.l.b16 %v123
  %v869 = vunpack.c.h.b16 %v123
  %v870 = vunpack.c.l.b16 %v124
  %v871 = vunpack.c.h.b16 %v124
  %v872 = vunpack.c.l.b16 %v125
  %v873 = vunpack.c.h.b16 %v125
  %v874 = vunpack.c.l.b16 %v126
  %v875 = vunpack.c.h.b16 %v126
  %v876 = vunpack.c.l.b16 %v127
  %v877 = vunpack.c.h.b16 %v127
  %v878 = vunpack.c.l.b16 %v128
  %v879 = vunpack.c.h.b16 %v128
  %v880 = vunpack.c.l.b16 %v129
  %v881 = vunpack.c.h.b16 %v129
  %v882 = vunpack.c.l.b16 %v130
  %v883 = vunpack.c.h.b16 %v130
  %v884 = vunpack.c.l.b16 %v131
  %v885 = vunpack.c.h.b16 %v131
  %v886 = vunpack.c.l.b16 %v132
  %v887 = vunpack.c.h.b16 %v132
  %v888 = vunpack.c.l.b16 %v133
  %v889 = vunpack.c.h.b16 %v133
  %v890 = vunpack.c.l.b16 %v134
  %v891 = vunpack.c.h.b16 %v134
  %v892 = vunpack.c.l.b16 %v135
  %v893 = vunpack.c.h.b16 %v135
  %v894 = vunpack.c.l.b16 %v136
  %v895 = vunpack.c.h.b16 %v136
  %v896 = vunpack.c.l.b16 %v137
  %v897 = vunpack.c.h.b16 %v137
  %v898 = vunpack.c.l.b16 %v138
  %v899 = vunpack.c.h.b16 %v138
  %v900 = vunpack.c.l.b16 %v139
  %v901 = vunpack.c.h.b16 %v139
  %v902 = vunpack.c.l.b16 %v140
  %v903 = vunpack.c.h.b16 %v140
  %v904 = vunpack.c.l.b16 %v141
  %v905 = vunpack.c.h.b16 %v141
  %v906 = vunpack.c.l.b16 %v142
  %v907 = vunpack.c.h.b16 %v142
  %v908 = vunpack.c.l.b16 %v143
  %v909 = vunpack.c.h.b16 %v143
  %v910 = vunpack.c.l.b16 %v144
  %v911 = vunpack.c.h.b16 %v144
  %v912 = vunpack.c.l.b16 %v145
  %v913 = vunpack.c.h.b16 %v145
  %v914 = vunpack.c.l.b16 %v146
  %v915 = vunpack.c.h.b16 %v146
  %v916 = vunpack.c.l.b16 %v147
  %v917 = vunpack.c.h.b16 %v147
  %v918 = vunpack.c.l.b16 %v148
  %v919 = vunpack.c.h.b16 %v148
  %v920 = vunpack.c.l.b16 %v149
  %v921 = vunpack.c.h.b16 %v149
  %v922 = vunpack.c.l.b16 %v150
  %v923 = vunpack.c.h.b16 %v150
  %v924 = vunpack.c.l.b16 %v151
  %v925 = vunpack.c.h.b16 %v151
  %v926 = vunpack.c.l.b16 %v152
  %v927 = vunpack.c.h.b16 %v152
  %v928 = vunpack.c.l.b16 %v153
  %v929 = vunpack.c.h.b16 %v153
  %v930 = vunpack.c.l.b16 %v154
  %v931 = vunpack.c.h.b16 %v154
  %v932 = vunpack.c.l.b16 %v155
  %v933 = vunpack.c.h.b16 %v155
  %v934 = vunpack.c.l.b16 %v156
  %v935 = vunpack.c.h.b16 %v156
  %v936 = vunpack.c.l.b16 %v157
  %v937 = vunpack.c.h.b16 %v157
  %v938 = vunpack.c.l.b16 %v158
  %v939 = vunpack.c.h.b16 %v158
  %v940 = vunpack.c.l.b16 %v159
  %v941 = vunpack.c.h.b16 %v159
  %v942 = vunpack.c.l.b16 %v160
  %v943 = vunpack.c.h.b16 %v160
  %v944 = vunpack.c.l.b16 %v161
  %v945 = vunpack.c.h.b16 %v161
  %v946 = vunpack.c.l.b16 %v162
  %v947 = vunpack.c.h.b16 %v162
  %v948 = vunpack.c.l.b16 %v163
  %v949 = vunpack.c.h.b16 %v163
  %v950 = vunpack.c.l.b16 %v164
  %v951 = vunpack.c.h.b16 %v164
  %v952 = vunpack.c.l.b16 %v165
  %v953 = vunpack.c.h.b16 %v165
  %v954 = vunpack.c.l.b16 %v166
  %v955 = vunpack.c.h.b16 %v166
  %v956 = vunpack.c.l.b16 %v167
  %v957 = vunpack.c.h.b16 %v167
  %v958 = vunpack.c.l.b16 %v168
  %v959 = vunpack.c.h.b16 %v168
  %v960 = vunpack.c.l.b16 %v169
  %v961 = vunpack.c.h.b16 %v169
  %v962 = vunpack.c.l.b16 %v170
  %v963 = vunpack.c.h.b16 %v170
  %v964 = vunpack.c.l.b16 %v171
  %v965 = vunpack.c.h.b16 %v171
  %v966 = vunpack.c.l.b16 %v172
  %v967 = vunpack.c.h.b16 %v172
  %v968 = vunpack.c.l.b16 %v173
  %v969 = vunpack.c.h.b16 %v173
  %v970 = vunpack.c.l.b16 %v174
  %v971 = vunpack.c.h.b16 %v174
  %v972 = vunpack.c.l.b16 %v175
  %v973 = vunpack.c.h.b16 %v175
  %v974 = vunpack.c.l.b16 %v176
  %v975 = vunpack.c.h.b16 %v176
  %v976 = vunpack.c.l.b16 %v177
  %v977 = vunpack.c.h.b16 %v177
  %v978 = vunpack.c.l.b16 %v178
  %v979 = vunpack.c.h.b16 %v178
  %v980 = vunpack.c.l.b16 %v179
  %v981 = vunpack.c.h.b16 %v179
  %v982 = vunpack.c.l.b16 %v180
  %v983 = vunpack.c.h.b16 %v180
  %v984 = vunpack.c.l.b16 %v181
  %v985 = vunpack.c.h.b16 %v181
  %v986 = vunpack.c.l.b16 %v182
  %v987 = vunpack.c.h.b16 %v182
  %v988 = vunpack.c.l.b16 %v183
  %v989 = vunpack.c.h.b16 %v183
  %v990 = vunpack.c.l.b16 %v184
  %v991 = vunpack.c.h.b16 %v184
  %v992 = vunpack.c.l.b16 %v185
  %v993 = vunpack.c.h.b16 %v185
  %v994 = vunpack.c.l.b16 %v186
  %v995 = vunpack.c.h.b16 %v186
  %v996 = vunpack.c.l.b16 %v187
  %v997 = vunpack.c.h.b16 %v187
  %v998 = vunpack.c.l.b16 %v188
  %v999 = vunpack.c.h.b16 %v188
  %v1000 = vunpack.c.l.b16 %v189
  %v1001 = vunpack.c.h.b16 %v189
  %v1002 = vunpack.c.l.b16 %v190
  %v1003 = vunpack.c.h.b16 %v190
  %v1004 = vunpack.c.l.b16 %v191
  %v1005 = vunpack.c.h.b16 %v191
  %v1006 = vunpack.c.l.b16 %v192
  %v1007 = vunpack.c.h.b16 %v192
  %v1008 = vunpack.c.l.b16 %v193
  %v1009 = vunpack.c.h.b16 %v193
  %v1010 = vunpack.c.l.b16 %v194
  %v1011 = vunpack.c.h.b16 %v194
  %v1012 = vunpack.c.l.b16 %v195
  %v1013 = vunpack.c.h.b16 %v195
  %v1014 = vunpack.c.l.b16 %v196
  %v1015 = vunpack.c.h.b16 %v196
  %v1016 = vunpack.c.l.b16 %v197
  %v1017 = vunpack.c.h.b16 %v197
  %v1018 = vunpack.c.l.b16 %v198
  %v1019 = vunpack.c.h.b16 %v198
  %v1020 = vunpack.c.l.b16 %v199
  %v1021 = vunpack.c.h.b16 %v199
  %v1022 = vunpack.c.l.b16 %v200
  %v1023 = vunpack.c.h.b16 %v200
  %v1024 = vunpack.c.l.b16 %v201
  %v1025 = vunpack.c.h.b16 %v201
  %v1026 = vunpack.c.l.b16 %v202
  %v1027 = vunpack.c.h.b16 %v202
  %v1028 = vunpack.c.l.b16 %v203
  %v1029 = vunpack.c.h.b16 %v203
  %v1030 = vunpack.c.l.b16 %v204
  %v1031 = vunpack.c.h.b16 %v204
  %v1032 = vunpack.c.l.b16 %v205
  %v1033 = vunpack.c.h.b16 %v205
  %v1034 = vunpack.c.l.b16 %v206
  %v1035 = vunpack.c.h.b16 %v206
  %v1036 = vunpack.c.l.b16 %v207
  %v1037 = vunpack.c.h.b16 %v207
  %v1038 = vunpack.c.l.b16 %v208
  %v1039 = vunpack.c.h.b16 %v208
  %v1040 = vunpack.c.l.b16 %v209
  %v1041 = vunpack.c.h.b16 %v209
  %v1042 = vunpack.c.l.b16 %v210
  %v1043 = vunpack.c.h.b16 %v210
  %v1044 = vunpack.c.l.b16 %v211
  %v1045 = vunpack.c.h.b16 %v211
  %v1046 = vunpack.c.l.b16 %v212
  %v1047 = vunpack.c.h.b16 %v212
  %v1048 = vunpack.c.l.b16 %v213
  %v1049 = vunpack.c.h.b16 %v213
  %v1050 = vunpack.c.l.b16 %v214
  %v1051 = vunpack.c.h.b16 %v214
  %v1052 = vunpack.c.l.b16 %v215
  %v1053 = vunpack.c.h.b16 %v215
  %v1054 = vunpack.c.l.b16 %v216
  %v1055 = vunpack.c.h.b16 %v216
  %v1056 = vunpack.c.l.b16 %v217
  %v1057 = vunpack.c.h.b16 %v217
  %v1058 = vunpack.c.l.b16 %v218
  %v1059 = vunpack.c.h.b16 %v218
  %v1060 = vunpack.c.l.b16 %v219
  %v1061 = vunpack.c.h.b16 %v219
  %v1062 = vunpack.c.l.b16 %v220
  %v1063 = vunpack.c.h.b16 %v220
  %v1064 = vunpack.c.l.b16 %v221
  %v1065 = vunpack.c.h.b16 %v221
  %v1066 = vunpack.c.l.b16 %v222
  %v1067 = vunpack.c.h.b16 %v222
  %v1068 = vunpack.c.l.b16 %v223
  %v1069 = vunpack.c.h.b16 %v223
  %v1070 = vunpack.c.l.b16 %v224
  %v1071 = vunpack.c.h.b16 %v224
  %v1072 = vunpack.c.l.b16 %v225
  %v1073 = vunpack.c.h.b16 %v225
  %v1074 = vunpack.c.l.b16 %v226
  %v1075 = vunpack.c.h.b16 %v226
  %v1076 = vunpack.c.l.b16 %v227
  %v1077 = vunpack.c.h.b16 %v227
  %v1078 = vunpack.c.l.b16 %v228
  %v1079 = vunpack.c.h.b16 %v228
  %v1080 = vunpack.c.l.b16 %v229
  %v1081 = vunpack.c.h.b16 %v229
  %v1082 = vunpack.c.l.b16 %v230
  %v1083 = vunpack.c.h.b16 %v230
  %v1084 = vunpack.c.l.b16 %v231
  %v1085 = vunpack.c.h.b16 %v231
  %v1086 = vunpack.c.l.b16 %v232
  %v1087 = vunpack.c.h.b16 %v232
  %v1088 = vunpack.c.l.b16 %v233
  %v1089 = vunpack.c.h.b16 %v233
  %v1090 = vunpack.c.l.b16 %v234
  %v1091 = vunpack.c.h.b16 %v234
  %v1092 = vunpack.c.l.b16 %v235
  %v1093 = vunpack.c.h.b16 %v235
  %v1094 = vunpack.c.l.b16 %v236
  %v1095 = vunpack.c.h.b16 %v236
  %v1096 = vunpack.c.l.b16 %v237
  %v1097 = vunpack.c.h.b16 %v237
  %v1098 = vunpack.c.l.b16 %v238
  %v1099 = vunpack.c.h.b16 %v238
  %v1100 = vunpack.c.l.b16 %v239
  %v1101 = vunpack.c.h.b16 %v239
  %v1102 = vunpack.c.l.b16 %v240
  %v1103 = vunpack.c.h.b16 %v240
  %v1104 = vunpack.c.l.b16 %v241
  %v1105 = vunpack.c.h.b16 %v241
  %v1106 = vunpack.c.l.b16 %v242
  %v1107 = vunpack.c.h.b16 %v242
  %v1108 = vunpack.c.l.b16 %v243
  %v1109 = vunpack.c.h.b16 %v243
  %v1110 = vunpack.c.l.b16 %v244
  %v1111 = vunpack.c.h.b16 %v244
  %v1112 = vunpack.c.l.b16 %v245
  %v1113 = vunpack.c.h.b16 %v245
  %v1114 = vunpack.c.l.b16 %v246
  %v1115 = vunpack.c.h.b16 %v246
  %v1116 = vunpack.c.l.b16 %v247
  %v1117 = vunpack.c.h.b16 %v247
  %v1118 = vunpack.c.l.b16 %v248
  %v1119 = vunpack.c.h.b16 %v248
  %v1120 = vunpack.c.l.b16 %v249
  %v1121 = vunpack.c.h.b16 %v249
  %v1122 = vunpack.c.l.b16 %v250
  %v1123 = vunpack.c.h.b16 %v250
  %v1124 = vunpack.c.l.b16 %v251
  %v1125 = vunpack.c.h.b16 %v251
  %v1126 = vunpack.c.l.b16 %v252
  %v1127 = vunpack.c.h.b16 %v252
  %v1128 = vunpack.c.l.b16 %v253
  %v1129 = vunpack.c.h.b16 %v253
  %v1130 = vunpack.c.l.b16 %v254
  %v1131 = vunpack.c.h.b16 %v254
  %v1132 = vunpack.c.l.b16 %v255
  %v1133 = vunpack.c.h.b16 %v255
  %v1134 = vunpack.c.l.b16 %v256
  %v1135 = vunpack.c.h.b16 %v256
  %v1136 = vunpack.c.l.b16 %v257
  %v1137 = vunpack.c.h.b16 %v257
  %v1138 = vunpack.c.l.b16 %v258
  %v1139 = vunpack.c.h.b16 %v258
  %v1140 = vunpack.c.l.b16 %v259
  %v1141 = vunpack.c.h.b16 %v259
  %v1142 = vunpack.c.l.b16 %v260
  %v1143 = vunpack.c.h.b16 %v260
  %v1144 = vunpack.c.l.b16 %v261
  %v1145 = vunpack.c.h.b16 %v261
  %v1146 = vunpack.c.l.b16 %v262
  %v1147 = vunpack.c.h.b16 %v262
  %v1148 = vunpack.c.l.b16 %v263
  %v1149 = vunpack.c.h.b16 %v263
  %v1150 = vunpack.c.l.b16 %v264
  %v1151 = vunpack.c.h.b16 %v264
  %v1152 = vunpack.c.l.b16 %v265
  %v1153 = vunpack.c.h.b16 %v265
  %v1154 = vunpack.c.l.b16 %v266
  %v1155 = vunpack.c.h.b16 %v266
  %v1156 = vunpack.c.l.b16 %v267
  %v1157 = vunpack.c.h.b16 %v267
  %v1158 = vunpack.c.l.b16 %v268
  %v1159 = vunpack.c.h.b16 %v268
  %v1160 = vunpack.c.l.b16 %v269
  %v1161 = vunpack.c.h.b16 %v269
  %v1162 = vunpack.c.l.b16 %v270
  %v1163 = vunpack.c.h.b16 %v270
  %v1164 = vunpack.c.l.b16 %v271
  %v1165 = vunpack.c.h.b16 %v271
  %v1166 = vunpack.c.l.b16 %v272
  %v1167 = vunpack.c.h.b16 %v272
  %v1168 = vunpack.c.l.b16 %v273
  %v1169 = vunpack.c.h.b16 %v273
  %v1170 = vunpack.c.l.b16 %v274
  %v1171 = vunpack.c.h.b16 %v274
  %v1172 = vunpack.c.l.b16 %v275
  %v1173 = vunpack.c.h.b16 %v275
  %v1174 = vunpack.c.l.b16 %v276
  %v1175 = vunpack.c.h.b16 %v276
  %v1176 = vunpack.c.l.b16 %v277
  %v1177 = vunpack.c.h.b16 %v277
  %v1178 = vunpack.c.l.b16 %v278
  %v1179 = vunpack.c.h.b16 %v278
  %v1180 = vunpack.c.l.b16 %v279
  %v1181 = vunpack.c.h.b16 %v279
  %v1182 = vunpack.c.l.b16 %v280
  %v1183 = vunpack.c.h.b16 %v280
  %v1184 = vunpack.c.l.b16 %v281
  %v1185 = vunpack.c.h.b16 %v281
  %v1186 = vunpack.c.l.b16 %v282
  %v1187 = vunpack.c.h.b16 %v282
  %v1188 = vunpack.c.l.b16 %v283
  %v1189 = vunpack.c.h.b16 %v283
  %v1190 = vunpack.c.l.b16 %v284
  %v1191 = vunpack.c.h.b16 %v284
  %v1192 = vunpack.c.l.b16 %v285
  %v1193 = vunpack.c.h.b16 %v285
  %v1194 = vunpack.c.l.b16 %v286
  %v1195 = vunpack.c.h.b16 %v286
  %v1196 = vunpack.c.l.b16 %v287
  %v1197 = vunpack.c.h.b16 %v287
  %v1198 = vunpack.c.l.b16 %v288
  %v1199 = vunpack.c.h.b16 %v288
  %v1200 = vunpack.c.l.b16 %v289
  %v1201 = vunpack.c.h.b16 %v289
  %v1202 = vunpack.c.l.b16 %v290
  %v1203 = vunpack.c.h.b16 %v290
  %v1204 = vunpack.c.l.b16 %v291
  %v1205 = vunpack.c.h.b16 %v291
  %v1206 = vunpack.c.l.b16 %v292
  %v1207 = vunpack.c.h.b16 %v292
  %v1208 = vunpack.c.l.b16 %v293
  %v1209 = vunpack.c.h.b16 %v293
  %v1210 = vunpack.c.l.b16 %v294
  %v1211 = vunpack.c.h.b16 %v294
  %v1212 = vunpack.c.l.b16 %v295
  %v1213 = vunpack.c.h.b16 %v295
  %v1214 = vunpack.c.l.b16 %v296
  %v1215 = vunpack.c.h.b16 %v296
  %v1216 = vunpack.c.l.b16 %v297
  %v1217 = vunpack.c.h.b16 %v297
  %v1218 = vunpack.c.l.b16 %v298
  %v1219 = vunpack.c.h.b16 %v298
  %v1220 = vunpack.c.l.b16 %v299
  %v1221 = vunpack.c.h.b16 %v299
  %v1222 = vunpack.c.l.b16 %v300
  %v1223 = vunpack.c.h.b16 %v300
  %v1224 = vunpack.c.l.b16 %v301
  %v1225 = vunpack.c.h.b16 %v301
  %v1226 = vunpack.c.l.b16 %v302
  %v1227 = vunpack.c.h.b16 %v302
  %v1228 = vunpack.c.l.b16 %v303
  %v1229 = vunpack.c.h.b16 %v303
  %v1230 = vunpack.c.l.b16 %v304
  %v1231 = vunpack.c.h.b16 %v304
  %v1232 = vunpack.c.l.b16 %v305
  %v1233 = vunpack.c.h.b16 %v305
  %v1234 = vunpack.c.l.b16 %v306
  %v1235 = vunpack.c.h.b16 %v306
  %v1236 = vunpack.c.l.b16 %v307
  %v1237 = vunpack.c.h.b16 %v307
  %v1238 = vunpack.c.l.b16 %v308
  %v1239 = vunpack.c.h.b16 %v308
  %v1240 = vunpack.c.l.b16 %v309
  %v1241 = vunpack.c.h.b16 %v309
  %v1242 = vunpack.c.l.b16 %v310
  %v1243 = vunpack.c.h.b16 %v310
  %v1244 = vpack.c.b16 %v670, %v668
  %v1245 = vpack.c.b16 %v671, %v669
  %v1246 = vpack.c.b16 %v674, %v672
  %v1247 = vpack.c.b16 %v675, %v673
  %v1248 = vpack.c.b16 %v678, %v676
  %v1249 = vpack.c.b16 %v679, %v677
  %v1250 = vpack.c.b16 %v682, %v680
  %v1251 = vpack.c.b16 %v683, %v681
  %v1252 = vpack.c.b16 %v686, %v684
  %v1253 = vpack.c.b16 %v687, %v685
  %v1254 = vpack.c.b16 %v690, %v688
  %v1255 = vpack.c.b16 %v691, %v689
  %v1256 = vpack.c.b16 %v694, %v692
  %v1257 = vpack.c.b16 %v695, %v693
  %v1258 = vpack.c.b16 %v698, %v696
  %v1259 = vpack.c.b16 %v699, %v697
  %v1260 = vpack.c.b16 %v702, %v700
  %v1261 = vpack.c.b16 %v703, %v701
  %v1262 = vpack.c.b16 %v706, %v704
  %v1263 = vpack.c.b16 %v707, %v705
  %v1264 = vpack.c.b16 %v710, %v708
  %v1265 = vpack.c.b16 %v711, %v709
  %v1266 = vpack.c.b16 %v714, %v712
  %v1267 = vpack.c.b16 %v715, %v713
  %v1268 = vpack.c.b16 %v718, %v716
  %v1269 = vpack.c.b16 %v719, %v717
  %v1270 = vpack.c.b16 %v722, %v720
  %v1271 = vpack.c.b16 %v723, %v721
  %v1272 = vpack.c.b16 %v726, %v724
  %v1273 = vpack.c.b16 %v727, %v725
  %v1274 = vpack.c.b16 %v730, %v728
  %v1275 = vpack.c.b16 %v731, %v729
  %v1276 = vpack.c.b16 %v734, %v732
  %v1277 = vpack.c.b16 %v735, %v733
  %v1278 = vpack.c.b16 %v738, %v736
  %v1279 = vpack.c.b16 %v739, %v737
  %v1280 = vpack.c.b16 %v742, %v740
  %v1281 = vpack.c.b16 %v743, %v741
  %v1282 = vpack.c.b16 %v746, %v744
  %v1283 = vpack.c.b16 %v747, %v745
  %v1284 = vpack.c.b16 %v750, %v748
  %v1285 = vpack.c.b16 %v751, %v749
  %v1286 = vpack.c.b16 %v754, %v752
  %v1287 = vpack.c.b16 %v755, %v753
  %v1288 = vpack.c.b16 %v758, %v756
  %v1289 = vpack.c.b16 %v759, %v757
  %v1290 = vpack.c.b16 %v762, %v760
  %v1291 = vpack.c.b16 %v763, %v761
  %v1292 = vpack.c.b16 %v766, %v764
  %v1293 = vpack.c.b16 %v767, %v765
  %v1294 = vpack.c.b16 %v770, %v768
  %v1295 = vpack.c.b16 %v771, %v769
  %v1296 = vpack.c.b16 %v774, %v772
  %v1297 = vpack.c.b16 %v775, %v773
  %v1298 = vpack.c.b16 %v778, %v776
  %v1299 = vpack.c.b16 %v779, %v777
  %v1300 = vpack.c.b16 %v782, %v780
  %v1301 = vpack.c.b16 %v783, %v781
  %v1302 = vpack.c.b16 %v786, %v784
  %v1303 = vpack.c.b16 %v787, %v785
  %v1304 = vpack.c.b16 %v790, %v788
  %v1305 = vpack.c.b16 %v791, %v789
  %v1306 = vpack.c.b16 %v794, %v792
  %v1307 = vpack.c.b16 %v795, %v793
  %v1308 = vpack.c.b16 %v798, %v796
  %v1309 = vpack.c.b16 %v799, %v797
  %v1310 = vpack.c.b16 %v802, %v800
  %v1311 = vpack.c.b16 %v803, %v801
  %v1312 = vpack.c.b16 %v806, %v804
  %v1313 = vpack.c.b16 %v807, %v805
  %v1314 = vpack.c.b16 %v810, %v808
  %v1315 = vpack.c.b16 %v811, %v809
  %v1316 = vpack.c.b16 %v814, %v812
  %v1317 = vpack.c.b16 %v815, %v813
  %v1318 = vpack.c.b16 %v818, %v816
  %v1319 = vpack.c.b16 %v819, %v817
  %v1320 = vpack.c.b16 %v822, %v820
  %v1321 = vpack.c.b16 %v823, %v821
  %v1322 = vpack.c.b16 %v826, %v824
  %v1323 = vpack.c.b16 %v827, %v825
  %v1324 = vpack.c.b16 %v830, %v828
  %v1325 = vpack.c.b16 %v831, %v829
  %v1326 = vpack.c.b16 %v834, %v832
  %v1327 = vpack.c.b16 %v835, %v833
  %v1328 = vpack.c.b16 %v838, %v836
  %v1329 = vpack.c.b16 %v839, %v837
  %v1330 = vpack.c.b16 %v842, %v840
  %v1331 = vpack.c.b16 %v843, %v841
  %v1332 = vpack.c.b16 %v846, %v844
  %v1333 = vpack.c.b16 %v847, %v845
  %v1334 = vpack.c.b16 %v850, %v848
  %v1335 = vpack.c.b16 %v851, %v849
  %v1336 = vpack.c.b16 %v854, %v852
  %v1337 = vpack.c.b16 %v855, %v853
  %v1338 = vpack.c.b16 %v858, %v856
  %v1339 = vpack.c.b16 %v859, %v857
  %v1340 = vpack.c.b16 %v862, %v860
  %v1341 = vpack.c.b16 %v863, %v861
  %v1342 = vpack.c.b16 %v866, %v864
  %v1343 = vpack.c.b16 %v867, %v865
  %v1344 = vpack.c.b16 %v870, %v868
  %v1345 = vpack.c.b16 %v871, %v869
  %v1346 = vpack.c.b16 %v874, %v872
  %v1347 = vpack.c.b16 %v875, %v873
  %v1348 = vpack.c.b16 %v878, %v876
  %v1349 = vpack.c.b16 %v879, %v877
  %v1350 = vpack.c.b16 %v882, %v880
  %v1351 = vpack.c.b16 %v883, %v881
  %v1352 = vpack.c.b16 %v886, %v884
  %v1353 = vpack.c.b16 %v887, %v885
  %v1354 = vpack.c.b16 %v890, %v888
  %v1355 = vpack.c.b16 %v891, %v889
  %v1356 = vpack.c.b16 %v894, %v892
  %v1357 = vpack.c.b16 %v895, %v893
  %v1358 = vpack.c.b16 %v898, %v896
  %v1359 = vpack.c.b16 %v899, %v897
  %v1360 = vpack.c.b16 %v902, %v900
  %v1361 = vpack.c.b16 %v903, %v901
  %v1362 = vpack.c.b16 %v906, %v904
  %v1363 = vpack.c.b16 %v907, %v905
  %v1364 = vpack.c.b16 %v910, %v908
  %v1365 = vpack.c.b16 %v911, %v909
  %v1366 = vpack.c.b16 %v914, %v912
  %v1367 = vpack.c.b16 %v915, %v913
  %v1368 = vpack.c.b16 %v918, %v916
  %v1369 = vpack.c.b16 %v919, %v917
  %v1370 = vpack.c.b16 %v922, %v920
  %v1371 = vpack.c.b16 %v923, %v921
  %v1372 = vpack.c.b16 %v926, %v924
  %v1373 = vpack.c.b16 %v927, %v925
  %v1374 = vpack.c.b16 %v930, %v928
  %v1375 = vpack.c.b16 %v931, %v929
  %v1376 = vpack.c.b16 %v934, %v932
  %v1377 = vpack.c.b16 %v935, %v933
  %v1378 = vpack.c.b16 %v938, %v936
  %v1379 = vpack.c.b16 %v939, %v937
  %v1380 = vpack.c.b16 %v942, %v940
  %v1381 = vpack.c.b16 %v943, %v941
  %v1382 = vpack.c.b16 %v946, %v944
  %v1383 = vpack.c.b16 %v947, %v945
  %v1384 = vpack.c.b16 %v950, %v948
  %v1385 = vpack.c.b16 %v951, %v949
  %v1386 = vpack.c.b16 %v954, %v952
  %v1387 = vpack.c.b16 %v955, %v953
  %v1388 = vpack.c.b16 %v958, %v956
  %v1389 = vpack.c.b16 %v959, %v957
  %v1390 = vpack.c.b16 %v962, %v960
  %v1391 = vpack.c.b16 %v963, %v961
  %v1392 = vpack.c.b16 %v966, %v964
  %v1393 = vpack.c.b16 %v967, %v965
  %v1394 = vpack.c.b16 %v970, %v968
  %v1395 = vpack.c.b16 %v971, %v969
  %v1396 = vpack.c.b16 %v974, %v972
  %v1397 = vpack.c.b16 %v975, %v973
  %v1398 = vpack.c.b16 %v978, %v976
  %v1399 = vpack.c.b16 %v979, %v977
  %v1400 = vpack.c.b16 %v982, %v980
  %v1401 = vpack.c.b16 %v983, %v981
  %v1402 = vpack.c.b16 %v986, %v984
  %v1403 = vpack.c.b16 %v987, %v985
  %v1404 = vpack.c.b16 %v990, %v988
  %v1405 = vpack.c.b16 %v991, %v989
  %v1406 = vpack.c.b16 %v994, %v992
  %v1407 = vpack.c.b16 %v995, %v993
  %v1408 = vpack.c.b16 %v998, %v996
  %v1409 = vpack.c.b16 %v999, %v997
  %v1410 = vpack.c.b16 %v1002, %v1000
  %v1411 = vpack.c.b16 %v1003, %v1001
  %v1412 = vpack.c.b16 %v1006, %v1004
  %v1413 = vpack.c.b16 %v1007, %v1005
  %v1414 = vpack.c.b16 %v1010, %v1008
  %v1415 = vpack.c.b16 %v1011, %v1009
  %v1416 = vpack.c.b16 %v1014, %v1012
  %v1417 = vpack.c.b16 %v1015, %v1013
  %v1418 = vpack.c.b16 %v1018, %v1016
  %v1419 = vpack.c.b16 %v1019, %v1017
  %v1420 = vpack.c.b16 %v1022, %v1020
  %v1421 = vpack.c.b16 %v1023, %v1021
  %v1422 = vpack.c.b16 %v1026, %v1024
  %v1423 = vpack.c.b16 %v1027, %v1025
  %v1424 = vpack.c.b16 %v1030, %v1028
  %v1425 = vpack.c.b16 %v1031, %v1029
  %v1426 = vpack.c.b16 %v1034, %v1032
  %v1427 = vpack.c.b16 %v1035, %v1033
  %v1428 = vpack.c.b16 %v1038, %v1036
  %v1429 = vpack.c.b16 %v1039, %v1037
  %v1430 = vpack.c.b16 %v1042, %v1040
  %v1431 = vpack.c.b16 %v1043, %v1041
  %v1432 = vpack.c.b16 %v1046, %v1044
  %v1433 = vpack.c.b16 %v1047, %v1045
  %v1434 = vpack.c.b16 %v1050, %v1048
  %v1435 = vpack.c.b16 %v1051, %v1049
  %v1436 = vpack.c.b16 %v1054, %v1052
  %v1437 = vpack.c.b16 %v1055, %v1053
  %v1438 = vpack.c.b16 %v1058, %v1056
  %v1439 = vpack.c.b16 %v1059, %v1057
  %v1440 = vpack.c.b16 %v1062, %v1060
  %v1441 = vpack.c.b16 %v1063, %v1061
  %v1442 = vpack.c.b16 %v1066, %v1064
  %v1443 = vpack.c.b16 %v1067, %v1065
  %v1444 = vpack.c.b16 %v1070, %v1068
  %v1445 = vpack.c.b16 %v1071, %v1069
  %v1446 = vpack.c.b16 %v1074, %v1072
  %v1447 = vpack.c.b16 %v1075, %v1073
  %v1448 = vpack.c.b16 %v1078, %v1076
  %v1449 = vpack.c.b16 %v1079, %v1077
  %v1450 = vpack.c.b16 %v1082, %v1080
  %v1451 = vpack.c.b16 %v1083, %v1081
  %v1452 = vpack.c.b16 %v1086, %v1084
  %v1453 = vpack.c.b16 %v1087, %v1085
  %v1454 = vpack.c.b16 %v1090, %v1088
  %v1455 = vpack.c.b16 %v1091, %v1089
  %v1456 = vpack.c.b16 %v1094, %v1092
  %v1457 = vpack.c.b16 %v1095, %v1093
  %v1458 = vpack.c.b16 %v1098, %v1096
  %v1459 = vpack.c.b16 %v1099, %v1097
  %v1460 = vpack.c.b16 %v1102, %v1100
  %v1461 = vpack.c.b16 %v1103, %v1101
  %v1462 = vpack.c.b16 %v1106, %v1104
  %v1463 = vpack.c.b16 %v1107, %v1105
  %v1464 = vpack.c.b16 %v1110, %v1108
  %v1465 = vpack.c.b16 %v1111, %v1109
  %v1466 = vpack.c.b16 %v1114, %v1112
  %v1467 = vpack.c.b16 %v1115, %v1113
  %v1468 = vpack.c.b16 %v1118, %v1116
  %v1469 = vpack.c.b16 %v1119, %v1117
  %v1470 = vpack.c.b16 %v1122, %v1120
  %v1471 = vpack.c.b16 %v1123, %v1121
  %v1472 = vpack.c.b16 %v1126, %v1124
  %v1473 = vpack.c.b16 %v1127, %v1125
  %v1474 = vpack.c.b16 %v1130, %v1128
  %v1475 = vpack.c.b16 %v1131, %v1129
  %v1476 = vpack.c.b16 %v1134, %v1132
  %v1477 = vpack.c.b16 %v1135, %v1133
  %v1478 = vpack.c.b16 %v1138, %v1136
  %v1479 = vpack.c.b16 %v1139, %v1137
  %v1480 = vpack.c.b16 %v1142, %v1140
  %v1481 = vpack.c.b16 %v1143, %v1141
  %v1482 = vpack.c.b16 %v1146, %v1144
  %v1483 = vpack.c.b16 %v1147, %v1145
  %v1484 = vpack.c.b16 %v1150, %v1148
  %v1485 = vpack.c.b16 %v1151, %v1149
  %v1486 = vpack.c.b16 %v1154, %v1152
  %v1487 = vpack.c.b16 %v1155, %v1153
  %v1488 = vpack.c.b16 %v1158, %v1156
  %v1489 = vpack.c.b16 %v1159, %v1157
  %v1490 = vpack.c.b16 %v1162, %v1160
  %v1491 = vpack.c.b16 %v1163, %v1161
  %v1492 = vpack.c.b16 %v1166, %v1164
  %v1493 = vpack.c.b16 %v1167, %v1165
  %v1494 = vpack.c.b16 %v1170, %v1168
  %v1495 = vpack.c.b16 %v1171, %v1169
  %v1496 = vpack.c.b16 %v1174, %v1172
  %v1497 = vpack.c.b16 %v1175, %v1173
  %v1498 = vpack.c.b16 %v1178, %v1176
  %v1499 = vpack.c.b16 %v1179, %v1177
  %v1500 = vpack.c.b16 %v1182, %v1180
  %v1501 = vpack.c.b16 %v1183, %v1181
  %v1502 = vpack.c.b16 %v1186, %v1184
  %v1503 = vpack.c.b16 %v1187, %v1185
  %v1504 = vpack.c.b16 %v1190, %v1188
  %v1505 = vpack.c.b16 %v1191, %v1189
  %v1506 = vpack.c.b16 %v1194, %v1192
  %v1507 = vpack.c.b16 %v1195, %v1193
  %v1508 = vpack.c.b16 %v1198, %v1196
  %v1509 = vpack.c.b16 %v1199, %v1197
  %v1510 = vpack.c.b16 %v1202, %v1200
  %v1511 = vpack.c.b16 %v1203, %v1201
  %v1512 = vpack.c.b16 %v1206, %v1204
  %v1513 = vpack.c.b16 %v1207, %v1205
  %v1514 = vpack.c.b16 %v1210, %v1208
  %v1515 = vpack.c.b16 %v1211, %v1209
  %v1516 = vpack.c.b16 %v1214, %v1212
  %v1517 = vpack.c.b16 %v1215, %v1213
  %v1518 = vpack.c.b16 %v1218, %v1216
  %v1519 = vpack.c.b16 %v1219, %v1217
  %v1520 = vpack.c.b16 %v1222, %v1220
  %v1521 = vpack.c.b16 %v1223, %v1221
  %v1522 = vpack.c.b16 %v1226, %v1224
  %v1523 = vpack.c.b16 %v1227, %v1225
  %v1524 = vpack.c.b16 %v1230, %v1228
  %v1525 = vpack.c.b16 %v1231, %v1229
  %v1526 = vpack.c.b16 %v1234, %v1232
  %v1527 = vpack.c.b16 %v1235, %v1233
  %v1528 = vpack.c.b16 %v1238, %v1236
  %v1529 = vpack.c.b16 %v1239, %v1237
  %v1530 = vpack.c.b16 %v1242, %v1240
  %v1531 = vpack.c.b16 %v1243, %v1241
  %1820 = vmatpush.bf16.msra.mxu0 %v1258
  %1821 = vmatpush.bf16.msra.mxu0 %v1256
  %1822 = vmatpush.bf16.msra.mxu0 %v1254
  %1823 = vmatpush.bf16.msra.mxu0 %v1252
  %1824 = vmatpush.bf16.msra.mxu0 %v1250
  %1825 = vmatpush.bf16.msra.mxu0 %v1248
  %1826 = vmatpush.bf16.msra.mxu0 %v1246
  %1827 = vmatpush.bf16.msra.mxu0 %v1244
  %1828 = vmatmul.bf16.gmra.mxu0 %v344
  %v1829 = vpop.f32.mrf.mxu0
  %v1830 = vadd.f32 %v313, %v1829
  %v1831 = vpop.f32.mrf.mxu0
  %1832 = vdwg.mxu0
  %1833 = vmatpush.bf16.msra.mxu0 %v1274
  %1834 = vmatpush.bf16.msra.mxu0 %v1272
  %1835 = vmatpush.bf16.msra.mxu0 %v1270
  %1836 = vmatpush.bf16.msra.mxu0 %v1268
  %1837 = vmatpush.bf16.msra.mxu0 %v1266
  %1838 = vmatpush.bf16.msra.mxu0 %v1264
  %1839 = vmatpush.bf16.msra.mxu0 %v1262
  %1840 = vmatpush.bf16.msra.mxu0 %v1260
  %1841 = vmatmul.bf16.gmra.mxu0 %v345
  %v1842 = vpop.f32.mrf.mxu0
  %v1843 = vadd.f32 %v1830, %v1842
  %v1844 = vpop.f32.mrf.mxu0
  %1845 = vdwg.mxu0
  %1846 = vmatpush.bf16.msra.mxu0 %v1290
  %1847 = vmatpush.bf16.msra.mxu0 %v1288
  %1848 = vmatpush.bf16.msra.mxu0 %v1286
  %1849 = vmatpush.bf16.msra.mxu0 %v1284
  %1850 = vmatpush.bf16.msra.mxu0 %v1282
  %1851 = vmatpush.bf16.msra.mxu0 %v1280
  %1852 = vmatpush.bf16.msra.mxu0 %v1278
  %1853 = vmatpush.bf16.msra.mxu0 %v1276
  %1854 = vmatmul.bf16.gmra.mxu0 %v346
  %v1855 = vpop.f32.mrf.mxu0
  %v1856 = vadd.f32 %v1843, %v1855
  %v1857 = vpop.f32.mrf.mxu0
  %1858 = vdwg.mxu0
  %1859 = vmatpush.bf16.msra.mxu0 %v1306
  %1860 = vmatpush.bf16.msra.mxu0 %v1304
  %1861 = vmatpush.bf16.msra.mxu0 %v1302
  %1862 = vmatpush.bf16.msra.mxu0 %v1300
  %1863 = vmatpush.bf16.msra.mxu0 %v1298
  %1864 = vmatpush.bf16.msra.mxu0 %v1296
  %1865 = vmatpush.bf16.msra.mxu0 %v1294
  %1866 = vmatpush.bf16.msra.mxu0 %v1292
  %1867 = vmatmul.bf16.gmra.mxu0 %v347
  %v1868 = vpop.f32.mrf.mxu0
  %v1869 = vadd.f32 %v1856, %v1868
  %v1870 = vpop.f32.mrf.mxu0
  %1871 = vdwg.mxu0
  %1872 = vmatpush.bf16.msra.mxu0 %v1322
  %1873 = vmatpush.bf16.msra.mxu0 %v1320
  %1874 = vmatpush.bf16.msra.mxu0 %v1318
  %1875 = vmatpush.bf16.msra.mxu0 %v1316
  %1876 = vmatpush.bf16.msra.mxu0 %v1314
  %1877 = vmatpush.bf16.msra.mxu0 %v1312
  %1878 = vmatpush.bf16.msra.mxu0 %v1310
  %1879 = vmatpush.bf16.msra.mxu0 %v1308
  %1880 = vmatmul.bf16.gmra.mxu0 %v348
  %v1881 = vpop.f32.mrf.mxu0
  %v1882 = vadd.f32 %v1869, %v1881
  %v1883 = vpop.f32.mrf.mxu0
  %1884 = vdwg.mxu0
  %1885 = vmatpush.bf16.msra.mxu0 %v1338
  %1886 = vmatpush.bf16.msra.mxu0 %v1336
  %1887 = vmatpush.bf16.msra.mxu0 %v1334
  %1888 = vmatpush.bf16.msra.mxu0 %v1332
  %1889 = vmatpush.bf16.msra.mxu0 %v1330
  %1890 = vmatpush.bf16.msra.mxu0 %v1328
  %1891 = vmatpush.bf16.msra.mxu0 %v1326
  %1892 = vmatpush.bf16.msra.mxu0 %v1324
  %1893 = vmatmul.bf16.gmra.mxu0 %v349
  %v1894 = vpop.f32.mrf.mxu0
  %v1895 = vadd.f32 %v1882, %v1894
  %v1896 = vpop.f32.mrf.mxu0
  %1897 = vdwg.mxu0
  %1898 = vmatpush.bf16.msra.mxu0 %v1354
  %1899 = vmatpush.bf16.msra.mxu0 %v1352
  %1900 = vmatpush.bf16.msra.mxu0 %v1350
  %1901 = vmatpush.bf16.msra.mxu0 %v1348
  %1902 = vmatpush.bf16.msra.mxu0 %v1346
  %1903 = vmatpush.bf16.msra.mxu0 %v1344
  %1904 = vmatpush.bf16.msra.mxu0 %v1342
  %1905 = vmatpush.bf16.msra.mxu0 %v1340
  %1906 = vmatmul.bf16.gmra.mxu0 %v350
  %v1907 = vpop.f32.mrf.mxu0
  %v1908 = vadd.f32 %v1895, %v1907
  %v1909 = vpop.f32.mrf.mxu0
  %1910 = vdwg.mxu0
  %1911 = vmatpush.bf16.msra.mxu0 %v1370
  %1912 = vmatpush.bf16.msra.mxu0 %v1368
  %1913 = vmatpush.bf16.msra.mxu0 %v1366
  %1914 = vmatpush.bf16.msra.mxu0 %v1364
  %1915 = vmatpush.bf16.msra.mxu0 %v1362
  %1916 = vmatpush.bf16.msra.mxu0 %v1360
  %1917 = vmatpush.bf16.msra.mxu0 %v1358
  %1918 = vmatpush.bf16.msra.mxu0 %v1356
  %1919 = vmatmul.bf16.gmra.mxu0 %v351
  %v1920 = vpop.f32.mrf.mxu0
  %v1921 = vadd.f32 %v1908, %v1920
  %v1922 = vpop.f32.mrf.mxu0
  %1923 = vdwg.mxu0
  %1924 = vmatpush.bf16.msra.mxu0 %v1386
  %1925 = vmatpush.bf16.msra.mxu0 %v1384
  %1926 = vmatpush.bf16.msra.mxu0 %v1382
  %1927 = vmatpush.bf16.msra.mxu0 %v1380
  %1928 = vmatpush.bf16.msra.mxu0 %v1378
  %1929 = vmatpush.bf16.msra.mxu0 %v1376
  %1930 = vmatpush.bf16.msra.mxu0 %v1374
  %1931 = vmatpush.bf16.msra.mxu0 %v1372
  %1932 = vmatmul.bf16.gmra.mxu0 %v352
  %v1933 = vpop.f32.mrf.mxu0
  %v1934 = vadd.f32 %v1921, %v1933
  %v1935 = vpop.f32.mrf.mxu0
  %1936 = vdwg.mxu0
  %1937 = vmatpush.bf16.msra.mxu0 %v1402
  %1938 = vmatpush.bf16.msra.mxu0 %v1400
  %1939 = vmatpush.bf16.msra.mxu0 %v1398
  %1940 = vmatpush.bf16.msra.mxu0 %v1396
  %1941 = vmatpush.bf16.msra.mxu0 %v1394
  %1942 = vmatpush.bf16.msra.mxu0 %v1392
  %1943 = vmatpush.bf16.msra.mxu0 %v1390
  %1944 = vmatpush.bf16.msra.mxu0 %v1388
  %1945 = vmatmul.bf16.gmra.mxu0 %v353
  %v1946 = vpop.f32.mrf.mxu0
  %v1947 = vadd.f32 %v1934, %v1946
  %v1948 = vpop.f32.mrf.mxu0
  %1949 = vdwg.mxu0
  %1950 = vmatpush.bf16.msra.mxu0 %v1418
  %1951 = vmatpush.bf16.msra.mxu0 %v1416
  %1952 = vmatpush.bf16.msra.mxu0 %v1414
  %1953 = vmatpush.bf16.msra.mxu0 %v1412
  %1954 = vmatpush.bf16.msra.mxu0 %v1410
  %1955 = vmatpush.bf16.msra.mxu0 %v1408
  %1956 = vmatpush.bf16.msra.mxu0 %v1406
  %1957 = vmatpush.bf16.msra.mxu0 %v1404
  %1958 = vmatmul.bf16.gmra.mxu0 %v354
  %v1959 = vpop.f32.mrf.mxu0
  %v1960 = vadd.f32 %v1947, %v1959
  %v1961 = vpop.f32.mrf.mxu0
  %1962 = vdwg.mxu0
  %1963 = vmatpush.bf16.msra.mxu0 %v1434
  %1964 = vmatpush.bf16.msra.mxu0 %v1432
  %1965 = vmatpush.bf16.msra.mxu0 %v1430
  %1966 = vmatpush.bf16.msra.mxu0 %v1428
  %1967 = vmatpush.bf16.msra.mxu0 %v1426
  %1968 = vmatpush.bf16.msra.mxu0 %v1424
  %1969 = vmatpush.bf16.msra.mxu0 %v1422
  %1970 = vmatpush.bf16.msra.mxu0 %v1420
  %1971 = vmatmul.bf16.gmra.mxu0 %v355
  %v1972 = vpop.f32.mrf.mxu0
  %v1973 = vadd.f32 %v1960, %v1972
  %v1974 = vpop.f32.mrf.mxu0
  %1975 = vdwg.mxu0
  %1976 = vmatpush.bf16.msra.mxu0 %v1450
  %1977 = vmatpush.bf16.msra.mxu0 %v1448
  %1978 = vmatpush.bf16.msra.mxu0 %v1446
  %1979 = vmatpush.bf16.msra.mxu0 %v1444
  %1980 = vmatpush.bf16.msra.mxu0 %v1442
  %1981 = vmatpush.bf16.msra.mxu0 %v1440
  %1982 = vmatpush.bf16.msra.mxu0 %v1438
  %1983 = vmatpush.bf16.msra.mxu0 %v1436
  %1984 = vmatmul.bf16.gmra.mxu0 %v356
  %v1985 = vpop.f32.mrf.mxu0
  %v1986 = vadd.f32 %v1973, %v1985
  %v1987 = vpop.f32.mrf.mxu0
  %1988 = vdwg.mxu0
  %1989 = vmatpush.bf16.msra.mxu0 %v1466
  %1990 = vmatpush.bf16.msra.mxu0 %v1464
  %1991 = vmatpush.bf16.msra.mxu0 %v1462
  %1992 = vmatpush.bf16.msra.mxu0 %v1460
  %1993 = vmatpush.bf16.msra.mxu0 %v1458
  %1994 = vmatpush.bf16.msra.mxu0 %v1456
  %1995 = vmatpush.bf16.msra.mxu0 %v1454
  %1996 = vmatpush.bf16.msra.mxu0 %v1452
  %1997 = vmatmul.bf16.gmra.mxu0 %v357
  %v1998 = vpop.f32.mrf.mxu0
  %v1999 = vadd.f32 %v1986, %v1998
  %v2000 = vpop.f32.mrf.mxu0
  %2001 = vdwg.mxu0
  %2002 = vmatpush.bf16.msra.mxu0 %v1482
  %2003 = vmatpush.bf16.msra.mxu0 %v1480
  %2004 = vmatpush.bf16.msra.mxu0 %v1478
  %2005 = vmatpush.bf16.msra.mxu0 %v1476
  %2006 = vmatpush.bf16.msra.mxu0 %v1474
  %2007 = vmatpush.bf16.msra.mxu0 %v1472
  %2008 = vmatpush.bf16.msra.mxu0 %v1470
  %2009 = vmatpush.bf16.msra.mxu0 %v1468
  %2010 = vmatmul.bf16.gmra.mxu0 %v358
  %v2011 = vpop.f32.mrf.mxu0
  %v2012 = vadd.f32 %v1999, %v2011
  %v2013 = vpop.f32.mrf.mxu0
  %2014 = vdwg.mxu0
  %2015 = vmatpush.bf16.msra.mxu0 %v1498
  %2016 = vmatpush.bf16.msra.mxu0 %v1496
  %2017 = vmatpush.bf16.msra.mxu0 %v1494
  %2018 = vmatpush.bf16.msra.mxu0 %v1492
  %2019 = vmatpush.bf16.msra.mxu0 %v1490
  %2020 = vmatpush.bf16.msra.mxu0 %v1488
  %2021 = vmatpush.bf16.msra.mxu0 %v1486
  %2022 = vmatpush.bf16.msra.mxu0 %v1484
  %2023 = vmatmul.bf16.gmra.mxu0 %v359
  %v2024 = vpop.f32.mrf.mxu0
  %v2025 = vadd.f32 %v2012, %v2024
  %v2026 = vpop.f32.mrf.mxu0
  %2027 = vdwg.mxu0
  %2028 = vmatpush.bf16.msra.mxu0 %v1514
  %2029 = vmatpush.bf16.msra.mxu0 %v1512
  %2030 = vmatpush.bf16.msra.mxu0 %v1510
  %2031 = vmatpush.bf16.msra.mxu0 %v1508
  %2032 = vmatpush.bf16.msra.mxu0 %v1506
  %2033 = vmatpush.bf16.msra.mxu0 %v1504
  %2034 = vmatpush.bf16.msra.mxu0 %v1502
  %2035 = vmatpush.bf16.msra.mxu0 %v1500
  %2036 = vmatmul.bf16.gmra.mxu0 %v360
  %v2037 = vpop.f32.mrf.mxu0
  %v2038 = vadd.f32 %v2025, %v2037
  %v2039 = vpop.f32.mrf.mxu0
  %2040 = vdwg.mxu0
  %2041 = vmatpush.bf16.msra.mxu0 %v1530
  %2042 = vmatpush.bf16.msra.mxu0 %v1528
  %2043 = vmatpush.bf16.msra.mxu0 %v1526
  %2044 = vmatpush.bf16.msra.mxu0 %v1524
  %2045 = vmatpush.bf16.msra.mxu0 %v1522
  %2046 = vmatpush.bf16.msra.mxu0 %v1520
  %2047 = vmatpush.bf16.msra.mxu0 %v1518
  %2048 = vmatpush.bf16.msra.mxu0 %v1516
  %2049 = vmatmul.bf16.gmra.mxu0 %v361
  %v2050 = vpop.f32.mrf.mxu0
  %v2051 = vadd.f32 %v2038, %v2050
  %v2052 = vpop.f32.mrf.mxu0
  %2053 = vdwg.mxu0
  %2054 = vmatpush.bf16.msra.mxu0 %v1259
  %2055 = vmatpush.bf16.msra.mxu0 %v1257
  %2056 = vmatpush.bf16.msra.mxu0 %v1255
  %2057 = vmatpush.bf16.msra.mxu0 %v1253
  %2058 = vmatpush.bf16.msra.mxu0 %v1251
  %2059 = vmatpush.bf16.msra.mxu0 %v1249
  %2060 = vmatpush.bf16.msra.mxu0 %v1247
  %2061 = vmatpush.bf16.msra.mxu0 %v1245
  %2062 = vmatmul.bf16.gmra.mxu0 %v344
  %v2063 = vpop.f32.mrf.mxu0
  %v2064 = vadd.f32 %v314, %v2063
  %v2065 = vpop.f32.mrf.mxu0
  %2066 = vdwg.mxu0
  %2067 = vmatpush.bf16.msra.mxu0 %v1275
  %2068 = vmatpush.bf16.msra.mxu0 %v1273
  %2069 = vmatpush.bf16.msra.mxu0 %v1271
  %2070 = vmatpush.bf16.msra.mxu0 %v1269
  %2071 = vmatpush.bf16.msra.mxu0 %v1267
  %2072 = vmatpush.bf16.msra.mxu0 %v1265
  %2073 = vmatpush.bf16.msra.mxu0 %v1263
  %2074 = vmatpush.bf16.msra.mxu0 %v1261
  %2075 = vmatmul.bf16.gmra.mxu0 %v345
  %v2076 = vpop.f32.mrf.mxu0
  %v2077 = vadd.f32 %v2064, %v2076
  %v2078 = vpop.f32.mrf.mxu0
  %2079 = vdwg.mxu0
  %2080 = vmatpush.bf16.msra.mxu0 %v1291
  %2081 = vmatpush.bf16.msra.mxu0 %v1289
  %2082 = vmatpush.bf16.msra.mxu0 %v1287
  %2083 = vmatpush.bf16.msra.mxu0 %v1285
  %2084 = vmatpush.bf16.msra.mxu0 %v1283
  %2085 = vmatpush.bf16.msra.mxu0 %v1281
  %2086 = vmatpush.bf16.msra.mxu0 %v1279
  %2087 = vmatpush.bf16.msra.mxu0 %v1277
  %2088 = vmatmul.bf16.gmra.mxu0 %v346
  %v2089 = vpop.f32.mrf.mxu0
  %v2090 = vadd.f32 %v2077, %v2089
  %v2091 = vpop.f32.mrf.mxu0
  %2092 = vdwg.mxu0
  %2093 = vmatpush.bf16.msra.mxu0 %v1307
  %2094 = vmatpush.bf16.msra.mxu0 %v1305
  %2095 = vmatpush.bf16.msra.mxu0 %v1303
  %2096 = vmatpush.bf16.msra.mxu0 %v1301
  %2097 = vmatpush.bf16.msra.mxu0 %v1299
  %2098 = vmatpush.bf16.msra.mxu0 %v1297
  %2099 = vmatpush.bf16.msra.mxu0 %v1295
  %2100 = vmatpush.bf16.msra.mxu0 %v1293
  %2101 = vmatmul.bf16.gmra.mxu0 %v347
  %v2102 = vpop.f32.mrf.mxu0
  %v2103 = vadd.f32 %v2090, %v2102
  %v2104 = vpop.f32.mrf.mxu0
  %2105 = vdwg.mxu0
  %2106 = vmatpush.bf16.msra.mxu0 %v1323
  %2107 = vmatpush.bf16.msra.mxu0 %v1321
  %2108 = vmatpush.bf16.msra.mxu0 %v1319
  %2109 = vmatpush.bf16.msra.mxu0 %v1317
  %2110 = vmatpush.bf16.msra.mxu0 %v1315
  %2111 = vmatpush.bf16.msra.mxu0 %v1313
  %2112 = vmatpush.bf16.msra.mxu0 %v1311
  %2113 = vmatpush.bf16.msra.mxu0 %v1309
  %2114 = vmatmul.bf16.gmra.mxu0 %v348
  %v2115 = vpop.f32.mrf.mxu0
  %v2116 = vadd.f32 %v2103, %v2115
  %v2117 = vpop.f32.mrf.mxu0
  %2118 = vdwg.mxu0
  %2119 = vmatpush.bf16.msra.mxu0 %v1339
  %2120 = vmatpush.bf16.msra.mxu0 %v1337
  %2121 = vmatpush.bf16.msra.mxu0 %v1335
  %2122 = vmatpush.bf16.msra.mxu0 %v1333
  %2123 = vmatpush.bf16.msra.mxu0 %v1331
  %2124 = vmatpush.bf16.msra.mxu0 %v1329
  %2125 = vmatpush.bf16.msra.mxu0 %v1327
  %2126 = vmatpush.bf16.msra.mxu0 %v1325
  %2127 = vmatmul.bf16.gmra.mxu0 %v349
  %v2128 = vpop.f32.mrf.mxu0
  %v2129 = vadd.f32 %v2116, %v2128
  %v2130 = vpop.f32.mrf.mxu0
  %2131 = vdwg.mxu0
  %2132 = vmatpush.bf16.msra.mxu0 %v1355
  %2133 = vmatpush.bf16.msra.mxu0 %v1353
  %2134 = vmatpush.bf16.msra.mxu0 %v1351
  %2135 = vmatpush.bf16.msra.mxu0 %v1349
  %2136 = vmatpush.bf16.msra.mxu0 %v1347
  %2137 = vmatpush.bf16.msra.mxu0 %v1345
  %2138 = vmatpush.bf16.msra.mxu0 %v1343
  %2139 = vmatpush.bf16.msra.mxu0 %v1341
  %2140 = vmatmul.bf16.gmra.mxu0 %v350
  %v2141 = vpop.f32.mrf.mxu0
  %v2142 = vadd.f32 %v2129, %v2141
  %v2143 = vpop.f32.mrf.mxu0
  %2144 = vdwg.mxu0
  %2145 = vmatpush.bf16.msra.mxu0 %v1371
  %2146 = vmatpush.bf16.msra.mxu0 %v1369
  %2147 = vmatpush.bf16.msra.mxu0 %v1367
  %2148 = vmatpush.bf16.msra.mxu0 %v1365
  %2149 = vmatpush.bf16.msra.mxu0 %v1363
  %2150 = vmatpush.bf16.msra.mxu0 %v1361
  %2151 = vmatpush.bf16.msra.mxu0 %v1359
  %2152 = vmatpush.bf16.msra.mxu0 %v1357
  %2153 = vmatmul.bf16.gmra.mxu0 %v351
  %v2154 = vpop.f32.mrf.mxu0
  %v2155 = vadd.f32 %v2142, %v2154
  %v2156 = vpop.f32.mrf.mxu0
  %2157 = vdwg.mxu0
  %2158 = vmatpush.bf16.msra.mxu0 %v1387
  %2159 = vmatpush.bf16.msra.mxu0 %v1385
  %2160 = vmatpush.bf16.msra.mxu0 %v1383
  %2161 = vmatpush.bf16.msra.mxu0 %v1381
  %2162 = vmatpush.bf16.msra.mxu0 %v1379
  %2163 = vmatpush.bf16.msra.mxu0 %v1377
  %2164 = vmatpush.bf16.msra.mxu0 %v1375
  %2165 = vmatpush.bf16.msra.mxu0 %v1373
  %2166 = vmatmul.bf16.gmra.mxu0 %v352
  %v2167 = vpop.f32.mrf.mxu0
  %v2168 = vadd.f32 %v2155, %v2167
  %v2169 = vpop.f32.mrf.mxu0
  %2170 = vdwg.mxu0
  %2171 = vmatpush.bf16.msra.mxu0 %v1403
  %2172 = vmatpush.bf16.msra.mxu0 %v1401
  %2173 = vmatpush.bf16.msra.mxu0 %v1399
  %2174 = vmatpush.bf16.msra.mxu0 %v1397
  %2175 = vmatpush.bf16.msra.mxu0 %v1395
  %2176 = vmatpush.bf16.msra.mxu0 %v1393
  %2177 = vmatpush.bf16.msra.mxu0 %v1391
  %2178 = vmatpush.bf16.msra.mxu0 %v1389
  %2179 = vmatmul.bf16.gmra.mxu0 %v353
  %v2180 = vpop.f32.mrf.mxu0
  %v2181 = vadd.f32 %v2168, %v2180
  %v2182 = vpop.f32.mrf.mxu0
  %2183 = vdwg.mxu0
  %2184 = vmatpush.bf16.msra.mxu0 %v1419
  %2185 = vmatpush.bf16.msra.mxu0 %v1417
  %2186 = vmatpush.bf16.msra.mxu0 %v1415
  %2187 = vmatpush.bf16.msra.mxu0 %v1413
  %2188 = vmatpush.bf16.msra.mxu0 %v1411
  %2189 = vmatpush.bf16.msra.mxu0 %v1409
  %2190 = vmatpush.bf16.msra.mxu0 %v1407
  %2191 = vmatpush.bf16.msra.mxu0 %v1405
  %2192 = vmatmul.bf16.gmra.mxu0 %v354
  %v2193 = vpop.f32.mrf.mxu0
  %v2194 = vadd.f32 %v2181, %v2193
  %v2195 = vpop.f32.mrf.mxu0
  %2196 = vdwg.mxu0
  %2197 = vmatpush.bf16.msra.mxu0 %v1435
  %2198 = vmatpush.bf16.msra.mxu0 %v1433
  %2199 = vmatpush.bf16.msra.mxu0 %v1431
  %2200 = vmatpush.bf16.msra.mxu0 %v1429
  %2201 = vmatpush.bf16.msra.mxu0 %v1427
  %2202 = vmatpush.bf16.msra.mxu0 %v1425
  %2203 = vmatpush.bf16.msra.mxu0 %v1423
  %2204 = vmatpush.bf16.msra.mxu0 %v1421
  %2205 = vmatmul.bf16.gmra.mxu0 %v355
  %v2206 = vpop.f32.mrf.mxu0
  %v2207 = vadd.f32 %v2194, %v2206
  %v2208 = vpop.f32.mrf.mxu0
  %2209 = vdwg.mxu0
  %2210 = vmatpush.bf16.msra.mxu0 %v1451
  %2211 = vmatpush.bf16.msra.mxu0 %v1449
  %2212 = vmatpush.bf16.msra.mxu0 %v1447
  %2213 = vmatpush.bf16.msra.mxu0 %v1445
  %2214 = vmatpush.bf16.msra.mxu0 %v1443
  %2215 = vmatpush.bf16.msra.mxu0 %v1441
  %2216 = vmatpush.bf16.msra.mxu0 %v1439
  %2217 = vmatpush.bf16.msra.mxu0 %v1437
  %2218 = vmatmul.bf16.gmra.mxu0 %v356
  %v2219 = vpop.f32.mrf.mxu0
  %v2220 = vadd.f32 %v2207, %v2219
  %v2221 = vpop.f32.mrf.mxu0
  %2222 = vdwg.mxu0
  %2223 = vmatpush.bf16.msra.mxu0 %v1467
  %2224 = vmatpush.bf16.msra.mxu0 %v1465
  %2225 = vmatpush.bf16.msra.mxu0 %v1463
  %2226 = vmatpush.bf16.msra.mxu0 %v1461
  %2227 = vmatpush.bf16.msra.mxu0 %v1459
  %2228 = vmatpush.bf16.msra.mxu0 %v1457
  %2229 = vmatpush.bf16.msra.mxu0 %v1455
  %2230 = vmatpush.bf16.msra.mxu0 %v1453
  %2231 = vmatmul.bf16.gmra.mxu0 %v357
  %v2232 = vpop.f32.mrf.mxu0
  %v2233 = vadd.f32 %v2220, %v2232
  %v2234 = vpop.f32.mrf.mxu0
  %2235 = vdwg.mxu0
  %2236 = vmatpush.bf16.msra.mxu0 %v1483
  %2237 = vmatpush.bf16.msra.mxu0 %v1481
  %2238 = vmatpush.bf16.msra.mxu0 %v1479
  %2239 = vmatpush.bf16.msra.mxu0 %v1477
  %2240 = vmatpush.bf16.msra.mxu0 %v1475
  %2241 = vmatpush.bf16.msra.mxu0 %v1473
  %2242 = vmatpush.bf16.msra.mxu0 %v1471
  %2243 = vmatpush.bf16.msra.mxu0 %v1469
  %2244 = vmatmul.bf16.gmra.mxu0 %v358
  %v2245 = vpop.f32.mrf.mxu0
  %v2246 = vadd.f32 %v2233, %v2245
  %v2247 = vpop.f32.mrf.mxu0
  %2248 = vdwg.mxu0
  %2249 = vmatpush.bf16.msra.mxu0 %v1499
  %2250 = vmatpush.bf16.msra.mxu0 %v1497
  %2251 = vmatpush.bf16.msra.mxu0 %v1495
  %2252 = vmatpush.bf16.msra.mxu0 %v1493
  %2253 = vmatpush.bf16.msra.mxu0 %v1491
  %2254 = vmatpush.bf16.msra.mxu0 %v1489
  %2255 = vmatpush.bf16.msra.mxu0 %v1487
  %2256 = vmatpush.bf16.msra.mxu0 %v1485
  %2257 = vmatmul.bf16.gmra.mxu0 %v359
  %v2258 = vpop.f32.mrf.mxu0
  %v2259 = vadd.f32 %v2246, %v2258
  %v2260 = vpop.f32.mrf.mxu0
  %2261 = vdwg.mxu0
  %2262 = vmatpush.bf16.msra.mxu0 %v1515
  %2263 = vmatpush.bf16.msra.mxu0 %v1513
  %2264 = vmatpush.bf16.msra.mxu0 %v1511
  %2265 = vmatpush.bf16.msra.mxu0 %v1509
  %2266 = vmatpush.bf16.msra.mxu0 %v1507
  %2267 = vmatpush.bf16.msra.mxu0 %v1505
  %2268 = vmatpush.bf16.msra.mxu0 %v1503
  %2269 = vmatpush.bf16.msra.mxu0 %v1501
  %2270 = vmatmul.bf16.gmra.mxu0 %v360
  %v2271 = vpop.f32.mrf.mxu0
  %v2272 = vadd.f32 %v2259, %v2271
  %v2273 = vpop.f32.mrf.mxu0
  %2274 = vdwg.mxu0
  %2275 = vmatpush.bf16.msra.mxu0 %v1531
  %2276 = vmatpush.bf16.msra.mxu0 %v1529
  %2277 = vmatpush.bf16.msra.mxu0 %v1527
  %2278 = vmatpush.bf16.msra.mxu0 %v1525
  %2279 = vmatpush.bf16.msra.mxu0 %v1523
  %2280 = vmatpush.bf16.msra.mxu0 %v1521
  %2281 = vmatpush.bf16.msra.mxu0 %v1519
  %2282 = vmatpush.bf16.msra.mxu0 %v1517
  %2283 = vmatmul.bf16.gmra.mxu0 %v361
  %v2284 = vpop.f32.mrf.mxu0
  %v2285 = vadd.f32 %v2272, %v2284
  %v2286 = vpop.f32.mrf.mxu0
  %2287 = vdwg.mxu0
  %vm2288 = vcmp.ge.f32.partialorder %v2051, 0.0
  %vm2289 = vcmp.ge.f32.partialorder %v2285, 0.0
  %v2290 = vmul.f32 %v2051, 0.2
  %v2291 = vmul.f32 %v2285, 0.2
  %v2292 = vsel %vm2288, %v2051, %v2290
  %v2293 = vsel %vm2289, %v2285, %v2291
  %v2294 = vrot.slane %v2292, 4
  %v2295 = vadd.f32 %v2292, %v2294
  %v2296 = vrot.slane %v2295, 2
  %v2297 = vadd.f32 %v2295, %v2296
  %v2298 = vrot.slane %v2297, 1
  %v2299 = vadd.f32 %v2297, %v2298
  %v2300 = vrot.slane %v2293, 4
  %v2301 = vadd.f32 %v2293, %v2300
  %v2302 = vrot.slane %v2301, 2
  %v2303 = vadd.f32 %v2301, %v2302
  %v2304 = vrot.slane %v2303, 1
  %v2305 = vadd.f32 %v2303, %v2304
  %v2306 = vrcp.pop 8.0
  %v2307 = vmul.f32 8.0, %v2306
  %v2308 = vsub.f32 1.0, %v2307
  %v2309 = vmul.f32 %v2306, %v2308
  %v2310 = vadd.f32 %v2306, %v2309
  %vm2311 = vweird.f32 %v2306
  %v2312 = vsel %vm2311, %v2306, %v2310
  %v2313 = vmul.f32 %v2299, %v2312
  %v2314 = vmul.f32 %v2305, %v2312
  %v2315 = vsub.f32 %v2292, %v2313
  %v2316 = vsub.f32 %v2293, %v2314
  %v2317 = vmul.f32 %v2315, %v2315
  %v2318 = vmul.f32 %v2316, %v2316
  %v2319 = vrot.slane %v2317, 4
  %v2320 = vadd.f32 %v2317, %v2319
  %v2321 = vrot.slane %v2320, 2
  %v2322 = vadd.f32 %v2320, %v2321
  %v2323 = vrot.slane %v2322, 1
  %v2324 = vadd.f32 %v2322, %v2323
  %v2325 = vrot.slane %v2318, 4
  %v2326 = vadd.f32 %v2318, %v2325
  %v2327 = vrot.slane %v2326, 2
  %v2328 = vadd.f32 %v2326, %v2327
  %v2329 = vrot.slane %v2328, 1
  %v2330 = vadd.f32 %v2328, %v2329
  %v2331 = vmul.f32 %v2324, %v2312
  %v2332 = vmul.f32 %v2330, %v2312
  %v2333 = vadd.f32 %v2331, 1e-05
  %v2334 = vadd.f32 %v2332, 1e-05
  %v2335 = vrsqrt.pop %v2333
  %v2336 = vmul.f32 %v2335, %v2333
  %v2337 = vmul.f32 %v2336, %v2335
  %v2338 = vmul.f32 0.5, %v2337
  %v2339 = vsub.f32 1.5, %v2338
  %v2340 = vmul.f32 %v2335, %v2339
  %vm2341 = vweird.f32 %v2333
  %vm2342 = vweird.f32 %v2335
  %vm2343 = vmor %vm2341, %vm2342
  %v2344 = vsel %vm2343, %v2335, %v2340
  %v2345 = vrsqrt.pop %v2334
  %v2346 = vmul.f32 %v2345, %v2334
  %v2347 = vmul.f32 %v2346, %v2345
  %v2348 = vmul.f32 0.5, %v2347
  %v2349 = vsub.f32 1.5, %v2348
  %v2350 = vmul.f32 %v2345, %v2349
  %vm2351 = vweird.f32 %v2334
  %vm2352 = vweird.f32 %v2345
  %vm2353 = vmor %vm2351, %vm2352
  %v2354 = vsel %vm2353, %v2345, %v2350
  %v2355 = vmul.f32 %v2315, %v2344
  %v2356 = vmul.f32 %v2316, %v2354
  %s2357 = scalar_lea.vmem %s2, 1
  %v2358 = vld [vmem:[%s2357] ss:$4 sm:$0x3]
  %v2360 = vperm.slane %v2358, 0
  %v2361 = vperm.slane %v2358, 1
  %v2364 = vmul.f32 %v2355, %v2360
  %v2365 = vmul.f32 %v2356, %v2361
  %s2366 = scalar_lea.vmem %s2, 2
  %v2367 = vld [vmem:[%s2366] ss:$4 sm:$0x3]
  %v2369 = vperm.slane %v2367, 0
  %v2370 = vperm.slane %v2367, 1
  %v2373 = vadd.f32 %v2364, %v2369
  %v2374 = vadd.f32 %v2365, %v2370
  %2375 = vst [vmem:[%s3] sm:$0xff] %v2373
  %2376 = vst [vmem:[%s3 + $0x8] sm:$0xff] %v2374
  // Predicated region
  $region14: #{net_forward.12} parent=0 // pred_check
    _
  $region15: #{net_forward.12} parent=0 // pred_check_branch
    %2378 = sbr.rel (0) target = $region17
  $region16: #{net_forward.12} parent=0 // pred_region
    _
  $region17: #{net_forward.12} parent=0 // pred_fallthru
    _
  // Predicated region
  $region18: #{net_forward.12} parent=0 // pred_check
    _
  $region19: #{net_forward.12} parent=0 // pred_check_branch
    %2380 = sbr.rel (0) target = $region21
  $region20: #{net_forward.12} parent=0 // pred_region
    _
  $region21: #{net_forward.12} parent=0 // pred_fallthru
    _

// kernel: net_forward.13
$region0: #{net_forward.13}
  #allocation0 [shape = 'u32[]', space=smem, size = 0x4, offset = 0x4, fixed_abs, tag = 'smem constant byte address 0x4 - core index']
  #allocation1 [shape = 'u32[72,128]{1,0:T(1,128)}', space=vmem, size = 0x9000, scoped, tag = 'internal scratch']
  %s0 = inlined_call_operand.vmem [shape: bf16[32,2304], index: 0, kind: input, shape index: {}]
  %s1 = inlined_call_operand.vmem [shape: bf16[2304,128], index: 1, kind: input, shape index: {}]
  %s2 = inlined_call_operand.vmem [shape: f32[3,128], index: 2, kind: input, shape index: {}]
  %s3 = inlined_call_operand.vmem [shape: f32[32,128], index: 3, kind: output, shape index: {}]
  %s4 = sld [smem:[#allocation0]]
  $region22: #{net_forward.13} parent=0
    _
  %s6 = ssub.s32 1, %s4
  %s7 = scalar_select 0, %s6, %s4
  // Predicated region
  $region2: #{net_forward.13} parent=0 // pred_check
    _
  $region3: #{net_forward.13} parent=0 // pred_check_branch
    %9 = sbr.rel (0) target = $region5
  $region4: #{net_forward.13} parent=0 // pred_region
    _
  $region5: #{net_forward.13} parent=0 // pred_fallthru
    _
  // Predicated region
  $region6: #{net_forward.13} parent=0 // pred_check
    _
  $region7: #{net_forward.13} parent=0 // pred_check_branch
    %11 = sbr.rel (0) target = $region9
  $region8: #{net_forward.13} parent=0 // pred_region
    _
  $region9: #{net_forward.13} parent=0 // pred_fallthru
    _
  // Predicated region
  $region10: #{net_forward.13} parent=0 // pred_check
    _
  $region11: #{net_forward.13} parent=0 // pred_check_branch
    %13 = sbr.rel (0) target = $region13
  $region12: #{net_forward.13} parent=0 // pred_region
    _
  $region13: #{net_forward.13} parent=0 // pred_fallthru
    _
  %v14 = vld [vmem:[%s0] sm:$0xff]
  %v15 = vld [vmem:[%s0 + $0x8] sm:$0xff]
  %v16 = vld [vmem:[%s0 + $0x10] sm:$0xff]
  %v17 = vld [vmem:[%s0 + $0x18] sm:$0xff]
  %v18 = vld [vmem:[%s0 + $0x20] sm:$0xff]
  %v19 = vld [vmem:[%s0 + $0x28] sm:$0xff]
  %v20 = vld [vmem:[%s0 + $0x30] sm:$0xff]
  %v21 = vld [vmem:[%s0 + $0x38] sm:$0xff]
  %v22 = vld [vmem:[%s0 + $0x40] sm:$0xff]
  %v23 = vld [vmem:[%s0 + $0x48] sm:$0xff]
  %v24 = vld [vmem:[%s0 + $0x50] sm:$0xff]
  %v25 = vld [vmem:[%s0 + $0x58] sm:$0xff]
  %v26 = vld [vmem:[%s0 + $0x60] sm:$0xff]
  %v27 = vld [vmem:[%s0 + $0x68] sm:$0xff]
  %v28 = vld [vmem:[%s0 + $0x70] sm:$0xff]
  %v29 = vld [vmem:[%s0 + $0x78] sm:$0xff]
  %v30 = vld [vmem:[%s0 + $0x80] sm:$0xff]
  %v31 = vld [vmem:[%s0 + $0x88] sm:$0xff]
  %v32 = vld [vmem:[%s0 + $0x90] sm:$0xff]
  %v33 = vld [vmem:[%s0 + $0x98] sm:$0xff]
  %v34 = vld [vmem:[%s0 + $0xa0] sm:$0xff]
  %v35 = vld [vmem:[%s0 + $0xa8] sm:$0xff]
  %v36 = vld [vmem:[%s0 + $0xb0] sm:$0xff]
  %v37 = vld [vmem:[%s0 + $0xb8] sm:$0xff]
  %v38 = vld [vmem:[%s0 + $0xc0] sm:$0xff]
  %v39 = vld [vmem:[%s0 + $0xc8] sm:$0xff]
  %v40 = vld [vmem:[%s0 + $0xd0] sm:$0xff]
  %v41 = vld [vmem:[%s0 + $0xd8] sm:$0xff]
  %v42 = vld [vmem:[%s0 + $0xe0] sm:$0xff]
  %v43 = vld [vmem:[%s0 + $0xe8] sm:$0xff]
  %v44 = vld [vmem:[%s0 + $0xf0] sm:$0xff]
  %v45 = vld [vmem:[%s0 + $0xf8] sm:$0xff]
  %v46 = vld [vmem:[%s0 + $0x100] sm:$0xff]
  %v47 = vld [vmem:[%s0 + $0x108] sm:$0xff]
  %v48 = vld [vmem:[%s0 + $0x110] sm:$0xff]
  %v49 = vld [vmem:[%s0 + $0x118] sm:$0xff]
  %v50 = vld [vmem:[%s1] sm:$0xf]
  %v51 = vld [vmem:[%s1 + $0x4] sm:$0xf]
  %v52 = vld [vmem:[%s1 + $0x8] sm:$0xf]
  %v53 = vld [vmem:[%s1 + $0xc] sm:$0xf]
  %v54 = vld [vmem:[%s1 + $0x10] sm:$0xf]
  %v55 = vld [vmem:[%s1 + $0x14] sm:$0xf]
  %v56 = vld [vmem:[%s1 + $0x18] sm:$0xf]
  %v57 = vld [vmem:[%s1 + $0x1c] sm:$0xf]
  %v58 = vld [vmem:[%s1 + $0x20] sm:$0xf]
  %v59 = vld [vmem:[%s1 + $0x24] sm:$0xf]
  %v60 = vld [vmem:[%s1 + $0x28] sm:$0xf]
  %v61 = vld [vmem:[%s1 + $0x2c] sm:$0xf]
  %v62 = vld [vmem:[%s1 + $0x30] sm:$0xf]
  %v63 = vld [vmem:[%s1 + $0x34] sm:$0xf]
  %v64 = vld [vmem:[%s1 + $0x38] sm:$0xf]
  %v65 = vld [vmem:[%s1 + $0x3c] sm:$0xf]
  %v66 = vld [vmem:[%s1 + $0x40] sm:$0xf]
  %v67 = vld [vmem:[%s1 + $0x44] sm:$0xf]
  %v68 = vld [vmem:[%s1 + $0x48] sm:$0xf]
  %v69 = vld [vmem:[%s1 + $0x4c] sm:$0xf]
  %v70 = vld [vmem:[%s1 + $0x50] sm:$0xf]
  %v71 = vld [vmem:[%s1 + $0x54] sm:$0xf]
  %v72 = vld [vmem:[%s1 + $0x58] sm:$0xf]
  %v73 = vld [vmem:[%s1 + $0x5c] sm:$0xf]
  %v74 = vld [vmem:[%s1 + $0x60] sm:$0xf]
  %v75 = vld [vmem:[%s1 + $0x64] sm:$0xf]
  %v76 = vld [vmem:[%s1 + $0x68] sm:$0xf]
  %v77 = vld [vmem:[%s1 + $0x6c] sm:$0xf]
  %v78 = vld [vmem:[%s1 + $0x70] sm:$0xf]
  %v79 = vld [vmem:[%s1 + $0x74] sm:$0xf]
  %v80 = vld [vmem:[%s1 + $0x78] sm:$0xf]
  %v81 = vld [vmem:[%s1 + $0x7c] sm:$0xf]
  %v82 = vld [vmem:[%s1 + $0x80] sm:$0xf]
  %v83 = vld [vmem:[%s1 + $0x84] sm:$0xf]
  %v84 = vld [vmem:[%s1 + $0x88] sm:$0xf]
  %v85 = vld [vmem:[%s1 + $0x8c] sm:$0xf]
  %v86 = vld [vmem:[%s1 + $0x90] sm:$0xf]
  %v87 = vld [vmem:[%s1 + $0x94] sm:$0xf]
  %v88 = vld [vmem:[%s1 + $0x98] sm:$0xf]
  %v89 = vld [vmem:[%s1 + $0x9c] sm:$0xf]
  %v90 = vld [vmem:[%s1 + $0xa0] sm:$0xf]
  %v91 = vld [vmem:[%s1 + $0xa4] sm:$0xf]
  %v92 = vld [vmem:[%s1 + $0xa8] sm:$0xf]
  %v93 = vld [vmem:[%s1 + $0xac] sm:$0xf]
  %v94 = vld [vmem:[%s1 + $0xb0] sm:$0xf]
  %v95 = vld [vmem:[%s1 + $0xb4] sm:$0xf]
  %v96 = vld [vmem:[%s1 + $0xb8] sm:$0xf]
  %v97 = vld [vmem:[%s1 + $0xbc] sm:$0xf]
  %v98 = vld [vmem:[%s1 + $0xc0] sm:$0xf]
  %v99 = vld [vmem:[%s1 + $0xc4] sm:$0xf]
  %v100 = vld [vmem:[%s1 + $0xc8] sm:$0xf]
  %v101 = vld [vmem:[%s1 + $0xcc] sm:$0xf]
  %v102 = vld [vmem:[%s1 + $0xd0] sm:$0xf]
  %v103 = vld [vmem:[%s1 + $0xd4] sm:$0xf]
  %v104 = vld [vmem:[%s1 + $0xd8] sm:$0xf]
  %v105 = vld [vmem:[%s1 + $0xdc] sm:$0xf]
  %v106 = vld [vmem:[%s1 + $0xe0] sm:$0xf]
  %v107 = vld [vmem:[%s1 + $0xe4] sm:$0xf]
  %v108 = vld [vmem:[%s1 + $0xe8] sm:$0xf]
  %v109 = vld [vmem:[%s1 + $0xec] sm:$0xf]
  %v110 = vld [vmem:[%s1 + $0xf0] sm:$0xf]
  %v111 = vld [vmem:[%s1 + $0xf4] sm:$0xf]
  %v112 = vld [vmem:[%s1 + $0xf8] sm:$0xf]
  %v113 = vld [vmem:[%s1 + $0xfc] sm:$0xf]
  %v114 = vld [vmem:[%s1 + $0x100] sm:$0xf]
  %v115 = vld [vmem:[%s1 + $0x104] sm:$0xf]
  %v116 = vld [vmem:[%s1 + $0x108] sm:$0xf]
  %v117 = vld [vmem:[%s1 + $0x10c] sm:$0xf]
  %v118 = vld [vmem:[%s1 + $0x110] sm:$0xf]
  %v119 = vld [vmem:[%s1 + $0x114] sm:$0xf]
  %v120 = vld [vmem:[%s1 + $0x118] sm:$0xf]
  %v121 = vld [vmem:[%s1 + $0x11c] sm:$0xf]
  %v122 = vld [vmem:[%s1 + $0x120] sm:$0xf]
  %v123 = vld [vmem:[%s1 + $0x124] sm:$0xf]
  %v124 = vld [vmem:[%s1 + $0x128] sm:$0xf]
  %v125 = vld [vmem:[%s1 + $0x12c] sm:$0xf]
  %v126 = vld [vmem:[%s1 + $0x130] sm:$0xf]
  %v127 = vld [vmem:[%s1 + $0x134] sm:$0xf]
  %v128 = vld [vmem:[%s1 + $0x138] sm:$0xf]
  %v129 = vld [vmem:[%s1 + $0x13c] sm:$0xf]
  %v130 = vld [vmem:[%s1 + $0x140] sm:$0xf]
  %v131 = vld [vmem:[%s1 + $0x144] sm:$0xf]
  %v132 = vld [vmem:[%s1 + $0x148] sm:$0xf]
  %v133 = vld [vmem:[%s1 + $0x14c] sm:$0xf]
  %v134 = vld [vmem:[%s1 + $0x150] sm:$0xf]
  %v135 = vld [vmem:[%s1 + $0x154] sm:$0xf]
  %v136 = vld [vmem:[%s1 + $0x158] sm:$0xf]
  %v137 = vld [vmem:[%s1 + $0x15c] sm:$0xf]
  %v138 = vld [vmem:[%s1 + $0x160] sm:$0xf]
  %v139 = vld [vmem:[%s1 + $0x164] sm:$0xf]
  %v140 = vld [vmem:[%s1 + $0x168] sm:$0xf]
  %v141 = vld [vmem:[%s1 + $0x16c] sm:$0xf]
  %v142 = vld [vmem:[%s1 + $0x170] sm:$0xf]
  %v143 = vld [vmem:[%s1 + $0x174] sm:$0xf]
  %v144 = vld [vmem:[%s1 + $0x178] sm:$0xf]
  %v145 = vld [vmem:[%s1 + $0x17c] sm:$0xf]
  %v146 = vld [vmem:[%s1 + $0x180] sm:$0xf]
  %v147 = vld [vmem:[%s1 + $0x184] sm:$0xf]
  %v148 = vld [vmem:[%s1 + $0x188] sm:$0xf]
  %v149 = vld [vmem:[%s1 + $0x18c] sm:$0xf]
  %v150 = vld [vmem:[%s1 + $0x190] sm:$0xf]
  %v151 = vld [vmem:[%s1 + $0x194] sm:$0xf]
  %v152 = vld [vmem:[%s1 + $0x198] sm:$0xf]
  %v153 = vld [vmem:[%s1 + $0x19c] sm:$0xf]
  %v154 = vld [vmem:[%s1 + $0x1a0] sm:$0xf]
  %v155 = vld [vmem:[%s1 + $0x1a4] sm:$0xf]
  %v156 = vld [vmem:[%s1 + $0x1a8] sm:$0xf]
  %v157 = vld [vmem:[%s1 + $0x1ac] sm:$0xf]
  %v158 = vld [vmem:[%s1 + $0x1b0] sm:$0xf]
  %v159 = vld [vmem:[%s1 + $0x1b4] sm:$0xf]
  %v160 = vld [vmem:[%s1 + $0x1b8] sm:$0xf]
  %v161 = vld [vmem:[%s1 + $0x1bc] sm:$0xf]
  %v162 = vld [vmem:[%s1 + $0x1c0] sm:$0xf]
  %v163 = vld [vmem:[%s1 + $0x1c4] sm:$0xf]
  %v164 = vld [vmem:[%s1 + $0x1c8] sm:$0xf]
  %v165 = vld [vmem:[%s1 + $0x1cc] sm:$0xf]
  %v166 = vld [vmem:[%s1 + $0x1d0] sm:$0xf]
  %v167 = vld [vmem:[%s1 + $0x1d4] sm:$0xf]
  %v168 = vld [vmem:[%s1 + $0x1d8] sm:$0xf]
  %v169 = vld [vmem:[%s1 + $0x1dc] sm:$0xf]
  %v170 = vld [vmem:[%s1 + $0x1e0] sm:$0xf]
  %v171 = vld [vmem:[%s1 + $0x1e4] sm:$0xf]
  %v172 = vld [vmem:[%s1 + $0x1e8] sm:$0xf]
  %v173 = vld [vmem:[%s1 + $0x1ec] sm:$0xf]
  %v174 = vld [vmem:[%s1 + $0x1f0] sm:$0xf]
  %v175 = vld [vmem:[%s1 + $0x1f4] sm:$0xf]
  %v176 = vld [vmem:[%s1 + $0x1f8] sm:$0xf]
  %v177 = vld [vmem:[%s1 + $0x1fc] sm:$0xf]
  %v178 = vld [vmem:[%s1 + $0x200] sm:$0xf]
  %v179 = vld [vmem:[%s1 + $0x204] sm:$0xf]
  %v180 = vld [vmem:[%s1 + $0x208] sm:$0xf]
  %v181 = vld [vmem:[%s1 + $0x20c] sm:$0xf]
  %v182 = vld [vmem:[%s1 + $0x210] sm:$0xf]
  %v183 = vld [vmem:[%s1 + $0x214] sm:$0xf]
  %v184 = vld [vmem:[%s1 + $0x218] sm:$0xf]
  %v185 = vld [vmem:[%s1 + $0x21c] sm:$0xf]
  %v186 = vld [vmem:[%s1 + $0x220] sm:$0xf]
  %v187 = vld [vmem:[%s1 + $0x224] sm:$0xf]
  %v188 = vld [vmem:[%s1 + $0x228] sm:$0xf]
  %v189 = vld [vmem:[%s1 + $0x22c] sm:$0xf]
  %v190 = vld [vmem:[%s1 + $0x230] sm:$0xf]
  %v191 = vld [vmem:[%s1 + $0x234] sm:$0xf]
  %v192 = vld [vmem:[%s1 + $0x238] sm:$0xf]
  %v193 = vld [vmem:[%s1 + $0x23c] sm:$0xf]
  %v194 = vld [vmem:[%s1 + $0x240] sm:$0xf]
  %v195 = vld [vmem:[%s1 + $0x244] sm:$0xf]
  %v196 = vld [vmem:[%s1 + $0x248] sm:$0xf]
  %v197 = vld [vmem:[%s1 + $0x24c] sm:$0xf]
  %v198 = vld [vmem:[%s1 + $0x250] sm:$0xf]
  %v199 = vld [vmem:[%s1 + $0x254] sm:$0xf]
  %v200 = vld [vmem:[%s1 + $0x258] sm:$0xf]
  %v201 = vld [vmem:[%s1 + $0x25c] sm:$0xf]
  %v202 = vld [vmem:[%s1 + $0x260] sm:$0xf]
  %v203 = vld [vmem:[%s1 + $0x264] sm:$0xf]
  %v204 = vld [vmem:[%s1 + $0x268] sm:$0xf]
  %v205 = vld [vmem:[%s1 + $0x26c] sm:$0xf]
  %v206 = vld [vmem:[%s1 + $0x270] sm:$0xf]
  %v207 = vld [vmem:[%s1 + $0x274] sm:$0xf]
  %v208 = vld [vmem:[%s1 + $0x278] sm:$0xf]
  %v209 = vld [vmem:[%s1 + $0x27c] sm:$0xf]
  %v210 = vld [vmem:[%s1 + $0x280] sm:$0xf]
  %v211 = vld [vmem:[%s1 + $0x284] sm:$0xf]
  %v212 = vld [vmem:[%s1 + $0x288] sm:$0xf]
  %v213 = vld [vmem:[%s1 + $0x28c] sm:$0xf]
  %v214 = vld [vmem:[%s1 + $0x290] sm:$0xf]
  %v215 = vld [vmem:[%s1 + $0x294] sm:$0xf]
  %v216 = vld [vmem:[%s1 + $0x298] sm:$0xf]
  %v217 = vld [vmem:[%s1 + $0x29c] sm:$0xf]
  %v218 = vld [vmem:[%s1 + $0x2a0] sm:$0xf]
  %v219 = vld [vmem:[%s1 + $0x2a4] sm:$0xf]
  %v220 = vld [vmem:[%s1 + $0x2a8] sm:$0xf]
  %v221 = vld [vmem:[%s1 + $0x2ac] sm:$0xf]
  %v222 = vld [vmem:[%s1 + $0x2b0] sm:$0xf]
  %v223 = vld [vmem:[%s1 + $0x2b4] sm:$0xf]
  %v224 = vld [vmem:[%s1 + $0x2b8] sm:$0xf]
  %v225 = vld [vmem:[%s1 + $0x2bc] sm:$0xf]
  %v226 = vld [vmem:[%s1 + $0x2c0] sm:$0xf]
  %v227 = vld [vmem:[%s1 + $0x2c4] sm:$0xf]
  %v228 = vld [vmem:[%s1 + $0x2c8] sm:$0xf]
  %v229 = vld [vmem:[%s1 + $0x2cc] sm:$0xf]
  %v230 = vld [vmem:[%s1 + $0x2d0] sm:$0xf]
  %v231 = vld [vmem:[%s1 + $0x2d4] sm:$0xf]
  %v232 = vld [vmem:[%s1 + $0x2d8] sm:$0xf]
  %v233 = vld [vmem:[%s1 + $0x2dc] sm:$0xf]
  %v234 = vld [vmem:[%s1 + $0x2e0] sm:$0xf]
  %v235 = vld [vmem:[%s1 + $0x2e4] sm:$0xf]
  %v236 = vld [vmem:[%s1 + $0x2e8] sm:$0xf]
  %v237 = vld [vmem:[%s1 + $0x2ec] sm:$0xf]
  %v238 = vld [vmem:[%s1 + $0x2f0] sm:$0xf]
  %v239 = vld [vmem:[%s1 + $0x2f4] sm:$0xf]
  %v240 = vld [vmem:[%s1 + $0x2f8] sm:$0xf]
  %v241 = vld [vmem:[%s1 + $0x2fc] sm:$0xf]
  %v242 = vld [vmem:[%s1 + $0x300] sm:$0xf]
  %v243 = vld [vmem:[%s1 + $0x304] sm:$0xf]
  %v244 = vld [vmem:[%s1 + $0x308] sm:$0xf]
  %v245 = vld [vmem:[%s1 + $0x30c] sm:$0xf]
  %v246 = vld [vmem:[%s1 + $0x310] sm:$0xf]
  %v247 = vld [vmem:[%s1 + $0x314] sm:$0xf]
  %v248 = vld [vmem:[%s1 + $0x318] sm:$0xf]
  %v249 = vld [vmem:[%s1 + $0x31c] sm:$0xf]
  %v250 = vld [vmem:[%s1 + $0x320] sm:$0xf]
  %v251 = vld [vmem:[%s1 + $0x324] sm:$0xf]
  %v252 = vld [vmem:[%s1 + $0x328] sm:$0xf]
  %v253 = vld [vmem:[%s1 + $0x32c] sm:$0xf]
  %v254 = vld [vmem:[%s1 + $0x330] sm:$0xf]
  %v255 = vld [vmem:[%s1 + $0x334] sm:$0xf]
  %v256 = vld [vmem:[%s1 + $0x338] sm:$0xf]
  %v257 = vld [vmem:[%s1 + $0x33c] sm:$0xf]
  %v258 = vld [vmem:[%s1 + $0x340] sm:$0xf]
  %v259 = vld [vmem:[%s1 + $0x344] sm:$0xf]
  %v260 = vld [vmem:[%s1 + $0x348] sm:$0xf]
  %v261 = vld [vmem:[%s1 + $0x34c] sm:$0xf]
  %v262 = vld [vmem:[%s1 + $0x350] sm:$0xf]
  %v263 = vld [vmem:[%s1 + $0x354] sm:$0xf]
  %v264 = vld [vmem:[%s1 + $0x358] sm:$0xf]
  %v265 = vld [vmem:[%s1 + $0x35c] sm:$0xf]
  %v266 = vld [vmem:[%s1 + $0x360] sm:$0xf]
  %v267 = vld [vmem:[%s1 + $0x364] sm:$0xf]
  %v268 = vld [vmem:[%s1 + $0x368] sm:$0xf]
  %v269 = vld [vmem:[%s1 + $0x36c] sm:$0xf]
  %v270 = vld [vmem:[%s1 + $0x370] sm:$0xf]
  %v271 = vld [vmem:[%s1 + $0x374] sm:$0xf]
  %v272 = vld [vmem:[%s1 + $0x378] sm:$0xf]
  %v273 = vld [vmem:[%s1 + $0x37c] sm:$0xf]
  %v274 = vld [vmem:[%s1 + $0x380] sm:$0xf]
  %v275 = vld [vmem:[%s1 + $0x384] sm:$0xf]
  %v276 = vld [vmem:[%s1 + $0x388] sm:$0xf]
  %v277 = vld [vmem:[%s1 + $0x38c] sm:$0xf]
  %v278 = vld [vmem:[%s1 + $0x390] sm:$0xf]
  %v279 = vld [vmem:[%s1 + $0x394] sm:$0xf]
  %v280 = vld [vmem:[%s1 + $0x398] sm:$0xf]
  %v281 = vld [vmem:[%s1 + $0x39c] sm:$0xf]
  %v282 = vld [vmem:[%s1 + $0x3a0] sm:$0xf]
  %v283 = vld [vmem:[%s1 + $0x3a4] sm:$0xf]
  %v284 = vld [vmem:[%s1 + $0x3a8] sm:$0xf]
  %v285 = vld [vmem:[%s1 + $0x3ac] sm:$0xf]
  %v286 = vld [vmem:[%s1 + $0x3b0] sm:$0xf]
  %v287 = vld [vmem:[%s1 + $0x3b4] sm:$0xf]
  %v288 = vld [vmem:[%s1 + $0x3b8] sm:$0xf]
  %v289 = vld [vmem:[%s1 + $0x3bc] sm:$0xf]
  %v290 = vld [vmem:[%s1 + $0x3c0] sm:$0xf]
  %v291 = vld [vmem:[%s1 + $0x3c4] sm:$0xf]
  %v292 = vld [vmem:[%s1 + $0x3c8] sm:$0xf]
  %v293 = vld [vmem:[%s1 + $0x3cc] sm:$0xf]
  %v294 = vld [vmem:[%s1 + $0x3d0] sm:$0xf]
  %v295 = vld [vmem:[%s1 + $0x3d4] sm:$0xf]
  %v296 = vld [vmem:[%s1 + $0x3d8] sm:$0xf]
  %v297 = vld [vmem:[%s1 + $0x3dc] sm:$0xf]
  %v298 = vld [vmem:[%s1 + $0x3e0] sm:$0xf]
  %v299 = vld [vmem:[%s1 + $0x3e4] sm:$0xf]
  %v300 = vld [vmem:[%s1 + $0x3e8] sm:$0xf]
  %v301 = vld [vmem:[%s1 + $0x3ec] sm:$0xf]
  %v302 = vld [vmem:[%s1 + $0x3f0] sm:$0xf]
  %v303 = vld [vmem:[%s1 + $0x3f4] sm:$0xf]
  %v304 = vld [vmem:[%s1 + $0x3f8] sm:$0xf]
  %v305 = vld [vmem:[%s1 + $0x3fc] sm:$0xf]
  %v306 = vld [vmem:[%s1 + $0x400] sm:$0xf]
  %v307 = vld [vmem:[%s1 + $0x404] sm:$0xf]
  %v308 = vld [vmem:[%s1 + $0x408] sm:$0xf]
  %v309 = vld [vmem:[%s1 + $0x40c] sm:$0xf]
  %v310 = vld [vmem:[%s1 + $0x410] sm:$0xf]
  %v311 = vld [vmem:[%s1 + $0x414] sm:$0xf]
  %v312 = vld [vmem:[%s1 + $0x418] sm:$0xf]
  %v313 = vld [vmem:[%s1 + $0x41c] sm:$0xf]
  %v314 = vld [vmem:[%s1 + $0x420] sm:$0xf]
  %v315 = vld [vmem:[%s1 + $0x424] sm:$0xf]
  %v316 = vld [vmem:[%s1 + $0x428] sm:$0xf]
  %v317 = vld [vmem:[%s1 + $0x42c] sm:$0xf]
  %v318 = vld [vmem:[%s1 + $0x430] sm:$0xf]
  %v319 = vld [vmem:[%s1 + $0x434] sm:$0xf]
  %v320 = vld [vmem:[%s1 + $0x438] sm:$0xf]
  %v321 = vld [vmem:[%s1 + $0x43c] sm:$0xf]
  %v322 = vld [vmem:[%s1 + $0x440] sm:$0xf]
  %v323 = vld [vmem:[%s1 + $0x444] sm:$0xf]
  %v324 = vld [vmem:[%s1 + $0x448] sm:$0xf]
  %v325 = vld [vmem:[%s1 + $0x44c] sm:$0xf]
  %v326 = vld [vmem:[%s1 + $0x450] sm:$0xf]
  %v327 = vld [vmem:[%s1 + $0x454] sm:$0xf]
  %v328 = vld [vmem:[%s1 + $0x458] sm:$0xf]
  %v329 = vld [vmem:[%s1 + $0x45c] sm:$0xf]
  %v330 = vld [vmem:[%s1 + $0x460] sm:$0xf]
  %v331 = vld [vmem:[%s1 + $0x464] sm:$0xf]
  %v332 = vld [vmem:[%s1 + $0x468] sm:$0xf]
  %v333 = vld [vmem:[%s1 + $0x46c] sm:$0xf]
  %v334 = vld [vmem:[%s1 + $0x470] sm:$0xf]
  %v335 = vld [vmem:[%s1 + $0x474] sm:$0xf]
  %v336 = vld [vmem:[%s1 + $0x478] sm:$0xf]
  %v337 = vld [vmem:[%s1 + $0x47c] sm:$0xf]
  %v338 = vld [vmem:[%s2] sm:$0x1]
  %v339 = vperm.slane %v338, 0
  %v376 = vunpack.c.l.b16 %v14
  %v377 = vunpack.c.h.b16 %v14
  %v378 = vunpack.c.l.b16 %v15
  %v379 = vunpack.c.h.b16 %v15
  %v380 = vunpack.c.l.b16 %v16
  %v381 = vunpack.c.h.b16 %v16
  %v382 = vunpack.c.l.b16 %v17
  %v383 = vunpack.c.h.b16 %v17
  %v384 = vunpack.c.l.b16 %v18
  %v385 = vunpack.c.h.b16 %v18
  %v386 = vunpack.c.l.b16 %v19
  %v387 = vunpack.c.h.b16 %v19
  %v388 = vunpack.c.l.b16 %v20
  %v389 = vunpack.c.h.b16 %v20
  %v390 = vunpack.c.l.b16 %v21
  %v391 = vunpack.c.h.b16 %v21
  %v392 = vunpack.c.l.b16 %v22
  %v393 = vunpack.c.h.b16 %v22
  %v394 = vunpack.c.l.b16 %v23
  %v395 = vunpack.c.h.b16 %v23
  %v396 = vunpack.c.l.b16 %v24
  %v397 = vunpack.c.h.b16 %v24
  %v398 = vunpack.c.l.b16 %v25
  %v399 = vunpack.c.h.b16 %v25
  %v400 = vunpack.c.l.b16 %v26
  %v401 = vunpack.c.h.b16 %v26
  %v402 = vunpack.c.l.b16 %v27
  %v403 = vunpack.c.h.b16 %v27
  %v404 = vunpack.c.l.b16 %v28
  %v405 = vunpack.c.h.b16 %v28
  %v406 = vunpack.c.l.b16 %v29
  %v407 = vunpack.c.h.b16 %v29
  %v408 = vunpack.c.l.b16 %v30
  %v409 = vunpack.c.h.b16 %v30
  %v410 = vunpack.c.l.b16 %v31
  %v411 = vunpack.c.h.b16 %v31
  %v412 = vunpack.c.l.b16 %v32
  %v413 = vunpack.c.h.b16 %v32
  %v414 = vunpack.c.l.b16 %v33
  %v415 = vunpack.c.h.b16 %v33
  %v416 = vunpack.c.l.b16 %v34
  %v417 = vunpack.c.h.b16 %v34
  %v418 = vunpack.c.l.b16 %v35
  %v419 = vunpack.c.h.b16 %v35
  %v420 = vunpack.c.l.b16 %v36
  %v421 = vunpack.c.h.b16 %v36
  %v422 = vunpack.c.l.b16 %v37
  %v423 = vunpack.c.h.b16 %v37
  %v424 = vunpack.c.l.b16 %v38
  %v425 = vunpack.c.h.b16 %v38
  %v426 = vunpack.c.l.b16 %v39
  %v427 = vunpack.c.h.b16 %v39
  %v428 = vunpack.c.l.b16 %v40
  %v429 = vunpack.c.h.b16 %v40
  %v430 = vunpack.c.l.b16 %v41
  %v431 = vunpack.c.h.b16 %v41
  %v432 = vunpack.c.l.b16 %v42
  %v433 = vunpack.c.h.b16 %v42
  %v434 = vunpack.c.l.b16 %v43
  %v435 = vunpack.c.h.b16 %v43
  %v436 = vunpack.c.l.b16 %v44
  %v437 = vunpack.c.h.b16 %v44
  %v438 = vunpack.c.l.b16 %v45
  %v439 = vunpack.c.h.b16 %v45
  %v440 = vunpack.c.l.b16 %v46
  %v441 = vunpack.c.h.b16 %v46
  %v442 = vunpack.c.l.b16 %v47
  %v443 = vunpack.c.h.b16 %v47
  %v444 = vunpack.c.l.b16 %v48
  %v445 = vunpack.c.h.b16 %v48
  %v446 = vunpack.c.l.b16 %v49
  %v447 = vunpack.c.h.b16 %v49
  %v448 = vpack.c.b16 %v394, %v376
  %v449 = vpack.c.b16 %v395, %v377
  %v450 = vpack.c.b16 %v396, %v378
  %v451 = vpack.c.b16 %v397, %v379
  %v452 = vpack.c.b16 %v398, %v380
  %v453 = vpack.c.b16 %v399, %v381
  %v454 = vpack.c.b16 %v400, %v382
  %v455 = vpack.c.b16 %v401, %v383
  %v456 = vpack.c.b16 %v402, %v384
  %v457 = vpack.c.b16 %v403, %v385
  %v458 = vpack.c.b16 %v404, %v386
  %v459 = vpack.c.b16 %v405, %v387
  %v460 = vpack.c.b16 %v406, %v388
  %v461 = vpack.c.b16 %v407, %v389
  %v462 = vpack.c.b16 %v408, %v390
  %v463 = vpack.c.b16 %v409, %v391
  %v464 = vpack.c.b16 %v410, %v392
  %v465 = vpack.c.b16 %v411, %v393
  %v466 = vpack.c.b16 %v430, %v412
  %v467 = vpack.c.b16 %v431, %v413
  %v468 = vpack.c.b16 %v432, %v414
  %v469 = vpack.c.b16 %v433, %v415
  %v470 = vpack.c.b16 %v434, %v416
  %v471 = vpack.c.b16 %v435, %v417
  %v472 = vpack.c.b16 %v436, %v418
  %v473 = vpack.c.b16 %v437, %v419
  %v474 = vpack.c.b16 %v438, %v420
  %v475 = vpack.c.b16 %v439, %v421
  %v476 = vpack.c.b16 %v440, %v422
  %v477 = vpack.c.b16 %v441, %v423
  %v478 = vpack.c.b16 %v442, %v424
  %v479 = vpack.c.b16 %v443, %v425
  %v480 = vpack.c.b16 %v444, %v426
  %v481 = vpack.c.b16 %v445, %v427
  %v482 = vpack.c.b16 %v446, %v428
  %v483 = vpack.c.b16 %v447, %v429
  %v808 = vunpack.c.l.b16 %v50
  %v809 = vunpack.c.l.b16 %v51
  %v810 = vunpack.c.l.b16 %v52
  %v811 = vunpack.c.l.b16 %v53
  %v812 = vunpack.c.l.b16 %v54
  %v813 = vunpack.c.l.b16 %v55
  %v814 = vunpack.c.l.b16 %v56
  %v815 = vunpack.c.l.b16 %v57
  %v816 = vunpack.c.l.b16 %v58
  %v817 = vunpack.c.l.b16 %v59
  %v818 = vunpack.c.l.b16 %v60
  %v819 = vunpack.c.l.b16 %v61
  %v820 = vunpack.c.l.b16 %v62
  %v821 = vunpack.c.l.b16 %v63
  %v822 = vunpack.c.l.b16 %v64
  %v823 = vunpack.c.l.b16 %v65
  %v824 = vunpack.c.l.b16 %v66
  %v825 = vunpack.c.l.b16 %v67
  %v826 = vunpack.c.l.b16 %v68
  %v827 = vunpack.c.l.b16 %v69
  %v828 = vunpack.c.l.b16 %v70
  %v829 = vunpack.c.l.b16 %v71
  %v830 = vunpack.c.l.b16 %v72
  %v831 = vunpack.c.l.b16 %v73
  %v832 = vunpack.c.l.b16 %v74
  %v833 = vunpack.c.l.b16 %v75
  %v834 = vunpack.c.l.b16 %v76
  %v835 = vunpack.c.l.b16 %v77
  %v836 = vunpack.c.l.b16 %v78
  %v837 = vunpack.c.l.b16 %v79
  %v838 = vunpack.c.l.b16 %v80
  %v839 = vunpack.c.l.b16 %v81
  %v840 = vunpack.c.l.b16 %v82
  %v841 = vunpack.c.l.b16 %v83
  %v842 = vunpack.c.l.b16 %v84
  %v843 = vunpack.c.l.b16 %v85
  %v844 = vunpack.c.l.b16 %v86
  %v845 = vunpack.c.l.b16 %v87
  %v846 = vunpack.c.l.b16 %v88
  %v847 = vunpack.c.l.b16 %v89
  %v848 = vunpack.c.l.b16 %v90
  %v849 = vunpack.c.l.b16 %v91
  %v850 = vunpack.c.l.b16 %v92
  %v851 = vunpack.c.l.b16 %v93
  %v852 = vunpack.c.l.b16 %v94
  %v853 = vunpack.c.l.b16 %v95
  %v854 = vunpack.c.l.b16 %v96
  %v855 = vunpack.c.l.b16 %v97
  %v856 = vunpack.c.l.b16 %v98
  %v857 = vunpack.c.l.b16 %v99
  %v858 = vunpack.c.l.b16 %v100
  %v859 = vunpack.c.l.b16 %v101
  %v860 = vunpack.c.l.b16 %v102
  %v861 = vunpack.c.l.b16 %v103
  %v862 = vunpack.c.l.b16 %v104
  %v863 = vunpack.c.l.b16 %v105
  %v864 = vunpack.c.l.b16 %v106
  %v865 = vunpack.c.l.b16 %v107
  %v866 = vunpack.c.l.b16 %v108
  %v867 = vunpack.c.l.b16 %v109
  %v868 = vunpack.c.l.b16 %v110
  %v869 = vunpack.c.l.b16 %v111
  %v870 = vunpack.c.l.b16 %v112
  %v871 = vunpack.c.l.b16 %v113
  %v872 = vunpack.c.l.b16 %v114
  %v873 = vunpack.c.l.b16 %v115
  %v874 = vunpack.c.l.b16 %v116
  %v875 = vunpack.c.l.b16 %v117
  %v876 = vunpack.c.l.b16 %v118
  %v877 = vunpack.c.l.b16 %v119
  %v878 = vunpack.c.l.b16 %v120
  %v879 = vunpack.c.l.b16 %v121
  %v880 = vunpack.c.l.b16 %v122
  %v881 = vunpack.c.l.b16 %v123
  %v882 = vunpack.c.l.b16 %v124
  %v883 = vunpack.c.l.b16 %v125
  %v884 = vunpack.c.l.b16 %v126
  %v885 = vunpack.c.l.b16 %v127
  %v886 = vunpack.c.l.b16 %v128
  %v887 = vunpack.c.l.b16 %v129
  %v888 = vunpack.c.l.b16 %v130
  %v889 = vunpack.c.l.b16 %v131
  %v890 = vunpack.c.l.b16 %v132
  %v891 = vunpack.c.l.b16 %v133
  %v892 = vunpack.c.l.b16 %v134
  %v893 = vunpack.c.l.b16 %v135
  %v894 = vunpack.c.l.b16 %v136
  %v895 = vunpack.c.l.b16 %v137
  %v896 = vunpack.c.l.b16 %v138
  %v897 = vunpack.c.l.b16 %v139
  %v898 = vunpack.c.l.b16 %v140
  %v899 = vunpack.c.l.b16 %v141
  %v900 = vunpack.c.l.b16 %v142
  %v901 = vunpack.c.l.b16 %v143
  %v902 = vunpack.c.l.b16 %v144
  %v903 = vunpack.c.l.b16 %v145
  %v904 = vunpack.c.l.b16 %v146
  %v905 = vunpack.c.l.b16 %v147
  %v906 = vunpack.c.l.b16 %v148
  %v907 = vunpack.c.l.b16 %v149
  %v908 = vunpack.c.l.b16 %v150
  %v909 = vunpack.c.l.b16 %v151
  %v910 = vunpack.c.l.b16 %v152
  %v911 = vunpack.c.l.b16 %v153
  %v912 = vunpack.c.l.b16 %v154
  %v913 = vunpack.c.l.b16 %v155
  %v914 = vunpack.c.l.b16 %v156
  %v915 = vunpack.c.l.b16 %v157
  %v916 = vunpack.c.l.b16 %v158
  %v917 = vunpack.c.l.b16 %v159
  %v918 = vunpack.c.l.b16 %v160
  %v919 = vunpack.c.l.b16 %v161
  %v920 = vunpack.c.l.b16 %v162
  %v921 = vunpack.c.l.b16 %v163
  %v922 = vunpack.c.l.b16 %v164
  %v923 = vunpack.c.l.b16 %v165
  %v924 = vunpack.c.l.b16 %v166
  %v925 = vunpack.c.l.b16 %v167
  %v926 = vunpack.c.l.b16 %v168
  %v927 = vunpack.c.l.b16 %v169
  %v928 = vunpack.c.l.b16 %v170
  %v929 = vunpack.c.l.b16 %v171
  %v930 = vunpack.c.l.b16 %v172
  %v931 = vunpack.c.l.b16 %v173
  %v932 = vunpack.c.l.b16 %v174
  %v933 = vunpack.c.l.b16 %v175
  %v934 = vunpack.c.l.b16 %v176
  %v935 = vunpack.c.l.b16 %v177
  %v936 = vunpack.c.l.b16 %v178
  %v937 = vunpack.c.l.b16 %v179
  %v938 = vunpack.c.l.b16 %v180
  %v939 = vunpack.c.l.b16 %v181
  %v940 = vunpack.c.l.b16 %v182
  %v941 = vunpack.c.l.b16 %v183
  %v942 = vunpack.c.l.b16 %v184
  %v943 = vunpack.c.l.b16 %v185
  %v944 = vunpack.c.l.b16 %v186
  %v945 = vunpack.c.l.b16 %v187
  %v946 = vunpack.c.l.b16 %v188
  %v947 = vunpack.c.l.b16 %v189
  %v948 = vunpack.c.l.b16 %v190
  %v949 = vunpack.c.l.b16 %v191
  %v950 = vunpack.c.l.b16 %v192
  %v951 = vunpack.c.l.b16 %v193
  %v952 = vunpack.c.l.b16 %v194
  %v953 = vunpack.c.l.b16 %v195
  %v954 = vunpack.c.l.b16 %v196
  %v955 = vunpack.c.l.b16 %v197
  %v956 = vunpack.c.l.b16 %v198
  %v957 = vunpack.c.l.b16 %v199
  %v958 = vunpack.c.l.b16 %v200
  %v959 = vunpack.c.l.b16 %v201
  %v960 = vunpack.c.l.b16 %v202
  %v961 = vunpack.c.l.b16 %v203
  %v962 = vunpack.c.l.b16 %v204
  %v963 = vunpack.c.l.b16 %v205
  %v964 = vunpack.c.l.b16 %v206
  %v965 = vunpack.c.l.b16 %v207
  %v966 = vunpack.c.l.b16 %v208
  %v967 = vunpack.c.l.b16 %v209
  %v968 = vunpack.c.l.b16 %v210
  %v969 = vunpack.c.l.b16 %v211
  %v970 = vunpack.c.l.b16 %v212
  %v971 = vunpack.c.l.b16 %v213
  %v972 = vunpack.c.l.b16 %v214
  %v973 = vunpack.c.l.b16 %v215
  %v974 = vunpack.c.l.b16 %v216
  %v975 = vunpack.c.l.b16 %v217
  %v976 = vunpack.c.l.b16 %v218
  %v977 = vunpack.c.l.b16 %v219
  %v978 = vunpack.c.l.b16 %v220
  %v979 = vunpack.c.l.b16 %v221
  %v980 = vunpack.c.l.b16 %v222
  %v981 = vunpack.c.l.b16 %v223
  %v982 = vunpack.c.l.b16 %v224
  %v983 = vunpack.c.l.b16 %v225
  %v984 = vunpack.c.l.b16 %v226
  %v985 = vunpack.c.l.b16 %v227
  %v986 = vunpack.c.l.b16 %v228
  %v987 = vunpack.c.l.b16 %v229
  %v988 = vunpack.c.l.b16 %v230
  %v989 = vunpack.c.l.b16 %v231
  %v990 = vunpack.c.l.b16 %v232
  %v991 = vunpack.c.l.b16 %v233
  %v992 = vunpack.c.l.b16 %v234
  %v993 = vunpack.c.l.b16 %v235
  %v994 = vunpack.c.l.b16 %v236
  %v995 = vunpack.c.l.b16 %v237
  %v996 = vunpack.c.l.b16 %v238
  %v997 = vunpack.c.l.b16 %v239
  %v998 = vunpack.c.l.b16 %v240
  %v999 = vunpack.c.l.b16 %v241
  %v1000 = vunpack.c.l.b16 %v242
  %v1001 = vunpack.c.l.b16 %v243
  %v1002 = vunpack.c.l.b16 %v244
  %v1003 = vunpack.c.l.b16 %v245
  %v1004 = vunpack.c.l.b16 %v246
  %v1005 = vunpack.c.l.b16 %v247
  %v1006 = vunpack.c.l.b16 %v248
  %v1007 = vunpack.c.l.b16 %v249
  %v1008 = vunpack.c.l.b16 %v250
  %v1009 = vunpack.c.l.b16 %v251
  %v1010 = vunpack.c.l.b16 %v252
  %v1011 = vunpack.c.l.b16 %v253
  %v1012 = vunpack.c.l.b16 %v254
  %v1013 = vunpack.c.l.b16 %v255
  %v1014 = vunpack.c.l.b16 %v256
  %v1015 = vunpack.c.l.b16 %v257
  %v1016 = vunpack.c.l.b16 %v258
  %v1017 = vunpack.c.l.b16 %v259
  %v1018 = vunpack.c.l.b16 %v260
  %v1019 = vunpack.c.l.b16 %v261
  %v1020 = vunpack.c.l.b16 %v262
  %v1021 = vunpack.c.l.b16 %v263
  %v1022 = vunpack.c.l.b16 %v264
  %v1023 = vunpack.c.l.b16 %v265
  %v1024 = vunpack.c.l.b16 %v266
  %v1025 = vunpack.c.l.b16 %v267
  %v1026 = vunpack.c.l.b16 %v268
  %v1027 = vunpack.c.l.b16 %v269
  %v1028 = vunpack.c.l.b16 %v270
  %v1029 = vunpack.c.l.b16 %v271
  %v1030 = vunpack.c.l.b16 %v272
  %v1031 = vunpack.c.l.b16 %v273
  %v1032 = vunpack.c.l.b16 %v274
  %v1033 = vunpack.c.l.b16 %v275
  %v1034 = vunpack.c.l.b16 %v276
  %v1035 = vunpack.c.l.b16 %v277
  %v1036 = vunpack.c.l.b16 %v278
  %v1037 = vunpack.c.l.b16 %v279
  %v1038 = vunpack.c.l.b16 %v280
  %v1039 = vunpack.c.l.b16 %v281
  %v1040 = vunpack.c.l.b16 %v282
  %v1041 = vunpack.c.l.b16 %v283
  %v1042 = vunpack.c.l.b16 %v284
  %v1043 = vunpack.c.l.b16 %v285
  %v1044 = vunpack.c.l.b16 %v286
  %v1045 = vunpack.c.l.b16 %v287
  %v1046 = vunpack.c.l.b16 %v288
  %v1047 = vunpack.c.l.b16 %v289
  %v1048 = vunpack.c.l.b16 %v290
  %v1049 = vunpack.c.l.b16 %v291
  %v1050 = vunpack.c.l.b16 %v292
  %v1051 = vunpack.c.l.b16 %v293
  %v1052 = vunpack.c.l.b16 %v294
  %v1053 = vunpack.c.l.b16 %v295
  %v1054 = vunpack.c.l.b16 %v296
  %v1055 = vunpack.c.l.b16 %v297
  %v1056 = vunpack.c.l.b16 %v298
  %v1057 = vunpack.c.l.b16 %v299
  %v1058 = vunpack.c.l.b16 %v300
  %v1059 = vunpack.c.l.b16 %v301
  %v1060 = vunpack.c.l.b16 %v302
  %v1061 = vunpack.c.l.b16 %v303
  %v1062 = vunpack.c.l.b16 %v304
  %v1063 = vunpack.c.l.b16 %v305
  %v1064 = vunpack.c.l.b16 %v306
  %v1065 = vunpack.c.l.b16 %v307
  %v1066 = vunpack.c.l.b16 %v308
  %v1067 = vunpack.c.l.b16 %v309
  %v1068 = vunpack.c.l.b16 %v310
  %v1069 = vunpack.c.l.b16 %v311
  %v1070 = vunpack.c.l.b16 %v312
  %v1071 = vunpack.c.l.b16 %v313
  %v1072 = vunpack.c.l.b16 %v314
  %v1073 = vunpack.c.l.b16 %v315
  %v1074 = vunpack.c.l.b16 %v316
  %v1075 = vunpack.c.l.b16 %v317
  %v1076 = vunpack.c.l.b16 %v318
  %v1077 = vunpack.c.l.b16 %v319
  %v1078 = vunpack.c.l.b16 %v320
  %v1079 = vunpack.c.l.b16 %v321
  %v1080 = vunpack.c.l.b16 %v322
  %v1081 = vunpack.c.l.b16 %v323
  %v1082 = vunpack.c.l.b16 %v324
  %v1083 = vunpack.c.l.b16 %v325
  %v1084 = vunpack.c.l.b16 %v326
  %v1085 = vunpack.c.l.b16 %v327
  %v1086 = vunpack.c.l.b16 %v328
  %v1087 = vunpack.c.l.b16 %v329
  %v1088 = vunpack.c.l.b16 %v330
  %v1089 = vunpack.c.l.b16 %v331
  %v1090 = vunpack.c.l.b16 %v332
  %v1091 = vunpack.c.l.b16 %v333
  %v1092 = vunpack.c.l.b16 %v334
  %v1093 = vunpack.c.l.b16 %v335
  %v1094 = vunpack.c.l.b16 %v336
  %v1095 = vunpack.c.l.b16 %v337
  %v1096 = vpack.c.b16 %v809, %v808
  %v1097 = vpack.c.b16 %v811, %v810
  %v1098 = vpack.c.b16 %v813, %v812
  %v1099 = vpack.c.b16 %v815, %v814
  %v1100 = vpack.c.b16 %v817, %v816
  %v1101 = vpack.c.b16 %v819, %v818
  %v1102 = vpack.c.b16 %v821, %v820
  %v1103 = vpack.c.b16 %v823, %v822
  %v1104 = vpack.c.b16 %v825, %v824
  %v1105 = vpack.c.b16 %v827, %v826
  %v1106 = vpack.c.b16 %v829, %v828
  %v1107 = vpack.c.b16 %v831, %v830
  %v1108 = vpack.c.b16 %v833, %v832
  %v1109 = vpack.c.b16 %v835, %v834
  %v1110 = vpack.c.b16 %v837, %v836
  %v1111 = vpack.c.b16 %v839, %v838
  %v1112 = vpack.c.b16 %v841, %v840
  %v1113 = vpack.c.b16 %v843, %v842
  %v1114 = vpack.c.b16 %v845, %v844
  %v1115 = vpack.c.b16 %v847, %v846
  %v1116 = vpack.c.b16 %v849, %v848
  %v1117 = vpack.c.b16 %v851, %v850
  %v1118 = vpack.c.b16 %v853, %v852
  %v1119 = vpack.c.b16 %v855, %v854
  %v1120 = vpack.c.b16 %v857, %v856
  %v1121 = vpack.c.b16 %v859, %v858
  %v1122 = vpack.c.b16 %v861, %v860
  %v1123 = vpack.c.b16 %v863, %v862
  %v1124 = vpack.c.b16 %v865, %v864
  %v1125 = vpack.c.b16 %v867, %v866
  %v1126 = vpack.c.b16 %v869, %v868
  %v1127 = vpack.c.b16 %v871, %v870
  %v1128 = vpack.c.b16 %v873, %v872
  %v1129 = vpack.c.b16 %v875, %v874
  %v1130 = vpack.c.b16 %v877, %v876
  %v1131 = vpack.c.b16 %v879, %v878
  %v1132 = vpack.c.b16 %v881, %v880
  %v1133 = vpack.c.b16 %v883, %v882
  %v1134 = vpack.c.b16 %v885, %v884
  %v1135 = vpack.c.b16 %v887, %v886
  %v1136 = vpack.c.b16 %v889, %v888
  %v1137 = vpack.c.b16 %v891, %v890
  %v1138 = vpack.c.b16 %v893, %v892
  %v1139 = vpack.c.b16 %v895, %v894
  %v1140 = vpack.c.b16 %v897, %v896
  %v1141 = vpack.c.b16 %v899, %v898
  %v1142 = vpack.c.b16 %v901, %v900
  %v1143 = vpack.c.b16 %v903, %v902
  %v1144 = vpack.c.b16 %v905, %v904
  %v1145 = vpack.c.b16 %v907, %v906
  %v1146 = vpack.c.b16 %v909, %v908
  %v1147 = vpack.c.b16 %v911, %v910
  %v1148 = vpack.c.b16 %v913, %v912
  %v1149 = vpack.c.b16 %v915, %v914
  %v1150 = vpack.c.b16 %v917, %v916
  %v1151 = vpack.c.b16 %v919, %v918
  %v1152 = vpack.c.b16 %v921, %v920
  %v1153 = vpack.c.b16 %v923, %v922
  %v1154 = vpack.c.b16 %v925, %v924
  %v1155 = vpack.c.b16 %v927, %v926
  %v1156 = vpack.c.b16 %v929, %v928
  %v1157 = vpack.c.b16 %v931, %v930
  %v1158 = vpack.c.b16 %v933, %v932
  %v1159 = vpack.c.b16 %v935, %v934
  %v1160 = vpack.c.b16 %v937, %v936
  %v1161 = vpack.c.b16 %v939, %v938
  %v1162 = vpack.c.b16 %v941, %v940
  %v1163 = vpack.c.b16 %v943, %v942
  %v1164 = vpack.c.b16 %v945, %v944
  %v1165 = vpack.c.b16 %v947, %v946
  %v1166 = vpack.c.b16 %v949, %v948
  %v1167 = vpack.c.b16 %v951, %v950
  %v1168 = vpack.c.b16 %v953, %v952
  %v1169 = vpack.c.b16 %v955, %v954
  %v1170 = vpack.c.b16 %v957, %v956
  %v1171 = vpack.c.b16 %v959, %v958
  %v1172 = vpack.c.b16 %v961, %v960
  %v1173 = vpack.c.b16 %v963, %v962
  %v1174 = vpack.c.b16 %v965, %v964
  %v1175 = vpack.c.b16 %v967, %v966
  %v1176 = vpack.c.b16 %v969, %v968
  %v1177 = vpack.c.b16 %v971, %v970
  %v1178 = vpack.c.b16 %v973, %v972
  %v1179 = vpack.c.b16 %v975, %v974
  %v1180 = vpack.c.b16 %v977, %v976
  %v1181 = vpack.c.b16 %v979, %v978
  %v1182 = vpack.c.b16 %v981, %v980
  %v1183 = vpack.c.b16 %v983, %v982
  %v1184 = vpack.c.b16 %v985, %v984
  %v1185 = vpack.c.b16 %v987, %v986
  %v1186 = vpack.c.b16 %v989, %v988
  %v1187 = vpack.c.b16 %v991, %v990
  %v1188 = vpack.c.b16 %v993, %v992
  %v1189 = vpack.c.b16 %v995, %v994
  %v1190 = vpack.c.b16 %v997, %v996
  %v1191 = vpack.c.b16 %v999, %v998
  %v1192 = vpack.c.b16 %v1001, %v1000
  %v1193 = vpack.c.b16 %v1003, %v1002
  %v1194 = vpack.c.b16 %v1005, %v1004
  %v1195 = vpack.c.b16 %v1007, %v1006
  %v1196 = vpack.c.b16 %v1009, %v1008
  %v1197 = vpack.c.b16 %v1011, %v1010
  %v1198 = vpack.c.b16 %v1013, %v1012
  %v1199 = vpack.c.b16 %v1015, %v1014
  %v1200 = vpack.c.b16 %v1017, %v1016
  %v1201 = vpack.c.b16 %v1019, %v1018
  %v1202 = vpack.c.b16 %v1021, %v1020
  %v1203 = vpack.c.b16 %v1023, %v1022
  %v1204 = vpack.c.b16 %v1025, %v1024
  %v1205 = vpack.c.b16 %v1027, %v1026
  %v1206 = vpack.c.b16 %v1029, %v1028
  %v1207 = vpack.c.b16 %v1031, %v1030
  %v1208 = vpack.c.b16 %v1033, %v1032
  %v1209 = vpack.c.b16 %v1035, %v1034
  %v1210 = vpack.c.b16 %v1037, %v1036
  %v1211 = vpack.c.b16 %v1039, %v1038
  %v1212 = vpack.c.b16 %v1041, %v1040
  %v1213 = vpack.c.b16 %v1043, %v1042
  %v1214 = vpack.c.b16 %v1045, %v1044
  %v1215 = vpack.c.b16 %v1047, %v1046
  %v1216 = vpack.c.b16 %v1049, %v1048
  %v1217 = vpack.c.b16 %v1051, %v1050
  %v1218 = vpack.c.b16 %v1053, %v1052
  %v1219 = vpack.c.b16 %v1055, %v1054
  %v1220 = vpack.c.b16 %v1057, %v1056
  %v1221 = vpack.c.b16 %v1059, %v1058
  %v1222 = vpack.c.b16 %v1061, %v1060
  %v1223 = vpack.c.b16 %v1063, %v1062
  %v1224 = vpack.c.b16 %v1065, %v1064
  %v1225 = vpack.c.b16 %v1067, %v1066
  %v1226 = vpack.c.b16 %v1069, %v1068
  %v1227 = vpack.c.b16 %v1071, %v1070
  %v1228 = vpack.c.b16 %v1073, %v1072
  %v1229 = vpack.c.b16 %v1075, %v1074
  %v1230 = vpack.c.b16 %v1077, %v1076
  %v1231 = vpack.c.b16 %v1079, %v1078
  %v1232 = vpack.c.b16 %v1081, %v1080
  %v1233 = vpack.c.b16 %v1083, %v1082
  %v1234 = vpack.c.b16 %v1085, %v1084
  %v1235 = vpack.c.b16 %v1087, %v1086
  %v1236 = vpack.c.b16 %v1089, %v1088
  %v1237 = vpack.c.b16 %v1091, %v1090
  %v1238 = vpack.c.b16 %v1093, %v1092
  %v1239 = vpack.c.b16 %v1095, %v1094
  %1384 = vmatpush.bf16.msra.mxu0 %v1103
  %1385 = vmatpush.bf16.msra.mxu0 %v1102
  %1386 = vmatpush.bf16.msra.mxu0 %v1101
  %1387 = vmatpush.bf16.msra.mxu0 %v1100
  %1388 = vmatpush.bf16.msra.mxu0 %v1099
  %1389 = vmatpush.bf16.msra.mxu0 %v1098
  %1390 = vmatpush.bf16.msra.mxu0 %v1097
  %1391 = vmatpush.bf16.msra.mxu0 %v1096
  %1392 = vmatmul.bf16.gmra.mxu0 %v448
  %v1393 = vpop.f32.mrf.mxu0
  %v1394 = vadd.f32 %v339, %v1393
  %v1395 = vpop.f32.mrf.mxu0
  %v1396 = vadd.f32 %v339, %v1395
  %1397 = vmatmul.bf16.gmra.mxu0 %v466
  %v1398 = vpop.f32.mrf.mxu0
  %v1399 = vadd.f32 %v339, %v1398
  %v1400 = vpop.f32.mrf.mxu0
  %v1401 = vadd.f32 %v339, %v1400
  %1402 = vdwg.mxu0
  %1403 = vmatpush.bf16.msra.mxu0 %v1111
  %1404 = vmatpush.bf16.msra.mxu0 %v1110
  %1405 = vmatpush.bf16.msra.mxu0 %v1109
  %1406 = vmatpush.bf16.msra.mxu0 %v1108
  %1407 = vmatpush.bf16.msra.mxu0 %v1107
  %1408 = vmatpush.bf16.msra.mxu0 %v1106
  %1409 = vmatpush.bf16.msra.mxu0 %v1105
  %1410 = vmatpush.bf16.msra.mxu0 %v1104
  %1411 = vmatmul.bf16.gmra.mxu0 %v449
  %v1412 = vpop.f32.mrf.mxu0
  %v1413 = vadd.f32 %v1394, %v1412
  %v1414 = vpop.f32.mrf.mxu0
  %v1415 = vadd.f32 %v1396, %v1414
  %1416 = vmatmul.bf16.gmra.mxu0 %v467
  %v1417 = vpop.f32.mrf.mxu0
  %v1418 = vadd.f32 %v1399, %v1417
  %v1419 = vpop.f32.mrf.mxu0
  %v1420 = vadd.f32 %v1401, %v1419
  %1421 = vdwg.mxu0
  %1422 = vmatpush.bf16.msra.mxu0 %v1119
  %1423 = vmatpush.bf16.msra.mxu0 %v1118
  %1424 = vmatpush.bf16.msra.mxu0 %v1117
  %1425 = vmatpush.bf16.msra.mxu0 %v1116
  %1426 = vmatpush.bf16.msra.mxu0 %v1115
  %1427 = vmatpush.bf16.msra.mxu0 %v1114
  %1428 = vmatpush.bf16.msra.mxu0 %v1113
  %1429 = vmatpush.bf16.msra.mxu0 %v1112
  %1430 = vmatmul.bf16.gmra.mxu0 %v450
  %v1431 = vpop.f32.mrf.mxu0
  %v1432 = vadd.f32 %v1413, %v1431
  %v1433 = vpop.f32.mrf.mxu0
  %v1434 = vadd.f32 %v1415, %v1433
  %1435 = vmatmul.bf16.gmra.mxu0 %v468
  %v1436 = vpop.f32.mrf.mxu0
  %v1437 = vadd.f32 %v1418, %v1436
  %v1438 = vpop.f32.mrf.mxu0
  %v1439 = vadd.f32 %v1420, %v1438
  %1440 = vdwg.mxu0
  %1441 = vmatpush.bf16.msra.mxu0 %v1127
  %1442 = vmatpush.bf16.msra.mxu0 %v1126
  %1443 = vmatpush.bf16.msra.mxu0 %v1125
  %1444 = vmatpush.bf16.msra.mxu0 %v1124
  %1445 = vmatpush.bf16.msra.mxu0 %v1123
  %1446 = vmatpush.bf16.msra.mxu0 %v1122
  %1447 = vmatpush.bf16.msra.mxu0 %v1121
  %1448 = vmatpush.bf16.msra.mxu0 %v1120
  %1449 = vmatmul.bf16.gmra.mxu0 %v451
  %v1450 = vpop.f32.mrf.mxu0
  %v1451 = vadd.f32 %v1432, %v1450
  %v1452 = vpop.f32.mrf.mxu0
  %v1453 = vadd.f32 %v1434, %v1452
  %1454 = vmatmul.bf16.gmra.mxu0 %v469
  %v1455 = vpop.f32.mrf.mxu0
  %v1456 = vadd.f32 %v1437, %v1455
  %v1457 = vpop.f32.mrf.mxu0
  %v1458 = vadd.f32 %v1439, %v1457
  %1459 = vdwg.mxu0
  %1460 = vmatpush.bf16.msra.mxu0 %v1135
  %1461 = vmatpush.bf16.msra.mxu0 %v1134
  %1462 = vmatpush.bf16.msra.mxu0 %v1133
  %1463 = vmatpush.bf16.msra.mxu0 %v1132
  %1464 = vmatpush.bf16.msra.mxu0 %v1131
  %1465 = vmatpush.bf16.msra.mxu0 %v1130
  %1466 = vmatpush.bf16.msra.mxu0 %v1129
  %1467 = vmatpush.bf16.msra.mxu0 %v1128
  %1468 = vmatmul.bf16.gmra.mxu0 %v452
  %v1469 = vpop.f32.mrf.mxu0
  %v1470 = vadd.f32 %v1451, %v1469
  %v1471 = vpop.f32.mrf.mxu0
  %v1472 = vadd.f32 %v1453, %v1471
  %1473 = vmatmul.bf16.gmra.mxu0 %v470
  %v1474 = vpop.f32.mrf.mxu0
  %v1475 = vadd.f32 %v1456, %v1474
  %v1476 = vpop.f32.mrf.mxu0
  %v1477 = vadd.f32 %v1458, %v1476
  %1478 = vdwg.mxu0
  %1479 = vmatpush.bf16.msra.mxu0 %v1143
  %1480 = vmatpush.bf16.msra.mxu0 %v1142
  %1481 = vmatpush.bf16.msra.mxu0 %v1141
  %1482 = vmatpush.bf16.msra.mxu0 %v1140
  %1483 = vmatpush.bf16.msra.mxu0 %v1139
  %1484 = vmatpush.bf16.msra.mxu0 %v1138
  %1485 = vmatpush.bf16.msra.mxu0 %v1137
  %1486 = vmatpush.bf16.msra.mxu0 %v1136
  %1487 = vmatmul.bf16.gmra.mxu0 %v453
  %v1488 = vpop.f32.mrf.mxu0
  %v1489 = vadd.f32 %v1470, %v1488
  %v1490 = vpop.f32.mrf.mxu0
  %v1491 = vadd.f32 %v1472, %v1490
  %1492 = vmatmul.bf16.gmra.mxu0 %v471
  %v1493 = vpop.f32.mrf.mxu0
  %v1494 = vadd.f32 %v1475, %v1493
  %v1495 = vpop.f32.mrf.mxu0
  %v1496 = vadd.f32 %v1477, %v1495
  %1497 = vdwg.mxu0
  %1498 = vmatpush.bf16.msra.mxu0 %v1151
  %1499 = vmatpush.bf16.msra.mxu0 %v1150
  %1500 = vmatpush.bf16.msra.mxu0 %v1149
  %1501 = vmatpush.bf16.msra.mxu0 %v1148
  %1502 = vmatpush.bf16.msra.mxu0 %v1147
  %1503 = vmatpush.bf16.msra.mxu0 %v1146
  %1504 = vmatpush.bf16.msra.mxu0 %v1145
  %1505 = vmatpush.bf16.msra.mxu0 %v1144
  %1506 = vmatmul.bf16.gmra.mxu0 %v454
  %v1507 = vpop.f32.mrf.mxu0
  %v1508 = vadd.f32 %v1489, %v1507
  %v1509 = vpop.f32.mrf.mxu0
  %v1510 = vadd.f32 %v1491, %v1509
  %1511 = vmatmul.bf16.gmra.mxu0 %v472
  %v1512 = vpop.f32.mrf.mxu0
  %v1513 = vadd.f32 %v1494, %v1512
  %v1514 = vpop.f32.mrf.mxu0
  %v1515 = vadd.f32 %v1496, %v1514
  %1516 = vdwg.mxu0
  %1517 = vmatpush.bf16.msra.mxu0 %v1159
  %1518 = vmatpush.bf16.msra.mxu0 %v1158
  %1519 = vmatpush.bf16.msra.mxu0 %v1157
  %1520 = vmatpush.bf16.msra.mxu0 %v1156
  %1521 = vmatpush.bf16.msra.mxu0 %v1155
  %1522 = vmatpush.bf16.msra.mxu0 %v1154
  %1523 = vmatpush.bf16.msra.mxu0 %v1153
  %1524 = vmatpush.bf16.msra.mxu0 %v1152
  %1525 = vmatmul.bf16.gmra.mxu0 %v455
  %v1526 = vpop.f32.mrf.mxu0
  %v1527 = vadd.f32 %v1508, %v1526
  %v1528 = vpop.f32.mrf.mxu0
  %v1529 = vadd.f32 %v1510, %v1528
  %1530 = vmatmul.bf16.gmra.mxu0 %v473
  %v1531 = vpop.f32.mrf.mxu0
  %v1532 = vadd.f32 %v1513, %v1531
  %v1533 = vpop.f32.mrf.mxu0
  %v1534 = vadd.f32 %v1515, %v1533
  %1535 = vdwg.mxu0
  %1536 = vmatpush.bf16.msra.mxu0 %v1167
  %1537 = vmatpush.bf16.msra.mxu0 %v1166
  %1538 = vmatpush.bf16.msra.mxu0 %v1165
  %1539 = vmatpush.bf16.msra.mxu0 %v1164
  %1540 = vmatpush.bf16.msra.mxu0 %v1163
  %1541 = vmatpush.bf16.msra.mxu0 %v1162
  %1542 = vmatpush.bf16.msra.mxu0 %v1161
  %1543 = vmatpush.bf16.msra.mxu0 %v1160
  %1544 = vmatmul.bf16.gmra.mxu0 %v456
  %v1545 = vpop.f32.mrf.mxu0
  %v1546 = vadd.f32 %v1527, %v1545
  %v1547 = vpop.f32.mrf.mxu0
  %v1548 = vadd.f32 %v1529, %v1547
  %1549 = vmatmul.bf16.gmra.mxu0 %v474
  %v1550 = vpop.f32.mrf.mxu0
  %v1551 = vadd.f32 %v1532, %v1550
  %v1552 = vpop.f32.mrf.mxu0
  %v1553 = vadd.f32 %v1534, %v1552
  %1554 = vdwg.mxu0
  %1555 = vmatpush.bf16.msra.mxu0 %v1175
  %1556 = vmatpush.bf16.msra.mxu0 %v1174
  %1557 = vmatpush.bf16.msra.mxu0 %v1173
  %1558 = vmatpush.bf16.msra.mxu0 %v1172
  %1559 = vmatpush.bf16.msra.mxu0 %v1171
  %1560 = vmatpush.bf16.msra.mxu0 %v1170
  %1561 = vmatpush.bf16.msra.mxu0 %v1169
  %1562 = vmatpush.bf16.msra.mxu0 %v1168
  %1563 = vmatmul.bf16.gmra.mxu0 %v457
  %v1564 = vpop.f32.mrf.mxu0
  %v1565 = vadd.f32 %v1546, %v1564
  %v1566 = vpop.f32.mrf.mxu0
  %v1567 = vadd.f32 %v1548, %v1566
  %1568 = vmatmul.bf16.gmra.mxu0 %v475
  %v1569 = vpop.f32.mrf.mxu0
  %v1570 = vadd.f32 %v1551, %v1569
  %v1571 = vpop.f32.mrf.mxu0
  %v1572 = vadd.f32 %v1553, %v1571
  %1573 = vdwg.mxu0
  %1574 = vmatpush.bf16.msra.mxu0 %v1183
  %1575 = vmatpush.bf16.msra.mxu0 %v1182
  %1576 = vmatpush.bf16.msra.mxu0 %v1181
  %1577 = vmatpush.bf16.msra.mxu0 %v1180
  %1578 = vmatpush.bf16.msra.mxu0 %v1179
  %1579 = vmatpush.bf16.msra.mxu0 %v1178
  %1580 = vmatpush.bf16.msra.mxu0 %v1177
  %1581 = vmatpush.bf16.msra.mxu0 %v1176
  %1582 = vmatmul.bf16.gmra.mxu0 %v458
  %v1583 = vpop.f32.mrf.mxu0
  %v1584 = vadd.f32 %v1565, %v1583
  %v1585 = vpop.f32.mrf.mxu0
  %v1586 = vadd.f32 %v1567, %v1585
  %1587 = vmatmul.bf16.gmra.mxu0 %v476
  %v1588 = vpop.f32.mrf.mxu0
  %v1589 = vadd.f32 %v1570, %v1588
  %v1590 = vpop.f32.mrf.mxu0
  %v1591 = vadd.f32 %v1572, %v1590
  %1592 = vdwg.mxu0
  %1593 = vmatpush.bf16.msra.mxu0 %v1191
  %1594 = vmatpush.bf16.msra.mxu0 %v1190
  %1595 = vmatpush.bf16.msra.mxu0 %v1189
  %1596 = vmatpush.bf16.msra.mxu0 %v1188
  %1597 = vmatpush.bf16.msra.mxu0 %v1187
  %1598 = vmatpush.bf16.msra.mxu0 %v1186
  %1599 = vmatpush.bf16.msra.mxu0 %v1185
  %1600 = vmatpush.bf16.msra.mxu0 %v1184
  %1601 = vmatmul.bf16.gmra.mxu0 %v459
  %v1602 = vpop.f32.mrf.mxu0
  %v1603 = vadd.f32 %v1584, %v1602
  %v1604 = vpop.f32.mrf.mxu0
  %v1605 = vadd.f32 %v1586, %v1604
  %1606 = vmatmul.bf16.gmra.mxu0 %v477
  %v1607 = vpop.f32.mrf.mxu0
  %v1608 = vadd.f32 %v1589, %v1607
  %v1609 = vpop.f32.mrf.mxu0
  %v1610 = vadd.f32 %v1591, %v1609
  %1611 = vdwg.mxu0
  %1612 = vmatpush.bf16.msra.mxu0 %v1199
  %1613 = vmatpush.bf16.msra.mxu0 %v1198
  %1614 = vmatpush.bf16.msra.mxu0 %v1197
  %1615 = vmatpush.bf16.msra.mxu0 %v1196
  %1616 = vmatpush.bf16.msra.mxu0 %v1195
  %1617 = vmatpush.bf16.msra.mxu0 %v1194
  %1618 = vmatpush.bf16.msra.mxu0 %v1193
  %1619 = vmatpush.bf16.msra.mxu0 %v1192
  %1620 = vmatmul.bf16.gmra.mxu0 %v460
  %v1621 = vpop.f32.mrf.mxu0
  %v1622 = vadd.f32 %v1603, %v1621
  %v1623 = vpop.f32.mrf.mxu0
  %v1624 = vadd.f32 %v1605, %v1623
  %1625 = vmatmul.bf16.gmra.mxu0 %v478
  %v1626 = vpop.f32.mrf.mxu0
  %v1627 = vadd.f32 %v1608, %v1626
  %v1628 = vpop.f32.mrf.mxu0
  %v1629 = vadd.f32 %v1610, %v1628
  %1630 = vdwg.mxu0
  %1631 = vmatpush.bf16.msra.mxu0 %v1207
  %1632 = vmatpush.bf16.msra.mxu0 %v1206
  %1633 = vmatpush.bf16.msra.mxu0 %v1205
  %1634 = vmatpush.bf16.msra.mxu0 %v1204
  %1635 = vmatpush.bf16.msra.mxu0 %v1203
  %1636 = vmatpush.bf16.msra.mxu0 %v1202
  %1637 = vmatpush.bf16.msra.mxu0 %v1201
  %1638 = vmatpush.bf16.msra.mxu0 %v1200
  %1639 = vmatmul.bf16.gmra.mxu0 %v461
  %v1640 = vpop.f32.mrf.mxu0
  %v1641 = vadd.f32 %v1622, %v1640
  %v1642 = vpop.f32.mrf.mxu0
  %v1643 = vadd.f32 %v1624, %v1642
  %1644 = vmatmul.bf16.gmra.mxu0 %v479
  %v1645 = vpop.f32.mrf.mxu0
  %v1646 = vadd.f32 %v1627, %v1645
  %v1647 = vpop.f32.mrf.mxu0
  %v1648 = vadd.f32 %v1629, %v1647
  %1649 = vdwg.mxu0
  %1650 = vmatpush.bf16.msra.mxu0 %v1215
  %1651 = vmatpush.bf16.msra.mxu0 %v1214
  %1652 = vmatpush.bf16.msra.mxu0 %v1213
  %1653 = vmatpush.bf16.msra.mxu0 %v1212
  %1654 = vmatpush.bf16.msra.mxu0 %v1211
  %1655 = vmatpush.bf16.msra.mxu0 %v1210
  %1656 = vmatpush.bf16.msra.mxu0 %v1209
  %1657 = vmatpush.bf16.msra.mxu0 %v1208
  %1658 = vmatmul.bf16.gmra.mxu0 %v462
  %v1659 = vpop.f32.mrf.mxu0
  %v1660 = vadd.f32 %v1641, %v1659
  %v1661 = vpop.f32.mrf.mxu0
  %v1662 = vadd.f32 %v1643, %v1661
  %1663 = vmatmul.bf16.gmra.mxu0 %v480
  %v1664 = vpop.f32.mrf.mxu0
  %v1665 = vadd.f32 %v1646, %v1664
  %v1666 = vpop.f32.mrf.mxu0
  %v1667 = vadd.f32 %v1648, %v1666
  %1668 = vdwg.mxu0
  %1669 = vmatpush.bf16.msra.mxu0 %v1223
  %1670 = vmatpush.bf16.msra.mxu0 %v1222
  %1671 = vmatpush.bf16.msra.mxu0 %v1221
  %1672 = vmatpush.bf16.msra.mxu0 %v1220
  %1673 = vmatpush.bf16.msra.mxu0 %v1219
  %1674 = vmatpush.bf16.msra.mxu0 %v1218
  %1675 = vmatpush.bf16.msra.mxu0 %v1217
  %1676 = vmatpush.bf16.msra.mxu0 %v1216
  %1677 = vmatmul.bf16.gmra.mxu0 %v463
  %v1678 = vpop.f32.mrf.mxu0
  %v1679 = vadd.f32 %v1660, %v1678
  %v1680 = vpop.f32.mrf.mxu0
  %v1681 = vadd.f32 %v1662, %v1680
  %1682 = vmatmul.bf16.gmra.mxu0 %v481
  %v1683 = vpop.f32.mrf.mxu0
  %v1684 = vadd.f32 %v1665, %v1683
  %v1685 = vpop.f32.mrf.mxu0
  %v1686 = vadd.f32 %v1667, %v1685
  %1687 = vdwg.mxu0
  %1688 = vmatpush.bf16.msra.mxu0 %v1231
  %1689 = vmatpush.bf16.msra.mxu0 %v1230
  %1690 = vmatpush.bf16.msra.mxu0 %v1229
  %1691 = vmatpush.bf16.msra.mxu0 %v1228
  %1692 = vmatpush.bf16.msra.mxu0 %v1227
  %1693 = vmatpush.bf16.msra.mxu0 %v1226
  %1694 = vmatpush.bf16.msra.mxu0 %v1225
  %1695 = vmatpush.bf16.msra.mxu0 %v1224
  %1696 = vmatmul.bf16.gmra.mxu0 %v464
  %v1697 = vpop.f32.mrf.mxu0
  %v1698 = vadd.f32 %v1679, %v1697
  %v1699 = vpop.f32.mrf.mxu0
  %v1700 = vadd.f32 %v1681, %v1699
  %1701 = vmatmul.bf16.gmra.mxu0 %v482
  %v1702 = vpop.f32.mrf.mxu0
  %v1703 = vadd.f32 %v1684, %v1702
  %v1704 = vpop.f32.mrf.mxu0
  %v1705 = vadd.f32 %v1686, %v1704
  %1706 = vdwg.mxu0
  %1707 = vmatpush.bf16.msra.mxu0 %v1239
  %1708 = vmatpush.bf16.msra.mxu0 %v1238
  %1709 = vmatpush.bf16.msra.mxu0 %v1237
  %1710 = vmatpush.bf16.msra.mxu0 %v1236
  %1711 = vmatpush.bf16.msra.mxu0 %v1235
  %1712 = vmatpush.bf16.msra.mxu0 %v1234
  %1713 = vmatpush.bf16.msra.mxu0 %v1233
  %1714 = vmatpush.bf16.msra.mxu0 %v1232
  %1715 = vmatmul.bf16.gmra.mxu0 %v465
  %v1716 = vpop.f32.mrf.mxu0
  %v1717 = vadd.f32 %v1698, %v1716
  %v1718 = vpop.f32.mrf.mxu0
  %v1719 = vadd.f32 %v1700, %v1718
  %1720 = vmatmul.bf16.gmra.mxu0 %v483
  %v1721 = vpop.f32.mrf.mxu0
  %v1722 = vadd.f32 %v1703, %v1721
  %v1723 = vpop.f32.mrf.mxu0
  %v1724 = vadd.f32 %v1705, %v1723
  %1725 = vdwg.mxu0
  %vm1726 = vcmp.ge.f32.partialorder %v1717, 0.0
  %vm1727 = vcmp.ge.f32.partialorder %v1719, 0.0
  %vm1728 = vcmp.ge.f32.partialorder %v1722, 0.0
  %vm1729 = vcmp.ge.f32.partialorder %v1724, 0.0
  %v1730 = vmul.f32 %v1717, 0.2
  %v1731 = vmul.f32 %v1719, 0.2
  %v1732 = vmul.f32 %v1722, 0.2
  %v1733 = vmul.f32 %v1724, 0.2
  %v1734 = vsel %vm1726, %v1717, %v1730
  %v1735 = vsel %vm1727, %v1719, %v1731
  %v1736 = vsel %vm1728, %v1722, %v1732
  %v1737 = vsel %vm1729, %v1724, %v1733
  %v1738 = vadd.f32 %v1734, %v1735
  %v1739 = vadd.f32 %v1738, %v1736
  %v1740 = vadd.f32 %v1739, %v1737
  %v1741 = vrot.slane %v1740, 4
  %v1742 = vadd.f32 %v1740, %v1741
  %v1743 = vrot.slane %v1742, 2
  %v1744 = vadd.f32 %v1742, %v1743
  %v1745 = vrot.slane %v1744, 1
  %v1746 = vadd.f32 %v1744, %v1745
  %v1747 = vrcp.pop 32.0
  %v1748 = vmul.f32 32.0, %v1747
  %v1749 = vsub.f32 1.0, %v1748
  %v1750 = vmul.f32 %v1747, %v1749
  %v1751 = vadd.f32 %v1747, %v1750
  %vm1752 = vweird.f32 %v1747
  %v1753 = vsel %vm1752, %v1747, %v1751
  %v1754 = vmul.f32 %v1746, %v1753
  %v1755 = vsub.f32 %v1734, %v1754
  %v1756 = vsub.f32 %v1735, %v1754
  %v1757 = vsub.f32 %v1736, %v1754
  %v1758 = vsub.f32 %v1737, %v1754
  %v1759 = vmul.f32 %v1755, %v1755
  %v1760 = vmul.f32 %v1756, %v1756
  %v1761 = vmul.f32 %v1757, %v1757
  %v1762 = vmul.f32 %v1758, %v1758
  %v1763 = vadd.f32 %v1759, %v1760
  %v1764 = vadd.f32 %v1763, %v1761
  %v1765 = vadd.f32 %v1764, %v1762
  %v1766 = vrot.slane %v1765, 4
  %v1767 = vadd.f32 %v1765, %v1766
  %v1768 = vrot.slane %v1767, 2
  %v1769 = vadd.f32 %v1767, %v1768
  %v1770 = vrot.slane %v1769, 1
  %v1771 = vadd.f32 %v1769, %v1770
  %v1772 = vmul.f32 %v1771, %v1753
  %v1773 = vadd.f32 %v1772, 1e-05
  %v1774 = vrsqrt.pop %v1773
  %v1775 = vmul.f32 %v1774, %v1773
  %v1776 = vmul.f32 %v1775, %v1774
  %v1777 = vmul.f32 0.5, %v1776
  %v1778 = vsub.f32 1.5, %v1777
  %v1779 = vmul.f32 %v1774, %v1778
  %vm1780 = vweird.f32 %v1773
  %vm1781 = vweird.f32 %v1774
  %vm1782 = vmor %vm1780, %vm1781
  %v1783 = vsel %vm1782, %v1774, %v1779
  %v1784 = vmul.f32 %v1755, %v1783
  %v1785 = vmul.f32 %v1756, %v1783
  %v1786 = vmul.f32 %v1757, %v1783
  %v1787 = vmul.f32 %v1758, %v1783
  %v1788 = vld [vmem:[%s2 + $0x1] sm:$0x1]
  %v1789 = vperm.slane %v1788, 0
  %v1790 = vmul.f32 %v1784, %v1789
  %v1791 = vmul.f32 %v1785, %v1789
  %v1792 = vmul.f32 %v1786, %v1789
  %v1793 = vmul.f32 %v1787, %v1789
  %v1794 = vld [vmem:[%s2 + $0x2] sm:$0x1]
  %v1795 = vperm.slane %v1794, 0
  %v1796 = vadd.f32 %v1790, %v1795
  %v1797 = vadd.f32 %v1791, %v1795
  %v1798 = vadd.f32 %v1792, %v1795
  %v1799 = vadd.f32 %v1793, %v1795
  %1800 = vst [vmem:[%s3] sm:$0xff] %v1796
  %1801 = vst [vmem:[%s3 + $0x8] sm:$0xff] %v1797
  %1802 = vst [vmem:[%s3 + $0x10] sm:$0xff] %v1798
  %1803 = vst [vmem:[%s3 + $0x18] sm:$0xff] %v1799
  // Predicated region
  $region14: #{net_forward.13} parent=0 // pred_check
    _
  $region15: #{net_forward.13} parent=0 // pred_check_branch
    %1805 = sbr.rel (0) target = $region17
  $region16: #{net_forward.13} parent=0 // pred_region
    _
  $region17: #{net_forward.13} parent=0 // pred_fallthru
    _
  // Predicated region
  $region18: #{net_forward.13} parent=0 // pred_check
    _
  $region19: #{net_forward.13} parent=0 // pred_check_branch
    %1807 = sbr.rel (0) target = $region21
  $region20: #{net_forward.13} parent=0 // pred_region
    _
  $region21: #{net_forward.13} parent=0 // pred_fallthru
    _

// kernel: net_forward.14
$region0: #{net_forward.14}
  #allocation0 [shape = 'u32[]', space=smem, size = 0x4, offset = 0x4, fixed_abs, tag = 'smem constant byte address 0x4 - core index']
  #allocation1 [shape = 'u32[72,128]{1,0:T(1,128)}', space=vmem, size = 0x9000, scoped, tag = 'internal scratch']
  %s0 = inlined_call_operand.vmem [shape: bf16[128,1152], index: 0, kind: input, shape index: {}]
  %s1 = inlined_call_operand.vmem [shape: bf16[1152,128], index: 1, kind: input, shape index: {}]
  %s2 = inlined_call_operand.vmem [shape: f32[3,128], index: 2, kind: input, shape index: {}]
  %s3 = inlined_call_operand.vmem [shape: f32[128,128], index: 3, kind: output, shape index: {}]
  %s4 = sld [smem:[#allocation0]]
  $region22: #{net_forward.14} parent=0
    _
  %s6 = ssub.s32 1, %s4
  %s7 = scalar_select 0, %s6, %s4
  // Predicated region
  $region2: #{net_forward.14} parent=0 // pred_check
    _
  $region3: #{net_forward.14} parent=0 // pred_check_branch
    %9 = sbr.rel (0) target = $region5
  $region4: #{net_forward.14} parent=0 // pred_region
    _
  $region5: #{net_forward.14} parent=0 // pred_fallthru
    _
  // Predicated region
  $region6: #{net_forward.14} parent=0 // pred_check
    _
  $region7: #{net_forward.14} parent=0 // pred_check_branch
    %11 = sbr.rel (0) target = $region9
  $region8: #{net_forward.14} parent=0 // pred_region
    _
  $region9: #{net_forward.14} parent=0 // pred_fallthru
    _
  // Predicated region
  $region10: #{net_forward.14} parent=0 // pred_check
    _
  $region11: #{net_forward.14} parent=0 // pred_check_branch
    %13 = sbr.rel (0) target = $region13
  $region12: #{net_forward.14} parent=0 // pred_region
    _
  $region13: #{net_forward.14} parent=0 // pred_fallthru
    _
  %v14 = vld [vmem:[%s0] sm:$0xff]
  %v15 = vld [vmem:[%s0 + $0x8] sm:$0xff]
  %v16 = vld [vmem:[%s0 + $0x10] sm:$0xff]
  %v17 = vld [vmem:[%s0 + $0x18] sm:$0xff]
  %v18 = vld [vmem:[%s0 + $0x20] sm:$0xf]
  %v19 = vld [vmem:[%s0 + $0x24] sm:$0xff]
  %v20 = vld [vmem:[%s0 + $0x2c] sm:$0xff]
  %v21 = vld [vmem:[%s0 + $0x34] sm:$0xff]
  %v22 = vld [vmem:[%s0 + $0x3c] sm:$0xff]
  %v23 = vld [vmem:[%s0 + $0x44] sm:$0xf]
  %v24 = vld [vmem:[%s0 + $0x48] sm:$0xff]
  %v25 = vld [vmem:[%s0 + $0x50] sm:$0xff]
  %v26 = vld [vmem:[%s0 + $0x58] sm:$0xff]
  %v27 = vld [vmem:[%s0 + $0x60] sm:$0xff]
  %v28 = vld [vmem:[%s0 + $0x68] sm:$0xf]
  %v29 = vld [vmem:[%s0 + $0x6c] sm:$0xff]
  %v30 = vld [vmem:[%s0 + $0x74] sm:$0xff]
  %v31 = vld [vmem:[%s0 + $0x7c] sm:$0xff]
  %v32 = vld [vmem:[%s0 + $0x84] sm:$0xff]
  %v33 = vld [vmem:[%s0 + $0x8c] sm:$0xf]
  %v34 = vld [vmem:[%s0 + $0x90] sm:$0xff]
  %v35 = vld [vmem:[%s0 + $0x98] sm:$0xff]
  %v36 = vld [vmem:[%s0 + $0xa0] sm:$0xff]
  %v37 = vld [vmem:[%s0 + $0xa8] sm:$0xff]
  %v38 = vld [vmem:[%s0 + $0xb0] sm:$0xf]
  %v39 = vld [vmem:[%s0 + $0xb4] sm:$0xff]
  %v40 = vld [vmem:[%s0 + $0xbc] sm:$0xff]
  %v41 = vld [vmem:[%s0 + $0xc4] sm:$0xff]
  %v42 = vld [vmem:[%s0 + $0xcc] sm:$0xff]
  %v43 = vld [vmem:[%s0 + $0xd4] sm:$0xf]
  %v44 = vld [vmem:[%s0 + $0xd8] sm:$0xff]
  %v45 = vld [vmem:[%s0 + $0xe0] sm:$0xff]
  %v46 = vld [vmem:[%s0 + $0xe8] sm:$0xff]
  %v47 = vld [vmem:[%s0 + $0xf0] sm:$0xff]
  %v48 = vld [vmem:[%s0 + $0xf8] sm:$0xf]
  %v49 = vld [vmem:[%s0 + $0xfc] sm:$0xff]
  %v50 = vld [vmem:[%s0 + $0x104] sm:$0xff]
  %v51 = vld [vmem:[%s0 + $0x10c] sm:$0xff]
  %v52 = vld [vmem:[%s0 + $0x114] sm:$0xff]
  %v53 = vld [vmem:[%s0 + $0x11c] sm:$0xf]
  %v54 = vld [vmem:[%s0 + $0x120] sm:$0xff]
  %v55 = vld [vmem:[%s0 + $0x128] sm:$0xff]
  %v56 = vld [vmem:[%s0 + $0x130] sm:$0xff]
  %v57 = vld [vmem:[%s0 + $0x138] sm:$0xff]
  %v58 = vld [vmem:[%s0 + $0x140] sm:$0xf]
  %v59 = vld [vmem:[%s0 + $0x144] sm:$0xff]
  %v60 = vld [vmem:[%s0 + $0x14c] sm:$0xff]
  %v61 = vld [vmem:[%s0 + $0x154] sm:$0xff]
  %v62 = vld [vmem:[%s0 + $0x15c] sm:$0xff]
  %v63 = vld [vmem:[%s0 + $0x164] sm:$0xf]
  %v64 = vld [vmem:[%s0 + $0x168] sm:$0xff]
  %v65 = vld [vmem:[%s0 + $0x170] sm:$0xff]
  %v66 = vld [vmem:[%s0 + $0x178] sm:$0xff]
  %v67 = vld [vmem:[%s0 + $0x180] sm:$0xff]
  %v68 = vld [vmem:[%s0 + $0x188] sm:$0xf]
  %v69 = vld [vmem:[%s0 + $0x18c] sm:$0xff]
  %v70 = vld [vmem:[%s0 + $0x194] sm:$0xff]
  %v71 = vld [vmem:[%s0 + $0x19c] sm:$0xff]
  %v72 = vld [vmem:[%s0 + $0x1a4] sm:$0xff]
  %v73 = vld [vmem:[%s0 + $0x1ac] sm:$0xf]
  %v74 = vld [vmem:[%s0 + $0x1b0] sm:$0xff]
  %v75 = vld [vmem:[%s0 + $0x1b8] sm:$0xff]
  %v76 = vld [vmem:[%s0 + $0x1c0] sm:$0xff]
  %v77 = vld [vmem:[%s0 + $0x1c8] sm:$0xff]
  %v78 = vld [vmem:[%s0 + $0x1d0] sm:$0xf]
  %v79 = vld [vmem:[%s0 + $0x1d4] sm:$0xff]
  %v80 = vld [vmem:[%s0 + $0x1dc] sm:$0xff]
  %v81 = vld [vmem:[%s0 + $0x1e4] sm:$0xff]
  %v82 = vld [vmem:[%s0 + $0x1ec] sm:$0xff]
  %v83 = vld [vmem:[%s0 + $0x1f4] sm:$0xf]
  %v84 = vld [vmem:[%s0 + $0x1f8] sm:$0xff]
  %v85 = vld [vmem:[%s0 + $0x200] sm:$0xff]
  %v86 = vld [vmem:[%s0 + $0x208] sm:$0xff]
  %v87 = vld [vmem:[%s0 + $0x210] sm:$0xff]
  %v88 = vld [vmem:[%s0 + $0x218] sm:$0xf]
  %v89 = vld [vmem:[%s0 + $0x21c] sm:$0xff]
  %v90 = vld [vmem:[%s0 + $0x224] sm:$0xff]
  %v91 = vld [vmem:[%s0 + $0x22c] sm:$0xff]
  %v92 = vld [vmem:[%s0 + $0x234] sm:$0xff]
  %v93 = vld [vmem:[%s0 + $0x23c] sm:$0xf]
  %v94 = vld [vmem:[%s1] sm:$0xf]
  %v95 = vld [vmem:[%s1 + $0x4] sm:$0xf]
  %v96 = vld [vmem:[%s1 + $0x8] sm:$0xf]
  %v97 = vld [vmem:[%s1 + $0xc] sm:$0xf]
  %v98 = vld [vmem:[%s1 + $0x10] sm:$0xf]
  %v99 = vld [vmem:[%s1 + $0x14] sm:$0xf]
  %v100 = vld [vmem:[%s1 + $0x18] sm:$0xf]
  %v101 = vld [vmem:[%s1 + $0x1c] sm:$0xf]
  %v102 = vld [vmem:[%s1 + $0x20] sm:$0xf]
  %v103 = vld [vmem:[%s1 + $0x24] sm:$0xf]
  %v104 = vld [vmem:[%s1 + $0x28] sm:$0xf]
  %v105 = vld [vmem:[%s1 + $0x2c] sm:$0xf]
  %v106 = vld [vmem:[%s1 + $0x30] sm:$0xf]
  %v107 = vld [vmem:[%s1 + $0x34] sm:$0xf]
  %v108 = vld [vmem:[%s1 + $0x38] sm:$0xf]
  %v109 = vld [vmem:[%s1 + $0x3c] sm:$0xf]
  %v110 = vld [vmem:[%s1 + $0x40] sm:$0xf]
  %v111 = vld [vmem:[%s1 + $0x44] sm:$0xf]
  %v112 = vld [vmem:[%s1 + $0x48] sm:$0xf]
  %v113 = vld [vmem:[%s1 + $0x4c] sm:$0xf]
  %v114 = vld [vmem:[%s1 + $0x50] sm:$0xf]
  %v115 = vld [vmem:[%s1 + $0x54] sm:$0xf]
  %v116 = vld [vmem:[%s1 + $0x58] sm:$0xf]
  %v117 = vld [vmem:[%s1 + $0x5c] sm:$0xf]
  %v118 = vld [vmem:[%s1 + $0x60] sm:$0xf]
  %v119 = vld [vmem:[%s1 + $0x64] sm:$0xf]
  %v120 = vld [vmem:[%s1 + $0x68] sm:$0xf]
  %v121 = vld [vmem:[%s1 + $0x6c] sm:$0xf]
  %v122 = vld [vmem:[%s1 + $0x70] sm:$0xf]
  %v123 = vld [vmem:[%s1 + $0x74] sm:$0xf]
  %v124 = vld [vmem:[%s1 + $0x78] sm:$0xf]
  %v125 = vld [vmem:[%s1 + $0x7c] sm:$0xf]
  %v126 = vld [vmem:[%s1 + $0x80] sm:$0xf]
  %v127 = vld [vmem:[%s1 + $0x84] sm:$0xf]
  %v128 = vld [vmem:[%s1 + $0x88] sm:$0xf]
  %v129 = vld [vmem:[%s1 + $0x8c] sm:$0xf]
  %v130 = vld [vmem:[%s1 + $0x90] sm:$0xf]
  %v131 = vld [vmem:[%s1 + $0x94] sm:$0xf]
  %v132 = vld [vmem:[%s1 + $0x98] sm:$0xf]
  %v133 = vld [vmem:[%s1 + $0x9c] sm:$0xf]
  %v134 = vld [vmem:[%s1 + $0xa0] sm:$0xf]
  %v135 = vld [vmem:[%s1 + $0xa4] sm:$0xf]
  %v136 = vld [vmem:[%s1 + $0xa8] sm:$0xf]
  %v137 = vld [vmem:[%s1 + $0xac] sm:$0xf]
  %v138 = vld [vmem:[%s1 + $0xb0] sm:$0xf]
  %v139 = vld [vmem:[%s1 + $0xb4] sm:$0xf]
  %v140 = vld [vmem:[%s1 + $0xb8] sm:$0xf]
  %v141 = vld [vmem:[%s1 + $0xbc] sm:$0xf]
  %v142 = vld [vmem:[%s1 + $0xc0] sm:$0xf]
  %v143 = vld [vmem:[%s1 + $0xc4] sm:$0xf]
  %v144 = vld [vmem:[%s1 + $0xc8] sm:$0xf]
  %v145 = vld [vmem:[%s1 + $0xcc] sm:$0xf]
  %v146 = vld [vmem:[%s1 + $0xd0] sm:$0xf]
  %v147 = vld [vmem:[%s1 + $0xd4] sm:$0xf]
  %v148 = vld [vmem:[%s1 + $0xd8] sm:$0xf]
  %v149 = vld [vmem:[%s1 + $0xdc] sm:$0xf]
  %v150 = vld [vmem:[%s1 + $0xe0] sm:$0xf]
  %v151 = vld [vmem:[%s1 + $0xe4] sm:$0xf]
  %v152 = vld [vmem:[%s1 + $0xe8] sm:$0xf]
  %v153 = vld [vmem:[%s1 + $0xec] sm:$0xf]
  %v154 = vld [vmem:[%s1 + $0xf0] sm:$0xf]
  %v155 = vld [vmem:[%s1 + $0xf4] sm:$0xf]
  %v156 = vld [vmem:[%s1 + $0xf8] sm:$0xf]
  %v157 = vld [vmem:[%s1 + $0xfc] sm:$0xf]
  %v158 = vld [vmem:[%s1 + $0x100] sm:$0xf]
  %v159 = vld [vmem:[%s1 + $0x104] sm:$0xf]
  %v160 = vld [vmem:[%s1 + $0x108] sm:$0xf]
  %v161 = vld [vmem:[%s1 + $0x10c] sm:$0xf]
  %v162 = vld [vmem:[%s1 + $0x110] sm:$0xf]
  %v163 = vld [vmem:[%s1 + $0x114] sm:$0xf]
  %v164 = vld [vmem:[%s1 + $0x118] sm:$0xf]
  %v165 = vld [vmem:[%s1 + $0x11c] sm:$0xf]
  %v166 = vld [vmem:[%s1 + $0x120] sm:$0xf]
  %v167 = vld [vmem:[%s1 + $0x124] sm:$0xf]
  %v168 = vld [vmem:[%s1 + $0x128] sm:$0xf]
  %v169 = vld [vmem:[%s1 + $0x12c] sm:$0xf]
  %v170 = vld [vmem:[%s1 + $0x130] sm:$0xf]
  %v171 = vld [vmem:[%s1 + $0x134] sm:$0xf]
  %v172 = vld [vmem:[%s1 + $0x138] sm:$0xf]
  %v173 = vld [vmem:[%s1 + $0x13c] sm:$0xf]
  %v174 = vld [vmem:[%s1 + $0x140] sm:$0xf]
  %v175 = vld [vmem:[%s1 + $0x144] sm:$0xf]
  %v176 = vld [vmem:[%s1 + $0x148] sm:$0xf]
  %v177 = vld [vmem:[%s1 + $0x14c] sm:$0xf]
  %v178 = vld [vmem:[%s1 + $0x150] sm:$0xf]
  %v179 = vld [vmem:[%s1 + $0x154] sm:$0xf]
  %v180 = vld [vmem:[%s1 + $0x158] sm:$0xf]
  %v181 = vld [vmem:[%s1 + $0x15c] sm:$0xf]
  %v182 = vld [vmem:[%s1 + $0x160] sm:$0xf]
  %v183 = vld [vmem:[%s1 + $0x164] sm:$0xf]
  %v184 = vld [vmem:[%s1 + $0x168] sm:$0xf]
  %v185 = vld [vmem:[%s1 + $0x16c] sm:$0xf]
  %v186 = vld [vmem:[%s1 + $0x170] sm:$0xf]
  %v187 = vld [vmem:[%s1 + $0x174] sm:$0xf]
  %v188 = vld [vmem:[%s1 + $0x178] sm:$0xf]
  %v189 = vld [vmem:[%s1 + $0x17c] sm:$0xf]
  %v190 = vld [vmem:[%s1 + $0x180] sm:$0xf]
  %v191 = vld [vmem:[%s1 + $0x184] sm:$0xf]
  %v192 = vld [vmem:[%s1 + $0x188] sm:$0xf]
  %v193 = vld [vmem:[%s1 + $0x18c] sm:$0xf]
  %v194 = vld [vmem:[%s1 + $0x190] sm:$0xf]
  %v195 = vld [vmem:[%s1 + $0x194] sm:$0xf]
  %v196 = vld [vmem:[%s1 + $0x198] sm:$0xf]
  %v197 = vld [vmem:[%s1 + $0x19c] sm:$0xf]
  %v198 = vld [vmem:[%s1 + $0x1a0] sm:$0xf]
  %v199 = vld [vmem:[%s1 + $0x1a4] sm:$0xf]
  %v200 = vld [vmem:[%s1 + $0x1a8] sm:$0xf]
  %v201 = vld [vmem:[%s1 + $0x1ac] sm:$0xf]
  %v202 = vld [vmem:[%s1 + $0x1b0] sm:$0xf]
  %v203 = vld [vmem:[%s1 + $0x1b4] sm:$0xf]
  %v204 = vld [vmem:[%s1 + $0x1b8] sm:$0xf]
  %v205 = vld [vmem:[%s1 + $0x1bc] sm:$0xf]
  %v206 = vld [vmem:[%s1 + $0x1c0] sm:$0xf]
  %v207 = vld [vmem:[%s1 + $0x1c4] sm:$0xf]
  %v208 = vld [vmem:[%s1 + $0x1c8] sm:$0xf]
  %v209 = vld [vmem:[%s1 + $0x1cc] sm:$0xf]
  %v210 = vld [vmem:[%s1 + $0x1d0] sm:$0xf]
  %v211 = vld [vmem:[%s1 + $0x1d4] sm:$0xf]
  %v212 = vld [vmem:[%s1 + $0x1d8] sm:$0xf]
  %v213 = vld [vmem:[%s1 + $0x1dc] sm:$0xf]
  %v214 = vld [vmem:[%s1 + $0x1e0] sm:$0xf]
  %v215 = vld [vmem:[%s1 + $0x1e4] sm:$0xf]
  %v216 = vld [vmem:[%s1 + $0x1e8] sm:$0xf]
  %v217 = vld [vmem:[%s1 + $0x1ec] sm:$0xf]
  %v218 = vld [vmem:[%s1 + $0x1f0] sm:$0xf]
  %v219 = vld [vmem:[%s1 + $0x1f4] sm:$0xf]
  %v220 = vld [vmem:[%s1 + $0x1f8] sm:$0xf]
  %v221 = vld [vmem:[%s1 + $0x1fc] sm:$0xf]
  %v222 = vld [vmem:[%s1 + $0x200] sm:$0xf]
  %v223 = vld [vmem:[%s1 + $0x204] sm:$0xf]
  %v224 = vld [vmem:[%s1 + $0x208] sm:$0xf]
  %v225 = vld [vmem:[%s1 + $0x20c] sm:$0xf]
  %v226 = vld [vmem:[%s1 + $0x210] sm:$0xf]
  %v227 = vld [vmem:[%s1 + $0x214] sm:$0xf]
  %v228 = vld [vmem:[%s1 + $0x218] sm:$0xf]
  %v229 = vld [vmem:[%s1 + $0x21c] sm:$0xf]
  %v230 = vld [vmem:[%s1 + $0x220] sm:$0xf]
  %v231 = vld [vmem:[%s1 + $0x224] sm:$0xf]
  %v232 = vld [vmem:[%s1 + $0x228] sm:$0xf]
  %v233 = vld [vmem:[%s1 + $0x22c] sm:$0xf]
  %v234 = vld [vmem:[%s1 + $0x230] sm:$0xf]
  %v235 = vld [vmem:[%s1 + $0x234] sm:$0xf]
  %v236 = vld [vmem:[%s1 + $0x238] sm:$0xf]
  %v237 = vld [vmem:[%s1 + $0x23c] sm:$0xf]
  %v238 = vld [vmem:[%s2] sm:$0x1]
  %v239 = vperm.slane %v238, 0
  %v320 = vunpack.c.l.b16 %v14
  %v321 = vunpack.c.h.b16 %v14
  %v322 = vunpack.c.l.b16 %v15
  %v323 = vunpack.c.h.b16 %v15
  %v324 = vunpack.c.l.b16 %v16
  %v325 = vunpack.c.h.b16 %v16
  %v326 = vunpack.c.l.b16 %v17
  %v327 = vunpack.c.h.b16 %v17
  %v328 = vunpack.c.l.b16 %v18
  %v329 = vunpack.c.l.b16 %v19
  %v330 = vunpack.c.h.b16 %v19
  %v331 = vunpack.c.l.b16 %v20
  %v332 = vunpack.c.h.b16 %v20
  %v333 = vunpack.c.l.b16 %v21
  %v334 = vunpack.c.h.b16 %v21
  %v335 = vunpack.c.l.b16 %v22
  %v336 = vunpack.c.h.b16 %v22
  %v337 = vunpack.c.l.b16 %v23
  %v338 = vunpack.c.l.b16 %v24
  %v339 = vunpack.c.h.b16 %v24
  %v340 = vunpack.c.l.b16 %v25
  %v341 = vunpack.c.h.b16 %v25
  %v342 = vunpack.c.l.b16 %v26
  %v343 = vunpack.c.h.b16 %v26
  %v344 = vunpack.c.l.b16 %v27
  %v345 = vunpack.c.h.b16 %v27
  %v346 = vunpack.c.l.b16 %v28
  %v347 = vunpack.c.l.b16 %v29
  %v348 = vunpack.c.h.b16 %v29
  %v349 = vunpack.c.l.b16 %v30
  %v350 = vunpack.c.h.b16 %v30
  %v351 = vunpack.c.l.b16 %v31
  %v352 = vunpack.c.h.b16 %v31
  %v353 = vunpack.c.l.b16 %v32
  %v354 = vunpack.c.h.b16 %v32
  %v355 = vunpack.c.l.b16 %v33
  %v356 = vunpack.c.l.b16 %v34
  %v357 = vunpack.c.h.b16 %v34
  %v358 = vunpack.c.l.b16 %v35
  %v359 = vunpack.c.h.b16 %v35
  %v360 = vunpack.c.l.b16 %v36
  %v361 = vunpack.c.h.b16 %v36
  %v362 = vunpack.c.l.b16 %v37
  %v363 = vunpack.c.h.b16 %v37
  %v364 = vunpack.c.l.b16 %v38
  %v365 = vunpack.c.l.b16 %v39
  %v366 = vunpack.c.h.b16 %v39
  %v367 = vunpack.c.l.b16 %v40
  %v368 = vunpack.c.h.b16 %v40
  %v369 = vunpack.c.l.b16 %v41
  %v370 = vunpack.c.h.b16 %v41
  %v371 = vunpack.c.l.b16 %v42
  %v372 = vunpack.c.h.b16 %v42
  %v373 = vunpack.c.l.b16 %v43
  %v374 = vunpack.c.l.b16 %v44
  %v375 = vunpack.c.h.b16 %v44
  %v376 = vunpack.c.l.b16 %v45
  %v377 = vunpack.c.h.b16 %v45
  %v378 = vunpack.c.l.b16 %v46
  %v379 = vunpack.c.h.b16 %v46
  %v380 = vunpack.c.l.b16 %v47
  %v381 = vunpack.c.h.b16 %v47
  %v382 = vunpack.c.l.b16 %v48
  %v383 = vunpack.c.l.b16 %v49
  %v384 = vunpack.c.h.b16 %v49
  %v385 = vunpack.c.l.b16 %v50
  %v386 = vunpack.c.h.b16 %v50
  %v387 = vunpack.c.l.b16 %v51
  %v388 = vunpack.c.h.b16 %v51
  %v389 = vunpack.c.l.b16 %v52
  %v390 = vunpack.c.h.b16 %v52
  %v391 = vunpack.c.l.b16 %v53
  %v392 = vunpack.c.l.b16 %v54
  %v393 = vunpack.c.h.b16 %v54
  %v394 = vunpack.c.l.b16 %v55
  %v395 = vunpack.c.h.b16 %v55
  %v396 = vunpack.c.l.b16 %v56
  %v397 = vunpack.c.h.b16 %v56
  %v398 = vunpack.c.l.b16 %v57
  %v399 = vunpack.c.h.b16 %v57
  %v400 = vunpack.c.l.b16 %v58
  %v401 = vunpack.c.l.b16 %v59
  %v402 = vunpack.c.h.b16 %v59
  %v403 = vunpack.c.l.b16 %v60
  %v404 = vunpack.c.h.b16 %v60
  %v405 = vunpack.c.l.b16 %v61
  %v406 = vunpack.c.h.b16 %v61
  %v407 = vunpack.c.l.b16 %v62
  %v408 = vunpack.c.h.b16 %v62
  %v409 = vunpack.c.l.b16 %v63
  %v410 = vunpack.c.l.b16 %v64
  %v411 = vunpack.c.h.b16 %v64
  %v412 = vunpack.c.l.b16 %v65
  %v413 = vunpack.c.h.b16 %v65
  %v414 = vunpack.c.l.b16 %v66
  %v415 = vunpack.c.h.b16 %v66
  %v416 = vunpack.c.l.b16 %v67
  %v417 = vunpack.c.h.b16 %v67
  %v418 = vunpack.c.l.b16 %v68
  %v419 = vunpack.c.l.b16 %v69
  %v420 = vunpack.c.h.b16 %v69
  %v421 = vunpack.c.l.b16 %v70
  %v422 = vunpack.c.h.b16 %v70
  %v423 = vunpack.c.l.b16 %v71
  %v424 = vunpack.c.h.b16 %v71
  %v425 = vunpack.c.l.b16 %v72
  %v426 = vunpack.c.h.b16 %v72
  %v427 = vunpack.c.l.b16 %v73
  %v428 = vunpack.c.l.b16 %v74
  %v429 = vunpack.c.h.b16 %v74
  %v430 = vunpack.c.l.b16 %v75
  %v431 = vunpack.c.h.b16 %v75
  %v432 = vunpack.c.l.b16 %v76
  %v433 = vunpack.c.h.b16 %v76
  %v434 = vunpack.c.l.b16 %v77
  %v435 = vunpack.c.h.b16 %v77
  %v436 = vunpack.c.l.b16 %v78
  %v437 = vunpack.c.l.b16 %v79
  %v438 = vunpack.c.h.b16 %v79
  %v439 = vunpack.c.l.b16 %v80
  %v440 = vunpack.c.h.b16 %v80
  %v441 = vunpack.c.l.b16 %v81
  %v442 = vunpack.c.h.b16 %v81
  %v443 = vunpack.c.l.b16 %v82
  %v444 = vunpack.c.h.b16 %v82
  %v445 = vunpack.c.l.b16 %v83
  %v446 = vunpack.c.l.b16 %v84
  %v447 = vunpack.c.h.b16 %v84
  %v448 = vunpack.c.l.b16 %v85
  %v449 = vunpack.c.h.b16 %v85
  %v450 = vunpack.c.l.b16 %v86
  %v451 = vunpack.c.h.b16 %v86
  %v452 = vunpack.c.l.b16 %v87
  %v453 = vunpack.c.h.b16 %v87
  %v454 = vunpack.c.l.b16 %v88
  %v455 = vunpack.c.l.b16 %v89
  %v456 = vunpack.c.h.b16 %v89
  %v457 = vunpack.c.l.b16 %v90
  %v458 = vunpack.c.h.b16 %v90
  %v459 = vunpack.c.l.b16 %v91
  %v460 = vunpack.c.h.b16 %v91
  %v461 = vunpack.c.l.b16 %v92
  %v462 = vunpack.c.h.b16 %v92
  %v463 = vunpack.c.l.b16 %v93
  %v464 = vpack.c.b16 %v329, %v320
  %v465 = vpack.c.b16 %v330, %v321
  %v466 = vpack.c.b16 %v331, %v322
  %v467 = vpack.c.b16 %v332, %v323
  %v468 = vpack.c.b16 %v333, %v324
  %v469 = vpack.c.b16 %v334, %v325
  %v470 = vpack.c.b16 %v335, %v326
  %v471 = vpack.c.b16 %v336, %v327
  %v472 = vpack.c.b16 %v337, %v328
  %v473 = vpack.c.b16 %v347, %v338
  %v474 = vpack.c.b16 %v348, %v339
  %v475 = vpack.c.b16 %v349, %v340
  %v476 = vpack.c.b16 %v350, %v341
  %v477 = vpack.c.b16 %v351, %v342
  %v478 = vpack.c.b16 %v352, %v343
  %v479 = vpack.c.b16 %v353, %v344
  %v480 = vpack.c.b16 %v354, %v345
  %v481 = vpack.c.b16 %v355, %v346
  %v482 = vpack.c.b16 %v365, %v356
  %v483 = vpack.c.b16 %v366, %v357
  %v484 = vpack.c.b16 %v367, %v358
  %v485 = vpack.c.b16 %v368, %v359
  %v486 = vpack.c.b16 %v369, %v360
  %v487 = vpack.c.b16 %v370, %v361
  %v488 = vpack.c.b16 %v371, %v362
  %v489 = vpack.c.b16 %v372, %v363
  %v490 = vpack.c.b16 %v373, %v364
  %v491 = vpack.c.b16 %v383, %v374
  %v492 = vpack.c.b16 %v384, %v375
  %v493 = vpack.c.b16 %v385, %v376
  %v494 = vpack.c.b16 %v386, %v377
  %v495 = vpack.c.b16 %v387, %v378
  %v496 = vpack.c.b16 %v388, %v379
  %v497 = vpack.c.b16 %v389, %v380
  %v498 = vpack.c.b16 %v390, %v381
  %v499 = vpack.c.b16 %v391, %v382
  %v500 = vpack.c.b16 %v401, %v392
  %v501 = vpack.c.b16 %v402, %v393
  %v502 = vpack.c.b16 %v403, %v394
  %v503 = vpack.c.b16 %v404, %v395
  %v504 = vpack.c.b16 %v405, %v396
  %v505 = vpack.c.b16 %v406, %v397
  %v506 = vpack.c.b16 %v407, %v398
  %v507 = vpack.c.b16 %v408, %v399
  %v508 = vpack.c.b16 %v409, %v400
  %v509 = vpack.c.b16 %v419, %v410
  %v510 = vpack.c.b16 %v420, %v411
  %v511 = vpack.c.b16 %v421, %v412
  %v512 = vpack.c.b16 %v422, %v413
  %v513 = vpack.c.b16 %v423, %v414
  %v514 = vpack.c.b16 %v424, %v415
  %v515 = vpack.c.b16 %v425, %v416
  %v516 = vpack.c.b16 %v426, %v417
  %v517 = vpack.c.b16 %v427, %v418
  %v518 = vpack.c.b16 %v437, %v428
  %v519 = vpack.c.b16 %v438, %v429
  %v520 = vpack.c.b16 %v439, %v430
  %v521 = vpack.c.b16 %v440, %v431
  %v522 = vpack.c.b16 %v441, %v432
  %v523 = vpack.c.b16 %v442, %v433
  %v524 = vpack.c.b16 %v443, %v434
  %v525 = vpack.c.b16 %v444, %v435
  %v526 = vpack.c.b16 %v445, %v436
  %v527 = vpack.c.b16 %v455, %v446
  %v528 = vpack.c.b16 %v456, %v447
  %v529 = vpack.c.b16 %v457, %v448
  %v530 = vpack.c.b16 %v458, %v449
  %v531 = vpack.c.b16 %v459, %v450
  %v532 = vpack.c.b16 %v460, %v451
  %v533 = vpack.c.b16 %v461, %v452
  %v534 = vpack.c.b16 %v462, %v453
  %v535 = vpack.c.b16 %v463, %v454
  %v752 = vunpack.c.l.b16 %v94
  %v753 = vunpack.c.l.b16 %v95
  %v754 = vunpack.c.l.b16 %v96
  %v755 = vunpack.c.l.b16 %v97
  %v756 = vunpack.c.l.b16 %v98
  %v757 = vunpack.c.l.b16 %v99
  %v758 = vunpack.c.l.b16 %v100
  %v759 = vunpack.c.l.b16 %v101
  %v760 = vunpack.c.l.b16 %v102
  %v761 = vunpack.c.l.b16 %v103
  %v762 = vunpack.c.l.b16 %v104
  %v763 = vunpack.c.l.b16 %v105
  %v764 = vunpack.c.l.b16 %v106
  %v765 = vunpack.c.l.b16 %v107
  %v766 = vunpack.c.l.b16 %v108
  %v767 = vunpack.c.l.b16 %v109
  %v768 = vunpack.c.l.b16 %v110
  %v769 = vunpack.c.l.b16 %v111
  %v770 = vunpack.c.l.b16 %v112
  %v771 = vunpack.c.l.b16 %v113
  %v772 = vunpack.c.l.b16 %v114
  %v773 = vunpack.c.l.b16 %v115
  %v774 = vunpack.c.l.b16 %v116
  %v775 = vunpack.c.l.b16 %v117
  %v776 = vunpack.c.l.b16 %v118
  %v777 = vunpack.c.l.b16 %v119
  %v778 = vunpack.c.l.b16 %v120
  %v779 = vunpack.c.l.b16 %v121
  %v780 = vunpack.c.l.b16 %v122
  %v781 = vunpack.c.l.b16 %v123
  %v782 = vunpack.c.l.b16 %v124
  %v783 = vunpack.c.l.b16 %v125
  %v784 = vunpack.c.l.b16 %v126
  %v785 = vunpack.c.l.b16 %v127
  %v786 = vunpack.c.l.b16 %v128
  %v787 = vunpack.c.l.b16 %v129
  %v788 = vunpack.c.l.b16 %v130
  %v789 = vunpack.c.l.b16 %v131
  %v790 = vunpack.c.l.b16 %v132
  %v791 = vunpack.c.l.b16 %v133
  %v792 = vunpack.c.l.b16 %v134
  %v793 = vunpack.c.l.b16 %v135
  %v794 = vunpack.c.l.b16 %v136
  %v795 = vunpack.c.l.b16 %v137
  %v796 = vunpack.c.l.b16 %v138
  %v797 = vunpack.c.l.b16 %v139
  %v798 = vunpack.c.l.b16 %v140
  %v799 = vunpack.c.l.b16 %v141
  %v800 = vunpack.c.l.b16 %v142
  %v801 = vunpack.c.l.b16 %v143
  %v802 = vunpack.c.l.b16 %v144
  %v803 = vunpack.c.l.b16 %v145
  %v804 = vunpack.c.l.b16 %v146
  %v805 = vunpack.c.l.b16 %v147
  %v806 = vunpack.c.l.b16 %v148
  %v807 = vunpack.c.l.b16 %v149
  %v808 = vunpack.c.l.b16 %v150
  %v809 = vunpack.c.l.b16 %v151
  %v810 = vunpack.c.l.b16 %v152
  %v811 = vunpack.c.l.b16 %v153
  %v812 = vunpack.c.l.b16 %v154
  %v813 = vunpack.c.l.b16 %v155
  %v814 = vunpack.c.l.b16 %v156
  %v815 = vunpack.c.l.b16 %v157
  %v816 = vunpack.c.l.b16 %v158
  %v817 = vunpack.c.l.b16 %v159
  %v818 = vunpack.c.l.b16 %v160
  %v819 = vunpack.c.l.b16 %v161
  %v820 = vunpack.c.l.b16 %v162
  %v821 = vunpack.c.l.b16 %v163
  %v822 = vunpack.c.l.b16 %v164
  %v823 = vunpack.c.l.b16 %v165
  %v824 = vunpack.c.l.b16 %v166
  %v825 = vunpack.c.l.b16 %v167
  %v826 = vunpack.c.l.b16 %v168
  %v827 = vunpack.c.l.b16 %v169
  %v828 = vunpack.c.l.b16 %v170
  %v829 = vunpack.c.l.b16 %v171
  %v830 = vunpack.c.l.b16 %v172
  %v831 = vunpack.c.l.b16 %v173
  %v832 = vunpack.c.l.b16 %v174
  %v833 = vunpack.c.l.b16 %v175
  %v834 = vunpack.c.l.b16 %v176
  %v835 = vunpack.c.l.b16 %v177
  %v836 = vunpack.c.l.b16 %v178
  %v837 = vunpack.c.l.b16 %v179
  %v838 = vunpack.c.l.b16 %v180
  %v839 = vunpack.c.l.b16 %v181
  %v840 = vunpack.c.l.b16 %v182
  %v841 = vunpack.c.l.b16 %v183
  %v842 = vunpack.c.l.b16 %v184
  %v843 = vunpack.c.l.b16 %v185
  %v844 = vunpack.c.l.b16 %v186
  %v845 = vunpack.c.l.b16 %v187
  %v846 = vunpack.c.l.b16 %v188
  %v847 = vunpack.c.l.b16 %v189
  %v848 = vunpack.c.l.b16 %v190
  %v849 = vunpack.c.l.b16 %v191
  %v850 = vunpack.c.l.b16 %v192
  %v851 = vunpack.c.l.b16 %v193
  %v852 = vunpack.c.l.b16 %v194
  %v853 = vunpack.c.l.b16 %v195
  %v854 = vunpack.c.l.b16 %v196
  %v855 = vunpack.c.l.b16 %v197
  %v856 = vunpack.c.l.b16 %v198
  %v857 = vunpack.c.l.b16 %v199
  %v858 = vunpack.c.l.b16 %v200
  %v859 = vunpack.c.l.b16 %v201
  %v860 = vunpack.c.l.b16 %v202
  %v861 = vunpack.c.l.b16 %v203
  %v862 = vunpack.c.l.b16 %v204
  %v863 = vunpack.c.l.b16 %v205
  %v864 = vunpack.c.l.b16 %v206
  %v865 = vunpack.c.l.b16 %v207
  %v866 = vunpack.c.l.b16 %v208
  %v867 = vunpack.c.l.b16 %v209
  %v868 = vunpack.c.l.b16 %v210
  %v869 = vunpack.c.l.b16 %v211
  %v870 = vunpack.c.l.b16 %v212
  %v871 = vunpack.c.l.b16 %v213
  %v872 = vunpack.c.l.b16 %v214
  %v873 = vunpack.c.l.b16 %v215
  %v874 = vunpack.c.l.b16 %v216
  %v875 = vunpack.c.l.b16 %v217
  %v876 = vunpack.c.l.b16 %v218
  %v877 = vunpack.c.l.b16 %v219
  %v878 = vunpack.c.l.b16 %v220
  %v879 = vunpack.c.l.b16 %v221
  %v880 = vunpack.c.l.b16 %v222
  %v881 = vunpack.c.l.b16 %v223
  %v882 = vunpack.c.l.b16 %v224
  %v883 = vunpack.c.l.b16 %v225
  %v884 = vunpack.c.l.b16 %v226
  %v885 = vunpack.c.l.b16 %v227
  %v886 = vunpack.c.l.b16 %v228
  %v887 = vunpack.c.l.b16 %v229
  %v888 = vunpack.c.l.b16 %v230
  %v889 = vunpack.c.l.b16 %v231
  %v890 = vunpack.c.l.b16 %v232
  %v891 = vunpack.c.l.b16 %v233
  %v892 = vunpack.c.l.b16 %v234
  %v893 = vunpack.c.l.b16 %v235
  %v894 = vunpack.c.l.b16 %v236
  %v895 = vunpack.c.l.b16 %v237
  %v896 = vpack.c.b16 %v753, %v752
  %v897 = vpack.c.b16 %v755, %v754
  %v898 = vpack.c.b16 %v757, %v756
  %v899 = vpack.c.b16 %v759, %v758
  %v900 = vpack.c.b16 %v761, %v760
  %v901 = vpack.c.b16 %v763, %v762
  %v902 = vpack.c.b16 %v765, %v764
  %v903 = vpack.c.b16 %v767, %v766
  %v904 = vpack.c.b16 %v769, %v768
  %v905 = vpack.c.b16 %v771, %v770
  %v906 = vpack.c.b16 %v773, %v772
  %v907 = vpack.c.b16 %v775, %v774
  %v908 = vpack.c.b16 %v777, %v776
  %v909 = vpack.c.b16 %v779, %v778
  %v910 = vpack.c.b16 %v781, %v780
  %v911 = vpack.c.b16 %v783, %v782
  %v912 = vpack.c.b16 %v785, %v784
  %v913 = vpack.c.b16 %v787, %v786
  %v914 = vpack.c.b16 %v789, %v788
  %v915 = vpack.c.b16 %v791, %v790
  %v916 = vpack.c.b16 %v793, %v792
  %v917 = vpack.c.b16 %v795, %v794
  %v918 = vpack.c.b16 %v797, %v796
  %v919 = vpack.c.b16 %v799, %v798
  %v920 = vpack.c.b16 %v801, %v800
  %v921 = vpack.c.b16 %v803, %v802
  %v922 = vpack.c.b16 %v805, %v804
  %v923 = vpack.c.b16 %v807, %v806
  %v924 = vpack.c.b16 %v809, %v808
  %v925 = vpack.c.b16 %v811, %v810
  %v926 = vpack.c.b16 %v813, %v812
  %v927 = vpack.c.b16 %v815, %v814
  %v928 = vpack.c.b16 %v817, %v816
  %v929 = vpack.c.b16 %v819, %v818
  %v930 = vpack.c.b16 %v821, %v820
  %v931 = vpack.c.b16 %v823, %v822
  %v932 = vpack.c.b16 %v825, %v824
  %v933 = vpack.c.b16 %v827, %v826
  %v934 = vpack.c.b16 %v829, %v828
  %v935 = vpack.c.b16 %v831, %v830
  %v936 = vpack.c.b16 %v833, %v832
  %v937 = vpack.c.b16 %v835, %v834
  %v938 = vpack.c.b16 %v837, %v836
  %v939 = vpack.c.b16 %v839, %v838
  %v940 = vpack.c.b16 %v841, %v840
  %v941 = vpack.c.b16 %v843, %v842
  %v942 = vpack.c.b16 %v845, %v844
  %v943 = vpack.c.b16 %v847, %v846
  %v944 = vpack.c.b16 %v849, %v848
  %v945 = vpack.c.b16 %v851, %v850
  %v946 = vpack.c.b16 %v853, %v852
  %v947 = vpack.c.b16 %v855, %v854
  %v948 = vpack.c.b16 %v857, %v856
  %v949 = vpack.c.b16 %v859, %v858
  %v950 = vpack.c.b16 %v861, %v860
  %v951 = vpack.c.b16 %v863, %v862
  %v952 = vpack.c.b16 %v865, %v864
  %v953 = vpack.c.b16 %v867, %v866
  %v954 = vpack.c.b16 %v869, %v868
  %v955 = vpack.c.b16 %v871, %v870
  %v956 = vpack.c.b16 %v873, %v872
  %v957 = vpack.c.b16 %v875, %v874
  %v958 = vpack.c.b16 %v877, %v876
  %v959 = vpack.c.b16 %v879, %v878
  %v960 = vpack.c.b16 %v881, %v880
  %v961 = vpack.c.b16 %v883, %v882
  %v962 = vpack.c.b16 %v885, %v884
  %v963 = vpack.c.b16 %v887, %v886
  %v964 = vpack.c.b16 %v889, %v888
  %v965 = vpack.c.b16 %v891, %v890
  %v966 = vpack.c.b16 %v893, %v892
  %v967 = vpack.c.b16 %v895, %v894
  %1040 = vmatpush.bf16.msra.mxu0 %v903
  %1041 = vmatpush.bf16.msra.mxu0 %v902
  %1042 = vmatpush.bf16.msra.mxu0 %v901
  %1043 = vmatpush.bf16.msra.mxu0 %v900
  %1044 = vmatpush.bf16.msra.mxu0 %v899
  %1045 = vmatpush.bf16.msra.mxu0 %v898
  %1046 = vmatpush.bf16.msra.mxu0 %v897
  %1047 = vmatpush.bf16.msra.mxu0 %v896
  %1048 = vmatmul.bf16.gmra.mxu0 %v464
  %v1049 = vpop.f32.mrf.mxu0
  %v1050 = vadd.f32 %v239, %v1049
  %v1051 = vpop.f32.mrf.mxu0
  %v1052 = vadd.f32 %v239, %v1051
  %1053 = vmatmul.bf16.gmra.mxu0 %v473
  %v1054 = vpop.f32.mrf.mxu0
  %v1055 = vadd.f32 %v239, %v1054
  %v1056 = vpop.f32.mrf.mxu0
  %v1057 = vadd.f32 %v239, %v1056
  %1058 = vmatmul.bf16.gmra.mxu0 %v482
  %v1059 = vpop.f32.mrf.mxu0
  %v1060 = vadd.f32 %v239, %v1059
  %v1061 = vpop.f32.mrf.mxu0
  %v1062 = vadd.f32 %v239, %v1061
  %1063 = vmatmul.bf16.gmra.mxu0 %v491
  %v1064 = vpop.f32.mrf.mxu0
  %v1065 = vadd.f32 %v239, %v1064
  %v1066 = vpop.f32.mrf.mxu0
  %v1067 = vadd.f32 %v239, %v1066
  %1068 = vmatmul.bf16.gmra.mxu0 %v500
  %v1069 = vpop.f32.mrf.mxu0
  %v1070 = vadd.f32 %v239, %v1069
  %v1071 = vpop.f32.mrf.mxu0
  %v1072 = vadd.f32 %v239, %v1071
  %1073 = vmatmul.bf16.gmra.mxu0 %v509
  %v1074 = vpop.f32.mrf.mxu0
  %v1075 = vadd.f32 %v239, %v1074
  %v1076 = vpop.f32.mrf.mxu0
  %v1077 = vadd.f32 %v239, %v1076
  %1078 = vmatmul.bf16.gmra.mxu0 %v518
  %v1079 = vpop.f32.mrf.mxu0
  %v1080 = vadd.f32 %v239, %v1079
  %v1081 = vpop.f32.mrf.mxu0
  %v1082 = vadd.f32 %v239, %v1081
  %1083 = vmatmul.bf16.gmra.mxu0 %v527
  %v1084 = vpop.f32.mrf.mxu0
  %v1085 = vadd.f32 %v239, %v1084
  %v1086 = vpop.f32.mrf.mxu0
  %v1087 = vadd.f32 %v239, %v1086
  %1088 = vdwg.mxu0
  %1089 = vmatpush.bf16.msra.mxu0 %v911
  %1090 = vmatpush.bf16.msra.mxu0 %v910
  %1091 = vmatpush.bf16.msra.mxu0 %v909
  %1092 = vmatpush.bf16.msra.mxu0 %v908
  %1093 = vmatpush.bf16.msra.mxu0 %v907
  %1094 = vmatpush.bf16.msra.mxu0 %v906
  %1095 = vmatpush.bf16.msra.mxu0 %v905
  %1096 = vmatpush.bf16.msra.mxu0 %v904
  %1097 = vmatmul.bf16.gmra.mxu0 %v465
  %v1098 = vpop.f32.mrf.mxu0
  %v1099 = vadd.f32 %v1050, %v1098
  %v1100 = vpop.f32.mrf.mxu0
  %v1101 = vadd.f32 %v1052, %v1100
  %1102 = vmatmul.bf16.gmra.mxu0 %v474
  %v1103 = vpop.f32.mrf.mxu0
  %v1104 = vadd.f32 %v1055, %v1103
  %v1105 = vpop.f32.mrf.mxu0
  %v1106 = vadd.f32 %v1057, %v1105
  %1107 = vmatmul.bf16.gmra.mxu0 %v483
  %v1108 = vpop.f32.mrf.mxu0
  %v1109 = vadd.f32 %v1060, %v1108
  %v1110 = vpop.f32.mrf.mxu0
  %v1111 = vadd.f32 %v1062, %v1110
  %1112 = vmatmul.bf16.gmra.mxu0 %v492
  %v1113 = vpop.f32.mrf.mxu0
  %v1114 = vadd.f32 %v1065, %v1113
  %v1115 = vpop.f32.mrf.mxu0
  %v1116 = vadd.f32 %v1067, %v1115
  %1117 = vmatmul.bf16.gmra.mxu0 %v501
  %v1118 = vpop.f32.mrf.mxu0
  %v1119 = vadd.f32 %v1070, %v1118
  %v1120 = vpop.f32.mrf.mxu0
  %v1121 = vadd.f32 %v1072, %v1120
  %1122 = vmatmul.bf16.gmra.mxu0 %v510
  %v1123 = vpop.f32.mrf.mxu0
  %v1124 = vadd.f32 %v1075, %v1123
  %v1125 = vpop.f32.mrf.mxu0
  %v1126 = vadd.f32 %v1077, %v1125
  %1127 = vmatmul.bf16.gmra.mxu0 %v519
  %v1128 = vpop.f32.mrf.mxu0
  %v1129 = vadd.f32 %v1080, %v1128
  %v1130 = vpop.f32.mrf.mxu0
  %v1131 = vadd.f32 %v1082, %v1130
  %1132 = vmatmul.bf16.gmra.mxu0 %v528
  %v1133 = vpop.f32.mrf.mxu0
  %v1134 = vadd.f32 %v1085, %v1133
  %v1135 = vpop.f32.mrf.mxu0
  %v1136 = vadd.f32 %v1087, %v1135
  %1137 = vdwg.mxu0
  %1138 = vmatpush.bf16.msra.mxu0 %v919
  %1139 = vmatpush.bf16.msra.mxu0 %v918
  %1140 = vmatpush.bf16.msra.mxu0 %v917
  %1141 = vmatpush.bf16.msra.mxu0 %v916
  %1142 = vmatpush.bf16.msra.mxu0 %v915
  %1143 = vmatpush.bf16.msra.mxu0 %v914
  %1144 = vmatpush.bf16.msra.mxu0 %v913
  %1145 = vmatpush.bf16.msra.mxu0 %v912
  %1146 = vmatmul.bf16.gmra.mxu0 %v466
  %v1147 = vpop.f32.mrf.mxu0
  %v1148 = vadd.f32 %v1099, %v1147
  %v1149 = vpop.f32.mrf.mxu0
  %v1150 = vadd.f32 %v1101, %v1149
  %1151 = vmatmul.bf16.gmra.mxu0 %v475
  %v1152 = vpop.f32.mrf.mxu0
  %v1153 = vadd.f32 %v1104, %v1152
  %v1154 = vpop.f32.mrf.mxu0
  %v1155 = vadd.f32 %v1106, %v1154
  %1156 = vmatmul.bf16.gmra.mxu0 %v484
  %v1157 = vpop.f32.mrf.mxu0
  %v1158 = vadd.f32 %v1109, %v1157
  %v1159 = vpop.f32.mrf.mxu0
  %v1160 = vadd.f32 %v1111, %v1159
  %1161 = vmatmul.bf16.gmra.mxu0 %v493
  %v1162 = vpop.f32.mrf.mxu0
  %v1163 = vadd.f32 %v1114, %v1162
  %v1164 = vpop.f32.mrf.mxu0
  %v1165 = vadd.f32 %v1116, %v1164
  %1166 = vmatmul.bf16.gmra.mxu0 %v502
  %v1167 = vpop.f32.mrf.mxu0
  %v1168 = vadd.f32 %v1119, %v1167
  %v1169 = vpop.f32.mrf.mxu0
  %v1170 = vadd.f32 %v1121, %v1169
  %1171 = vmatmul.bf16.gmra.mxu0 %v511
  %v1172 = vpop.f32.mrf.mxu0
  %v1173 = vadd.f32 %v1124, %v1172
  %v1174 = vpop.f32.mrf.mxu0
  %v1175 = vadd.f32 %v1126, %v1174
  %1176 = vmatmul.bf16.gmra.mxu0 %v520
  %v1177 = vpop.f32.mrf.mxu0
  %v1178 = vadd.f32 %v1129, %v1177
  %v1179 = vpop.f32.mrf.mxu0
  %v1180 = vadd.f32 %v1131, %v1179
  %1181 = vmatmul.bf16.gmra.mxu0 %v529
  %v1182 = vpop.f32.mrf.mxu0
  %v1183 = vadd.f32 %v1134, %v1182
  %v1184 = vpop.f32.mrf.mxu0
  %v1185 = vadd.f32 %v1136, %v1184
  %1186 = vdwg.mxu0
  %1187 = vmatpush.bf16.msra.mxu0 %v927
  %1188 = vmatpush.bf16.msra.mxu0 %v926
  %1189 = vmatpush.bf16.msra.mxu0 %v925
  %1190 = vmatpush.bf16.msra.mxu0 %v924
  %1191 = vmatpush.bf16.msra.mxu0 %v923
  %1192 = vmatpush.bf16.msra.mxu0 %v922
  %1193 = vmatpush.bf16.msra.mxu0 %v921
  %1194 = vmatpush.bf16.msra.mxu0 %v920
  %1195 = vmatmul.bf16.gmra.mxu0 %v467
  %v1196 = vpop.f32.mrf.mxu0
  %v1197 = vadd.f32 %v1148, %v1196
  %v1198 = vpop.f32.mrf.mxu0
  %v1199 = vadd.f32 %v1150, %v1198
  %1200 = vmatmul.bf16.gmra.mxu0 %v476
  %v1201 = vpop.f32.mrf.mxu0
  %v1202 = vadd.f32 %v1153, %v1201
  %v1203 = vpop.f32.mrf.mxu0
  %v1204 = vadd.f32 %v1155, %v1203
  %1205 = vmatmul.bf16.gmra.mxu0 %v485
  %v1206 = vpop.f32.mrf.mxu0
  %v1207 = vadd.f32 %v1158, %v1206
  %v1208 = vpop.f32.mrf.mxu0
  %v1209 = vadd.f32 %v1160, %v1208
  %1210 = vmatmul.bf16.gmra.mxu0 %v494
  %v1211 = vpop.f32.mrf.mxu0
  %v1212 = vadd.f32 %v1163, %v1211
  %v1213 = vpop.f32.mrf.mxu0
  %v1214 = vadd.f32 %v1165, %v1213
  %1215 = vmatmul.bf16.gmra.mxu0 %v503
  %v1216 = vpop.f32.mrf.mxu0
  %v1217 = vadd.f32 %v1168, %v1216
  %v1218 = vpop.f32.mrf.mxu0
  %v1219 = vadd.f32 %v1170, %v1218
  %1220 = vmatmul.bf16.gmra.mxu0 %v512
  %v1221 = vpop.f32.mrf.mxu0
  %v1222 = vadd.f32 %v1173, %v1221
  %v1223 = vpop.f32.mrf.mxu0
  %v1224 = vadd.f32 %v1175, %v1223
  %1225 = vmatmul.bf16.gmra.mxu0 %v521
  %v1226 = vpop.f32.mrf.mxu0
  %v1227 = vadd.f32 %v1178, %v1226
  %v1228 = vpop.f32.mrf.mxu0
  %v1229 = vadd.f32 %v1180, %v1228
  %1230 = vmatmul.bf16.gmra.mxu0 %v530
  %v1231 = vpop.f32.mrf.mxu0
  %v1232 = vadd.f32 %v1183, %v1231
  %v1233 = vpop.f32.mrf.mxu0
  %v1234 = vadd.f32 %v1185, %v1233
  %1235 = vdwg.mxu0
  %1236 = vmatpush.bf16.msra.mxu0 %v935
  %1237 = vmatpush.bf16.msra.mxu0 %v934
  %1238 = vmatpush.bf16.msra.mxu0 %v933
  %1239 = vmatpush.bf16.msra.mxu0 %v932
  %1240 = vmatpush.bf16.msra.mxu0 %v931
  %1241 = vmatpush.bf16.msra.mxu0 %v930
  %1242 = vmatpush.bf16.msra.mxu0 %v929
  %1243 = vmatpush.bf16.msra.mxu0 %v928
  %1244 = vmatmul.bf16.gmra.mxu0 %v468
  %v1245 = vpop.f32.mrf.mxu0
  %v1246 = vadd.f32 %v1197, %v1245
  %v1247 = vpop.f32.mrf.mxu0
  %v1248 = vadd.f32 %v1199, %v1247
  %1249 = vmatmul.bf16.gmra.mxu0 %v477
  %v1250 = vpop.f32.mrf.mxu0
  %v1251 = vadd.f32 %v1202, %v1250
  %v1252 = vpop.f32.mrf.mxu0
  %v1253 = vadd.f32 %v1204, %v1252
  %1254 = vmatmul.bf16.gmra.mxu0 %v486
  %v1255 = vpop.f32.mrf.mxu0
  %v1256 = vadd.f32 %v1207, %v1255
  %v1257 = vpop.f32.mrf.mxu0
  %v1258 = vadd.f32 %v1209, %v1257
  %1259 = vmatmul.bf16.gmra.mxu0 %v495
  %v1260 = vpop.f32.mrf.mxu0
  %v1261 = vadd.f32 %v1212, %v1260
  %v1262 = vpop.f32.mrf.mxu0
  %v1263 = vadd.f32 %v1214, %v1262
  %1264 = vmatmul.bf16.gmra.mxu0 %v504
  %v1265 = vpop.f32.mrf.mxu0
  %v1266 = vadd.f32 %v1217, %v1265
  %v1267 = vpop.f32.mrf.mxu0
  %v1268 = vadd.f32 %v1219, %v1267
  %1269 = vmatmul.bf16.gmra.mxu0 %v513
  %v1270 = vpop.f32.mrf.mxu0
  %v1271 = vadd.f32 %v1222, %v1270
  %v1272 = vpop.f32.mrf.mxu0
  %v1273 = vadd.f32 %v1224, %v1272
  %1274 = vmatmul.bf16.gmra.mxu0 %v522
  %v1275 = vpop.f32.mrf.mxu0
  %v1276 = vadd.f32 %v1227, %v1275
  %v1277 = vpop.f32.mrf.mxu0
  %v1278 = vadd.f32 %v1229, %v1277
  %1279 = vmatmul.bf16.gmra.mxu0 %v531
  %v1280 = vpop.f32.mrf.mxu0
  %v1281 = vadd.f32 %v1232, %v1280
  %v1282 = vpop.f32.mrf.mxu0
  %v1283 = vadd.f32 %v1234, %v1282
  %1284 = vdwg.mxu0
  %1285 = vmatpush.bf16.msra.mxu0 %v943
  %1286 = vmatpush.bf16.msra.mxu0 %v942
  %1287 = vmatpush.bf16.msra.mxu0 %v941
  %1288 = vmatpush.bf16.msra.mxu0 %v940
  %1289 = vmatpush.bf16.msra.mxu0 %v939
  %1290 = vmatpush.bf16.msra.mxu0 %v938
  %1291 = vmatpush.bf16.msra.mxu0 %v937
  %1292 = vmatpush.bf16.msra.mxu0 %v936
  %1293 = vmatmul.bf16.gmra.mxu0 %v469
  %v1294 = vpop.f32.mrf.mxu0
  %v1295 = vadd.f32 %v1246, %v1294
  %v1296 = vpop.f32.mrf.mxu0
  %v1297 = vadd.f32 %v1248, %v1296
  %1298 = vmatmul.bf16.gmra.mxu0 %v478
  %v1299 = vpop.f32.mrf.mxu0
  %v1300 = vadd.f32 %v1251, %v1299
  %v1301 = vpop.f32.mrf.mxu0
  %v1302 = vadd.f32 %v1253, %v1301
  %1303 = vmatmul.bf16.gmra.mxu0 %v487
  %v1304 = vpop.f32.mrf.mxu0
  %v1305 = vadd.f32 %v1256, %v1304
  %v1306 = vpop.f32.mrf.mxu0
  %v1307 = vadd.f32 %v1258, %v1306
  %1308 = vmatmul.bf16.gmra.mxu0 %v496
  %v1309 = vpop.f32.mrf.mxu0
  %v1310 = vadd.f32 %v1261, %v1309
  %v1311 = vpop.f32.mrf.mxu0
  %v1312 = vadd.f32 %v1263, %v1311
  %1313 = vmatmul.bf16.gmra.mxu0 %v505
  %v1314 = vpop.f32.mrf.mxu0
  %v1315 = vadd.f32 %v1266, %v1314
  %v1316 = vpop.f32.mrf.mxu0
  %v1317 = vadd.f32 %v1268, %v1316
  %1318 = vmatmul.bf16.gmra.mxu0 %v514
  %v1319 = vpop.f32.mrf.mxu0
  %v1320 = vadd.f32 %v1271, %v1319
  %v1321 = vpop.f32.mrf.mxu0
  %v1322 = vadd.f32 %v1273, %v1321
  %1323 = vmatmul.bf16.gmra.mxu0 %v523
  %v1324 = vpop.f32.mrf.mxu0
  %v1325 = vadd.f32 %v1276, %v1324
  %v1326 = vpop.f32.mrf.mxu0
  %v1327 = vadd.f32 %v1278, %v1326
  %1328 = vmatmul.bf16.gmra.mxu0 %v532
  %v1329 = vpop.f32.mrf.mxu0
  %v1330 = vadd.f32 %v1281, %v1329
  %v1331 = vpop.f32.mrf.mxu0
  %v1332 = vadd.f32 %v1283, %v1331
  %1333 = vdwg.mxu0
  %1334 = vmatpush.bf16.msra.mxu0 %v951
  %1335 = vmatpush.bf16.msra.mxu0 %v950
  %1336 = vmatpush.bf16.msra.mxu0 %v949
  %1337 = vmatpush.bf16.msra.mxu0 %v948
  %1338 = vmatpush.bf16.msra.mxu0 %v947
  %1339 = vmatpush.bf16.msra.mxu0 %v946
  %1340 = vmatpush.bf16.msra.mxu0 %v945
  %1341 = vmatpush.bf16.msra.mxu0 %v944
  %1342 = vmatmul.bf16.gmra.mxu0 %v470
  %v1343 = vpop.f32.mrf.mxu0
  %v1344 = vadd.f32 %v1295, %v1343
  %v1345 = vpop.f32.mrf.mxu0
  %v1346 = vadd.f32 %v1297, %v1345
  %1347 = vmatmul.bf16.gmra.mxu0 %v479
  %v1348 = vpop.f32.mrf.mxu0
  %v1349 = vadd.f32 %v1300, %v1348
  %v1350 = vpop.f32.mrf.mxu0
  %v1351 = vadd.f32 %v1302, %v1350
  %1352 = vmatmul.bf16.gmra.mxu0 %v488
  %v1353 = vpop.f32.mrf.mxu0
  %v1354 = vadd.f32 %v1305, %v1353
  %v1355 = vpop.f32.mrf.mxu0
  %v1356 = vadd.f32 %v1307, %v1355
  %1357 = vmatmul.bf16.gmra.mxu0 %v497
  %v1358 = vpop.f32.mrf.mxu0
  %v1359 = vadd.f32 %v1310, %v1358
  %v1360 = vpop.f32.mrf.mxu0
  %v1361 = vadd.f32 %v1312, %v1360
  %1362 = vmatmul.bf16.gmra.mxu0 %v506
  %v1363 = vpop.f32.mrf.mxu0
  %v1364 = vadd.f32 %v1315, %v1363
  %v1365 = vpop.f32.mrf.mxu0
  %v1366 = vadd.f32 %v1317, %v1365
  %1367 = vmatmul.bf16.gmra.mxu0 %v515
  %v1368 = vpop.f32.mrf.mxu0
  %v1369 = vadd.f32 %v1320, %v1368
  %v1370 = vpop.f32.mrf.mxu0
  %v1371 = vadd.f32 %v1322, %v1370
  %1372 = vmatmul.bf16.gmra.mxu0 %v524
  %v1373 = vpop.f32.mrf.mxu0
  %v1374 = vadd.f32 %v1325, %v1373
  %v1375 = vpop.f32.mrf.mxu0
  %v1376 = vadd.f32 %v1327, %v1375
  %1377 = vmatmul.bf16.gmra.mxu0 %v533
  %v1378 = vpop.f32.mrf.mxu0
  %v1379 = vadd.f32 %v1330, %v1378
  %v1380 = vpop.f32.mrf.mxu0
  %v1381 = vadd.f32 %v1332, %v1380
  %1382 = vdwg.mxu0
  %1383 = vmatpush.bf16.msra.mxu0 %v959
  %1384 = vmatpush.bf16.msra.mxu0 %v958
  %1385 = vmatpush.bf16.msra.mxu0 %v957
  %1386 = vmatpush.bf16.msra.mxu0 %v956
  %1387 = vmatpush.bf16.msra.mxu0 %v955
  %1388 = vmatpush.bf16.msra.mxu0 %v954
  %1389 = vmatpush.bf16.msra.mxu0 %v953
  %1390 = vmatpush.bf16.msra.mxu0 %v952
  %1391 = vmatmul.bf16.gmra.mxu0 %v471
  %v1392 = vpop.f32.mrf.mxu0
  %v1393 = vadd.f32 %v1344, %v1392
  %v1394 = vpop.f32.mrf.mxu0
  %v1395 = vadd.f32 %v1346, %v1394
  %1396 = vmatmul.bf16.gmra.mxu0 %v480
  %v1397 = vpop.f32.mrf.mxu0
  %v1398 = vadd.f32 %v1349, %v1397
  %v1399 = vpop.f32.mrf.mxu0
  %v1400 = vadd.f32 %v1351, %v1399
  %1401 = vmatmul.bf16.gmra.mxu0 %v489
  %v1402 = vpop.f32.mrf.mxu0
  %v1403 = vadd.f32 %v1354, %v1402
  %v1404 = vpop.f32.mrf.mxu0
  %v1405 = vadd.f32 %v1356, %v1404
  %1406 = vmatmul.bf16.gmra.mxu0 %v498
  %v1407 = vpop.f32.mrf.mxu0
  %v1408 = vadd.f32 %v1359, %v1407
  %v1409 = vpop.f32.mrf.mxu0
  %v1410 = vadd.f32 %v1361, %v1409
  %1411 = vmatmul.bf16.gmra.mxu0 %v507
  %v1412 = vpop.f32.mrf.mxu0
  %v1413 = vadd.f32 %v1364, %v1412
  %v1414 = vpop.f32.mrf.mxu0
  %v1415 = vadd.f32 %v1366, %v1414
  %1416 = vmatmul.bf16.gmra.mxu0 %v516
  %v1417 = vpop.f32.mrf.mxu0
  %v1418 = vadd.f32 %v1369, %v1417
  %v1419 = vpop.f32.mrf.mxu0
  %v1420 = vadd.f32 %v1371, %v1419
  %1421 = vmatmul.bf16.gmra.mxu0 %v525
  %v1422 = vpop.f32.mrf.mxu0
  %v1423 = vadd.f32 %v1374, %v1422
  %v1424 = vpop.f32.mrf.mxu0
  %v1425 = vadd.f32 %v1376, %v1424
  %1426 = vmatmul.bf16.gmra.mxu0 %v534
  %v1427 = vpop.f32.mrf.mxu0
  %v1428 = vadd.f32 %v1379, %v1427
  %v1429 = vpop.f32.mrf.mxu0
  %v1430 = vadd.f32 %v1381, %v1429
  %1431 = vdwg.mxu0
  %1432 = vmatpush.bf16.msra.mxu0 %v967
  %1433 = vmatpush.bf16.msra.mxu0 %v966
  %1434 = vmatpush.bf16.msra.mxu0 %v965
  %1435 = vmatpush.bf16.msra.mxu0 %v964
  %1436 = vmatpush.bf16.msra.mxu0 %v963
  %1437 = vmatpush.bf16.msra.mxu0 %v962
  %1438 = vmatpush.bf16.msra.mxu0 %v961
  %1439 = vmatpush.bf16.msra.mxu0 %v960
  %1440 = vmatmul.bf16.gmra.mxu0 %v472
  %v1441 = vpop.f32.mrf.mxu0
  %v1442 = vadd.f32 %v1393, %v1441
  %v1443 = vpop.f32.mrf.mxu0
  %v1444 = vadd.f32 %v1395, %v1443
  %1445 = vmatmul.bf16.gmra.mxu0 %v481
  %v1446 = vpop.f32.mrf.mxu0
  %v1447 = vadd.f32 %v1398, %v1446
  %v1448 = vpop.f32.mrf.mxu0
  %v1449 = vadd.f32 %v1400, %v1448
  %1450 = vmatmul.bf16.gmra.mxu0 %v490
  %v1451 = vpop.f32.mrf.mxu0
  %v1452 = vadd.f32 %v1403, %v1451
  %v1453 = vpop.f32.mrf.mxu0
  %v1454 = vadd.f32 %v1405, %v1453
  %1455 = vmatmul.bf16.gmra.mxu0 %v499
  %v1456 = vpop.f32.mrf.mxu0
  %v1457 = vadd.f32 %v1408, %v1456
  %v1458 = vpop.f32.mrf.mxu0
  %v1459 = vadd.f32 %v1410, %v1458
  %1460 = vmatmul.bf16.gmra.mxu0 %v508
  %v1461 = vpop.f32.mrf.mxu0
  %v1462 = vadd.f32 %v1413, %v1461
  %v1463 = vpop.f32.mrf.mxu0
  %v1464 = vadd.f32 %v1415, %v1463
  %1465 = vmatmul.bf16.gmra.mxu0 %v517
  %v1466 = vpop.f32.mrf.mxu0
  %v1467 = vadd.f32 %v1418, %v1466
  %v1468 = vpop.f32.mrf.mxu0
  %v1469 = vadd.f32 %v1420, %v1468
  %1470 = vmatmul.bf16.gmra.mxu0 %v526
  %v1471 = vpop.f32.mrf.mxu0
  %v1472 = vadd.f32 %v1423, %v1471
  %v1473 = vpop.f32.mrf.mxu0
  %v1474 = vadd.f32 %v1425, %v1473
  %1475 = vmatmul.bf16.gmra.mxu0 %v535
  %v1476 = vpop.f32.mrf.mxu0
  %v1477 = vadd.f32 %v1428, %v1476
  %v1478 = vpop.f32.mrf.mxu0
  %v1479 = vadd.f32 %v1430, %v1478
  %1480 = vdwg.mxu0
  %vm1481 = vcmp.ge.f32.partialorder %v1442, 0.0
  %vm1482 = vcmp.ge.f32.partialorder %v1444, 0.0
  %vm1483 = vcmp.ge.f32.partialorder %v1447, 0.0
  %vm1484 = vcmp.ge.f32.partialorder %v1449, 0.0
  %vm1485 = vcmp.ge.f32.partialorder %v1452, 0.0
  %vm1486 = vcmp.ge.f32.partialorder %v1454, 0.0
  %vm1487 = vcmp.ge.f32.partialorder %v1457, 0.0
  %vm1488 = vcmp.ge.f32.partialorder %v1459, 0.0
  %vm1489 = vcmp.ge.f32.partialorder %v1462, 0.0
  %vm1490 = vcmp.ge.f32.partialorder %v1464, 0.0
  %vm1491 = vcmp.ge.f32.partialorder %v1467, 0.0
  %vm1492 = vcmp.ge.f32.partialorder %v1469, 0.0
  %vm1493 = vcmp.ge.f32.partialorder %v1472, 0.0
  %vm1494 = vcmp.ge.f32.partialorder %v1474, 0.0
  %vm1495 = vcmp.ge.f32.partialorder %v1477, 0.0
  %vm1496 = vcmp.ge.f32.partialorder %v1479, 0.0
  %v1497 = vmul.f32 %v1442, 0.2
  %v1498 = vmul.f32 %v1444, 0.2
  %v1499 = vmul.f32 %v1447, 0.2
  %v1500 = vmul.f32 %v1449, 0.2
  %v1501 = vmul.f32 %v1452, 0.2
  %v1502 = vmul.f32 %v1454, 0.2
  %v1503 = vmul.f32 %v1457, 0.2
  %v1504 = vmul.f32 %v1459, 0.2
  %v1505 = vmul.f32 %v1462, 0.2
  %v1506 = vmul.f32 %v1464, 0.2
  %v1507 = vmul.f32 %v1467, 0.2
  %v1508 = vmul.f32 %v1469, 0.2
  %v1509 = vmul.f32 %v1472, 0.2
  %v1510 = vmul.f32 %v1474, 0.2
  %v1511 = vmul.f32 %v1477, 0.2
  %v1512 = vmul.f32 %v1479, 0.2
  %v1513 = vsel %vm1481, %v1442, %v1497
  %v1514 = vsel %vm1482, %v1444, %v1498
  %v1515 = vsel %vm1483, %v1447, %v1499
  %v1516 = vsel %vm1484, %v1449, %v1500
  %v1517 = vsel %vm1485, %v1452, %v1501
  %v1518 = vsel %vm1486, %v1454, %v1502
  %v1519 = vsel %vm1487, %v1457, %v1503
  %v1520 = vsel %vm1488, %v1459, %v1504
  %v1521 = vsel %vm1489, %v1462, %v1505
  %v1522 = vsel %vm1490, %v1464, %v1506
  %v1523 = vsel %vm1491, %v1467, %v1507
  %v1524 = vsel %vm1492, %v1469, %v1508
  %v1525 = vsel %vm1493, %v1472, %v1509
  %v1526 = vsel %vm1494, %v1474, %v1510
  %v1527 = vsel %vm1495, %v1477, %v1511
  %v1528 = vsel %vm1496, %v1479, %v1512
  %v1529 = vadd.f32 %v1513, %v1514
  %v1530 = vadd.f32 %v1529, %v1515
  %v1531 = vadd.f32 %v1530, %v1516
  %v1532 = vadd.f32 %v1531, %v1517
  %v1533 = vadd.f32 %v1532, %v1518
  %v1534 = vadd.f32 %v1533, %v1519
  %v1535 = vadd.f32 %v1534, %v1520
  %v1536 = vadd.f32 %v1535, %v1521
  %v1537 = vadd.f32 %v1536, %v1522
  %v1538 = vadd.f32 %v1537, %v1523
  %v1539 = vadd.f32 %v1538, %v1524
  %v1540 = vadd.f32 %v1539, %v1525
  %v1541 = vadd.f32 %v1540, %v1526
  %v1542 = vadd.f32 %v1541, %v1527
  %v1543 = vadd.f32 %v1542, %v1528
  %v1544 = vrot.slane %v1543, 4
  %v1545 = vadd.f32 %v1543, %v1544
  %v1546 = vrot.slane %v1545, 2
  %v1547 = vadd.f32 %v1545, %v1546
  %v1548 = vrot.slane %v1547, 1
  %v1549 = vadd.f32 %v1547, %v1548
  %v1550 = vrcp.pop 128.0
  %v1551 = vmul.f32 128.0, %v1550
  %v1552 = vsub.f32 1.0, %v1551
  %v1553 = vmul.f32 %v1550, %v1552
  %v1554 = vadd.f32 %v1550, %v1553
  %vm1555 = vweird.f32 %v1550
  %v1556 = vsel %vm1555, %v1550, %v1554
  %v1557 = vmul.f32 %v1549, %v1556
  %v1558 = vsub.f32 %v1513, %v1557
  %v1559 = vsub.f32 %v1514, %v1557
  %v1560 = vsub.f32 %v1515, %v1557
  %v1561 = vsub.f32 %v1516, %v1557
  %v1562 = vsub.f32 %v1517, %v1557
  %v1563 = vsub.f32 %v1518, %v1557
  %v1564 = vsub.f32 %v1519, %v1557
  %v1565 = vsub.f32 %v1520, %v1557
  %v1566 = vsub.f32 %v1521, %v1557
  %v1567 = vsub.f32 %v1522, %v1557
  %v1568 = vsub.f32 %v1523, %v1557
  %v1569 = vsub.f32 %v1524, %v1557
  %v1570 = vsub.f32 %v1525, %v1557
  %v1571 = vsub.f32 %v1526, %v1557
  %v1572 = vsub.f32 %v1527, %v1557
  %v1573 = vsub.f32 %v1528, %v1557
  %v1574 = vmul.f32 %v1558, %v1558
  %v1575 = vmul.f32 %v1559, %v1559
  %v1576 = vmul.f32 %v1560, %v1560
  %v1577 = vmul.f32 %v1561, %v1561
  %v1578 = vmul.f32 %v1562, %v1562
  %v1579 = vmul.f32 %v1563, %v1563
  %v1580 = vmul.f32 %v1564, %v1564
  %v1581 = vmul.f32 %v1565, %v1565
  %v1582 = vmul.f32 %v1566, %v1566
  %v1583 = vmul.f32 %v1567, %v1567
  %v1584 = vmul.f32 %v1568, %v1568
  %v1585 = vmul.f32 %v1569, %v1569
  %v1586 = vmul.f32 %v1570, %v1570
  %v1587 = vmul.f32 %v1571, %v1571
  %v1588 = vmul.f32 %v1572, %v1572
  %v1589 = vmul.f32 %v1573, %v1573
  %v1590 = vadd.f32 %v1574, %v1575
  %v1591 = vadd.f32 %v1590, %v1576
  %v1592 = vadd.f32 %v1591, %v1577
  %v1593 = vadd.f32 %v1592, %v1578
  %v1594 = vadd.f32 %v1593, %v1579
  %v1595 = vadd.f32 %v1594, %v1580
  %v1596 = vadd.f32 %v1595, %v1581
  %v1597 = vadd.f32 %v1596, %v1582
  %v1598 = vadd.f32 %v1597, %v1583
  %v1599 = vadd.f32 %v1598, %v1584
  %v1600 = vadd.f32 %v1599, %v1585
  %v1601 = vadd.f32 %v1600, %v1586
  %v1602 = vadd.f32 %v1601, %v1587
  %v1603 = vadd.f32 %v1602, %v1588
  %v1604 = vadd.f32 %v1603, %v1589
  %v1605 = vrot.slane %v1604, 4
  %v1606 = vadd.f32 %v1604, %v1605
  %v1607 = vrot.slane %v1606, 2
  %v1608 = vadd.f32 %v1606, %v1607
  %v1609 = vrot.slane %v1608, 1
  %v1610 = vadd.f32 %v1608, %v1609
  %v1611 = vmul.f32 %v1610, %v1556
  %v1612 = vadd.f32 %v1611, 1e-05
  %v1613 = vrsqrt.pop %v1612
  %v1614 = vmul.f32 %v1613, %v1612
  %v1615 = vmul.f32 %v1614, %v1613
  %v1616 = vmul.f32 0.5, %v1615
  %v1617 = vsub.f32 1.5, %v1616
  %v1618 = vmul.f32 %v1613, %v1617
  %vm1619 = vweird.f32 %v1612
  %vm1620 = vweird.f32 %v1613
  %vm1621 = vmor %vm1619, %vm1620
  %v1622 = vsel %vm1621, %v1613, %v1618
  %v1623 = vmul.f32 %v1558, %v1622
  %v1624 = vmul.f32 %v1559, %v1622
  %v1625 = vmul.f32 %v1560, %v1622
  %v1626 = vmul.f32 %v1561, %v1622
  %v1627 = vmul.f32 %v1562, %v1622
  %v1628 = vmul.f32 %v1563, %v1622
  %v1629 = vmul.f32 %v1564, %v1622
  %v1630 = vmul.f32 %v1565, %v1622
  %v1631 = vmul.f32 %v1566, %v1622
  %v1632 = vmul.f32 %v1567, %v1622
  %v1633 = vmul.f32 %v1568, %v1622
  %v1634 = vmul.f32 %v1569, %v1622
  %v1635 = vmul.f32 %v1570, %v1622
  %v1636 = vmul.f32 %v1571, %v1622
  %v1637 = vmul.f32 %v1572, %v1622
  %v1638 = vmul.f32 %v1573, %v1622
  %v1639 = vld [vmem:[%s2 + $0x1] sm:$0x1]
  %v1640 = vperm.slane %v1639, 0
  %v1641 = vmul.f32 %v1623, %v1640
  %v1642 = vmul.f32 %v1624, %v1640
  %v1643 = vmul.f32 %v1625, %v1640
  %v1644 = vmul.f32 %v1626, %v1640
  %v1645 = vmul.f32 %v1627, %v1640
  %v1646 = vmul.f32 %v1628, %v1640
  %v1647 = vmul.f32 %v1629, %v1640
  %v1648 = vmul.f32 %v1630, %v1640
  %v1649 = vmul.f32 %v1631, %v1640
  %v1650 = vmul.f32 %v1632, %v1640
  %v1651 = vmul.f32 %v1633, %v1640
  %v1652 = vmul.f32 %v1634, %v1640
  %v1653 = vmul.f32 %v1635, %v1640
  %v1654 = vmul.f32 %v1636, %v1640
  %v1655 = vmul.f32 %v1637, %v1640
  %v1656 = vmul.f32 %v1638, %v1640
  %v1657 = vld [vmem:[%s2 + $0x2] sm:$0x1]
  %v1658 = vperm.slane %v1657, 0
  %v1659 = vadd.f32 %v1641, %v1658
  %v1660 = vadd.f32 %v1642, %v1658
  %v1661 = vadd.f32 %v1643, %v1658
  %v1662 = vadd.f32 %v1644, %v1658
  %v1663 = vadd.f32 %v1645, %v1658
  %v1664 = vadd.f32 %v1646, %v1658
  %v1665 = vadd.f32 %v1647, %v1658
  %v1666 = vadd.f32 %v1648, %v1658
  %v1667 = vadd.f32 %v1649, %v1658
  %v1668 = vadd.f32 %v1650, %v1658
  %v1669 = vadd.f32 %v1651, %v1658
  %v1670 = vadd.f32 %v1652, %v1658
  %v1671 = vadd.f32 %v1653, %v1658
  %v1672 = vadd.f32 %v1654, %v1658
  %v1673 = vadd.f32 %v1655, %v1658
  %v1674 = vadd.f32 %v1656, %v1658
  %1675 = vst [vmem:[%s3] sm:$0xff] %v1659
  %1676 = vst [vmem:[%s3 + $0x8] sm:$0xff] %v1660
  %1677 = vst [vmem:[%s3 + $0x10] sm:$0xff] %v1661
  %1678 = vst [vmem:[%s3 + $0x18] sm:$0xff] %v1662
  %1679 = vst [vmem:[%s3 + $0x20] sm:$0xff] %v1663
  %1680 = vst [vmem:[%s3 + $0x28] sm:$0xff] %v1664
  %1681 = vst [vmem:[%s3 + $0x30] sm:$0xff] %v1665
  %1682 = vst [vmem:[%s3 + $0x38] sm:$0xff] %v1666
  %1683 = vst [vmem:[%s3 + $0x40] sm:$0xff] %v1667
  %1684 = vst [vmem:[%s3 + $0x48] sm:$0xff] %v1668
  %1685 = vst [vmem:[%s3 + $0x50] sm:$0xff] %v1669
  %1686 = vst [vmem:[%s3 + $0x58] sm:$0xff] %v1670
  %1687 = vst [vmem:[%s3 + $0x60] sm:$0xff] %v1671
  %1688 = vst [vmem:[%s3 + $0x68] sm:$0xff] %v1672
  %1689 = vst [vmem:[%s3 + $0x70] sm:$0xff] %v1673
  %1690 = vst [vmem:[%s3 + $0x78] sm:$0xff] %v1674
  // Predicated region
  $region14: #{net_forward.14} parent=0 // pred_check
    _
  $region15: #{net_forward.14} parent=0 // pred_check_branch
    %1692 = sbr.rel (0) target = $region17
  $region16: #{net_forward.14} parent=0 // pred_region
    _
  $region17: #{net_forward.14} parent=0 // pred_fallthru
    _
  // Predicated region
  $region18: #{net_forward.14} parent=0 // pred_check
    _
  $region19: #{net_forward.14} parent=0 // pred_check_branch
    %1694 = sbr.rel (0) target = $region21
  $region20: #{net_forward.14} parent=0 // pred_region
    _
  $region21: #{net_forward.14} parent=0 // pred_fallthru
    _

// kernel: net_forward.15
$region0: #{net_forward.15}
  #allocation0 [shape = 'u32[]', space=smem, size = 0x4, offset = 0x4, fixed_abs, tag = 'smem constant byte address 0x4 - core index']
  #allocation1 [shape = 'u32[72,128]{1,0:T(1,128)}', space=vmem, size = 0x9000, scoped, tag = 'internal scratch']
  %s0 = inlined_call_operand.vmem [shape: bf16[512,576], index: 0, kind: input, shape index: {}]
  %s1 = inlined_call_operand.vmem [shape: bf16[576,128], index: 1, kind: input, shape index: {}]
  %s2 = inlined_call_operand.vmem [shape: f32[3,128], index: 2, kind: input, shape index: {}]
  %s3 = inlined_call_operand.vmem [shape: f32[512,128], index: 3, kind: output, shape index: {}]
  %s4 = sld [smem:[#allocation0]]
  $region22: #{net_forward.15} parent=0
    _
  %s6 = ssub.s32 1, %s4
  %s7 = scalar_select 0, %s6, %s4
  // Predicated region
  $region2: #{net_forward.15} parent=0 // pred_check
    _
  $region3: #{net_forward.15} parent=0 // pred_check_branch
    %9 = sbr.rel (0) target = $region5
  $region4: #{net_forward.15} parent=0 // pred_region
    _
  $region5: #{net_forward.15} parent=0 // pred_fallthru
    _
  // Predicated region
  $region6: #{net_forward.15} parent=0 // pred_check
    _
  $region7: #{net_forward.15} parent=0 // pred_check_branch
    %11 = sbr.rel (0) target = $region9
  $region8: #{net_forward.15} parent=0 // pred_region
    _
  $region9: #{net_forward.15} parent=0 // pred_fallthru
    _
  // Predicated region
  $region10: #{net_forward.15} parent=0 // pred_check
    _
  $region11: #{net_forward.15} parent=0 // pred_check_branch
    %13 = sbr.rel (0) target = $region13
  $region12: #{net_forward.15} parent=0 // pred_region
    _
  $region13: #{net_forward.15} parent=0 // pred_fallthru
    _
  %v15 = vld [vmem:[%s0] sm:$0xff]
  %v16 = vld [vmem:[%s0 + $0x8] sm:$0xff]
  %v17 = vld [vmem:[%s0 + $0x10] sm:$0xf]
  %v18 = vld [vmem:[%s0 + $0x14] sm:$0xff]
  %v19 = vld [vmem:[%s0 + $0x1c] sm:$0xff]
  %v20 = vld [vmem:[%s0 + $0x24] sm:$0xf]
  %v21 = vld [vmem:[%s0 + $0x28] sm:$0xff]
  %v22 = vld [vmem:[%s0 + $0x30] sm:$0xff]
  %v23 = vld [vmem:[%s0 + $0x38] sm:$0xf]
  %v24 = vld [vmem:[%s0 + $0x3c] sm:$0xff]
  %v25 = vld [vmem:[%s0 + $0x44] sm:$0xff]
  %v26 = vld [vmem:[%s0 + $0x4c] sm:$0xf]
  %v27 = vld [vmem:[%s0 + $0x50] sm:$0xff]
  %v28 = vld [vmem:[%s0 + $0x58] sm:$0xff]
  %v29 = vld [vmem:[%s0 + $0x60] sm:$0xf]
  %v30 = vld [vmem:[%s0 + $0x64] sm:$0xff]
  %v31 = vld [vmem:[%s0 + $0x6c] sm:$0xff]
  %v32 = vld [vmem:[%s0 + $0x74] sm:$0xf]
  %v33 = vld [vmem:[%s0 + $0x78] sm:$0xff]
  %v34 = vld [vmem:[%s0 + $0x80] sm:$0xff]
  %v35 = vld [vmem:[%s0 + $0x88] sm:$0xf]
  %v36 = vld [vmem:[%s0 + $0x8c] sm:$0xff]
  %v37 = vld [vmem:[%s0 + $0x94] sm:$0xff]
  %v38 = vld [vmem:[%s0 + $0x9c] sm:$0xf]
  %v39 = vld [vmem:[%s0 + $0xa0] sm:$0xff]
  %v40 = vld [vmem:[%s0 + $0xa8] sm:$0xff]
  %v41 = vld [vmem:[%s0 + $0xb0] sm:$0xf]
  %v42 = vld [vmem:[%s0 + $0xb4] sm:$0xff]
  %v43 = vld [vmem:[%s0 + $0xbc] sm:$0xff]
  %v44 = vld [vmem:[%s0 + $0xc4] sm:$0xf]
  %v45 = vld [vmem:[%s0 + $0xc8] sm:$0xff]
  %v46 = vld [vmem:[%s0 + $0xd0] sm:$0xff]
  %v47 = vld [vmem:[%s0 + $0xd8] sm:$0xf]
  %v48 = vld [vmem:[%s0 + $0xdc] sm:$0xff]
  %v49 = vld [vmem:[%s0 + $0xe4] sm:$0xff]
  %v50 = vld [vmem:[%s0 + $0xec] sm:$0xf]
  %v51 = vld [vmem:[%s0 + $0xf0] sm:$0xff]
  %v52 = vld [vmem:[%s0 + $0xf8] sm:$0xff]
  %v53 = vld [vmem:[%s0 + $0x100] sm:$0xf]
  %v54 = vld [vmem:[%s0 + $0x104] sm:$0xff]
  %v55 = vld [vmem:[%s0 + $0x10c] sm:$0xff]
  %v56 = vld [vmem:[%s0 + $0x114] sm:$0xf]
  %v57 = vld [vmem:[%s0 + $0x118] sm:$0xff]
  %v58 = vld [vmem:[%s0 + $0x120] sm:$0xff]
  %v59 = vld [vmem:[%s0 + $0x128] sm:$0xf]
  %v60 = vld [vmem:[%s0 + $0x12c] sm:$0xff]
  %v61 = vld [vmem:[%s0 + $0x134] sm:$0xff]
  %v62 = vld [vmem:[%s0 + $0x13c] sm:$0xf]
  %v63 = vld [vmem:[%s0 + $0x140] sm:$0xff]
  %v64 = vld [vmem:[%s0 + $0x148] sm:$0xff]
  %v65 = vld [vmem:[%s0 + $0x150] sm:$0xf]
  %v66 = vld [vmem:[%s0 + $0x154] sm:$0xff]
  %v67 = vld [vmem:[%s0 + $0x15c] sm:$0xff]
  %v68 = vld [vmem:[%s0 + $0x164] sm:$0xf]
  %v69 = vld [vmem:[%s0 + $0x168] sm:$0xff]
  %v70 = vld [vmem:[%s0 + $0x170] sm:$0xff]
  %v71 = vld [vmem:[%s0 + $0x178] sm:$0xf]
  %v72 = vld [vmem:[%s0 + $0x17c] sm:$0xff]
  %v73 = vld [vmem:[%s0 + $0x184] sm:$0xff]
  %v74 = vld [vmem:[%s0 + $0x18c] sm:$0xf]
  %v75 = vld [vmem:[%s0 + $0x190] sm:$0xff]
  %v76 = vld [vmem:[%s0 + $0x198] sm:$0xff]
  %v77 = vld [vmem:[%s0 + $0x1a0] sm:$0xf]
  %v78 = vld [vmem:[%s0 + $0x1a4] sm:$0xff]
  %v79 = vld [vmem:[%s0 + $0x1ac] sm:$0xff]
  %v80 = vld [vmem:[%s0 + $0x1b4] sm:$0xf]
  %v81 = vld [vmem:[%s0 + $0x1b8] sm:$0xff]
  %v82 = vld [vmem:[%s0 + $0x1c0] sm:$0xff]
  %v83 = vld [vmem:[%s0 + $0x1c8] sm:$0xf]
  %v84 = vld [vmem:[%s0 + $0x1cc] sm:$0xff]
  %v85 = vld [vmem:[%s0 + $0x1d4] sm:$0xff]
  %v86 = vld [vmem:[%s0 + $0x1dc] sm:$0xf]
  %v87 = vld [vmem:[%s0 + $0x1e0] sm:$0xff]
  %v88 = vld [vmem:[%s0 + $0x1e8] sm:$0xff]
  %v89 = vld [vmem:[%s0 + $0x1f0] sm:$0xf]
  %v90 = vld [vmem:[%s0 + $0x1f4] sm:$0xff]
  %v91 = vld [vmem:[%s0 + $0x1fc] sm:$0xff]
  %v92 = vld [vmem:[%s0 + $0x204] sm:$0xf]
  %v93 = vld [vmem:[%s0 + $0x208] sm:$0xff]
  %v94 = vld [vmem:[%s0 + $0x210] sm:$0xff]
  %v95 = vld [vmem:[%s0 + $0x218] sm:$0xf]
  %v96 = vld [vmem:[%s0 + $0x21c] sm:$0xff]
  %v97 = vld [vmem:[%s0 + $0x224] sm:$0xff]
  %v98 = vld [vmem:[%s0 + $0x22c] sm:$0xf]
  %v99 = vld [vmem:[%s0 + $0x230] sm:$0xff]
  %v100 = vld [vmem:[%s0 + $0x238] sm:$0xff]
  %v101 = vld [vmem:[%s0 + $0x240] sm:$0xf]
  %v102 = vld [vmem:[%s0 + $0x244] sm:$0xff]
  %v103 = vld [vmem:[%s0 + $0x24c] sm:$0xff]
  %v104 = vld [vmem:[%s0 + $0x254] sm:$0xf]
  %v105 = vld [vmem:[%s0 + $0x258] sm:$0xff]
  %v106 = vld [vmem:[%s0 + $0x260] sm:$0xff]
  %v107 = vld [vmem:[%s0 + $0x268] sm:$0xf]
  %v108 = vld [vmem:[%s0 + $0x26c] sm:$0xff]
  %v109 = vld [vmem:[%s0 + $0x274] sm:$0xff]
  %v110 = vld [vmem:[%s0 + $0x27c] sm:$0xf]
  %v111 = vld [vmem:[%s0 + $0x280] sm:$0xff]
  %v112 = vld [vmem:[%s0 + $0x288] sm:$0xff]
  %v113 = vld [vmem:[%s0 + $0x290] sm:$0xf]
  %v114 = vld [vmem:[%s0 + $0x294] sm:$0xff]
  %v115 = vld [vmem:[%s0 + $0x29c] sm:$0xff]
  %v116 = vld [vmem:[%s0 + $0x2a4] sm:$0xf]
  %v117 = vld [vmem:[%s0 + $0x2a8] sm:$0xff]
  %v118 = vld [vmem:[%s0 + $0x2b0] sm:$0xff]
  %v119 = vld [vmem:[%s0 + $0x2b8] sm:$0xf]
  %v120 = vld [vmem:[%s0 + $0x2bc] sm:$0xff]
  %v121 = vld [vmem:[%s0 + $0x2c4] sm:$0xff]
  %v122 = vld [vmem:[%s0 + $0x2cc] sm:$0xf]
  %v123 = vld [vmem:[%s0 + $0x2d0] sm:$0xff]
  %v124 = vld [vmem:[%s0 + $0x2d8] sm:$0xff]
  %v125 = vld [vmem:[%s0 + $0x2e0] sm:$0xf]
  %v126 = vld [vmem:[%s0 + $0x2e4] sm:$0xff]
  %v127 = vld [vmem:[%s0 + $0x2ec] sm:$0xff]
  %v128 = vld [vmem:[%s0 + $0x2f4] sm:$0xf]
  %v129 = vld [vmem:[%s0 + $0x2f8] sm:$0xff]
  %v130 = vld [vmem:[%s0 + $0x300] sm:$0xff]
  %v131 = vld [vmem:[%s0 + $0x308] sm:$0xf]
  %v132 = vld [vmem:[%s0 + $0x30c] sm:$0xff]
  %v133 = vld [vmem:[%s0 + $0x314] sm:$0xff]
  %v134 = vld [vmem:[%s0 + $0x31c] sm:$0xf]
  %v135 = vld [vmem:[%s0 + $0x320] sm:$0xff]
  %v136 = vld [vmem:[%s0 + $0x328] sm:$0xff]
  %v137 = vld [vmem:[%s0 + $0x330] sm:$0xf]
  %v138 = vld [vmem:[%s0 + $0x334] sm:$0xff]
  %v139 = vld [vmem:[%s0 + $0x33c] sm:$0xff]
  %v140 = vld [vmem:[%s0 + $0x344] sm:$0xf]
  %v141 = vld [vmem:[%s0 + $0x348] sm:$0xff]
  %v142 = vld [vmem:[%s0 + $0x350] sm:$0xff]
  %v143 = vld [vmem:[%s0 + $0x358] sm:$0xf]
  %v144 = vld [vmem:[%s0 + $0x35c] sm:$0xff]
  %v145 = vld [vmem:[%s0 + $0x364] sm:$0xff]
  %v146 = vld [vmem:[%s0 + $0x36c] sm:$0xf]
  %v147 = vld [vmem:[%s0 + $0x370] sm:$0xff]
  %v148 = vld [vmem:[%s0 + $0x378] sm:$0xff]
  %v149 = vld [vmem:[%s0 + $0x380] sm:$0xf]
  %v150 = vld [vmem:[%s0 + $0x384] sm:$0xff]
  %v151 = vld [vmem:[%s0 + $0x38c] sm:$0xff]
  %v152 = vld [vmem:[%s0 + $0x394] sm:$0xf]
  %v153 = vld [vmem:[%s0 + $0x398] sm:$0xff]
  %v154 = vld [vmem:[%s0 + $0x3a0] sm:$0xff]
  %v155 = vld [vmem:[%s0 + $0x3a8] sm:$0xf]
  %v156 = vld [vmem:[%s0 + $0x3ac] sm:$0xff]
  %v157 = vld [vmem:[%s0 + $0x3b4] sm:$0xff]
  %v158 = vld [vmem:[%s0 + $0x3bc] sm:$0xf]
  %v159 = vld [vmem:[%s0 + $0x3c0] sm:$0xff]
  %v160 = vld [vmem:[%s0 + $0x3c8] sm:$0xff]
  %v161 = vld [vmem:[%s0 + $0x3d0] sm:$0xf]
  %v162 = vld [vmem:[%s0 + $0x3d4] sm:$0xff]
  %v163 = vld [vmem:[%s0 + $0x3dc] sm:$0xff]
  %v164 = vld [vmem:[%s0 + $0x3e4] sm:$0xf]
  %v165 = vld [vmem:[%s0 + $0x3e8] sm:$0xff]
  %v166 = vld [vmem:[%s0 + $0x3f0] sm:$0xff]
  %v167 = vld [vmem:[%s0 + $0x3f8] sm:$0xf]
  %v168 = vld [vmem:[%s0 + $0x3fc] sm:$0xff]
  %v169 = vld [vmem:[%s0 + $0x404] sm:$0xff]
  %v170 = vld [vmem:[%s0 + $0x40c] sm:$0xf]
  %v171 = vld [vmem:[%s0 + $0x410] sm:$0xff]
  %v172 = vld [vmem:[%s0 + $0x418] sm:$0xff]
  %v173 = vld [vmem:[%s0 + $0x420] sm:$0xf]
  %v174 = vld [vmem:[%s0 + $0x424] sm:$0xff]
  %v175 = vld [vmem:[%s0 + $0x42c] sm:$0xff]
  %v176 = vld [vmem:[%s0 + $0x434] sm:$0xf]
  %v177 = vld [vmem:[%s0 + $0x438] sm:$0xff]
  %v178 = vld [vmem:[%s0 + $0x440] sm:$0xff]
  %v179 = vld [vmem:[%s0 + $0x448] sm:$0xf]
  %v180 = vld [vmem:[%s0 + $0x44c] sm:$0xff]
  %v181 = vld [vmem:[%s0 + $0x454] sm:$0xff]
  %v182 = vld [vmem:[%s0 + $0x45c] sm:$0xf]
  %v183 = vld [vmem:[%s0 + $0x460] sm:$0xff]
  %v184 = vld [vmem:[%s0 + $0x468] sm:$0xff]
  %v185 = vld [vmem:[%s0 + $0x470] sm:$0xf]
  %v186 = vld [vmem:[%s0 + $0x474] sm:$0xff]
  %v187 = vld [vmem:[%s0 + $0x47c] sm:$0xff]
  %v188 = vld [vmem:[%s0 + $0x484] sm:$0xf]
  %v189 = vld [vmem:[%s0 + $0x488] sm:$0xff]
  %v190 = vld [vmem:[%s0 + $0x490] sm:$0xff]
  %v191 = vld [vmem:[%s0 + $0x498] sm:$0xf]
  %v192 = vld [vmem:[%s0 + $0x49c] sm:$0xff]
  %v193 = vld [vmem:[%s0 + $0x4a4] sm:$0xff]
  %v194 = vld [vmem:[%s0 + $0x4ac] sm:$0xf]
  %v195 = vld [vmem:[%s0 + $0x4b0] sm:$0xff]
  %v196 = vld [vmem:[%s0 + $0x4b8] sm:$0xff]
  %v197 = vld [vmem:[%s0 + $0x4c0] sm:$0xf]
  %v198 = vld [vmem:[%s0 + $0x4c4] sm:$0xff]
  %v199 = vld [vmem:[%s0 + $0x4cc] sm:$0xff]
  %v200 = vld [vmem:[%s0 + $0x4d4] sm:$0xf]
  %v201 = vld [vmem:[%s0 + $0x4d8] sm:$0xff]
  %v202 = vld [vmem:[%s0 + $0x4e0] sm:$0xff]
  %v203 = vld [vmem:[%s0 + $0x4e8] sm:$0xf]
  %v204 = vld [vmem:[%s0 + $0x4ec] sm:$0xff]
  %v205 = vld [vmem:[%s0 + $0x4f4] sm:$0xff]
  %v206 = vld [vmem:[%s0 + $0x4fc] sm:$0xf]
  %v207 = vld [vmem:[%s1] sm:$0xf]
  %v208 = vld [vmem:[%s1 + $0x4] sm:$0xf]
  %v209 = vld [vmem:[%s1 + $0x8] sm:$0xf]
  %v210 = vld [vmem:[%s1 + $0xc] sm:$0xf]
  %v211 = vld [vmem:[%s1 + $0x10] sm:$0xf]
  %v212 = vld [vmem:[%s1 + $0x14] sm:$0xf]
  %v213 = vld [vmem:[%s1 + $0x18] sm:$0xf]
  %v214 = vld [vmem:[%s1 + $0x1c] sm:$0xf]
  %v215 = vld [vmem:[%s1 + $0x20] sm:$0xf]
  %v216 = vld [vmem:[%s1 + $0x24] sm:$0xf]
  %v217 = vld [vmem:[%s1 + $0x28] sm:$0xf]
  %v218 = vld [vmem:[%s1 + $0x2c] sm:$0xf]
  %v219 = vld [vmem:[%s1 + $0x30] sm:$0xf]
  %v220 = vld [vmem:[%s1 + $0x34] sm:$0xf]
  %v221 = vld [vmem:[%s1 + $0x38] sm:$0xf]
  %v222 = vld [vmem:[%s1 + $0x3c] sm:$0xf]
  %v223 = vld [vmem:[%s1 + $0x40] sm:$0xf]
  %v224 = vld [vmem:[%s1 + $0x44] sm:$0xf]
  %v225 = vld [vmem:[%s1 + $0x48] sm:$0xf]
  %v226 = vld [vmem:[%s1 + $0x4c] sm:$0xf]
  %v227 = vld [vmem:[%s1 + $0x50] sm:$0xf]
  %v228 = vld [vmem:[%s1 + $0x54] sm:$0xf]
  %v229 = vld [vmem:[%s1 + $0x58] sm:$0xf]
  %v230 = vld [vmem:[%s1 + $0x5c] sm:$0xf]
  %v231 = vld [vmem:[%s1 + $0x60] sm:$0xf]
  %v232 = vld [vmem:[%s1 + $0x64] sm:$0xf]
  %v233 = vld [vmem:[%s1 + $0x68] sm:$0xf]
  %v234 = vld [vmem:[%s1 + $0x6c] sm:$0xf]
  %v235 = vld [vmem:[%s1 + $0x70] sm:$0xf]
  %v236 = vld [vmem:[%s1 + $0x74] sm:$0xf]
  %v237 = vld [vmem:[%s1 + $0x78] sm:$0xf]
  %v238 = vld [vmem:[%s1 + $0x7c] sm:$0xf]
  %v239 = vld [vmem:[%s1 + $0x80] sm:$0xf]
  %v240 = vld [vmem:[%s1 + $0x84] sm:$0xf]
  %v241 = vld [vmem:[%s1 + $0x88] sm:$0xf]
  %v242 = vld [vmem:[%s1 + $0x8c] sm:$0xf]
  %v243 = vld [vmem:[%s1 + $0x90] sm:$0xf]
  %v244 = vld [vmem:[%s1 + $0x94] sm:$0xf]
  %v245 = vld [vmem:[%s1 + $0x98] sm:$0xf]
  %v246 = vld [vmem:[%s1 + $0x9c] sm:$0xf]
  %v247 = vld [vmem:[%s1 + $0xa0] sm:$0xf]
  %v248 = vld [vmem:[%s1 + $0xa4] sm:$0xf]
  %v249 = vld [vmem:[%s1 + $0xa8] sm:$0xf]
  %v250 = vld [vmem:[%s1 + $0xac] sm:$0xf]
  %v251 = vld [vmem:[%s1 + $0xb0] sm:$0xf]
  %v252 = vld [vmem:[%s1 + $0xb4] sm:$0xf]
  %v253 = vld [vmem:[%s1 + $0xb8] sm:$0xf]
  %v254 = vld [vmem:[%s1 + $0xbc] sm:$0xf]
  %v255 = vld [vmem:[%s1 + $0xc0] sm:$0xf]
  %v256 = vld [vmem:[%s1 + $0xc4] sm:$0xf]
  %v257 = vld [vmem:[%s1 + $0xc8] sm:$0xf]
  %v258 = vld [vmem:[%s1 + $0xcc] sm:$0xf]
  %v259 = vld [vmem:[%s1 + $0xd0] sm:$0xf]
  %v260 = vld [vmem:[%s1 + $0xd4] sm:$0xf]
  %v261 = vld [vmem:[%s1 + $0xd8] sm:$0xf]
  %v262 = vld [vmem:[%s1 + $0xdc] sm:$0xf]
  %v263 = vld [vmem:[%s1 + $0xe0] sm:$0xf]
  %v264 = vld [vmem:[%s1 + $0xe4] sm:$0xf]
  %v265 = vld [vmem:[%s1 + $0xe8] sm:$0xf]
  %v266 = vld [vmem:[%s1 + $0xec] sm:$0xf]
  %v267 = vld [vmem:[%s1 + $0xf0] sm:$0xf]
  %v268 = vld [vmem:[%s1 + $0xf4] sm:$0xf]
  %v269 = vld [vmem:[%s1 + $0xf8] sm:$0xf]
  %v270 = vld [vmem:[%s1 + $0xfc] sm:$0xf]
  %v271 = vld [vmem:[%s1 + $0x100] sm:$0xf]
  %v272 = vld [vmem:[%s1 + $0x104] sm:$0xf]
  %v273 = vld [vmem:[%s1 + $0x108] sm:$0xf]
  %v274 = vld [vmem:[%s1 + $0x10c] sm:$0xf]
  %v275 = vld [vmem:[%s1 + $0x110] sm:$0xf]
  %v276 = vld [vmem:[%s1 + $0x114] sm:$0xf]
  %v277 = vld [vmem:[%s1 + $0x118] sm:$0xf]
  %v278 = vld [vmem:[%s1 + $0x11c] sm:$0xf]
  %v279 = vld [vmem:[%s2] sm:$0x1]
  %v280 = vperm.slane %v279, 0
  %v473 = vunpack.c.l.b16 %v15
  %v474 = vunpack.c.h.b16 %v15
  %v475 = vunpack.c.l.b16 %v16
  %v476 = vunpack.c.h.b16 %v16
  %v477 = vunpack.c.l.b16 %v17
  %v478 = vunpack.c.l.b16 %v18
  %v479 = vunpack.c.h.b16 %v18
  %v480 = vunpack.c.l.b16 %v19
  %v481 = vunpack.c.h.b16 %v19
  %v482 = vunpack.c.l.b16 %v20
  %v483 = vunpack.c.l.b16 %v21
  %v484 = vunpack.c.h.b16 %v21
  %v485 = vunpack.c.l.b16 %v22
  %v486 = vunpack.c.h.b16 %v22
  %v487 = vunpack.c.l.b16 %v23
  %v488 = vunpack.c.l.b16 %v24
  %v489 = vunpack.c.h.b16 %v24
  %v490 = vunpack.c.l.b16 %v25
  %v491 = vunpack.c.h.b16 %v25
  %v492 = vunpack.c.l.b16 %v26
  %v493 = vunpack.c.l.b16 %v27
  %v494 = vunpack.c.h.b16 %v27
  %v495 = vunpack.c.l.b16 %v28
  %v496 = vunpack.c.h.b16 %v28
  %v497 = vunpack.c.l.b16 %v29
  %v498 = vunpack.c.l.b16 %v30
  %v499 = vunpack.c.h.b16 %v30
  %v500 = vunpack.c.l.b16 %v31
  %v501 = vunpack.c.h.b16 %v31
  %v502 = vunpack.c.l.b16 %v32
  %v503 = vunpack.c.l.b16 %v33
  %v504 = vunpack.c.h.b16 %v33
  %v505 = vunpack.c.l.b16 %v34
  %v506 = vunpack.c.h.b16 %v34
  %v507 = vunpack.c.l.b16 %v35
  %v508 = vunpack.c.l.b16 %v36
  %v509 = vunpack.c.h.b16 %v36
  %v510 = vunpack.c.l.b16 %v37
  %v511 = vunpack.c.h.b16 %v37
  %v512 = vunpack.c.l.b16 %v38
  %v513 = vunpack.c.l.b16 %v39
  %v514 = vunpack.c.h.b16 %v39
  %v515 = vunpack.c.l.b16 %v40
  %v516 = vunpack.c.h.b16 %v40
  %v517 = vunpack.c.l.b16 %v41
  %v518 = vunpack.c.l.b16 %v42
  %v519 = vunpack.c.h.b16 %v42
  %v520 = vunpack.c.l.b16 %v43
  %v521 = vunpack.c.h.b16 %v43
  %v522 = vunpack.c.l.b16 %v44
  %v523 = vunpack.c.l.b16 %v45
  %v524 = vunpack.c.h.b16 %v45
  %v525 = vunpack.c.l.b16 %v46
  %v526 = vunpack.c.h.b16 %v46
  %v527 = vunpack.c.l.b16 %v47
  %v528 = vunpack.c.l.b16 %v48
  %v529 = vunpack.c.h.b16 %v48
  %v530 = vunpack.c.l.b16 %v49
  %v531 = vunpack.c.h.b16 %v49
  %v532 = vunpack.c.l.b16 %v50
  %v533 = vunpack.c.l.b16 %v51
  %v534 = vunpack.c.h.b16 %v51
  %v535 = vunpack.c.l.b16 %v52
  %v536 = vunpack.c.h.b16 %v52
  %v537 = vunpack.c.l.b16 %v53
  %v538 = vunpack.c.l.b16 %v54
  %v539 = vunpack.c.h.b16 %v54
  %v540 = vunpack.c.l.b16 %v55
  %v541 = vunpack.c.h.b16 %v55
  %v542 = vunpack.c.l.b16 %v56
  %v543 = vunpack.c.l.b16 %v57
  %v544 = vunpack.c.h.b16 %v57
  %v545 = vunpack.c.l.b16 %v58
  %v546 = vunpack.c.h.b16 %v58
  %v547 = vunpack.c.l.b16 %v59
  %v548 = vunpack.c.l.b16 %v60
  %v549 = vunpack.c.h.b16 %v60
  %v550 = vunpack.c.l.b16 %v61
  %v551 = vunpack.c.h.b16 %v61
  %v552 = vunpack.c.l.b16 %v62
  %v553 = vunpack.c.l.b16 %v63
  %v554 = vunpack.c.h.b16 %v63
  %v555 = vunpack.c.l.b16 %v64
  %v556 = vunpack.c.h.b16 %v64
  %v557 = vunpack.c.l.b16 %v65
  %v558 = vunpack.c.l.b16 %v66
  %v559 = vunpack.c.h.b16 %v66
  %v560 = vunpack.c.l.b16 %v67
  %v561 = vunpack.c.h.b16 %v67
  %v562 = vunpack.c.l.b16 %v68
  %v563 = vunpack.c.l.b16 %v69
  %v564 = vunpack.c.h.b16 %v69
  %v565 = vunpack.c.l.b16 %v70
  %v566 = vunpack.c.h.b16 %v70
  %v567 = vunpack.c.l.b16 %v71
  %v568 = vunpack.c.l.b16 %v72
  %v569 = vunpack.c.h.b16 %v72
  %v570 = vunpack.c.l.b16 %v73
  %v571 = vunpack.c.h.b16 %v73
  %v572 = vunpack.c.l.b16 %v74
  %v573 = vunpack.c.l.b16 %v75
  %v574 = vunpack.c.h.b16 %v75
  %v575 = vunpack.c.l.b16 %v76
  %v576 = vunpack.c.h.b16 %v76
  %v577 = vunpack.c.l.b16 %v77
  %v578 = vunpack.c.l.b16 %v78
  %v579 = vunpack.c.h.b16 %v78
  %v580 = vunpack.c.l.b16 %v79
  %v581 = vunpack.c.h.b16 %v79
  %v582 = vunpack.c.l.b16 %v80
  %v583 = vunpack.c.l.b16 %v81
  %v584 = vunpack.c.h.b16 %v81
  %v585 = vunpack.c.l.b16 %v82
  %v586 = vunpack.c.h.b16 %v82
  %v587 = vunpack.c.l.b16 %v83
  %v588 = vunpack.c.l.b16 %v84
  %v589 = vunpack.c.h.b16 %v84
  %v590 = vunpack.c.l.b16 %v85
  %v591 = vunpack.c.h.b16 %v85
  %v592 = vunpack.c.l.b16 %v86
  %v593 = vunpack.c.l.b16 %v87
  %v594 = vunpack.c.h.b16 %v87
  %v595 = vunpack.c.l.b16 %v88
  %v596 = vunpack.c.h.b16 %v88
  %v597 = vunpack.c.l.b16 %v89
  %v598 = vunpack.c.l.b16 %v90
  %v599 = vunpack.c.h.b16 %v90
  %v600 = vunpack.c.l.b16 %v91
  %v601 = vunpack.c.h.b16 %v91
  %v602 = vunpack.c.l.b16 %v92
  %v603 = vunpack.c.l.b16 %v93
  %v604 = vunpack.c.h.b16 %v93
  %v605 = vunpack.c.l.b16 %v94
  %v606 = vunpack.c.h.b16 %v94
  %v607 = vunpack.c.l.b16 %v95
  %v608 = vunpack.c.l.b16 %v96
  %v609 = vunpack.c.h.b16 %v96
  %v610 = vunpack.c.l.b16 %v97
  %v611 = vunpack.c.h.b16 %v97
  %v612 = vunpack.c.l.b16 %v98
  %v613 = vunpack.c.l.b16 %v99
  %v614 = vunpack.c.h.b16 %v99
  %v615 = vunpack.c.l.b16 %v100
  %v616 = vunpack.c.h.b16 %v100
  %v617 = vunpack.c.l.b16 %v101
  %v618 = vunpack.c.l.b16 %v102
  %v619 = vunpack.c.h.b16 %v102
  %v620 = vunpack.c.l.b16 %v103
  %v621 = vunpack.c.h.b16 %v103
  %v622 = vunpack.c.l.b16 %v104
  %v623 = vunpack.c.l.b16 %v105
  %v624 = vunpack.c.h.b16 %v105
  %v625 = vunpack.c.l.b16 %v106
  %v626 = vunpack.c.h.b16 %v106
  %v627 = vunpack.c.l.b16 %v107
  %v628 = vunpack.c.l.b16 %v108
  %v629 = vunpack.c.h.b16 %v108
  %v630 = vunpack.c.l.b16 %v109
  %v631 = vunpack.c.h.b16 %v109
  %v632 = vunpack.c.l.b16 %v110
  %v633 = vunpack.c.l.b16 %v111
  %v634 = vunpack.c.h.b16 %v111
  %v635 = vunpack.c.l.b16 %v112
  %v636 = vunpack.c.h.b16 %v112
  %v637 = vunpack.c.l.b16 %v113
  %v638 = vunpack.c.l.b16 %v114
  %v639 = vunpack.c.h.b16 %v114
  %v640 = vunpack.c.l.b16 %v115
  %v641 = vunpack.c.h.b16 %v115
  %v642 = vunpack.c.l.b16 %v116
  %v643 = vunpack.c.l.b16 %v117
  %v644 = vunpack.c.h.b16 %v117
  %v645 = vunpack.c.l.b16 %v118
  %v646 = vunpack.c.h.b16 %v118
  %v647 = vunpack.c.l.b16 %v119
  %v648 = vunpack.c.l.b16 %v120
  %v649 = vunpack.c.h.b16 %v120
  %v650 = vunpack.c.l.b16 %v121
  %v651 = vunpack.c.h.b16 %v121
  %v652 = vunpack.c.l.b16 %v122
  %v653 = vunpack.c.l.b16 %v123
  %v654 = vunpack.c.h.b16 %v123
  %v655 = vunpack.c.l.b16 %v124
  %v656 = vunpack.c.h.b16 %v124
  %v657 = vunpack.c.l.b16 %v125
  %v658 = vunpack.c.l.b16 %v126
  %v659 = vunpack.c.h.b16 %v126
  %v660 = vunpack.c.l.b16 %v127
  %v661 = vunpack.c.h.b16 %v127
  %v662 = vunpack.c.l.b16 %v128
  %v663 = vunpack.c.l.b16 %v129
  %v664 = vunpack.c.h.b16 %v129
  %v665 = vunpack.c.l.b16 %v130
  %v666 = vunpack.c.h.b16 %v130
  %v667 = vunpack.c.l.b16 %v131
  %v668 = vunpack.c.l.b16 %v132
  %v669 = vunpack.c.h.b16 %v132
  %v670 = vunpack.c.l.b16 %v133
  %v671 = vunpack.c.h.b16 %v133
  %v672 = vunpack.c.l.b16 %v134
  %v673 = vunpack.c.l.b16 %v135
  %v674 = vunpack.c.h.b16 %v135
  %v675 = vunpack.c.l.b16 %v136
  %v676 = vunpack.c.h.b16 %v136
  %v677 = vunpack.c.l.b16 %v137
  %v678 = vunpack.c.l.b16 %v138
  %v679 = vunpack.c.h.b16 %v138
  %v680 = vunpack.c.l.b16 %v139
  %v681 = vunpack.c.h.b16 %v139
  %v682 = vunpack.c.l.b16 %v140
  %v683 = vunpack.c.l.b16 %v141
  %v684 = vunpack.c.h.b16 %v141
  %v685 = vunpack.c.l.b16 %v142
  %v686 = vunpack.c.h.b16 %v142
  %v687 = vunpack.c.l.b16 %v143
  %v688 = vunpack.c.l.b16 %v144
  %v689 = vunpack.c.h.b16 %v144
  %v690 = vunpack.c.l.b16 %v145
  %v691 = vunpack.c.h.b16 %v145
  %v692 = vunpack.c.l.b16 %v146
  %v693 = vunpack.c.l.b16 %v147
  %v694 = vunpack.c.h.b16 %v147
  %v695 = vunpack.c.l.b16 %v148
  %v696 = vunpack.c.h.b16 %v148
  %v697 = vunpack.c.l.b16 %v149
  %v698 = vunpack.c.l.b16 %v150
  %v699 = vunpack.c.h.b16 %v150
  %v700 = vunpack.c.l.b16 %v151
  %v701 = vunpack.c.h.b16 %v151
  %v702 = vunpack.c.l.b16 %v152
  %v703 = vunpack.c.l.b16 %v153
  %v704 = vunpack.c.h.b16 %v153
  %v705 = vunpack.c.l.b16 %v154
  %v706 = vunpack.c.h.b16 %v154
  %v707 = vunpack.c.l.b16 %v155
  %v708 = vunpack.c.l.b16 %v156
  %v709 = vunpack.c.h.b16 %v156
  %v710 = vunpack.c.l.b16 %v157
  %v711 = vunpack.c.h.b16 %v157
  %v712 = vunpack.c.l.b16 %v158
  %v713 = vunpack.c.l.b16 %v159
  %v714 = vunpack.c.h.b16 %v159
  %v715 = vunpack.c.l.b16 %v160
  %v716 = vunpack.c.h.b16 %v160
  %v717 = vunpack.c.l.b16 %v161
  %v718 = vunpack.c.l.b16 %v162
  %v719 = vunpack.c.h.b16 %v162
  %v720 = vunpack.c.l.b16 %v163
  %v721 = vunpack.c.h.b16 %v163
  %v722 = vunpack.c.l.b16 %v164
  %v723 = vunpack.c.l.b16 %v165
  %v724 = vunpack.c.h.b16 %v165
  %v725 = vunpack.c.l.b16 %v166
  %v726 = vunpack.c.h.b16 %v166
  %v727 = vunpack.c.l.b16 %v167
  %v728 = vunpack.c.l.b16 %v168
  %v729 = vunpack.c.h.b16 %v168
  %v730 = vunpack.c.l.b16 %v169
  %v731 = vunpack.c.h.b16 %v169
  %v732 = vunpack.c.l.b16 %v170
  %v733 = vunpack.c.l.b16 %v171
  %v734 = vunpack.c.h.b16 %v171
  %v735 = vunpack.c.l.b16 %v172
  %v736 = vunpack.c.h.b16 %v172
  %v737 = vunpack.c.l.b16 %v173
  %v738 = vunpack.c.l.b16 %v174
  %v739 = vunpack.c.h.b16 %v174
  %v740 = vunpack.c.l.b16 %v175
  %v741 = vunpack.c.h.b16 %v175
  %v742 = vunpack.c.l.b16 %v176
  %v743 = vunpack.c.l.b16 %v177
  %v744 = vunpack.c.h.b16 %v177
  %v745 = vunpack.c.l.b16 %v178
  %v746 = vunpack.c.h.b16 %v178
  %v747 = vunpack.c.l.b16 %v179
  %v748 = vunpack.c.l.b16 %v180
  %v749 = vunpack.c.h.b16 %v180
  %v750 = vunpack.c.l.b16 %v181
  %v751 = vunpack.c.h.b16 %v181
  %v752 = vunpack.c.l.b16 %v182
  %v753 = vunpack.c.l.b16 %v183
  %v754 = vunpack.c.h.b16 %v183
  %v755 = vunpack.c.l.b16 %v184
  %v756 = vunpack.c.h.b16 %v184
  %v757 = vunpack.c.l.b16 %v185
  %v758 = vunpack.c.l.b16 %v186
  %v759 = vunpack.c.h.b16 %v186
  %v760 = vunpack.c.l.b16 %v187
  %v761 = vunpack.c.h.b16 %v187
  %v762 = vunpack.c.l.b16 %v188
  %v763 = vunpack.c.l.b16 %v189
  %v764 = vunpack.c.h.b16 %v189
  %v765 = vunpack.c.l.b16 %v190
  %v766 = vunpack.c.h.b16 %v190
  %v767 = vunpack.c.l.b16 %v191
  %v768 = vunpack.c.l.b16 %v192
  %v769 = vunpack.c.h.b16 %v192
  %v770 = vunpack.c.l.b16 %v193
  %v771 = vunpack.c.h.b16 %v193
  %v772 = vunpack.c.l.b16 %v194
  %v773 = vunpack.c.l.b16 %v195
  %v774 = vunpack.c.h.b16 %v195
  %v775 = vunpack.c.l.b16 %v196
  %v776 = vunpack.c.h.b16 %v196
  %v777 = vunpack.c.l.b16 %v197
  %v778 = vunpack.c.l.b16 %v198
  %v779 = vunpack.c.h.b16 %v198
  %v780 = vunpack.c.l.b16 %v199
  %v781 = vunpack.c.h.b16 %v199
  %v782 = vunpack.c.l.b16 %v200
  %v783 = vunpack.c.l.b16 %v201
  %v784 = vunpack.c.h.b16 %v201
  %v785 = vunpack.c.l.b16 %v202
  %v786 = vunpack.c.h.b16 %v202
  %v787 = vunpack.c.l.b16 %v203
  %v788 = vunpack.c.l.b16 %v204
  %v789 = vunpack.c.h.b16 %v204
  %v790 = vunpack.c.l.b16 %v205
  %v791 = vunpack.c.h.b16 %v205
  %v792 = vunpack.c.l.b16 %v206
  %v793 = vpack.c.b16 %v478, %v473
  %v794 = vpack.c.b16 %v479, %v474
  %v795 = vpack.c.b16 %v480, %v475
  %v796 = vpack.c.b16 %v481, %v476
  %v797 = vpack.c.b16 %v482, %v477
  %v798 = vpack.c.b16 %v488, %v483
  %v799 = vpack.c.b16 %v489, %v484
  %v800 = vpack.c.b16 %v490, %v485
  %v801 = vpack.c.b16 %v491, %v486
  %v802 = vpack.c.b16 %v492, %v487
  %v803 = vpack.c.b16 %v498, %v493
  %v804 = vpack.c.b16 %v499, %v494
  %v805 = vpack.c.b16 %v500, %v495
  %v806 = vpack.c.b16 %v501, %v496
  %v807 = vpack.c.b16 %v502, %v497
  %v808 = vpack.c.b16 %v508, %v503
  %v809 = vpack.c.b16 %v509, %v504
  %v810 = vpack.c.b16 %v510, %v505
  %v811 = vpack.c.b16 %v511, %v506
  %v812 = vpack.c.b16 %v512, %v507
  %v813 = vpack.c.b16 %v518, %v513
  %v814 = vpack.c.b16 %v519, %v514
  %v815 = vpack.c.b16 %v520, %v515
  %v816 = vpack.c.b16 %v521, %v516
  %v817 = vpack.c.b16 %v522, %v517
  %v818 = vpack.c.b16 %v528, %v523
  %v819 = vpack.c.b16 %v529, %v524
  %v820 = vpack.c.b16 %v530, %v525
  %v821 = vpack.c.b16 %v531, %v526
  %v822 = vpack.c.b16 %v532, %v527
  %v823 = vpack.c.b16 %v538, %v533
  %v824 = vpack.c.b16 %v539, %v534
  %v825 = vpack.c.b16 %v540, %v535
  %v826 = vpack.c.b16 %v541, %v536
  %v827 = vpack.c.b16 %v542, %v537
  %v828 = vpack.c.b16 %v548, %v543
  %v829 = vpack.c.b16 %v549, %v544
  %v830 = vpack.c.b16 %v550, %v545
  %v831 = vpack.c.b16 %v551, %v546
  %v832 = vpack.c.b16 %v552, %v547
  %v833 = vpack.c.b16 %v558, %v553
  %v834 = vpack.c.b16 %v559, %v554
  %v835 = vpack.c.b16 %v560, %v555
  %v836 = vpack.c.b16 %v561, %v556
  %v837 = vpack.c.b16 %v562, %v557
  %v838 = vpack.c.b16 %v568, %v563
  %v839 = vpack.c.b16 %v569, %v564
  %v840 = vpack.c.b16 %v570, %v565
  %v841 = vpack.c.b16 %v571, %v566
  %v842 = vpack.c.b16 %v572, %v567
  %v843 = vpack.c.b16 %v578, %v573
  %v844 = vpack.c.b16 %v579, %v574
  %v845 = vpack.c.b16 %v580, %v575
  %v846 = vpack.c.b16 %v581, %v576
  %v847 = vpack.c.b16 %v582, %v577
  %v848 = vpack.c.b16 %v588, %v583
  %v849 = vpack.c.b16 %v589, %v584
  %v850 = vpack.c.b16 %v590, %v585
  %v851 = vpack.c.b16 %v591, %v586
  %v852 = vpack.c.b16 %v592, %v587
  %v853 = vpack.c.b16 %v598, %v593
  %v854 = vpack.c.b16 %v599, %v594
  %v855 = vpack.c.b16 %v600, %v595
  %v856 = vpack.c.b16 %v601, %v596
  %v857 = vpack.c.b16 %v602, %v597
  %v858 = vpack.c.b16 %v608, %v603
  %v859 = vpack.c.b16 %v609, %v604
  %v860 = vpack.c.b16 %v610, %v605
  %v861 = vpack.c.b16 %v611, %v606
  %v862 = vpack.c.b16 %v612, %v607
  %v863 = vpack.c.b16 %v618, %v613
  %v864 = vpack.c.b16 %v619, %v614
  %v865 = vpack.c.b16 %v620, %v615
  %v866 = vpack.c.b16 %v621, %v616
  %v867 = vpack.c.b16 %v622, %v617
  %v868 = vpack.c.b16 %v628, %v623
  %v869 = vpack.c.b16 %v629, %v624
  %v870 = vpack.c.b16 %v630, %v625
  %v871 = vpack.c.b16 %v631, %v626
  %v872 = vpack.c.b16 %v632, %v627
  %v873 = vpack.c.b16 %v638, %v633
  %v874 = vpack.c.b16 %v639, %v634
  %v875 = vpack.c.b16 %v640, %v635
  %v876 = vpack.c.b16 %v641, %v636
  %v877 = vpack.c.b16 %v642, %v637
  %v878 = vpack.c.b16 %v648, %v643
  %v879 = vpack.c.b16 %v649, %v644
  %v880 = vpack.c.b16 %v650, %v645
  %v881 = vpack.c.b16 %v651, %v646
  %v882 = vpack.c.b16 %v652, %v647
  %v883 = vpack.c.b16 %v658, %v653
  %v884 = vpack.c.b16 %v659, %v654
  %v885 = vpack.c.b16 %v660, %v655
  %v886 = vpack.c.b16 %v661, %v656
  %v887 = vpack.c.b16 %v662, %v657
  %v888 = vpack.c.b16 %v668, %v663
  %v889 = vpack.c.b16 %v669, %v664
  %v890 = vpack.c.b16 %v670, %v665
  %v891 = vpack.c.b16 %v671, %v666
  %v892 = vpack.c.b16 %v672, %v667
  %v893 = vpack.c.b16 %v678, %v673
  %v894 = vpack.c.b16 %v679, %v674
  %v895 = vpack.c.b16 %v680, %v675
  %v896 = vpack.c.b16 %v681, %v676
  %v897 = vpack.c.b16 %v682, %v677
  %v898 = vpack.c.b16 %v688, %v683
  %v899 = vpack.c.b16 %v689, %v684
  %v900 = vpack.c.b16 %v690, %v685
  %v901 = vpack.c.b16 %v691, %v686
  %v902 = vpack.c.b16 %v692, %v687
  %v903 = vpack.c.b16 %v698, %v693
  %v904 = vpack.c.b16 %v699, %v694
  %v905 = vpack.c.b16 %v700, %v695
  %v906 = vpack.c.b16 %v701, %v696
  %v907 = vpack.c.b16 %v702, %v697
  %v908 = vpack.c.b16 %v708, %v703
  %v909 = vpack.c.b16 %v709, %v704
  %v910 = vpack.c.b16 %v710, %v705
  %v911 = vpack.c.b16 %v711, %v706
  %v912 = vpack.c.b16 %v712, %v707
  %v913 = vpack.c.b16 %v718, %v713
  %v914 = vpack.c.b16 %v719, %v714
  %v915 = vpack.c.b16 %v720, %v715
  %v916 = vpack.c.b16 %v721, %v716
  %v917 = vpack.c.b16 %v722, %v717
  %v918 = vpack.c.b16 %v728, %v723
  %v919 = vpack.c.b16 %v729, %v724
  %v920 = vpack.c.b16 %v730, %v725
  %v921 = vpack.c.b16 %v731, %v726
  %v922 = vpack.c.b16 %v732, %v727
  %v923 = vpack.c.b16 %v738, %v733
  %v924 = vpack.c.b16 %v739, %v734
  %v925 = vpack.c.b16 %v740, %v735
  %v926 = vpack.c.b16 %v741, %v736
  %v927 = vpack.c.b16 %v742, %v737
  %v928 = vpack.c.b16 %v748, %v743
  %v929 = vpack.c.b16 %v749, %v744
  %v930 = vpack.c.b16 %v750, %v745
  %v931 = vpack.c.b16 %v751, %v746
  %v932 = vpack.c.b16 %v752, %v747
  %v933 = vpack.c.b16 %v758, %v753
  %v934 = vpack.c.b16 %v759, %v754
  %v935 = vpack.c.b16 %v760, %v755
  %v936 = vpack.c.b16 %v761, %v756
  %v937 = vpack.c.b16 %v762, %v757
  %v938 = vpack.c.b16 %v768, %v763
  %v939 = vpack.c.b16 %v769, %v764
  %v940 = vpack.c.b16 %v770, %v765
  %v941 = vpack.c.b16 %v771, %v766
  %v942 = vpack.c.b16 %v772, %v767
  %v943 = vpack.c.b16 %v778, %v773
  %v944 = vpack.c.b16 %v779, %v774
  %v945 = vpack.c.b16 %v780, %v775
  %v946 = vpack.c.b16 %v781, %v776
  %v947 = vpack.c.b16 %v782, %v777
  %v948 = vpack.c.b16 %v788, %v783
  %v949 = vpack.c.b16 %v789, %v784
  %v950 = vpack.c.b16 %v790, %v785
  %v951 = vpack.c.b16 %v791, %v786
  %v952 = vpack.c.b16 %v792, %v787
  %v1153 = vunpack.c.l.b16 %v207
  %v1154 = vunpack.c.l.b16 %v208
  %v1155 = vunpack.c.l.b16 %v209
  %v1156 = vunpack.c.l.b16 %v210
  %v1157 = vunpack.c.l.b16 %v211
  %v1158 = vunpack.c.l.b16 %v212
  %v1159 = vunpack.c.l.b16 %v213
  %v1160 = vunpack.c.l.b16 %v214
  %v1161 = vunpack.c.l.b16 %v215
  %v1162 = vunpack.c.l.b16 %v216
  %v1163 = vunpack.c.l.b16 %v217
  %v1164 = vunpack.c.l.b16 %v218
  %v1165 = vunpack.c.l.b16 %v219
  %v1166 = vunpack.c.l.b16 %v220
  %v1167 = vunpack.c.l.b16 %v221
  %v1168 = vunpack.c.l.b16 %v222
  %v1169 = vunpack.c.l.b16 %v223
  %v1170 = vunpack.c.l.b16 %v224
  %v1171 = vunpack.c.l.b16 %v225
  %v1172 = vunpack.c.l.b16 %v226
  %v1173 = vunpack.c.l.b16 %v227
  %v1174 = vunpack.c.l.b16 %v228
  %v1175 = vunpack.c.l.b16 %v229
  %v1176 = vunpack.c.l.b16 %v230
  %v1177 = vunpack.c.l.b16 %v231
  %v1178 = vunpack.c.l.b16 %v232
  %v1179 = vunpack.c.l.b16 %v233
  %v1180 = vunpack.c.l.b16 %v234
  %v1181 = vunpack.c.l.b16 %v235
  %v1182 = vunpack.c.l.b16 %v236
  %v1183 = vunpack.c.l.b16 %v237
  %v1184 = vunpack.c.l.b16 %v238
  %v1185 = vunpack.c.l.b16 %v239
  %v1186 = vunpack.c.l.b16 %v240
  %v1187 = vunpack.c.l.b16 %v241
  %v1188 = vunpack.c.l.b16 %v242
  %v1189 = vunpack.c.l.b16 %v243
  %v1190 = vunpack.c.l.b16 %v244
  %v1191 = vunpack.c.l.b16 %v245
  %v1192 = vunpack.c.l.b16 %v246
  %v1193 = vunpack.c.l.b16 %v247
  %v1194 = vunpack.c.l.b16 %v248
  %v1195 = vunpack.c.l.b16 %v249
  %v1196 = vunpack.c.l.b16 %v250
  %v1197 = vunpack.c.l.b16 %v251
  %v1198 = vunpack.c.l.b16 %v252
  %v1199 = vunpack.c.l.b16 %v253
  %v1200 = vunpack.c.l.b16 %v254
  %v1201 = vunpack.c.l.b16 %v255
  %v1202 = vunpack.c.l.b16 %v256
  %v1203 = vunpack.c.l.b16 %v257
  %v1204 = vunpack.c.l.b16 %v258
  %v1205 = vunpack.c.l.b16 %v259
  %v1206 = vunpack.c.l.b16 %v260
  %v1207 = vunpack.c.l.b16 %v261
  %v1208 = vunpack.c.l.b16 %v262
  %v1209 = vunpack.c.l.b16 %v263
  %v1210 = vunpack.c.l.b16 %v264
  %v1211 = vunpack.c.l.b16 %v265
  %v1212 = vunpack.c.l.b16 %v266
  %v1213 = vunpack.c.l.b16 %v267
  %v1214 = vunpack.c.l.b16 %v268
  %v1215 = vunpack.c.l.b16 %v269
  %v1216 = vunpack.c.l.b16 %v270
  %v1217 = vunpack.c.l.b16 %v271
  %v1218 = vunpack.c.l.b16 %v272
  %v1219 = vunpack.c.l.b16 %v273
  %v1220 = vunpack.c.l.b16 %v274
  %v1221 = vunpack.c.l.b16 %v275
  %v1222 = vunpack.c.l.b16 %v276
  %v1223 = vunpack.c.l.b16 %v277
  %v1224 = vunpack.c.l.b16 %v278
  %v1225 = vpack.c.b16 %v1154, %v1153
  %v1226 = vpack.c.b16 %v1156, %v1155
  %v1227 = vpack.c.b16 %v1158, %v1157
  %v1228 = vpack.c.b16 %v1160, %v1159
  %v1229 = vpack.c.b16 %v1162, %v1161
  %v1230 = vpack.c.b16 %v1164, %v1163
  %v1231 = vpack.c.b16 %v1166, %v1165
  %v1232 = vpack.c.b16 %v1168, %v1167
  %v1233 = vpack.c.b16 %v1170, %v1169
  %v1234 = vpack.c.b16 %v1172, %v1171
  %v1235 = vpack.c.b16 %v1174, %v1173
  %v1236 = vpack.c.b16 %v1176, %v1175
  %v1237 = vpack.c.b16 %v1178, %v1177
  %v1238 = vpack.c.b16 %v1180, %v1179
  %v1239 = vpack.c.b16 %v1182, %v1181
  %v1240 = vpack.c.b16 %v1184, %v1183
  %v1241 = vpack.c.b16 %v1186, %v1185
  %v1242 = vpack.c.b16 %v1188, %v1187
  %v1243 = vpack.c.b16 %v1190, %v1189
  %v1244 = vpack.c.b16 %v1192, %v1191
  %v1245 = vpack.c.b16 %v1194, %v1193
  %v1246 = vpack.c.b16 %v1196, %v1195
  %v1247 = vpack.c.b16 %v1198, %v1197
  %v1248 = vpack.c.b16 %v1200, %v1199
  %v1249 = vpack.c.b16 %v1202, %v1201
  %v1250 = vpack.c.b16 %v1204, %v1203
  %v1251 = vpack.c.b16 %v1206, %v1205
  %v1252 = vpack.c.b16 %v1208, %v1207
  %v1253 = vpack.c.b16 %v1210, %v1209
  %v1254 = vpack.c.b16 %v1212, %v1211
  %v1255 = vpack.c.b16 %v1214, %v1213
  %v1256 = vpack.c.b16 %v1216, %v1215
  %v1257 = vpack.c.b16 %v1218, %v1217
  %v1258 = vpack.c.b16 %v1220, %v1219
  %v1259 = vpack.c.b16 %v1222, %v1221
  %v1260 = vpack.c.b16 %v1224, %v1223
  %vm1297 = vcmask 523264
  %v1299 = vsel %vm1297, %v797, 0
  %v1302 = vsel %vm1297, %v802, 0
  %v1305 = vsel %vm1297, %v807, 0
  %v1308 = vsel %vm1297, %v812, 0
  %v1311 = vsel %vm1297, %v817, 0
  %v1314 = vsel %vm1297, %v822, 0
  %v1317 = vsel %vm1297, %v827, 0
  %v1320 = vsel %vm1297, %v832, 0
  %v1323 = vsel %vm1297, %v837, 0
  %v1326 = vsel %vm1297, %v842, 0
  %v1329 = vsel %vm1297, %v847, 0
  %v1332 = vsel %vm1297, %v852, 0
  %v1335 = vsel %vm1297, %v857, 0
  %v1338 = vsel %vm1297, %v862, 0
  %v1341 = vsel %vm1297, %v867, 0
  %v1344 = vsel %vm1297, %v872, 0
  %v1347 = vsel %vm1297, %v877, 0
  %v1350 = vsel %vm1297, %v882, 0
  %v1353 = vsel %vm1297, %v887, 0
  %v1356 = vsel %vm1297, %v892, 0
  %v1359 = vsel %vm1297, %v897, 0
  %v1362 = vsel %vm1297, %v902, 0
  %v1365 = vsel %vm1297, %v907, 0
  %v1368 = vsel %vm1297, %v912, 0
  %v1371 = vsel %vm1297, %v917, 0
  %v1374 = vsel %vm1297, %v922, 0
  %v1377 = vsel %vm1297, %v927, 0
  %v1380 = vsel %vm1297, %v932, 0
  %v1383 = vsel %vm1297, %v937, 0
  %v1386 = vsel %vm1297, %v942, 0
  %v1389 = vsel %vm1297, %v947, 0
  %v1392 = vsel %vm1297, %v952, 0
  %1394 = vmatpush.bf16.msra.mxu0 %v1232
  %1395 = vmatpush.bf16.msra.mxu0 %v1231
  %1396 = vmatpush.bf16.msra.mxu0 %v1230
  %1397 = vmatpush.bf16.msra.mxu0 %v1229
  %1398 = vmatpush.bf16.msra.mxu0 %v1228
  %1399 = vmatpush.bf16.msra.mxu0 %v1227
  %1400 = vmatpush.bf16.msra.mxu0 %v1226
  %1401 = vmatpush.bf16.msra.mxu0 %v1225
  %1402 = vmatmul.bf16.gmra.mxu0 %v793
  %v1403 = vpop.f32.mrf.mxu0
  %v1404 = vadd.f32 %v280, %v1403
  %v1405 = vpop.f32.mrf.mxu0
  %v1406 = vadd.f32 %v280, %v1405
  %1407 = vmatmul.bf16.gmra.mxu0 %v798
  %v1408 = vpop.f32.mrf.mxu0
  %v1409 = vadd.f32 %v280, %v1408
  %v1410 = vpop.f32.mrf.mxu0
  %v1411 = vadd.f32 %v280, %v1410
  %1412 = vmatmul.bf16.gmra.mxu0 %v803
  %v1413 = vpop.f32.mrf.mxu0
  %v1414 = vadd.f32 %v280, %v1413
  %v1415 = vpop.f32.mrf.mxu0
  %v1416 = vadd.f32 %v280, %v1415
  %1417 = vmatmul.bf16.gmra.mxu0 %v808
  %v1418 = vpop.f32.mrf.mxu0
  %v1419 = vadd.f32 %v280, %v1418
  %v1420 = vpop.f32.mrf.mxu0
  %v1421 = vadd.f32 %v280, %v1420
  %1422 = vmatmul.bf16.gmra.mxu0 %v813
  %v1423 = vpop.f32.mrf.mxu0
  %v1424 = vadd.f32 %v280, %v1423
  %v1425 = vpop.f32.mrf.mxu0
  %v1426 = vadd.f32 %v280, %v1425
  %1427 = vmatmul.bf16.gmra.mxu0 %v818
  %v1428 = vpop.f32.mrf.mxu0
  %v1429 = vadd.f32 %v280, %v1428
  %v1430 = vpop.f32.mrf.mxu0
  %v1431 = vadd.f32 %v280, %v1430
  %1432 = vmatmul.bf16.gmra.mxu0 %v823
  %v1433 = vpop.f32.mrf.mxu0
  %v1434 = vadd.f32 %v280, %v1433
  %v1435 = vpop.f32.mrf.mxu0
  %v1436 = vadd.f32 %v280, %v1435
  %1437 = vmatmul.bf16.gmra.mxu0 %v828
  %v1438 = vpop.f32.mrf.mxu0
  %v1439 = vadd.f32 %v280, %v1438
  %v1440 = vpop.f32.mrf.mxu0
  %v1441 = vadd.f32 %v280, %v1440
  %1442 = vmatmul.bf16.gmra.mxu0 %v833
  %v1443 = vpop.f32.mrf.mxu0
  %v1444 = vadd.f32 %v280, %v1443
  %v1445 = vpop.f32.mrf.mxu0
  %v1446 = vadd.f32 %v280, %v1445
  %1447 = vmatmul.bf16.gmra.mxu0 %v838
  %v1448 = vpop.f32.mrf.mxu0
  %v1449 = vadd.f32 %v280, %v1448
  %v1450 = vpop.f32.mrf.mxu0
  %v1451 = vadd.f32 %v280, %v1450
  %1452 = vmatmul.bf16.gmra.mxu0 %v843
  %v1453 = vpop.f32.mrf.mxu0
  %v1454 = vadd.f32 %v280, %v1453
  %v1455 = vpop.f32.mrf.mxu0
  %v1456 = vadd.f32 %v280, %v1455
  %1457 = vmatmul.bf16.gmra.mxu0 %v848
  %v1458 = vpop.f32.mrf.mxu0
  %v1459 = vadd.f32 %v280, %v1458
  %v1460 = vpop.f32.mrf.mxu0
  %v1461 = vadd.f32 %v280, %v1460
  %1462 = vmatmul.bf16.gmra.mxu0 %v853
  %v1463 = vpop.f32.mrf.mxu0
  %v1464 = vadd.f32 %v280, %v1463
  %v1465 = vpop.f32.mrf.mxu0
  %v1466 = vadd.f32 %v280, %v1465
  %1467 = vmatmul.bf16.gmra.mxu0 %v858
  %v1468 = vpop.f32.mrf.mxu0
  %v1469 = vadd.f32 %v280, %v1468
  %v1470 = vpop.f32.mrf.mxu0
  %v1471 = vadd.f32 %v280, %v1470
  %1472 = vmatmul.bf16.gmra.mxu0 %v863
  %v1473 = vpop.f32.mrf.mxu0
  %v1474 = vadd.f32 %v280, %v1473
  %v1475 = vpop.f32.mrf.mxu0
  %v1476 = vadd.f32 %v280, %v1475
  %1477 = vmatmul.bf16.gmra.mxu0 %v868
  %v1478 = vpop.f32.mrf.mxu0
  %v1479 = vadd.f32 %v280, %v1478
  %v1480 = vpop.f32.mrf.mxu0
  %v1481 = vadd.f32 %v280, %v1480
  %1482 = vmatmul.bf16.gmra.mxu0 %v873
  %v1483 = vpop.f32.mrf.mxu0
  %v1484 = vadd.f32 %v280, %v1483
  %v1485 = vpop.f32.mrf.mxu0
  %v1486 = vadd.f32 %v280, %v1485
  %1487 = vmatmul.bf16.gmra.mxu0 %v878
  %v1488 = vpop.f32.mrf.mxu0
  %v1489 = vadd.f32 %v280, %v1488
  %v1490 = vpop.f32.mrf.mxu0
  %v1491 = vadd.f32 %v280, %v1490
  %1492 = vmatmul.bf16.gmra.mxu0 %v883
  %v1493 = vpop.f32.mrf.mxu0
  %v1494 = vadd.f32 %v280, %v1493
  %v1495 = vpop.f32.mrf.mxu0
  %v1496 = vadd.f32 %v280, %v1495
  %1497 = vmatmul.bf16.gmra.mxu0 %v888
  %v1498 = vpop.f32.mrf.mxu0
  %v1499 = vadd.f32 %v280, %v1498
  %v1500 = vpop.f32.mrf.mxu0
  %v1501 = vadd.f32 %v280, %v1500
  %1502 = vmatmul.bf16.gmra.mxu0 %v893
  %v1503 = vpop.f32.mrf.mxu0
  %v1504 = vadd.f32 %v280, %v1503
  %v1505 = vpop.f32.mrf.mxu0
  %v1506 = vadd.f32 %v280, %v1505
  %1507 = vmatmul.bf16.gmra.mxu0 %v898
  %v1508 = vpop.f32.mrf.mxu0
  %v1509 = vadd.f32 %v280, %v1508
  %v1510 = vpop.f32.mrf.mxu0
  %v1511 = vadd.f32 %v280, %v1510
  %1512 = vmatmul.bf16.gmra.mxu0 %v903
  %v1513 = vpop.f32.mrf.mxu0
  %v1514 = vadd.f32 %v280, %v1513
  %v1515 = vpop.f32.mrf.mxu0
  %v1516 = vadd.f32 %v280, %v1515
  %1517 = vmatmul.bf16.gmra.mxu0 %v908
  %v1518 = vpop.f32.mrf.mxu0
  %v1519 = vadd.f32 %v280, %v1518
  %v1520 = vpop.f32.mrf.mxu0
  %v1521 = vadd.f32 %v280, %v1520
  %1522 = vmatmul.bf16.gmra.mxu0 %v913
  %v1523 = vpop.f32.mrf.mxu0
  %v1524 = vadd.f32 %v280, %v1523
  %v1525 = vpop.f32.mrf.mxu0
  %v1526 = vadd.f32 %v280, %v1525
  %1527 = vmatmul.bf16.gmra.mxu0 %v918
  %v1528 = vpop.f32.mrf.mxu0
  %v1529 = vadd.f32 %v280, %v1528
  %v1530 = vpop.f32.mrf.mxu0
  %v1531 = vadd.f32 %v280, %v1530
  %1532 = vmatmul.bf16.gmra.mxu0 %v923
  %v1533 = vpop.f32.mrf.mxu0
  %v1534 = vadd.f32 %v280, %v1533
  %v1535 = vpop.f32.mrf.mxu0
  %v1536 = vadd.f32 %v280, %v1535
  %1537 = vmatmul.bf16.gmra.mxu0 %v928
  %v1538 = vpop.f32.mrf.mxu0
  %v1539 = vadd.f32 %v280, %v1538
  %v1540 = vpop.f32.mrf.mxu0
  %v1541 = vadd.f32 %v280, %v1540
  %1542 = vmatmul.bf16.gmra.mxu0 %v933
  %v1543 = vpop.f32.mrf.mxu0
  %v1544 = vadd.f32 %v280, %v1543
  %v1545 = vpop.f32.mrf.mxu0
  %v1546 = vadd.f32 %v280, %v1545
  %1547 = vmatmul.bf16.gmra.mxu0 %v938
  %v1548 = vpop.f32.mrf.mxu0
  %v1549 = vadd.f32 %v280, %v1548
  %v1550 = vpop.f32.mrf.mxu0
  %v1551 = vadd.f32 %v280, %v1550
  %1552 = vmatmul.bf16.gmra.mxu0 %v943
  %v1553 = vpop.f32.mrf.mxu0
  %v1554 = vadd.f32 %v280, %v1553
  %v1555 = vpop.f32.mrf.mxu0
  %v1556 = vadd.f32 %v280, %v1555
  %1557 = vmatmul.bf16.gmra.mxu0 %v948
  %v1558 = vpop.f32.mrf.mxu0
  %v1559 = vadd.f32 %v280, %v1558
  %v1560 = vpop.f32.mrf.mxu0
  %v1561 = vadd.f32 %v280, %v1560
  %1562 = vdwg.mxu0
  %1563 = vmatpush.bf16.msra.mxu0 %v1240
  %1564 = vmatpush.bf16.msra.mxu0 %v1239
  %1565 = vmatpush.bf16.msra.mxu0 %v1238
  %1566 = vmatpush.bf16.msra.mxu0 %v1237
  %1567 = vmatpush.bf16.msra.mxu0 %v1236
  %1568 = vmatpush.bf16.msra.mxu0 %v1235
  %1569 = vmatpush.bf16.msra.mxu0 %v1234
  %1570 = vmatpush.bf16.msra.mxu0 %v1233
  %1571 = vmatmul.bf16.gmra.mxu0 %v794
  %v1572 = vpop.f32.mrf.mxu0
  %v1573 = vadd.f32 %v1404, %v1572
  %v1574 = vpop.f32.mrf.mxu0
  %v1575 = vadd.f32 %v1406, %v1574
  %1576 = vmatmul.bf16.gmra.mxu0 %v799
  %v1577 = vpop.f32.mrf.mxu0
  %v1578 = vadd.f32 %v1409, %v1577
  %v1579 = vpop.f32.mrf.mxu0
  %v1580 = vadd.f32 %v1411, %v1579
  %1581 = vmatmul.bf16.gmra.mxu0 %v804
  %v1582 = vpop.f32.mrf.mxu0
  %v1583 = vadd.f32 %v1414, %v1582
  %v1584 = vpop.f32.mrf.mxu0
  %v1585 = vadd.f32 %v1416, %v1584
  %1586 = vmatmul.bf16.gmra.mxu0 %v809
  %v1587 = vpop.f32.mrf.mxu0
  %v1588 = vadd.f32 %v1419, %v1587
  %v1589 = vpop.f32.mrf.mxu0
  %v1590 = vadd.f32 %v1421, %v1589
  %1591 = vmatmul.bf16.gmra.mxu0 %v814
  %v1592 = vpop.f32.mrf.mxu0
  %v1593 = vadd.f32 %v1424, %v1592
  %v1594 = vpop.f32.mrf.mxu0
  %v1595 = vadd.f32 %v1426, %v1594
  %1596 = vmatmul.bf16.gmra.mxu0 %v819
  %v1597 = vpop.f32.mrf.mxu0
  %v1598 = vadd.f32 %v1429, %v1597
  %v1599 = vpop.f32.mrf.mxu0
  %v1600 = vadd.f32 %v1431, %v1599
  %1601 = vmatmul.bf16.gmra.mxu0 %v824
  %v1602 = vpop.f32.mrf.mxu0
  %v1603 = vadd.f32 %v1434, %v1602
  %v1604 = vpop.f32.mrf.mxu0
  %v1605 = vadd.f32 %v1436, %v1604
  %1606 = vmatmul.bf16.gmra.mxu0 %v829
  %v1607 = vpop.f32.mrf.mxu0
  %v1608 = vadd.f32 %v1439, %v1607
  %v1609 = vpop.f32.mrf.mxu0
  %v1610 = vadd.f32 %v1441, %v1609
  %1611 = vmatmul.bf16.gmra.mxu0 %v834
  %v1612 = vpop.f32.mrf.mxu0
  %v1613 = vadd.f32 %v1444, %v1612
  %v1614 = vpop.f32.mrf.mxu0
  %v1615 = vadd.f32 %v1446, %v1614
  %1616 = vmatmul.bf16.gmra.mxu0 %v839
  %v1617 = vpop.f32.mrf.mxu0
  %v1618 = vadd.f32 %v1449, %v1617
  %v1619 = vpop.f32.mrf.mxu0
  %v1620 = vadd.f32 %v1451, %v1619
  %1621 = vmatmul.bf16.gmra.mxu0 %v844
  %v1622 = vpop.f32.mrf.mxu0
  %v1623 = vadd.f32 %v1454, %v1622
  %v1624 = vpop.f32.mrf.mxu0
  %v1625 = vadd.f32 %v1456, %v1624
  %1626 = vmatmul.bf16.gmra.mxu0 %v849
  %v1627 = vpop.f32.mrf.mxu0
  %v1628 = vadd.f32 %v1459, %v1627
  %v1629 = vpop.f32.mrf.mxu0
  %v1630 = vadd.f32 %v1461, %v1629
  %1631 = vmatmul.bf16.gmra.mxu0 %v854
  %v1632 = vpop.f32.mrf.mxu0
  %v1633 = vadd.f32 %v1464, %v1632
  %v1634 = vpop.f32.mrf.mxu0
  %v1635 = vadd.f32 %v1466, %v1634
  %1636 = vmatmul.bf16.gmra.mxu0 %v859
  %v1637 = vpop.f32.mrf.mxu0
  %v1638 = vadd.f32 %v1469, %v1637
  %v1639 = vpop.f32.mrf.mxu0
  %v1640 = vadd.f32 %v1471, %v1639
  %1641 = vmatmul.bf16.gmra.mxu0 %v864
  %v1642 = vpop.f32.mrf.mxu0
  %v1643 = vadd.f32 %v1474, %v1642
  %v1644 = vpop.f32.mrf.mxu0
  %v1645 = vadd.f32 %v1476, %v1644
  %1646 = vmatmul.bf16.gmra.mxu0 %v869
  %v1647 = vpop.f32.mrf.mxu0
  %v1648 = vadd.f32 %v1479, %v1647
  %v1649 = vpop.f32.mrf.mxu0
  %v1650 = vadd.f32 %v1481, %v1649
  %1651 = vmatmul.bf16.gmra.mxu0 %v874
  %v1652 = vpop.f32.mrf.mxu0
  %v1653 = vadd.f32 %v1484, %v1652
  %v1654 = vpop.f32.mrf.mxu0
  %v1655 = vadd.f32 %v1486, %v1654
  %1656 = vmatmul.bf16.gmra.mxu0 %v879
  %v1657 = vpop.f32.mrf.mxu0
  %v1658 = vadd.f32 %v1489, %v1657
  %v1659 = vpop.f32.mrf.mxu0
  %v1660 = vadd.f32 %v1491, %v1659
  %1661 = vmatmul.bf16.gmra.mxu0 %v884
  %v1662 = vpop.f32.mrf.mxu0
  %v1663 = vadd.f32 %v1494, %v1662
  %v1664 = vpop.f32.mrf.mxu0
  %v1665 = vadd.f32 %v1496, %v1664
  %1666 = vmatmul.bf16.gmra.mxu0 %v889
  %v1667 = vpop.f32.mrf.mxu0
  %v1668 = vadd.f32 %v1499, %v1667
  %v1669 = vpop.f32.mrf.mxu0
  %v1670 = vadd.f32 %v1501, %v1669
  %1671 = vmatmul.bf16.gmra.mxu0 %v894
  %v1672 = vpop.f32.mrf.mxu0
  %v1673 = vadd.f32 %v1504, %v1672
  %v1674 = vpop.f32.mrf.mxu0
  %v1675 = vadd.f32 %v1506, %v1674
  %1676 = vmatmul.bf16.gmra.mxu0 %v899
  %v1677 = vpop.f32.mrf.mxu0
  %v1678 = vadd.f32 %v1509, %v1677
  %v1679 = vpop.f32.mrf.mxu0
  %v1680 = vadd.f32 %v1511, %v1679
  %1681 = vmatmul.bf16.gmra.mxu0 %v904
  %v1682 = vpop.f32.mrf.mxu0
  %v1683 = vadd.f32 %v1514, %v1682
  %v1684 = vpop.f32.mrf.mxu0
  %v1685 = vadd.f32 %v1516, %v1684
  %1686 = vmatmul.bf16.gmra.mxu0 %v909
  %v1687 = vpop.f32.mrf.mxu0
  %v1688 = vadd.f32 %v1519, %v1687
  %v1689 = vpop.f32.mrf.mxu0
  %v1690 = vadd.f32 %v1521, %v1689
  %1691 = vmatmul.bf16.gmra.mxu0 %v914
  %v1692 = vpop.f32.mrf.mxu0
  %v1693 = vadd.f32 %v1524, %v1692
  %v1694 = vpop.f32.mrf.mxu0
  %v1695 = vadd.f32 %v1526, %v1694
  %1696 = vmatmul.bf16.gmra.mxu0 %v919
  %v1697 = vpop.f32.mrf.mxu0
  %v1698 = vadd.f32 %v1529, %v1697
  %v1699 = vpop.f32.mrf.mxu0
  %v1700 = vadd.f32 %v1531, %v1699
  %1701 = vmatmul.bf16.gmra.mxu0 %v924
  %v1702 = vpop.f32.mrf.mxu0
  %v1703 = vadd.f32 %v1534, %v1702
  %v1704 = vpop.f32.mrf.mxu0
  %v1705 = vadd.f32 %v1536, %v1704
  %1706 = vmatmul.bf16.gmra.mxu0 %v929
  %v1707 = vpop.f32.mrf.mxu0
  %v1708 = vadd.f32 %v1539, %v1707
  %v1709 = vpop.f32.mrf.mxu0
  %v1710 = vadd.f32 %v1541, %v1709
  %1711 = vmatmul.bf16.gmra.mxu0 %v934
  %v1712 = vpop.f32.mrf.mxu0
  %v1713 = vadd.f32 %v1544, %v1712
  %v1714 = vpop.f32.mrf.mxu0
  %v1715 = vadd.f32 %v1546, %v1714
  %1716 = vmatmul.bf16.gmra.mxu0 %v939
  %v1717 = vpop.f32.mrf.mxu0
  %v1718 = vadd.f32 %v1549, %v1717
  %v1719 = vpop.f32.mrf.mxu0
  %v1720 = vadd.f32 %v1551, %v1719
  %1721 = vmatmul.bf16.gmra.mxu0 %v944
  %v1722 = vpop.f32.mrf.mxu0
  %v1723 = vadd.f32 %v1554, %v1722
  %v1724 = vpop.f32.mrf.mxu0
  %v1725 = vadd.f32 %v1556, %v1724
  %1726 = vmatmul.bf16.gmra.mxu0 %v949
  %v1727 = vpop.f32.mrf.mxu0
  %v1728 = vadd.f32 %v1559, %v1727
  %v1729 = vpop.f32.mrf.mxu0
  %v1730 = vadd.f32 %v1561, %v1729
  %1731 = vdwg.mxu0
  %1732 = vmatpush.bf16.msra.mxu0 %v1248
  %1733 = vmatpush.bf16.msra.mxu0 %v1247
  %1734 = vmatpush.bf16.msra.mxu0 %v1246
  %1735 = vmatpush.bf16.msra.mxu0 %v1245
  %1736 = vmatpush.bf16.msra.mxu0 %v1244
  %1737 = vmatpush.bf16.msra.mxu0 %v1243
  %1738 = vmatpush.bf16.msra.mxu0 %v1242
  %1739 = vmatpush.bf16.msra.mxu0 %v1241
  %1740 = vmatmul.bf16.gmra.mxu0 %v795
  %v1741 = vpop.f32.mrf.mxu0
  %v1742 = vadd.f32 %v1573, %v1741
  %v1743 = vpop.f32.mrf.mxu0
  %v1744 = vadd.f32 %v1575, %v1743
  %1745 = vmatmul.bf16.gmra.mxu0 %v800
  %v1746 = vpop.f32.mrf.mxu0
  %v1747 = vadd.f32 %v1578, %v1746
  %v1748 = vpop.f32.mrf.mxu0
  %v1749 = vadd.f32 %v1580, %v1748
  %1750 = vmatmul.bf16.gmra.mxu0 %v805
  %v1751 = vpop.f32.mrf.mxu0
  %v1752 = vadd.f32 %v1583, %v1751
  %v1753 = vpop.f32.mrf.mxu0
  %v1754 = vadd.f32 %v1585, %v1753
  %1755 = vmatmul.bf16.gmra.mxu0 %v810
  %v1756 = vpop.f32.mrf.mxu0
  %v1757 = vadd.f32 %v1588, %v1756
  %v1758 = vpop.f32.mrf.mxu0
  %v1759 = vadd.f32 %v1590, %v1758
  %1760 = vmatmul.bf16.gmra.mxu0 %v815
  %v1761 = vpop.f32.mrf.mxu0
  %v1762 = vadd.f32 %v1593, %v1761
  %v1763 = vpop.f32.mrf.mxu0
  %v1764 = vadd.f32 %v1595, %v1763
  %1765 = vmatmul.bf16.gmra.mxu0 %v820
  %v1766 = vpop.f32.mrf.mxu0
  %v1767 = vadd.f32 %v1598, %v1766
  %v1768 = vpop.f32.mrf.mxu0
  %v1769 = vadd.f32 %v1600, %v1768
  %1770 = vmatmul.bf16.gmra.mxu0 %v825
  %v1771 = vpop.f32.mrf.mxu0
  %v1772 = vadd.f32 %v1603, %v1771
  %v1773 = vpop.f32.mrf.mxu0
  %v1774 = vadd.f32 %v1605, %v1773
  %1775 = vmatmul.bf16.gmra.mxu0 %v830
  %v1776 = vpop.f32.mrf.mxu0
  %v1777 = vadd.f32 %v1608, %v1776
  %v1778 = vpop.f32.mrf.mxu0
  %v1779 = vadd.f32 %v1610, %v1778
  %1780 = vmatmul.bf16.gmra.mxu0 %v835
  %v1781 = vpop.f32.mrf.mxu0
  %v1782 = vadd.f32 %v1613, %v1781
  %v1783 = vpop.f32.mrf.mxu0
  %v1784 = vadd.f32 %v1615, %v1783
  %1785 = vmatmul.bf16.gmra.mxu0 %v840
  %v1786 = vpop.f32.mrf.mxu0
  %v1787 = vadd.f32 %v1618, %v1786
  %v1788 = vpop.f32.mrf.mxu0
  %v1789 = vadd.f32 %v1620, %v1788
  %1790 = vmatmul.bf16.gmra.mxu0 %v845
  %v1791 = vpop.f32.mrf.mxu0
  %v1792 = vadd.f32 %v1623, %v1791
  %v1793 = vpop.f32.mrf.mxu0
  %v1794 = vadd.f32 %v1625, %v1793
  %1795 = vmatmul.bf16.gmra.mxu0 %v850
  %v1796 = vpop.f32.mrf.mxu0
  %v1797 = vadd.f32 %v1628, %v1796
  %v1798 = vpop.f32.mrf.mxu0
  %v1799 = vadd.f32 %v1630, %v1798
  %1800 = vmatmul.bf16.gmra.mxu0 %v855
  %v1801 = vpop.f32.mrf.mxu0
  %v1802 = vadd.f32 %v1633, %v1801
  %v1803 = vpop.f32.mrf.mxu0
  %v1804 = vadd.f32 %v1635, %v1803
  %1805 = vmatmul.bf16.gmra.mxu0 %v860
  %v1806 = vpop.f32.mrf.mxu0
  %v1807 = vadd.f32 %v1638, %v1806
  %v1808 = vpop.f32.mrf.mxu0
  %v1809 = vadd.f32 %v1640, %v1808
  %1810 = vmatmul.bf16.gmra.mxu0 %v865
  %v1811 = vpop.f32.mrf.mxu0
  %v1812 = vadd.f32 %v1643, %v1811
  %v1813 = vpop.f32.mrf.mxu0
  %v1814 = vadd.f32 %v1645, %v1813
  %1815 = vmatmul.bf16.gmra.mxu0 %v870
  %v1816 = vpop.f32.mrf.mxu0
  %v1817 = vadd.f32 %v1648, %v1816
  %v1818 = vpop.f32.mrf.mxu0
  %v1819 = vadd.f32 %v1650, %v1818
  %1820 = vmatmul.bf16.gmra.mxu0 %v875
  %v1821 = vpop.f32.mrf.mxu0
  %v1822 = vadd.f32 %v1653, %v1821
  %v1823 = vpop.f32.mrf.mxu0
  %v1824 = vadd.f32 %v1655, %v1823
  %1825 = vmatmul.bf16.gmra.mxu0 %v880
  %v1826 = vpop.f32.mrf.mxu0
  %v1827 = vadd.f32 %v1658, %v1826
  %v1828 = vpop.f32.mrf.mxu0
  %v1829 = vadd.f32 %v1660, %v1828
  %1830 = vmatmul.bf16.gmra.mxu0 %v885
  %v1831 = vpop.f32.mrf.mxu0
  %v1832 = vadd.f32 %v1663, %v1831
  %v1833 = vpop.f32.mrf.mxu0
  %v1834 = vadd.f32 %v1665, %v1833
  %1835 = vmatmul.bf16.gmra.mxu0 %v890
  %v1836 = vpop.f32.mrf.mxu0
  %v1837 = vadd.f32 %v1668, %v1836
  %v1838 = vpop.f32.mrf.mxu0
  %v1839 = vadd.f32 %v1670, %v1838
  %1840 = vmatmul.bf16.gmra.mxu0 %v895
  %v1841 = vpop.f32.mrf.mxu0
  %v1842 = vadd.f32 %v1673, %v1841
  %v1843 = vpop.f32.mrf.mxu0
  %v1844 = vadd.f32 %v1675, %v1843
  %1845 = vmatmul.bf16.gmra.mxu0 %v900
  %v1846 = vpop.f32.mrf.mxu0
  %v1847 = vadd.f32 %v1678, %v1846
  %v1848 = vpop.f32.mrf.mxu0
  %v1849 = vadd.f32 %v1680, %v1848
  %1850 = vmatmul.bf16.gmra.mxu0 %v905
  %v1851 = vpop.f32.mrf.mxu0
  %v1852 = vadd.f32 %v1683, %v1851
  %v1853 = vpop.f32.mrf.mxu0
  %v1854 = vadd.f32 %v1685, %v1853
  %1855 = vmatmul.bf16.gmra.mxu0 %v910
  %v1856 = vpop.f32.mrf.mxu0
  %v1857 = vadd.f32 %v1688, %v1856
  %v1858 = vpop.f32.mrf.mxu0
  %v1859 = vadd.f32 %v1690, %v1858
  %1860 = vmatmul.bf16.gmra.mxu0 %v915
  %v1861 = vpop.f32.mrf.mxu0
  %v1862 = vadd.f32 %v1693, %v1861
  %v1863 = vpop.f32.mrf.mxu0
  %v1864 = vadd.f32 %v1695, %v1863
  %1865 = vmatmul.bf16.gmra.mxu0 %v920
  %v1866 = vpop.f32.mrf.mxu0
  %v1867 = vadd.f32 %v1698, %v1866
  %v1868 = vpop.f32.mrf.mxu0
  %v1869 = vadd.f32 %v1700, %v1868
  %1870 = vmatmul.bf16.gmra.mxu0 %v925
  %v1871 = vpop.f32.mrf.mxu0
  %v1872 = vadd.f32 %v1703, %v1871
  %v1873 = vpop.f32.mrf.mxu0
  %v1874 = vadd.f32 %v1705, %v1873
  %1875 = vmatmul.bf16.gmra.mxu0 %v930
  %v1876 = vpop.f32.mrf.mxu0
  %v1877 = vadd.f32 %v1708, %v1876
  %v1878 = vpop.f32.mrf.mxu0
  %v1879 = vadd.f32 %v1710, %v1878
  %1880 = vmatmul.bf16.gmra.mxu0 %v935
  %v1881 = vpop.f32.mrf.mxu0
  %v1882 = vadd.f32 %v1713, %v1881
  %v1883 = vpop.f32.mrf.mxu0
  %v1884 = vadd.f32 %v1715, %v1883
  %1885 = vmatmul.bf16.gmra.mxu0 %v940
  %v1886 = vpop.f32.mrf.mxu0
  %v1887 = vadd.f32 %v1718, %v1886
  %v1888 = vpop.f32.mrf.mxu0
  %v1889 = vadd.f32 %v1720, %v1888
  %1890 = vmatmul.bf16.gmra.mxu0 %v945
  %v1891 = vpop.f32.mrf.mxu0
  %v1892 = vadd.f32 %v1723, %v1891
  %v1893 = vpop.f32.mrf.mxu0
  %v1894 = vadd.f32 %v1725, %v1893
  %1895 = vmatmul.bf16.gmra.mxu0 %v950
  %v1896 = vpop.f32.mrf.mxu0
  %v1897 = vadd.f32 %v1728, %v1896
  %v1898 = vpop.f32.mrf.mxu0
  %v1899 = vadd.f32 %v1730, %v1898
  %1900 = vdwg.mxu0
  %1901 = vmatpush.bf16.msra.mxu0 %v1256
  %1902 = vmatpush.bf16.msra.mxu0 %v1255
  %1903 = vmatpush.bf16.msra.mxu0 %v1254
  %1904 = vmatpush.bf16.msra.mxu0 %v1253
  %1905 = vmatpush.bf16.msra.mxu0 %v1252
  %1906 = vmatpush.bf16.msra.mxu0 %v1251
  %1907 = vmatpush.bf16.msra.mxu0 %v1250
  %1908 = vmatpush.bf16.msra.mxu0 %v1249
  %1909 = vmatmul.bf16.gmra.mxu0 %v796
  %v1910 = vpop.f32.mrf.mxu0
  %v1911 = vadd.f32 %v1742, %v1910
  %v1912 = vpop.f32.mrf.mxu0
  %v1913 = vadd.f32 %v1744, %v1912
  %1914 = vmatmul.bf16.gmra.mxu0 %v801
  %v1915 = vpop.f32.mrf.mxu0
  %v1916 = vadd.f32 %v1747, %v1915
  %v1917 = vpop.f32.mrf.mxu0
  %v1918 = vadd.f32 %v1749, %v1917
  %1919 = vmatmul.bf16.gmra.mxu0 %v806
  %v1920 = vpop.f32.mrf.mxu0
  %v1921 = vadd.f32 %v1752, %v1920
  %v1922 = vpop.f32.mrf.mxu0
  %v1923 = vadd.f32 %v1754, %v1922
  %1924 = vmatmul.bf16.gmra.mxu0 %v811
  %v1925 = vpop.f32.mrf.mxu0
  %v1926 = vadd.f32 %v1757, %v1925
  %v1927 = vpop.f32.mrf.mxu0
  %v1928 = vadd.f32 %v1759, %v1927
  %1929 = vmatmul.bf16.gmra.mxu0 %v816
  %v1930 = vpop.f32.mrf.mxu0
  %v1931 = vadd.f32 %v1762, %v1930
  %v1932 = vpop.f32.mrf.mxu0
  %v1933 = vadd.f32 %v1764, %v1932
  %1934 = vmatmul.bf16.gmra.mxu0 %v821
  %v1935 = vpop.f32.mrf.mxu0
  %v1936 = vadd.f32 %v1767, %v1935
  %v1937 = vpop.f32.mrf.mxu0
  %v1938 = vadd.f32 %v1769, %v1937
  %1939 = vmatmul.bf16.gmra.mxu0 %v826
  %v1940 = vpop.f32.mrf.mxu0
  %v1941 = vadd.f32 %v1772, %v1940
  %v1942 = vpop.f32.mrf.mxu0
  %v1943 = vadd.f32 %v1774, %v1942
  %1944 = vmatmul.bf16.gmra.mxu0 %v831
  %v1945 = vpop.f32.mrf.mxu0
  %v1946 = vadd.f32 %v1777, %v1945
  %v1947 = vpop.f32.mrf.mxu0
  %v1948 = vadd.f32 %v1779, %v1947
  %1949 = vmatmul.bf16.gmra.mxu0 %v836
  %v1950 = vpop.f32.mrf.mxu0
  %v1951 = vadd.f32 %v1782, %v1950
  %v1952 = vpop.f32.mrf.mxu0
  %v1953 = vadd.f32 %v1784, %v1952
  %1954 = vmatmul.bf16.gmra.mxu0 %v841
  %v1955 = vpop.f32.mrf.mxu0
  %v1956 = vadd.f32 %v1787, %v1955
  %v1957 = vpop.f32.mrf.mxu0
  %v1958 = vadd.f32 %v1789, %v1957
  %1959 = vmatmul.bf16.gmra.mxu0 %v846
  %v1960 = vpop.f32.mrf.mxu0
  %v1961 = vadd.f32 %v1792, %v1960
  %v1962 = vpop.f32.mrf.mxu0
  %v1963 = vadd.f32 %v1794, %v1962
  %1964 = vmatmul.bf16.gmra.mxu0 %v851
  %v1965 = vpop.f32.mrf.mxu0
  %v1966 = vadd.f32 %v1797, %v1965
  %v1967 = vpop.f32.mrf.mxu0
  %v1968 = vadd.f32 %v1799, %v1967
  %1969 = vmatmul.bf16.gmra.mxu0 %v856
  %v1970 = vpop.f32.mrf.mxu0
  %v1971 = vadd.f32 %v1802, %v1970
  %v1972 = vpop.f32.mrf.mxu0
  %v1973 = vadd.f32 %v1804, %v1972
  %1974 = vmatmul.bf16.gmra.mxu0 %v861
  %v1975 = vpop.f32.mrf.mxu0
  %v1976 = vadd.f32 %v1807, %v1975
  %v1977 = vpop.f32.mrf.mxu0
  %v1978 = vadd.f32 %v1809, %v1977
  %1979 = vmatmul.bf16.gmra.mxu0 %v866
  %v1980 = vpop.f32.mrf.mxu0
  %v1981 = vadd.f32 %v1812, %v1980
  %v1982 = vpop.f32.mrf.mxu0
  %v1983 = vadd.f32 %v1814, %v1982
  %1984 = vmatmul.bf16.gmra.mxu0 %v871
  %v1985 = vpop.f32.mrf.mxu0
  %v1986 = vadd.f32 %v1817, %v1985
  %v1987 = vpop.f32.mrf.mxu0
  %v1988 = vadd.f32 %v1819, %v1987
  %1989 = vmatmul.bf16.gmra.mxu0 %v876
  %v1990 = vpop.f32.mrf.mxu0
  %v1991 = vadd.f32 %v1822, %v1990
  %v1992 = vpop.f32.mrf.mxu0
  %v1993 = vadd.f32 %v1824, %v1992
  %1994 = vmatmul.bf16.gmra.mxu0 %v881
  %v1995 = vpop.f32.mrf.mxu0
  %v1996 = vadd.f32 %v1827, %v1995
  %v1997 = vpop.f32.mrf.mxu0
  %v1998 = vadd.f32 %v1829, %v1997
  %1999 = vmatmul.bf16.gmra.mxu0 %v886
  %v2000 = vpop.f32.mrf.mxu0
  %v2001 = vadd.f32 %v1832, %v2000
  %v2002 = vpop.f32.mrf.mxu0
  %v2003 = vadd.f32 %v1834, %v2002
  %2004 = vmatmul.bf16.gmra.mxu0 %v891
  %v2005 = vpop.f32.mrf.mxu0
  %v2006 = vadd.f32 %v1837, %v2005
  %v2007 = vpop.f32.mrf.mxu0
  %v2008 = vadd.f32 %v1839, %v2007
  %2009 = vmatmul.bf16.gmra.mxu0 %v896
  %v2010 = vpop.f32.mrf.mxu0
  %v2011 = vadd.f32 %v1842, %v2010
  %v2012 = vpop.f32.mrf.mxu0
  %v2013 = vadd.f32 %v1844, %v2012
  %2014 = vmatmul.bf16.gmra.mxu0 %v901
  %v2015 = vpop.f32.mrf.mxu0
  %v2016 = vadd.f32 %v1847, %v2015
  %v2017 = vpop.f32.mrf.mxu0
  %v2018 = vadd.f32 %v1849, %v2017
  %2019 = vmatmul.bf16.gmra.mxu0 %v906
  %v2020 = vpop.f32.mrf.mxu0
  %v2021 = vadd.f32 %v1852, %v2020
  %v2022 = vpop.f32.mrf.mxu0
  %v2023 = vadd.f32 %v1854, %v2022
  %2024 = vmatmul.bf16.gmra.mxu0 %v911
  %v2025 = vpop.f32.mrf.mxu0
  %v2026 = vadd.f32 %v1857, %v2025
  %v2027 = vpop.f32.mrf.mxu0
  %v2028 = vadd.f32 %v1859, %v2027
  %2029 = vmatmul.bf16.gmra.mxu0 %v916
  %v2030 = vpop.f32.mrf.mxu0
  %v2031 = vadd.f32 %v1862, %v2030
  %v2032 = vpop.f32.mrf.mxu0
  %v2033 = vadd.f32 %v1864, %v2032
  %2034 = vmatmul.bf16.gmra.mxu0 %v921
  %v2035 = vpop.f32.mrf.mxu0
  %v2036 = vadd.f32 %v1867, %v2035
  %v2037 = vpop.f32.mrf.mxu0
  %v2038 = vadd.f32 %v1869, %v2037
  %2039 = vmatmul.bf16.gmra.mxu0 %v926
  %v2040 = vpop.f32.mrf.mxu0
  %v2041 = vadd.f32 %v1872, %v2040
  %v2042 = vpop.f32.mrf.mxu0
  %v2043 = vadd.f32 %v1874, %v2042
  %2044 = vmatmul.bf16.gmra.mxu0 %v931
  %v2045 = vpop.f32.mrf.mxu0
  %v2046 = vadd.f32 %v1877, %v2045
  %v2047 = vpop.f32.mrf.mxu0
  %v2048 = vadd.f32 %v1879, %v2047
  %2049 = vmatmul.bf16.gmra.mxu0 %v936
  %v2050 = vpop.f32.mrf.mxu0
  %v2051 = vadd.f32 %v1882, %v2050
  %v2052 = vpop.f32.mrf.mxu0
  %v2053 = vadd.f32 %v1884, %v2052
  %2054 = vmatmul.bf16.gmra.mxu0 %v941
  %v2055 = vpop.f32.mrf.mxu0
  %v2056 = vadd.f32 %v1887, %v2055
  %v2057 = vpop.f32.mrf.mxu0
  %v2058 = vadd.f32 %v1889, %v2057
  %2059 = vmatmul.bf16.gmra.mxu0 %v946
  %v2060 = vpop.f32.mrf.mxu0
  %v2061 = vadd.f32 %v1892, %v2060
  %v2062 = vpop.f32.mrf.mxu0
  %v2063 = vadd.f32 %v1894, %v2062
  %2064 = vmatmul.bf16.gmra.mxu0 %v951
  %v2065 = vpop.f32.mrf.mxu0
  %v2066 = vadd.f32 %v1897, %v2065
  %v2067 = vpop.f32.mrf.mxu0
  %v2068 = vadd.f32 %v1899, %v2067
  %2069 = vdwg.mxu0
  %2070 = vmatpush.bf16.msra.mxu0 0
  %2071 = vmatpush.bf16.msra.mxu0 0
  %2072 = vmatpush.bf16.msra.mxu0 0
  %2073 = vmatpush.bf16.msra.mxu0 0
  %2074 = vmatpush.bf16.msra.mxu0 %v1260
  %2075 = vmatpush.bf16.msra.mxu0 %v1259
  %2076 = vmatpush.bf16.msra.mxu0 %v1258
  %2077 = vmatpush.bf16.msra.mxu0 %v1257
  %2078 = vmatmul.bf16.gmra.mxu0 %v1299
  %v2079 = vpop.f32.mrf.mxu0
  %v2080 = vadd.f32 %v1911, %v2079
  %v2081 = vpop.f32.mrf.mxu0
  %v2082 = vadd.f32 %v1913, %v2081
  %2083 = vmatmul.bf16.gmra.mxu0 %v1302
  %v2084 = vpop.f32.mrf.mxu0
  %v2085 = vadd.f32 %v1916, %v2084
  %v2086 = vpop.f32.mrf.mxu0
  %v2087 = vadd.f32 %v1918, %v2086
  %2088 = vmatmul.bf16.gmra.mxu0 %v1305
  %v2089 = vpop.f32.mrf.mxu0
  %v2090 = vadd.f32 %v1921, %v2089
  %v2091 = vpop.f32.mrf.mxu0
  %v2092 = vadd.f32 %v1923, %v2091
  %2093 = vmatmul.bf16.gmra.mxu0 %v1308
  %v2094 = vpop.f32.mrf.mxu0
  %v2095 = vadd.f32 %v1926, %v2094
  %v2096 = vpop.f32.mrf.mxu0
  %v2097 = vadd.f32 %v1928, %v2096
  %2098 = vmatmul.bf16.gmra.mxu0 %v1311
  %v2099 = vpop.f32.mrf.mxu0
  %v2100 = vadd.f32 %v1931, %v2099
  %v2101 = vpop.f32.mrf.mxu0
  %v2102 = vadd.f32 %v1933, %v2101
  %2103 = vmatmul.bf16.gmra.mxu0 %v1314
  %v2104 = vpop.f32.mrf.mxu0
  %v2105 = vadd.f32 %v1936, %v2104
  %v2106 = vpop.f32.mrf.mxu0
  %v2107 = vadd.f32 %v1938, %v2106
  %2108 = vmatmul.bf16.gmra.mxu0 %v1317
  %v2109 = vpop.f32.mrf.mxu0
  %v2110 = vadd.f32 %v1941, %v2109
  %v2111 = vpop.f32.mrf.mxu0
  %v2112 = vadd.f32 %v1943, %v2111
  %2113 = vmatmul.bf16.gmra.mxu0 %v1320
  %v2114 = vpop.f32.mrf.mxu0
  %v2115 = vadd.f32 %v1946, %v2114
  %v2116 = vpop.f32.mrf.mxu0
  %v2117 = vadd.f32 %v1948, %v2116
  %2118 = vmatmul.bf16.gmra.mxu0 %v1323
  %v2119 = vpop.f32.mrf.mxu0
  %v2120 = vadd.f32 %v1951, %v2119
  %v2121 = vpop.f32.mrf.mxu0
  %v2122 = vadd.f32 %v1953, %v2121
  %2123 = vmatmul.bf16.gmra.mxu0 %v1326
  %v2124 = vpop.f32.mrf.mxu0
  %v2125 = vadd.f32 %v1956, %v2124
  %v2126 = vpop.f32.mrf.mxu0
  %v2127 = vadd.f32 %v1958, %v2126
  %2128 = vmatmul.bf16.gmra.mxu0 %v1329
  %v2129 = vpop.f32.mrf.mxu0
  %v2130 = vadd.f32 %v1961, %v2129
  %v2131 = vpop.f32.mrf.mxu0
  %v2132 = vadd.f32 %v1963, %v2131
  %2133 = vmatmul.bf16.gmra.mxu0 %v1332
  %v2134 = vpop.f32.mrf.mxu0
  %v2135 = vadd.f32 %v1966, %v2134
  %v2136 = vpop.f32.mrf.mxu0
  %v2137 = vadd.f32 %v1968, %v2136
  %2138 = vmatmul.bf16.gmra.mxu0 %v1335
  %v2139 = vpop.f32.mrf.mxu0
  %v2140 = vadd.f32 %v1971, %v2139
  %v2141 = vpop.f32.mrf.mxu0
  %v2142 = vadd.f32 %v1973, %v2141
  %2143 = vmatmul.bf16.gmra.mxu0 %v1338
  %v2144 = vpop.f32.mrf.mxu0
  %v2145 = vadd.f32 %v1976, %v2144
  %v2146 = vpop.f32.mrf.mxu0
  %v2147 = vadd.f32 %v1978, %v2146
  %2148 = vmatmul.bf16.gmra.mxu0 %v1341
  %v2149 = vpop.f32.mrf.mxu0
  %v2150 = vadd.f32 %v1981, %v2149
  %v2151 = vpop.f32.mrf.mxu0
  %v2152 = vadd.f32 %v1983, %v2151
  %2153 = vmatmul.bf16.gmra.mxu0 %v1344
  %v2154 = vpop.f32.mrf.mxu0
  %v2155 = vadd.f32 %v1986, %v2154
  %v2156 = vpop.f32.mrf.mxu0
  %v2157 = vadd.f32 %v1988, %v2156
  %2158 = vmatmul.bf16.gmra.mxu0 %v1347
  %v2159 = vpop.f32.mrf.mxu0
  %v2160 = vadd.f32 %v1991, %v2159
  %v2161 = vpop.f32.mrf.mxu0
  %v2162 = vadd.f32 %v1993, %v2161
  %2163 = vmatmul.bf16.gmra.mxu0 %v1350
  %v2164 = vpop.f32.mrf.mxu0
  %v2165 = vadd.f32 %v1996, %v2164
  %v2166 = vpop.f32.mrf.mxu0
  %v2167 = vadd.f32 %v1998, %v2166
  %2168 = vmatmul.bf16.gmra.mxu0 %v1353
  %v2169 = vpop.f32.mrf.mxu0
  %v2170 = vadd.f32 %v2001, %v2169
  %v2171 = vpop.f32.mrf.mxu0
  %v2172 = vadd.f32 %v2003, %v2171
  %2173 = vmatmul.bf16.gmra.mxu0 %v1356
  %v2174 = vpop.f32.mrf.mxu0
  %v2175 = vadd.f32 %v2006, %v2174
  %v2176 = vpop.f32.mrf.mxu0
  %v2177 = vadd.f32 %v2008, %v2176
  %2178 = vmatmul.bf16.gmra.mxu0 %v1359
  %v2179 = vpop.f32.mrf.mxu0
  %v2180 = vadd.f32 %v2011, %v2179
  %v2181 = vpop.f32.mrf.mxu0
  %v2182 = vadd.f32 %v2013, %v2181
  %2183 = vmatmul.bf16.gmra.mxu0 %v1362
  %v2184 = vpop.f32.mrf.mxu0
  %v2185 = vadd.f32 %v2016, %v2184
  %v2186 = vpop.f32.mrf.mxu0
  %v2187 = vadd.f32 %v2018, %v2186
  %2188 = vmatmul.bf16.gmra.mxu0 %v1365
  %v2189 = vpop.f32.mrf.mxu0
  %v2190 = vadd.f32 %v2021, %v2189
  %v2191 = vpop.f32.mrf.mxu0
  %v2192 = vadd.f32 %v2023, %v2191
  %2193 = vmatmul.bf16.gmra.mxu0 %v1368
  %v2194 = vpop.f32.mrf.mxu0
  %v2195 = vadd.f32 %v2026, %v2194
  %v2196 = vpop.f32.mrf.mxu0
  %v2197 = vadd.f32 %v2028, %v2196
  %2198 = vmatmul.bf16.gmra.mxu0 %v1371
  %v2199 = vpop.f32.mrf.mxu0
  %v2200 = vadd.f32 %v2031, %v2199
  %v2201 = vpop.f32.mrf.mxu0
  %v2202 = vadd.f32 %v2033, %v2201
  %2203 = vmatmul.bf16.gmra.mxu0 %v1374
  %v2204 = vpop.f32.mrf.mxu0
  %v2205 = vadd.f32 %v2036, %v2204
  %v2206 = vpop.f32.mrf.mxu0
  %v2207 = vadd.f32 %v2038, %v2206
  %2208 = vmatmul.bf16.gmra.mxu0 %v1377
  %v2209 = vpop.f32.mrf.mxu0
  %v2210 = vadd.f32 %v2041, %v2209
  %v2211 = vpop.f32.mrf.mxu0
  %v2212 = vadd.f32 %v2043, %v2211
  %2213 = vmatmul.bf16.gmra.mxu0 %v1380
  %v2214 = vpop.f32.mrf.mxu0
  %v2215 = vadd.f32 %v2046, %v2214
  %v2216 = vpop.f32.mrf.mxu0
  %v2217 = vadd.f32 %v2048, %v2216
  %2218 = vmatmul.bf16.gmra.mxu0 %v1383
  %v2219 = vpop.f32.mrf.mxu0
  %v2220 = vadd.f32 %v2051, %v2219
  %v2221 = vpop.f32.mrf.mxu0
  %v2222 = vadd.f32 %v2053, %v2221
  %2223 = vmatmul.bf16.gmra.mxu0 %v1386
  %v2224 = vpop.f32.mrf.mxu0
  %v2225 = vadd.f32 %v2056, %v2224
  %v2226 = vpop.f32.mrf.mxu0
  %v2227 = vadd.f32 %v2058, %v2226
  %2228 = vmatmul.bf16.gmra.mxu0 %v1389
  %v2229 = vpop.f32.mrf.mxu0
  %v2230 = vadd.f32 %v2061, %v2229
  %v2231 = vpop.f32.mrf.mxu0
  %v2232 = vadd.f32 %v2063, %v2231
  %2233 = vmatmul.bf16.gmra.mxu0 %v1392
  %v2234 = vpop.f32.mrf.mxu0
  %v2235 = vadd.f32 %v2066, %v2234
  %v2236 = vpop.f32.mrf.mxu0
  %v2237 = vadd.f32 %v2068, %v2236
  %2238 = vdwg.mxu0
  %2239 = vst [vmem:[%s3] sm:$0xff] %v2080
  %2240 = vst [vmem:[%s3 + $0x8] sm:$0xff] %v2082
  %2241 = vst [vmem:[%s3 + $0x10] sm:$0xff] %v2085
  %2242 = vst [vmem:[%s3 + $0x18] sm:$0xff] %v2087
  %2243 = vst [vmem:[%s3 + $0x20] sm:$0xff] %v2090
  %2244 = vst [vmem:[%s3 + $0x28] sm:$0xff] %v2092
  %2245 = vst [vmem:[%s3 + $0x30] sm:$0xff] %v2095
  %2246 = vst [vmem:[%s3 + $0x38] sm:$0xff] %v2097
  %2247 = vst [vmem:[%s3 + $0x40] sm:$0xff] %v2100
  %2248 = vst [vmem:[%s3 + $0x48] sm:$0xff] %v2102
  %2249 = vst [vmem:[%s3 + $0x50] sm:$0xff] %v2105
  %2250 = vst [vmem:[%s3 + $0x58] sm:$0xff] %v2107
  %2251 = vst [vmem:[%s3 + $0x60] sm:$0xff] %v2110
  %2252 = vst [vmem:[%s3 + $0x68] sm:$0xff] %v2112
  %2253 = vst [vmem:[%s3 + $0x70] sm:$0xff] %v2115
  %2254 = vst [vmem:[%s3 + $0x78] sm:$0xff] %v2117
  %2255 = vst [vmem:[%s3 + $0x80] sm:$0xff] %v2120
  %2256 = vst [vmem:[%s3 + $0x88] sm:$0xff] %v2122
  %2257 = vst [vmem:[%s3 + $0x90] sm:$0xff] %v2125
  %2258 = vst [vmem:[%s3 + $0x98] sm:$0xff] %v2127
  %2259 = vst [vmem:[%s3 + $0xa0] sm:$0xff] %v2130
  %2260 = vst [vmem:[%s3 + $0xa8] sm:$0xff] %v2132
  %2261 = vst [vmem:[%s3 + $0xb0] sm:$0xff] %v2135
  %2262 = vst [vmem:[%s3 + $0xb8] sm:$0xff] %v2137
  %2263 = vst [vmem:[%s3 + $0xc0] sm:$0xff] %v2140
  %2264 = vst [vmem:[%s3 + $0xc8] sm:$0xff] %v2142
  %2265 = vst [vmem:[%s3 + $0xd0] sm:$0xff] %v2145
  %2266 = vst [vmem:[%s3 + $0xd8] sm:$0xff] %v2147
  %2267 = vst [vmem:[%s3 + $0xe0] sm:$0xff] %v2150
  %2268 = vst [vmem:[%s3 + $0xe8] sm:$0xff] %v2152
  %2269 = vst [vmem:[%s3 + $0xf0] sm:$0xff] %v2155
  %2270 = vst [vmem:[%s3 + $0xf8] sm:$0xff] %v2157
  %2271 = vst [vmem:[%s3 + $0x100] sm:$0xff] %v2160
  %2272 = vst [vmem:[%s3 + $0x108] sm:$0xff] %v2162
  %2273 = vst [vmem:[%s3 + $0x110] sm:$0xff] %v2165
  %2274 = vst [vmem:[%s3 + $0x118] sm:$0xff] %v2167
  %2275 = vst [vmem:[%s3 + $0x120] sm:$0xff] %v2170
  %2276 = vst [vmem:[%s3 + $0x128] sm:$0xff] %v2172
  %2277 = vst [vmem:[%s3 + $0x130] sm:$0xff] %v2175
  %2278 = vst [vmem:[%s3 + $0x138] sm:$0xff] %v2177
  %2279 = vst [vmem:[%s3 + $0x140] sm:$0xff] %v2180
  %2280 = vst [vmem:[%s3 + $0x148] sm:$0xff] %v2182
  %2281 = vst [vmem:[%s3 + $0x150] sm:$0xff] %v2185
  %2282 = vst [vmem:[%s3 + $0x158] sm:$0xff] %v2187
  %2283 = vst [vmem:[%s3 + $0x160] sm:$0xff] %v2190
  %2284 = vst [vmem:[%s3 + $0x168] sm:$0xff] %v2192
  %2285 = vst [vmem:[%s3 + $0x170] sm:$0xff] %v2195
  %2286 = vst [vmem:[%s3 + $0x178] sm:$0xff] %v2197
  %2287 = vst [vmem:[%s3 + $0x180] sm:$0xff] %v2200
  %2288 = vst [vmem:[%s3 + $0x188] sm:$0xff] %v2202
  %2289 = vst [vmem:[%s3 + $0x190] sm:$0xff] %v2205
  %2290 = vst [vmem:[%s3 + $0x198] sm:$0xff] %v2207
  %2291 = vst [vmem:[%s3 + $0x1a0] sm:$0xff] %v2210
  %2292 = vst [vmem:[%s3 + $0x1a8] sm:$0xff] %v2212
  %2293 = vst [vmem:[%s3 + $0x1b0] sm:$0xff] %v2215
  %2294 = vst [vmem:[%s3 + $0x1b8] sm:$0xff] %v2217
  %2295 = vst [vmem:[%s3 + $0x1c0] sm:$0xff] %v2220
  %2296 = vst [vmem:[%s3 + $0x1c8] sm:$0xff] %v2222
  %2297 = vst [vmem:[%s3 + $0x1d0] sm:$0xff] %v2225
  %2298 = vst [vmem:[%s3 + $0x1d8] sm:$0xff] %v2227
  %2299 = vst [vmem:[%s3 + $0x1e0] sm:$0xff] %v2230
  %2300 = vst [vmem:[%s3 + $0x1e8] sm:$0xff] %v2232
  %2301 = vst [vmem:[%s3 + $0x1f0] sm:$0xff] %v2235
  %2302 = vst [vmem:[%s3 + $0x1f8] sm:$0xff] %v2237
  // Predicated region
  $region14: #{net_forward.15} parent=0 // pred_check
    _
  $region15: #{net_forward.15} parent=0 // pred_check_branch
    %2304 = sbr.rel (0) target = $region17
  $region16: #{net_forward.15} parent=0 // pred_region
    _
  $region17: #{net_forward.15} parent=0 // pred_fallthru
    _
  // Predicated region
  $region18: #{net_forward.15} parent=0 // pred_check
    _
  $region19: #{net_forward.15} parent=0 // pred_check_branch
    %2306 = sbr.rel (0) target = $region21
  $region20: #{net_forward.15} parent=0 // pred_region
    _
  $region21: #{net_forward.15} parent=0 // pred_fallthru
    _

</llo_original>
